<compile_context>
chip_gen: v7x
topology: tpu7x:2x2x1
jax: 0.10.0
libtpu: 0.0.40
codegen_flags: <defaults>
</compile_context>

<pallas_src>
import jax
import jax.numpy as jnp
from jax.experimental import pallas as pl
from jax.experimental.pallas import tpu as pltpu


_PARALLEL = pltpu.CompilerParams(dimension_semantics=("parallel",))


# ------------------------------ in-kernel math -------------------------------

def _instnorm_relu(y):
    # y: (C, HW) f32.  nn.InstanceNorm2d(affine=False): biased var, eps=1e-5.
    mean = jnp.mean(y, axis=-1, keepdims=True)
    var = jnp.mean(jnp.square(y - mean), axis=-1, keepdims=True)
    return jnp.maximum((y - mean) * jax.lax.rsqrt(var + 1e-5), 0.0)


# ------------------------------ Pallas kernels -------------------------------

def _conv_in_relu_kernel(p_ref, w_ref, o_ref):
    # p: (K2C, HW) bf16 im2col patches ; w: (Cout, K2C) bf16
    y = jnp.dot(w_ref[...], p_ref[...], preferred_element_type=jnp.float32)
    o_ref[...] = _instnorm_relu(y)


def _conv_in_relu_sa_kernel(p_ref, w_ref, wqkv_ref, bqkv_ref, o_ref):
    # conv(matmul) + InstanceNorm + ReLU + SelfAttention, fused in VMEM.
    y = jnp.dot(w_ref[...], p_ref[...], preferred_element_type=jnp.float32)
    y = _instnorm_relu(y)                                        # (C, HW) f32

    # Fused q/k/v projection (cq padded to 8 with zero rows in the wrapper so
    # all sublane slices below are aligned):  (2*8+C, C) @ (C, HW)
    qkv = jnp.dot(wqkv_ref[...], y.astype(jnp.bfloat16),
                  preferred_element_type=jnp.float32) + bqkv_ref[...]
    c = y.shape[0]
    cqp = (qkv.shape[0] - c) // 2        # static (== 8 here)
    q = qkv[:cqp]                        # (8, HW)
    k = qkv[cqp:2 * cqp]                 # (8, HW)
    v = qkv[2 * cqp:]                    # (C, HW)  (already scaled by gamma)

    # energy[i, j] = <q_:,i , k_:,j>  ; softmax over j, kept in f32.
    energy = jnp.dot(jnp.transpose(q), k, preferred_element_type=jnp.float32)
    energy = energy - jnp.max(energy, axis=-1, keepdims=True)
    p = jnp.exp(energy)
    attn = p * pl.reciprocal(jnp.sum(p, axis=-1, keepdims=True), approx=True)

    # out[c, i] = sum_j v[c, j] * attn[i, j]   (rhs-transposed MXU matmul)
    out = jax.lax.dot_general(v.astype(jnp.bfloat16), attn.astype(jnp.bfloat16),
                              (((1,), (1,)), ((), ())),
                              preferred_element_type=jnp.float32)
    o_ref[...] = out + y                 # == gamma * attention_out + y


def _conv_bias_tanh_kernel(p_ref, w_ref, b_ref, o_ref):
    y = jnp.dot(w_ref[...], p_ref[...], preferred_element_type=jnp.float32)
    o_ref[...] = jnp.tanh(y + b_ref[...])


def _upsample_kernel(x_ref, m_ref, o_ref):
    # x: (C, H*W) f32 ; m: (H*W, Ho*Wo) = kron(A_rows, A_cols)^T, VMEM-resident.
    o_ref[...] = jnp.dot(x_ref[...], m_ref[...],
                         preferred_element_type=jnp.float32)


# ------------------------------- JAX glue ------------------------------------

def _im2col(x, k, stride, pad, pad_mode):
    """(N, C, H, W) -> bf16 patches (N, C*k*k, Ho*Wo) with row order c*k*k + tap,
    which matches torch_weight.reshape(Cout, Cin*k*k)."""
    if pad > 0:
        x = jnp.pad(x, ((0, 0), (0, 0), (pad, pad), (pad, pad)), mode=pad_mode)
    n, c, h, w = x.shape
    ho = (h - k) // stride + 1
    wo = (w - k) // stride + 1
    taps = [x[:, :, di:di + stride * (ho - 1) + 1:stride,
              dj:dj + stride * (wo - 1) + 1:stride]
            for di in range(k) for dj in range(k)]
    p = jnp.stack(taps, axis=2)                       # (N, C, k*k, Ho, Wo)
    return p.reshape(n, c * k * k, ho * wo).astype(jnp.bfloat16), (ho, wo)


def _pack_qkv(sa, cout):
    """Concat Wq/Wk/Wv into one matrix; pad cq up to a sublane multiple (8) and
    fold gamma into the value projection (gamma*(attn@V) == attn@(gamma*V))."""
    cq = sa['wq'].shape[0]
    cqp = 8 * ((cq + 7) // 8)
    padw = ((0, cqp - cq), (0, 0))
    padb = ((0, cqp - cq),)
    g = sa['gamma']
    wqkv = jnp.concatenate([jnp.pad(sa['wq'], padw),
                            jnp.pad(sa['wk'], padw),
                            g * sa['wv']], axis=0)                 # (2*cqp+C, C)
    bqkv = jnp.concatenate([jnp.pad(sa['bq'], padb),
                            jnp.pad(sa['bk'], padb),
                            g * sa['bv']], axis=0)[:, None]        # (2*cqp+C, 1)
    return wqkv.astype(jnp.bfloat16), bqkv.astype(jnp.float32), 2 * cqp + cout


def conv_block(x, w, sa=None, *, stride=1, pad=0, pad_mode='constant'):
    """[pad +] conv(no bias) + InstanceNorm + ReLU [+ SelfAttention] -> NCHW."""
    n = x.shape[0]
    cout, cin, k, _ = w.shape
    patches, (ho, wo) = _im2col(x, k, stride, pad, pad_mode)
    k2c, hw = cin * k * k, ho * wo
    wmat = w.reshape(cout, k2c).astype(jnp.bfloat16)

    p_spec = pl.BlockSpec((None, k2c, hw), lambda b: (b, 0, 0))
    o_spec = pl.BlockSpec((None, cout, hw), lambda b: (b, 0, 0))

    if sa is None:
        out = pl.pallas_call(
            _conv_in_relu_kernel,
            out_shape=jax.ShapeDtypeStruct((n, cout, hw), jnp.float32),
            grid=(n,),
            in_specs=[p_spec, pl.BlockSpec((cout, k2c), lambda b: (0, 0))],
            out_specs=o_spec,
            compiler_params=_PARALLEL,
        )(patches, wmat)
    else:
        wqkv, bqkv, qkvc = _pack_qkv(sa, cout)
        out = pl.pallas_call(
            _conv_in_relu_sa_kernel,
            out_shape=jax.ShapeDtypeStruct((n, cout, hw), jnp.float32),
            grid=(n,),
            in_specs=[p_spec,
                      pl.BlockSpec((cout, k2c), lambda b: (0, 0)),
                      pl.BlockSpec((qkvc, cout), lambda b: (0, 0)),
                      pl.BlockSpec((qkvc, 1), lambda b: (0, 0))],
            out_specs=o_spec,
            compiler_params=_PARALLEL,
        )(patches, wmat, wqkv, bqkv)
    return out.reshape(n, cout, ho, wo)


def final_conv_tanh(x, w, bias):
    n = x.shape[0]
    cout, cin, k, _ = w.shape
    patches, (ho, wo) = _im2col(x, k, 1, 3, 'reflect')
    k2c, hw = cin * k * k, ho * wo
    out = pl.pallas_call(
        _conv_bias_tanh_kernel,
        out_shape=jax.ShapeDtypeStruct((n, cout, hw), jnp.float32),
        grid=(n,),
        in_specs=[pl.BlockSpec((None, k2c, hw), lambda b: (b, 0, 0)),
                  pl.BlockSpec((cout, k2c), lambda b: (0, 0)),
                  pl.BlockSpec((cout, 1), lambda b: (0, 0))],
        out_specs=pl.BlockSpec((None, cout, hw), lambda b: (b, 0, 0)),
        compiler_params=_PARALLEL,
    )(patches, w.reshape(cout, k2c).astype(jnp.bfloat16),
      bias.reshape(cout, 1).astype(jnp.float32))
    return out.reshape(n, cout, ho, wo)


def _interp_matrix(size_in, size_out):
    # bilinear, align_corners=True (matches nn.Upsample)
    src = jnp.arange(size_out, dtype=jnp.float32) * (size_in - 1) / (size_out - 1)
    i0 = jnp.clip(jnp.floor(src).astype(jnp.int32), 0, size_in - 2)
    frac = src - i0.astype(jnp.float32)
    rows = jnp.arange(size_out)
    m = jnp.zeros((size_out, size_in), jnp.float32)
    m = m.at[rows, i0].add(1.0 - frac)
    m = m.at[rows, i0 + 1].add(frac)
    return m


def upsample_bilinear_x2(x):
    """(N, C, H, W) -> (N, C, 2H, 2W).  Both interpolation directions collapsed
    into a single per-batch matmul against kron(A_h, A_w)^T (a few KiB)."""
    n, c, h, w = x.shape
    ho, wo = 2 * h, 2 * w
    a = _interp_matrix(h, ho)                              # (Ho, H)
    bm = _interp_matrix(w, wo)                             # (Wo, W)
    m = jnp.transpose((a[:, None, :, None] * bm[None, :, None, :])
                      .reshape(ho * wo, h * w))            # (H*W, Ho*Wo)
    out = pl.pallas_call(
        _upsample_kernel,
        out_shape=jax.ShapeDtypeStruct((n, c, ho * wo), jnp.float32),
        grid=(n,),
        in_specs=[pl.BlockSpec((None, c, h * w), lambda b: (b, 0, 0)),
                  pl.BlockSpec((h * w, ho * wo), lambda b: (0, 0))],
        out_specs=pl.BlockSpec((None, c, ho * wo), lambda b: (b, 0, 0)),
        compiler_params=_PARALLEL,
    )(x.reshape(n, c, h * w), m)
    return out.reshape(n, c, ho, wo)


# ----------------------------- parameter init --------------------------------

def _init_sa(keys, dim):
    cq = dim // 8
    return dict(
        wq=0.1 * jax.random.normal(next(keys), (cq, dim), jnp.float32),
        bq=0.02 * jax.random.normal(next(keys), (cq,), jnp.float32),
        wk=0.1 * jax.random.normal(next(keys), (cq, dim), jnp.float32),
        bk=0.02 * jax.random.normal(next(keys), (cq,), jnp.float32),
        wv=0.1 * jax.random.normal(next(keys), (dim, dim), jnp.float32),
        bv=0.02 * jax.random.normal(next(keys), (dim,), jnp.float32),
        # PyTorch inits gamma = 0 (attention branch would be a no-op); use a
        # deterministic nonzero value so the attention path is exercised.
        gamma=jnp.asarray(0.1, jnp.float32),
    )


def init_params(key, in_ch=3, out_ch=3, ngf=8):
    keys = iter(jax.random.split(key, 128))

    def nrm(shape, scale=0.1):
        return scale * jax.random.normal(next(keys), shape, jnp.float32)

    p = {'enc0_w': nrm((ngf, in_ch, 7, 7)), 'down': [], 'res': [], 'up': []}
    mult = 1
    for _ in range(2):
        cin, cout = ngf * mult, ngf * mult * 2
        p['down'].append(dict(w=nrm((cout, cin, 3, 3)), sa=_init_sa(keys, cout)))
        mult *= 2
    dim = ngf * mult
    for _ in range(2):
        p['res'].append(dict(w=nrm((dim, dim, 3, 3)), sa=_init_sa(keys, dim)))
    for _ in range(2):
        p['up'].append(dict(w=nrm((dim // 2, dim, 3, 3)),
                            sa=_init_sa(keys, dim // 2)))
        dim //= 2
    p['final_w'] = nrm((out_ch, dim, 7, 7))
    p['final_b'] = nrm((out_ch,), 0.02)
    return p


# --------------------------------- forward -----------------------------------

def attn_resnet_generator(params, x_nchw):
    x = x_nchw.astype(jnp.float32)                           # NCHW throughout
    # encoder head: ReflectPad(3) + Conv7 + IN + ReLU
    x = conv_block(x, params['enc0_w'], None, stride=1, pad=3,
                   pad_mode='reflect')
    # downsampling: Conv3 s2 (zero pad 1) + IN + ReLU + SelfAttention
    for blk in params['down']:
        x = conv_block(x, blk['w'], blk['sa'], stride=2, pad=1,
                       pad_mode='constant')
    # ConvAttnBlocks: ReflectPad(1) + Conv3 + IN + ReLU + SelfAttention (no skip)
    for blk in params['res']:
        x = conv_block(x, blk['w'], blk['sa'], stride=1, pad=1,
                       pad_mode='reflect')
    # upsampling: bilinear x2 (align_corners) + Conv3 (zero pad 1) + IN + ReLU + SA
    for blk in params['up']:
        x = upsample_bilinear_x2(x)
        x = conv_block(x, blk['w'], blk['sa'], stride=1, pad=1,
                       pad_mode='constant')
    # final: ReflectPad(3) + Conv7 (+bias) + Tanh
    return final_conv_tanh(x, params['final_w'], params['final_b'])


# ----------------------------------- main -------------------------------------

if __name__ == "__main__":
    root = jax.random.PRNGKey(0)
    k_param, k_x = jax.random.split(root)
    params = init_params(k_param, in_ch=3, out_ch=3, ngf=8)
    x = jax.random.normal(k_x, (2, 3, 16, 16), jnp.float32)   # NCHW, like PyTorch

    fwd = jax.jit(attn_resnet_generator)
    y = jax.block_until_ready(fwd(params, x))
    assert y.shape == (2, 3, 16, 16), y.shape
    assert bool(jnp.all(jnp.isfinite(y)))
    print("KERNEL_OK")
</pallas_src>

<mosaic_0001>
module attributes {stable_mosaic.version = 11 : i64} {
  func.func private @main(%arg0: i32) attributes {dimension_semantics = [#tpu.dimension_semantics<core_parallel>], iteration_bounds = array<i64: 2>, tpu.core_type = #tpu.core_type<sc_scalar_subcore>, window_params = []} {
    return
  }
}

module attributes {stable_mosaic.version = 11 : i64} {
  func.func private @main(%arg0: i32) attributes {dimension_semantics = [#tpu.dimension_semantics<core_parallel>], iteration_bounds = array<i64: 2>, tpu.core_type = #tpu.core_type<sc_scalar_subcore>, window_params = []} {
    return
  }
}

module attributes {stable_mosaic.version = 11 : i64} {
  func.func @_conv_in_relu_kernel(%arg0: i32, %arg1: memref<1x147x256xbf16, #tpu.memory_space<vmem>>, %arg2: memref<8x147xbf16, #tpu.memory_space<vmem>>, %arg3: memref<1x8x256xf32, #tpu.memory_space<vmem>>) attributes {dimension_semantics = [#tpu.dimension_semantics<parallel>], iteration_bounds = array<i64: 2>, scalar_prefetch = 0 : i64, scratch_operands = 0 : i64, tpu.core_type = #tpu.core_type<tc>, window_params = [{transform_indices = @transform_0, window_bounds = array<i64: 1, 147, 256>}, {pipeline_mode = #tpu.pipeline_mode<synchronous>, transform_indices = @transform_1, window_bounds = array<i64: 8, 147>}, {transform_indices = @transform_2, window_bounds = array<i64: 1, 8, 256>}]} {
    %c0 = arith.constant 0 : index
    %c0_0 = arith.constant 0 : index
    %0 = vector.load %arg2[%c0, %c0_0] : memref<8x147xbf16, #tpu.memory_space<vmem>>, vector<8x147xbf16>
    %c0_1 = arith.constant 0 : index
    %c0_2 = arith.constant 0 : index
    %c0_3 = arith.constant 0 : index
    %1 = vector.load %arg1[%c0_1, %c0_2, %c0_3] : memref<1x147x256xbf16, #tpu.memory_space<vmem>>, vector<1x147x256xbf16>
    %2 = vector.shape_cast %1 : vector<1x147x256xbf16> to vector<147x256xbf16>
    %cst = arith.constant dense<0.000000e+00> : vector<8x256xf32>
    %3 = tpu.matmul %0, %2, %cst {dimension_numbers = #tpu.dot_dimension_numbers<[1], [0], [0], [1], [0, 0, 1, 1], [], []>} : vector<8x147xbf16>, vector<147x256xbf16>, vector<8x256xf32> -> vector<8x256xf32>
    %cst_4 = arith.constant dense<0.000000e+00> : vector<8xf32>
    %4 = vector.multi_reduction <add>, %3, %cst_4 [1] : vector<8x256xf32> to vector<8xf32>
    %5 = vector.shape_cast %4 : vector<8xf32> to vector<8x1xf32>
    %cst_5 = arith.constant 2.560000e+02 : f32
    %6 = vector.broadcast %cst_5 : f32 to vector<8x1xf32>
    %7 = arith.divf %5, %6 : vector<8x1xf32>
    %8 = vector.broadcast %7 : vector<8x1xf32> to vector<8x256xf32>
    %9 = arith.subf %3, %8 : vector<8x256xf32>
    %10 = arith.mulf %9, %9 : vector<8x256xf32>
    %cst_6 = arith.constant dense<0.000000e+00> : vector<8xf32>
    %11 = vector.multi_reduction <add>, %10, %cst_6 [1] : vector<8x256xf32> to vector<8xf32>
    %12 = vector.shape_cast %11 : vector<8xf32> to vector<8x1xf32>
    %cst_7 = arith.constant 2.560000e+02 : f32
    %13 = vector.broadcast %cst_7 : f32 to vector<8x1xf32>
    %14 = arith.divf %12, %13 : vector<8x1xf32>
    %15 = vector.broadcast %7 : vector<8x1xf32> to vector<8x256xf32>
    %16 = arith.subf %3, %15 : vector<8x256xf32>
    %cst_8 = arith.constant 9.99999974E-6 : f32
    %17 = vector.broadcast %cst_8 : f32 to vector<8x1xf32>
    %18 = arith.addf %14, %17 : vector<8x1xf32>
    %19 = math.rsqrt %18 : vector<8x1xf32>
    %20 = vector.broadcast %19 : vector<8x1xf32> to vector<8x256xf32>
    %21 = arith.mulf %16, %20 : vector<8x256xf32>
    %cst_9 = arith.constant 0.000000e+00 : f32
    %22 = vector.broadcast %cst_9 : f32 to vector<8x256xf32>
    %23 = arith.maximumf %21, %22 : vector<8x256xf32>
    %c0_10 = arith.constant 0 : index
    %c0_11 = arith.constant 0 : index
    %c0_12 = arith.constant 0 : index
    %24 = vector.load %arg3[%c0_10, %c0_11, %c0_12] : memref<1x8x256xf32, #tpu.memory_space<vmem>>, vector<1x8x256xf32>
    %25 = vector.shape_cast %24 : vector<1x8x256xf32> to vector<8x256xf32>
    %26 = vector.shape_cast %23 : vector<8x256xf32> to vector<1x8x256xf32>
    tpu.vector_store %arg3[%c0_10, %c0_11, %c0_12], %26 {strides = array<i32>} : memref<1x8x256xf32, #tpu.memory_space<vmem>>, vector<1x8x256xf32>,
    return
  }
  func.func @transform_0(%arg0: i32) -> (i32, i32, i32) {
    %c0_i32 = arith.constant 0 : i32
    %c0_i32_0 = arith.constant 0 : i32
    %c0_i32_1 = arith.constant 0 : i32
    return %arg0, %c0_i32, %c0_i32_0 : i32, i32, i32
  }
  func.func @transform_1(%arg0: i32) -> (i32, i32) {
    %c0_i32 = arith.constant 0 : i32
    %c0_i32_0 = arith.constant 0 : i32
    %c0_i32_1 = arith.constant 0 : i32
    return %c0_i32, %c0_i32_0 : i32, i32
  }
  func.func @transform_2(%arg0: i32) -> (i32, i32, i32) {
    %c0_i32 = arith.constant 0 : i32
    %c0_i32_0 = arith.constant 0 : i32
    %c0_i32_1 = arith.constant 0 : i32
    return %arg0, %c0_i32, %c0_i32_0 : i32, i32, i32
  }
}

module attributes {stable_mosaic.version = 11 : i64} {
  func.func @_conv_in_relu_sa_kernel(%arg0: i32, %arg1: memref<1x72x64xbf16, #tpu.memory_space<vmem>>, %arg2: memref<16x72xbf16, #tpu.memory_space<vmem>>, %arg3: memref<32x16xbf16, #tpu.memory_space<vmem>>, %arg4: memref<32x1xf32, #tpu.memory_space<vmem>>, %arg5: memref<1x16x64xf32, #tpu.memory_space<vmem>>) attributes {dimension_semantics = [#tpu.dimension_semantics<parallel>], iteration_bounds = array<i64: 2>, scalar_prefetch = 0 : i64, scratch_operands = 0 : i64, tpu.core_type = #tpu.core_type<tc>, window_params = [{transform_indices = @transform_0, window_bounds = array<i64: 1, 72, 64>}, {pipeline_mode = #tpu.pipeline_mode<synchronous>, transform_indices = @transform_1, window_bounds = array<i64: 16, 72>}, {pipeline_mode = #tpu.pipeline_mode<synchronous>, transform_indices = @transform_2, window_bounds = array<i64: 32, 16>}, {pipeline_mode = #tpu.pipeline_mode<synchronous>, transform_indices = @transform_3, window_bounds = array<i64: 32, 1>}, {transform_indices = @transform_4, window_bounds = array<i64: 1, 16, 64>}]} {
    %c0 = arith.constant 0 : index
    %c0_0 = arith.constant 0 : index
    %0 = vector.load %arg2[%c0, %c0_0] : memref<16x72xbf16, #tpu.memory_space<vmem>>, vector<16x72xbf16>
    %c0_1 = arith.constant 0 : index
    %c0_2 = arith.constant 0 : index
    %c0_3 = arith.constant 0 : index
    %1 = vector.load %arg1[%c0_1, %c0_2, %c0_3] : memref<1x72x64xbf16, #tpu.memory_space<vmem>>, vector<1x72x64xbf16>
    %2 = vector.shape_cast %1 : vector<1x72x64xbf16> to vector<72x64xbf16>
    %cst = arith.constant dense<0.000000e+00> : vector<16x64xf32>
    %3 = tpu.matmul %0, %2, %cst {dimension_numbers = #tpu.dot_dimension_numbers<[1], [0], [0], [1], [0, 0, 1, 1], [], []>} : vector<16x72xbf16>, vector<72x64xbf16>, vector<16x64xf32> -> vector<16x64xf32>
    %cst_4 = arith.constant dense<0.000000e+00> : vector<16xf32>
    %4 = vector.multi_reduction <add>, %3, %cst_4 [1] : vector<16x64xf32> to vector<16xf32>
    %5 = vector.shape_cast %4 : vector<16xf32> to vector<16x1xf32>
    %cst_5 = arith.constant 6.400000e+01 : f32
    %6 = vector.broadcast %cst_5 : f32 to vector<16x1xf32>
    %7 = arith.divf %5, %6 : vector<16x1xf32>
    %8 = vector.broadcast %7 : vector<16x1xf32> to vector<16x64xf32>
    %9 = arith.subf %3, %8 : vector<16x64xf32>
    %10 = arith.mulf %9, %9 : vector<16x64xf32>
    %cst_6 = arith.constant dense<0.000000e+00> : vector<16xf32>
    %11 = vector.multi_reduction <add>, %10, %cst_6 [1] : vector<16x64xf32> to vector<16xf32>
    %12 = vector.shape_cast %11 : vector<16xf32> to vector<16x1xf32>
    %cst_7 = arith.constant 6.400000e+01 : f32
    %13 = vector.broadcast %cst_7 : f32 to vector<16x1xf32>
    %14 = arith.divf %12, %13 : vector<16x1xf32>
    %15 = vector.broadcast %7 : vector<16x1xf32> to vector<16x64xf32>
    %16 = arith.subf %3, %15 : vector<16x64xf32>
    %cst_8 = arith.constant 9.99999974E-6 : f32
    %17 = vector.broadcast %cst_8 : f32 to vector<16x1xf32>
    %18 = arith.addf %14, %17 : vector<16x1xf32>
    %19 = math.rsqrt %18 : vector<16x1xf32>
    %20 = vector.broadcast %19 : vector<16x1xf32> to vector<16x64xf32>
    %21 = arith.mulf %16, %20 : vector<16x64xf32>
    %cst_9 = arith.constant 0.000000e+00 : f32
    %22 = vector.broadcast %cst_9 : f32 to vector<16x64xf32>
    %23 = arith.maximumf %21, %22 : vector<16x64xf32>
    %c0_10 = arith.constant 0 : index
    %c0_11 = arith.constant 0 : index
    %24 = vector.load %arg3[%c0_10, %c0_11] : memref<32x16xbf16, #tpu.memory_space<vmem>>, vector<32x16xbf16>
    %25 = arith.truncf %23 : vector<16x64xf32> to vector<16x64xbf16>
    %cst_12 = arith.constant dense<0.000000e+00> : vector<32x64xf32>
    %26 = tpu.matmul %24, %25, %cst_12 {dimension_numbers = #tpu.dot_dimension_numbers<[1], [0], [0], [1], [0, 0, 1, 1], [], []>} : vector<32x16xbf16>, vector<16x64xbf16>, vector<32x64xf32> -> vector<32x64xf32>
    %c0_13 = arith.constant 0 : index
    %c0_14 = arith.constant 0 : index
    %27 = vector.load %arg4[%c0_13, %c0_14] : memref<32x1xf32, #tpu.memory_space<vmem>>, vector<32x1xf32>
    %28 = vector.broadcast %27 : vector<32x1xf32> to vector<32x64xf32>
    %29 = arith.addf %26, %28 : vector<32x64xf32>
    %30 = vector.extract_strided_slice %29 {offsets = [0, 0], sizes = [8, 64], strides = [1, 1]} : vector<32x64xf32> to vector<8x64xf32>
    %31 = vector.extract_strided_slice %29 {offsets = [8, 0], sizes = [8, 64], strides = [1, 1]} : vector<32x64xf32> to vector<8x64xf32>
    %32 = vector.extract_strided_slice %29 {offsets = [16, 0], sizes = [16, 64], strides = [1, 1]} : vector<32x64xf32> to vector<16x64xf32>
    %33 = tpu.transpose %30, [1, 0] : vector<8x64xf32> -> vector<64x8xf32>
    %cst_15 = arith.constant dense<0.000000e+00> : vector<64x64xf32>
    %34 = tpu.matmul %33, %31, %cst_15 {dimension_numbers = #tpu.dot_dimension_numbers<[1], [0], [0], [1], [0, 0, 1, 1], [], []>} : vector<64x8xf32>, vector<8x64xf32>, vector<64x64xf32> -> vector<64x64xf32>
    %cst_16 = arith.constant dense<0xFF800000> : vector<64xf32>
    %35 = vector.multi_reduction <maximumf>, %34, %cst_16 [1] : vector<64x64xf32> to vector<64xf32>
    %36 = vector.shape_cast %35 : vector<64xf32> to vector<64x1xf32>
    %37 = vector.broadcast %36 : vector<64x1xf32> to vector<64x64xf32>
    %38 = arith.subf %34, %37 : vector<64x64xf32>
    %39 = math.exp %38 : vector<64x64xf32>
    %cst_17 = arith.constant dense<0.000000e+00> : vector<64xf32>
    %40 = vector.multi_reduction <add>, %39, %cst_17 [1] : vector<64x64xf32> to vector<64xf32>
    %41 = vector.shape_cast %40 : vector<64xf32> to vector<64x1xf32>
    %42 = tpu.reciprocal %41 {approx = true} : vector<64x1xf32> -> vector<64x1xf32>
    %43 = vector.broadcast %42 : vector<64x1xf32> to vector<64x64xf32>
    %44 = arith.mulf %39, %43 : vector<64x64xf32>
    %45 = arith.truncf %32 : vector<16x64xf32> to vector<16x64xbf16>
    %46 = arith.truncf %44 : vector<64x64xf32> to vector<64x64xbf16>
    %cst_18 = arith.constant dense<0.000000e+00> : vector<16x64xf32>
    %47 = tpu.matmul %45, %46, %cst_18 {dimension_numbers = #tpu.dot_dimension_numbers<[1], [1], [0], [0], [0, 0, 1, 0], [], []>} : vector<16x64xbf16>, vector<64x64xbf16>, vector<16x64xf32> -> vector<16x64xf32>
    %48 = arith.addf %47, %23 : vector<16x64xf32>
    %c0_19 = arith.constant 0 : index
    %c0_20 = arith.constant 0 : index
    %c0_21 = arith.constant 0 : index
    %49 = vector.load %arg5[%c0_19, %c0_20, %c0_21] : memref<1x16x64xf32, #tpu.memory_space<vmem>>, vector<1x16x64xf32>
    %50 = vector.shape_cast %49 : vector<1x16x64xf32> to vector<16x64xf32>
    %51 = vector.shape_cast %48 : vector<16x64xf32> to vector<1x16x64xf32>
    tpu.vector_store %arg5[%c0_19, %c0_20, %c0_21], %51 {strides = array<i32>} : memref<1x16x64xf32, #tpu.memory_space<vmem>>, vector<1x16x64xf32>,
    return
  }
  func.func @transform_0(%arg0: i32) -> (i32, i32, i32) {
    %c0_i32 = arith.constant 0 : i32
    %c0_i32_0 = arith.constant 0 : i32
    %c0_i32_1 = arith.constant 0 : i32
    return %arg0, %c0_i32, %c0_i32_0 : i32, i32, i32
  }
  func.func @transform_1(%arg0: i32) -> (i32, i32) {
    %c0_i32 = arith.constant 0 : i32
    %c0_i32_0 = arith.constant 0 : i32
    %c0_i32_1 = arith.constant 0 : i32
    return %c0_i32, %c0_i32_0 : i32, i32
  }
  func.func @transform_2(%arg0: i32) -> (i32, i32) {
    %c0_i32 = arith.constant 0 : i32
    %c0_i32_0 = arith.constant 0 : i32
    %c0_i32_1 = arith.constant 0 : i32
    return %c0_i32, %c0_i32_0 : i32, i32
  }
  func.func @transform_3(%arg0: i32) -> (i32, i32) {
    %c0_i32 = arith.constant 0 : i32
    %c0_i32_0 = arith.constant 0 : i32
    %c0_i32_1 = arith.constant 0 : i32
    return %c0_i32, %c0_i32_0 : i32, i32
  }
  func.func @transform_4(%arg0: i32) -> (i32, i32, i32) {
    %c0_i32 = arith.constant 0 : i32
    %c0_i32_0 = arith.constant 0 : i32
    %c0_i32_1 = arith.constant 0 : i32
    return %arg0, %c0_i32, %c0_i32_0 : i32, i32, i32
  }
}

module attributes {stable_mosaic.version = 11 : i64} {
  func.func @_conv_in_relu_sa_kernel(%arg0: i32, %arg1: memref<1x144x16xbf16, #tpu.memory_space<vmem>>, %arg2: memref<32x144xbf16, #tpu.memory_space<vmem>>, %arg3: memref<48x32xbf16, #tpu.memory_space<vmem>>, %arg4: memref<48x1xf32, #tpu.memory_space<vmem>>, %arg5: memref<1x32x16xf32, #tpu.memory_space<vmem>>) attributes {dimension_semantics = [#tpu.dimension_semantics<parallel>], iteration_bounds = array<i64: 2>, scalar_prefetch = 0 : i64, scratch_operands = 0 : i64, tpu.core_type = #tpu.core_type<tc>, window_params = [{transform_indices = @transform_0, window_bounds = array<i64: 1, 144, 16>}, {pipeline_mode = #tpu.pipeline_mode<synchronous>, transform_indices = @transform_1, window_bounds = array<i64: 32, 144>}, {pipeline_mode = #tpu.pipeline_mode<synchronous>, transform_indices = @transform_2, window_bounds = array<i64: 48, 32>}, {pipeline_mode = #tpu.pipeline_mode<synchronous>, transform_indices = @transform_3, window_bounds = array<i64: 48, 1>}, {transform_indices = @transform_4, window_bounds = array<i64: 1, 32, 16>}]} {
    %c0 = arith.constant 0 : index
    %c0_0 = arith.constant 0 : index
    %0 = vector.load %arg2[%c0, %c0_0] : memref<32x144xbf16, #tpu.memory_space<vmem>>, vector<32x144xbf16>
    %c0_1 = arith.constant 0 : index
    %c0_2 = arith.constant 0 : index
    %c0_3 = arith.constant 0 : index
    %1 = vector.load %arg1[%c0_1, %c0_2, %c0_3] : memref<1x144x16xbf16, #tpu.memory_space<vmem>>, vector<1x144x16xbf16>
    %2 = vector.shape_cast %1 : vector<1x144x16xbf16> to vector<144x16xbf16>
    %cst = arith.constant dense<0.000000e+00> : vector<32x16xf32>
    %3 = tpu.matmul %0, %2, %cst {dimension_numbers = #tpu.dot_dimension_numbers<[1], [0], [0], [1], [0, 0, 1, 1], [], []>} : vector<32x144xbf16>, vector<144x16xbf16>, vector<32x16xf32> -> vector<32x16xf32>
    %cst_4 = arith.constant dense<0.000000e+00> : vector<32xf32>
    %4 = vector.multi_reduction <add>, %3, %cst_4 [1] : vector<32x16xf32> to vector<32xf32>
    %5 = vector.shape_cast %4 : vector<32xf32> to vector<32x1xf32>
    %cst_5 = arith.constant 1.600000e+01 : f32
    %6 = vector.broadcast %cst_5 : f32 to vector<32x1xf32>
    %7 = arith.divf %5, %6 : vector<32x1xf32>
    %8 = vector.broadcast %7 : vector<32x1xf32> to vector<32x16xf32>
    %9 = arith.subf %3, %8 : vector<32x16xf32>
    %10 = arith.mulf %9, %9 : vector<32x16xf32>
    %cst_6 = arith.constant dense<0.000000e+00> : vector<32xf32>
    %11 = vector.multi_reduction <add>, %10, %cst_6 [1] : vector<32x16xf32> to vector<32xf32>
    %12 = vector.shape_cast %11 : vector<32xf32> to vector<32x1xf32>
    %cst_7 = arith.constant 1.600000e+01 : f32
    %13 = vector.broadcast %cst_7 : f32 to vector<32x1xf32>
    %14 = arith.divf %12, %13 : vector<32x1xf32>
    %15 = vector.broadcast %7 : vector<32x1xf32> to vector<32x16xf32>
    %16 = arith.subf %3, %15 : vector<32x16xf32>
    %cst_8 = arith.constant 9.99999974E-6 : f32
    %17 = vector.broadcast %cst_8 : f32 to vector<32x1xf32>
    %18 = arith.addf %14, %17 : vector<32x1xf32>
    %19 = math.rsqrt %18 : vector<32x1xf32>
    %20 = vector.broadcast %19 : vector<32x1xf32> to vector<32x16xf32>
    %21 = arith.mulf %16, %20 : vector<32x16xf32>
    %cst_9 = arith.constant 0.000000e+00 : f32
    %22 = vector.broadcast %cst_9 : f32 to vector<32x16xf32>
    %23 = arith.maximumf %21, %22 : vector<32x16xf32>
    %c0_10 = arith.constant 0 : index
    %c0_11 = arith.constant 0 : index
    %24 = vector.load %arg3[%c0_10, %c0_11] : memref<48x32xbf16, #tpu.memory_space<vmem>>, vector<48x32xbf16>
    %25 = arith.truncf %23 : vector<32x16xf32> to vector<32x16xbf16>
    %cst_12 = arith.constant dense<0.000000e+00> : vector<48x16xf32>
    %26 = tpu.matmul %24, %25, %cst_12 {dimension_numbers = #tpu.dot_dimension_numbers<[1], [0], [0], [1], [0, 0, 1, 1], [], []>} : vector<48x32xbf16>, vector<32x16xbf16>, vector<48x16xf32> -> vector<48x16xf32>
    %c0_13 = arith.constant 0 : index
    %c0_14 = arith.constant 0 : index
    %27 = vector.load %arg4[%c0_13, %c0_14] : memref<48x1xf32, #tpu.memory_space<vmem>>, vector<48x1xf32>
    %28 = vector.broadcast %27 : vector<48x1xf32> to vector<48x16xf32>
    %29 = arith.addf %26, %28 : vector<48x16xf32>
    %30 = vector.extract_strided_slice %29 {offsets = [0, 0], sizes = [8, 16], strides = [1, 1]} : vector<48x16xf32> to vector<8x16xf32>
    %31 = vector.extract_strided_slice %29 {offsets = [8, 0], sizes = [8, 16], strides = [1, 1]} : vector<48x16xf32> to vector<8x16xf32>
    %32 = vector.extract_strided_slice %29 {offsets = [16, 0], sizes = [32, 16], strides = [1, 1]} : vector<48x16xf32> to vector<32x16xf32>
    %33 = tpu.transpose %30, [1, 0] : vector<8x16xf32> -> vector<16x8xf32>
    %cst_15 = arith.constant dense<0.000000e+00> : vector<16x16xf32>
    %34 = tpu.matmul %33, %31, %cst_15 {dimension_numbers = #tpu.dot_dimension_numbers<[1], [0], [0], [1], [0, 0, 1, 1], [], []>} : vector<16x8xf32>, vector<8x16xf32>, vector<16x16xf32> -> vector<16x16xf32>
    %cst_16 = arith.constant dense<0xFF800000> : vector<16xf32>
    %35 = vector.multi_reduction <maximumf>, %34, %cst_16 [1] : vector<16x16xf32> to vector<16xf32>
    %36 = vector.shape_cast %35 : vector<16xf32> to vector<16x1xf32>
    %37 = vector.broadcast %36 : vector<16x1xf32> to vector<16x16xf32>
    %38 = arith.subf %34, %37 : vector<16x16xf32>
    %39 = math.exp %38 : vector<16x16xf32>
    %cst_17 = arith.constant dense<0.000000e+00> : vector<16xf32>
    %40 = vector.multi_reduction <add>, %39, %cst_17 [1] : vector<16x16xf32> to vector<16xf32>
    %41 = vector.shape_cast %40 : vector<16xf32> to vector<16x1xf32>
    %42 = tpu.reciprocal %41 {approx = true} : vector<16x1xf32> -> vector<16x1xf32>
    %43 = vector.broadcast %42 : vector<16x1xf32> to vector<16x16xf32>
    %44 = arith.mulf %39, %43 : vector<16x16xf32>
    %45 = arith.truncf %32 : vector<32x16xf32> to vector<32x16xbf16>
    %46 = arith.truncf %44 : vector<16x16xf32> to vector<16x16xbf16>
    %cst_18 = arith.constant dense<0.000000e+00> : vector<32x16xf32>
    %47 = tpu.matmul %45, %46, %cst_18 {dimension_numbers = #tpu.dot_dimension_numbers<[1], [1], [0], [0], [0, 0, 1, 0], [], []>} : vector<32x16xbf16>, vector<16x16xbf16>, vector<32x16xf32> -> vector<32x16xf32>
    %48 = arith.addf %47, %23 : vector<32x16xf32>
    %c0_19 = arith.constant 0 : index
    %c0_20 = arith.constant 0 : index
    %c0_21 = arith.constant 0 : index
    %49 = vector.load %arg5[%c0_19, %c0_20, %c0_21] : memref<1x32x16xf32, #tpu.memory_space<vmem>>, vector<1x32x16xf32>
    %50 = vector.shape_cast %49 : vector<1x32x16xf32> to vector<32x16xf32>
    %51 = vector.shape_cast %48 : vector<32x16xf32> to vector<1x32x16xf32>
    tpu.vector_store %arg5[%c0_19, %c0_20, %c0_21], %51 {strides = array<i32>} : memref<1x32x16xf32, #tpu.memory_space<vmem>>, vector<1x32x16xf32>,
    return
  }
  func.func @transform_0(%arg0: i32) -> (i32, i32, i32) {
    %c0_i32 = arith.constant 0 : i32
    %c0_i32_0 = arith.constant 0 : i32
    %c0_i32_1 = arith.constant 0 : i32
    return %arg0, %c0_i32, %c0_i32_0 : i32, i32, i32
  }
  func.func @transform_1(%arg0: i32) -> (i32, i32) {
    %c0_i32 = arith.constant 0 : i32
    %c0_i32_0 = arith.constant 0 : i32
    %c0_i32_1 = arith.constant 0 : i32
    return %c0_i32, %c0_i32_0 : i32, i32
  }
  func.func @transform_2(%arg0: i32) -> (i32, i32) {
    %c0_i32 = arith.constant 0 : i32
    %c0_i32_0 = arith.constant 0 : i32
    %c0_i32_1 = arith.constant 0 : i32
    return %c0_i32, %c0_i32_0 : i32, i32
  }
  func.func @transform_3(%arg0: i32) -> (i32, i32) {
    %c0_i32 = arith.constant 0 : i32
    %c0_i32_0 = arith.constant 0 : i32
    %c0_i32_1 = arith.constant 0 : i32
    return %c0_i32, %c0_i32_0 : i32, i32
  }
  func.func @transform_4(%arg0: i32) -> (i32, i32, i32) {
    %c0_i32 = arith.constant 0 : i32
    %c0_i32_0 = arith.constant 0 : i32
    %c0_i32_1 = arith.constant 0 : i32
    return %arg0, %c0_i32, %c0_i32_0 : i32, i32, i32
  }
}

module attributes {stable_mosaic.version = 11 : i64} {
  func.func @_conv_in_relu_sa_kernel(%arg0: i32, %arg1: memref<1x288x16xbf16, #tpu.memory_space<vmem>>, %arg2: memref<32x288xbf16, #tpu.memory_space<vmem>>, %arg3: memref<48x32xbf16, #tpu.memory_space<vmem>>, %arg4: memref<48x1xf32, #tpu.memory_space<vmem>>, %arg5: memref<1x32x16xf32, #tpu.memory_space<vmem>>) attributes {dimension_semantics = [#tpu.dimension_semantics<parallel>], iteration_bounds = array<i64: 2>, scalar_prefetch = 0 : i64, scratch_operands = 0 : i64, tpu.core_type = #tpu.core_type<tc>, window_params = [{transform_indices = @transform_0, window_bounds = array<i64: 1, 288, 16>}, {pipeline_mode = #tpu.pipeline_mode<synchronous>, transform_indices = @transform_1, window_bounds = array<i64: 32, 288>}, {pipeline_mode = #tpu.pipeline_mode<synchronous>, transform_indices = @transform_2, window_bounds = array<i64: 48, 32>}, {pipeline_mode = #tpu.pipeline_mode<synchronous>, transform_indices = @transform_3, window_bounds = array<i64: 48, 1>}, {transform_indices = @transform_4, window_bounds = array<i64: 1, 32, 16>}]} {
    %c0 = arith.constant 0 : index
    %c0_0 = arith.constant 0 : index
    %0 = vector.load %arg2[%c0, %c0_0] : memref<32x288xbf16, #tpu.memory_space<vmem>>, vector<32x288xbf16>
    %c0_1 = arith.constant 0 : index
    %c0_2 = arith.constant 0 : index
    %c0_3 = arith.constant 0 : index
    %1 = vector.load %arg1[%c0_1, %c0_2, %c0_3] : memref<1x288x16xbf16, #tpu.memory_space<vmem>>, vector<1x288x16xbf16>
    %2 = vector.shape_cast %1 : vector<1x288x16xbf16> to vector<288x16xbf16>
    %cst = arith.constant dense<0.000000e+00> : vector<32x16xf32>
    %3 = tpu.matmul %0, %2, %cst {dimension_numbers = #tpu.dot_dimension_numbers<[1], [0], [0], [1], [0, 0, 1, 1], [], []>} : vector<32x288xbf16>, vector<288x16xbf16>, vector<32x16xf32> -> vector<32x16xf32>
    %cst_4 = arith.constant dense<0.000000e+00> : vector<32xf32>
    %4 = vector.multi_reduction <add>, %3, %cst_4 [1] : vector<32x16xf32> to vector<32xf32>
    %5 = vector.shape_cast %4 : vector<32xf32> to vector<32x1xf32>
    %cst_5 = arith.constant 1.600000e+01 : f32
    %6 = vector.broadcast %cst_5 : f32 to vector<32x1xf32>
    %7 = arith.divf %5, %6 : vector<32x1xf32>
    %8 = vector.broadcast %7 : vector<32x1xf32> to vector<32x16xf32>
    %9 = arith.subf %3, %8 : vector<32x16xf32>
    %10 = arith.mulf %9, %9 : vector<32x16xf32>
    %cst_6 = arith.constant dense<0.000000e+00> : vector<32xf32>
    %11 = vector.multi_reduction <add>, %10, %cst_6 [1] : vector<32x16xf32> to vector<32xf32>
    %12 = vector.shape_cast %11 : vector<32xf32> to vector<32x1xf32>
    %cst_7 = arith.constant 1.600000e+01 : f32
    %13 = vector.broadcast %cst_7 : f32 to vector<32x1xf32>
    %14 = arith.divf %12, %13 : vector<32x1xf32>
    %15 = vector.broadcast %7 : vector<32x1xf32> to vector<32x16xf32>
    %16 = arith.subf %3, %15 : vector<32x16xf32>
    %cst_8 = arith.constant 9.99999974E-6 : f32
    %17 = vector.broadcast %cst_8 : f32 to vector<32x1xf32>
    %18 = arith.addf %14, %17 : vector<32x1xf32>
    %19 = math.rsqrt %18 : vector<32x1xf32>
    %20 = vector.broadcast %19 : vector<32x1xf32> to vector<32x16xf32>
    %21 = arith.mulf %16, %20 : vector<32x16xf32>
    %cst_9 = arith.constant 0.000000e+00 : f32
    %22 = vector.broadcast %cst_9 : f32 to vector<32x16xf32>
    %23 = arith.maximumf %21, %22 : vector<32x16xf32>
    %c0_10 = arith.constant 0 : index
    %c0_11 = arith.constant 0 : index
    %24 = vector.load %arg3[%c0_10, %c0_11] : memref<48x32xbf16, #tpu.memory_space<vmem>>, vector<48x32xbf16>
    %25 = arith.truncf %23 : vector<32x16xf32> to vector<32x16xbf16>
    %cst_12 = arith.constant dense<0.000000e+00> : vector<48x16xf32>
    %26 = tpu.matmul %24, %25, %cst_12 {dimension_numbers = #tpu.dot_dimension_numbers<[1], [0], [0], [1], [0, 0, 1, 1], [], []>} : vector<48x32xbf16>, vector<32x16xbf16>, vector<48x16xf32> -> vector<48x16xf32>
    %c0_13 = arith.constant 0 : index
    %c0_14 = arith.constant 0 : index
    %27 = vector.load %arg4[%c0_13, %c0_14] : memref<48x1xf32, #tpu.memory_space<vmem>>, vector<48x1xf32>
    %28 = vector.broadcast %27 : vector<48x1xf32> to vector<48x16xf32>
    %29 = arith.addf %26, %28 : vector<48x16xf32>
    %30 = vector.extract_strided_slice %29 {offsets = [0, 0], sizes = [8, 16], strides = [1, 1]} : vector<48x16xf32> to vector<8x16xf32>
    %31 = vector.extract_strided_slice %29 {offsets = [8, 0], sizes = [8, 16], strides = [1, 1]} : vector<48x16xf32> to vector<8x16xf32>
    %32 = vector.extract_strided_slice %29 {offsets = [16, 0], sizes = [32, 16], strides = [1, 1]} : vector<48x16xf32> to vector<32x16xf32>
    %33 = tpu.transpose %30, [1, 0] : vector<8x16xf32> -> vector<16x8xf32>
    %cst_15 = arith.constant dense<0.000000e+00> : vector<16x16xf32>
    %34 = tpu.matmul %33, %31, %cst_15 {dimension_numbers = #tpu.dot_dimension_numbers<[1], [0], [0], [1], [0, 0, 1, 1], [], []>} : vector<16x8xf32>, vector<8x16xf32>, vector<16x16xf32> -> vector<16x16xf32>
    %cst_16 = arith.constant dense<0xFF800000> : vector<16xf32>
    %35 = vector.multi_reduction <maximumf>, %34, %cst_16 [1] : vector<16x16xf32> to vector<16xf32>
    %36 = vector.shape_cast %35 : vector<16xf32> to vector<16x1xf32>
    %37 = vector.broadcast %36 : vector<16x1xf32> to vector<16x16xf32>
    %38 = arith.subf %34, %37 : vector<16x16xf32>
    %39 = math.exp %38 : vector<16x16xf32>
    %cst_17 = arith.constant dense<0.000000e+00> : vector<16xf32>
    %40 = vector.multi_reduction <add>, %39, %cst_17 [1] : vector<16x16xf32> to vector<16xf32>
    %41 = vector.shape_cast %40 : vector<16xf32> to vector<16x1xf32>
    %42 = tpu.reciprocal %41 {approx = true} : vector<16x1xf32> -> vector<16x1xf32>
    %43 = vector.broadcast %42 : vector<16x1xf32> to vector<16x16xf32>
    %44 = arith.mulf %39, %43 : vector<16x16xf32>
    %45 = arith.truncf %32 : vector<32x16xf32> to vector<32x16xbf16>
    %46 = arith.truncf %44 : vector<16x16xf32> to vector<16x16xbf16>
    %cst_18 = arith.constant dense<0.000000e+00> : vector<32x16xf32>
    %47 = tpu.matmul %45, %46, %cst_18 {dimension_numbers = #tpu.dot_dimension_numbers<[1], [1], [0], [0], [0, 0, 1, 0], [], []>} : vector<32x16xbf16>, vector<16x16xbf16>, vector<32x16xf32> -> vector<32x16xf32>
    %48 = arith.addf %47, %23 : vector<32x16xf32>
    %c0_19 = arith.constant 0 : index
    %c0_20 = arith.constant 0 : index
    %c0_21 = arith.constant 0 : index
    %49 = vector.load %arg5[%c0_19, %c0_20, %c0_21] : memref<1x32x16xf32, #tpu.memory_space<vmem>>, vector<1x32x16xf32>
    %50 = vector.shape_cast %49 : vector<1x32x16xf32> to vector<32x16xf32>
    %51 = vector.shape_cast %48 : vector<32x16xf32> to vector<1x32x16xf32>
    tpu.vector_store %arg5[%c0_19, %c0_20, %c0_21], %51 {strides = array<i32>} : memref<1x32x16xf32, #tpu.memory_space<vmem>>, vector<1x32x16xf32>,
    return
  }
  func.func @transform_0(%arg0: i32) -> (i32, i32, i32) {
    %c0_i32 = arith.constant 0 : i32
    %c0_i32_0 = arith.constant 0 : i32
    %c0_i32_1 = arith.constant 0 : i32
    return %arg0, %c0_i32, %c0_i32_0 : i32, i32, i32
  }
  func.func @transform_1(%arg0: i32) -> (i32, i32) {
    %c0_i32 = arith.constant 0 : i32
    %c0_i32_0 = arith.constant 0 : i32
    %c0_i32_1 = arith.constant 0 : i32
    return %c0_i32, %c0_i32_0 : i32, i32
  }
  func.func @transform_2(%arg0: i32) -> (i32, i32) {
    %c0_i32 = arith.constant 0 : i32
    %c0_i32_0 = arith.constant 0 : i32
    %c0_i32_1 = arith.constant 0 : i32
    return %c0_i32, %c0_i32_0 : i32, i32
  }
  func.func @transform_3(%arg0: i32) -> (i32, i32) {
    %c0_i32 = arith.constant 0 : i32
    %c0_i32_0 = arith.constant 0 : i32
    %c0_i32_1 = arith.constant 0 : i32
    return %c0_i32, %c0_i32_0 : i32, i32
  }
  func.func @transform_4(%arg0: i32) -> (i32, i32, i32) {
    %c0_i32 = arith.constant 0 : i32
    %c0_i32_0 = arith.constant 0 : i32
    %c0_i32_1 = arith.constant 0 : i32
    return %arg0, %c0_i32, %c0_i32_0 : i32, i32, i32
  }
}

module attributes {stable_mosaic.version = 11 : i64} {
  func.func @_upsample_kernel(%arg0: i32, %arg1: memref<1x32x16xf32, #tpu.memory_space<vmem>>, %arg2: memref<16x64xf32, #tpu.memory_space<vmem>>, %arg3: memref<1x32x64xf32, #tpu.memory_space<vmem>>) attributes {dimension_semantics = [#tpu.dimension_semantics<parallel>], iteration_bounds = array<i64: 2>, scalar_prefetch = 0 : i64, scratch_operands = 0 : i64, tpu.core_type = #tpu.core_type<tc>, window_params = [{transform_indices = @transform_0, window_bounds = array<i64: 1, 32, 16>}, {pipeline_mode = #tpu.pipeline_mode<synchronous>, transform_indices = @transform_1, window_bounds = array<i64: 16, 64>}, {transform_indices = @transform_2, window_bounds = array<i64: 1, 32, 64>}]} {
    %c0 = arith.constant 0 : index
    %c0_0 = arith.constant 0 : index
    %c0_1 = arith.constant 0 : index
    %0 = vector.load %arg1[%c0, %c0_0, %c0_1] : memref<1x32x16xf32, #tpu.memory_space<vmem>>, vector<1x32x16xf32>
    %1 = vector.shape_cast %0 : vector<1x32x16xf32> to vector<32x16xf32>
    %c0_2 = arith.constant 0 : index
    %c0_3 = arith.constant 0 : index
    %2 = vector.load %arg2[%c0_2, %c0_3] : memref<16x64xf32, #tpu.memory_space<vmem>>, vector<16x64xf32>
    %cst = arith.constant dense<0.000000e+00> : vector<32x64xf32>
    %3 = tpu.matmul %1, %2, %cst {dimension_numbers = #tpu.dot_dimension_numbers<[1], [0], [0], [1], [0, 0, 1, 1], [], []>} : vector<32x16xf32>, vector<16x64xf32>, vector<32x64xf32> -> vector<32x64xf32>
    %c0_4 = arith.constant 0 : index
    %c0_5 = arith.constant 0 : index
    %c0_6 = arith.constant 0 : index
    %4 = vector.load %arg3[%c0_4, %c0_5, %c0_6] : memref<1x32x64xf32, #tpu.memory_space<vmem>>, vector<1x32x64xf32>
    %5 = vector.shape_cast %4 : vector<1x32x64xf32> to vector<32x64xf32>
    %6 = vector.shape_cast %3 : vector<32x64xf32> to vector<1x32x64xf32>
    tpu.vector_store %arg3[%c0_4, %c0_5, %c0_6], %6 {strides = array<i32>} : memref<1x32x64xf32, #tpu.memory_space<vmem>>, vector<1x32x64xf32>,
    return
  }
  func.func @transform_0(%arg0: i32) -> (i32, i32, i32) {
    %c0_i32 = arith.constant 0 : i32
    %c0_i32_0 = arith.constant 0 : i32
    %c0_i32_1 = arith.constant 0 : i32
    return %arg0, %c0_i32, %c0_i32_0 : i32, i32, i32
  }
  func.func @transform_1(%arg0: i32) -> (i32, i32) {
    %c0_i32 = arith.constant 0 : i32
    %c0_i32_0 = arith.constant 0 : i32
    %c0_i32_1 = arith.constant 0 : i32
    return %c0_i32, %c0_i32_0 : i32, i32
  }
  func.func @transform_2(%arg0: i32) -> (i32, i32, i32) {
    %c0_i32 = arith.constant 0 : i32
    %c0_i32_0 = arith.constant 0 : i32
    %c0_i32_1 = arith.constant 0 : i32
    return %arg0, %c0_i32, %c0_i32_0 : i32, i32, i32
  }
}

module attributes {stable_mosaic.version = 11 : i64} {
  func.func @_conv_in_relu_sa_kernel(%arg0: i32, %arg1: memref<1x288x64xbf16, #tpu.memory_space<vmem>>, %arg2: memref<16x288xbf16, #tpu.memory_space<vmem>>, %arg3: memref<32x16xbf16, #tpu.memory_space<vmem>>, %arg4: memref<32x1xf32, #tpu.memory_space<vmem>>, %arg5: memref<1x16x64xf32, #tpu.memory_space<vmem>>) attributes {dimension_semantics = [#tpu.dimension_semantics<parallel>], iteration_bounds = array<i64: 2>, scalar_prefetch = 0 : i64, scratch_operands = 0 : i64, tpu.core_type = #tpu.core_type<tc>, window_params = [{transform_indices = @transform_0, window_bounds = array<i64: 1, 288, 64>}, {pipeline_mode = #tpu.pipeline_mode<synchronous>, transform_indices = @transform_1, window_bounds = array<i64: 16, 288>}, {pipeline_mode = #tpu.pipeline_mode<synchronous>, transform_indices = @transform_2, window_bounds = array<i64: 32, 16>}, {pipeline_mode = #tpu.pipeline_mode<synchronous>, transform_indices = @transform_3, window_bounds = array<i64: 32, 1>}, {transform_indices = @transform_4, window_bounds = array<i64: 1, 16, 64>}]} {
    %c0 = arith.constant 0 : index
    %c0_0 = arith.constant 0 : index
    %0 = vector.load %arg2[%c0, %c0_0] : memref<16x288xbf16, #tpu.memory_space<vmem>>, vector<16x288xbf16>
    %c0_1 = arith.constant 0 : index
    %c0_2 = arith.constant 0 : index
    %c0_3 = arith.constant 0 : index
    %1 = vector.load %arg1[%c0_1, %c0_2, %c0_3] : memref<1x288x64xbf16, #tpu.memory_space<vmem>>, vector<1x288x64xbf16>
    %2 = vector.shape_cast %1 : vector<1x288x64xbf16> to vector<288x64xbf16>
    %cst = arith.constant dense<0.000000e+00> : vector<16x64xf32>
    %3 = tpu.matmul %0, %2, %cst {dimension_numbers = #tpu.dot_dimension_numbers<[1], [0], [0], [1], [0, 0, 1, 1], [], []>} : vector<16x288xbf16>, vector<288x64xbf16>, vector<16x64xf32> -> vector<16x64xf32>
    %cst_4 = arith.constant dense<0.000000e+00> : vector<16xf32>
    %4 = vector.multi_reduction <add>, %3, %cst_4 [1] : vector<16x64xf32> to vector<16xf32>
    %5 = vector.shape_cast %4 : vector<16xf32> to vector<16x1xf32>
    %cst_5 = arith.constant 6.400000e+01 : f32
    %6 = vector.broadcast %cst_5 : f32 to vector<16x1xf32>
    %7 = arith.divf %5, %6 : vector<16x1xf32>
    %8 = vector.broadcast %7 : vector<16x1xf32> to vector<16x64xf32>
    %9 = arith.subf %3, %8 : vector<16x64xf32>
    %10 = arith.mulf %9, %9 : vector<16x64xf32>
    %cst_6 = arith.constant dense<0.000000e+00> : vector<16xf32>
    %11 = vector.multi_reduction <add>, %10, %cst_6 [1] : vector<16x64xf32> to vector<16xf32>
    %12 = vector.shape_cast %11 : vector<16xf32> to vector<16x1xf32>
    %cst_7 = arith.constant 6.400000e+01 : f32
    %13 = vector.broadcast %cst_7 : f32 to vector<16x1xf32>
    %14 = arith.divf %12, %13 : vector<16x1xf32>
    %15 = vector.broadcast %7 : vector<16x1xf32> to vector<16x64xf32>
    %16 = arith.subf %3, %15 : vector<16x64xf32>
    %cst_8 = arith.constant 9.99999974E-6 : f32
    %17 = vector.broadcast %cst_8 : f32 to vector<16x1xf32>
    %18 = arith.addf %14, %17 : vector<16x1xf32>
    %19 = math.rsqrt %18 : vector<16x1xf32>
    %20 = vector.broadcast %19 : vector<16x1xf32> to vector<16x64xf32>
    %21 = arith.mulf %16, %20 : vector<16x64xf32>
    %cst_9 = arith.constant 0.000000e+00 : f32
    %22 = vector.broadcast %cst_9 : f32 to vector<16x64xf32>
    %23 = arith.maximumf %21, %22 : vector<16x64xf32>
    %c0_10 = arith.constant 0 : index
    %c0_11 = arith.constant 0 : index
    %24 = vector.load %arg3[%c0_10, %c0_11] : memref<32x16xbf16, #tpu.memory_space<vmem>>, vector<32x16xbf16>
    %25 = arith.truncf %23 : vector<16x64xf32> to vector<16x64xbf16>
    %cst_12 = arith.constant dense<0.000000e+00> : vector<32x64xf32>
    %26 = tpu.matmul %24, %25, %cst_12 {dimension_numbers = #tpu.dot_dimension_numbers<[1], [0], [0], [1], [0, 0, 1, 1], [], []>} : vector<32x16xbf16>, vector<16x64xbf16>, vector<32x64xf32> -> vector<32x64xf32>
    %c0_13 = arith.constant 0 : index
    %c0_14 = arith.constant 0 : index
    %27 = vector.load %arg4[%c0_13, %c0_14] : memref<32x1xf32, #tpu.memory_space<vmem>>, vector<32x1xf32>
    %28 = vector.broadcast %27 : vector<32x1xf32> to vector<32x64xf32>
    %29 = arith.addf %26, %28 : vector<32x64xf32>
    %30 = vector.extract_strided_slice %29 {offsets = [0, 0], sizes = [8, 64], strides = [1, 1]} : vector<32x64xf32> to vector<8x64xf32>
    %31 = vector.extract_strided_slice %29 {offsets = [8, 0], sizes = [8, 64], strides = [1, 1]} : vector<32x64xf32> to vector<8x64xf32>
    %32 = vector.extract_strided_slice %29 {offsets = [16, 0], sizes = [16, 64], strides = [1, 1]} : vector<32x64xf32> to vector<16x64xf32>
    %33 = tpu.transpose %30, [1, 0] : vector<8x64xf32> -> vector<64x8xf32>
    %cst_15 = arith.constant dense<0.000000e+00> : vector<64x64xf32>
    %34 = tpu.matmul %33, %31, %cst_15 {dimension_numbers = #tpu.dot_dimension_numbers<[1], [0], [0], [1], [0, 0, 1, 1], [], []>} : vector<64x8xf32>, vector<8x64xf32>, vector<64x64xf32> -> vector<64x64xf32>
    %cst_16 = arith.constant dense<0xFF800000> : vector<64xf32>
    %35 = vector.multi_reduction <maximumf>, %34, %cst_16 [1] : vector<64x64xf32> to vector<64xf32>
    %36 = vector.shape_cast %35 : vector<64xf32> to vector<64x1xf32>
    %37 = vector.broadcast %36 : vector<64x1xf32> to vector<64x64xf32>
    %38 = arith.subf %34, %37 : vector<64x64xf32>
    %39 = math.exp %38 : vector<64x64xf32>
    %cst_17 = arith.constant dense<0.000000e+00> : vector<64xf32>
    %40 = vector.multi_reduction <add>, %39, %cst_17 [1] : vector<64x64xf32> to vector<64xf32>
    %41 = vector.shape_cast %40 : vector<64xf32> to vector<64x1xf32>
    %42 = tpu.reciprocal %41 {approx = true} : vector<64x1xf32> -> vector<64x1xf32>
    %43 = vector.broadcast %42 : vector<64x1xf32> to vector<64x64xf32>
    %44 = arith.mulf %39, %43 : vector<64x64xf32>
    %45 = arith.truncf %32 : vector<16x64xf32> to vector<16x64xbf16>
    %46 = arith.truncf %44 : vector<64x64xf32> to vector<64x64xbf16>
    %cst_18 = arith.constant dense<0.000000e+00> : vector<16x64xf32>
    %47 = tpu.matmul %45, %46, %cst_18 {dimension_numbers = #tpu.dot_dimension_numbers<[1], [1], [0], [0], [0, 0, 1, 0], [], []>} : vector<16x64xbf16>, vector<64x64xbf16>, vector<16x64xf32> -> vector<16x64xf32>
    %48 = arith.addf %47, %23 : vector<16x64xf32>
    %c0_19 = arith.constant 0 : index
    %c0_20 = arith.constant 0 : index
    %c0_21 = arith.constant 0 : index
    %49 = vector.load %arg5[%c0_19, %c0_20, %c0_21] : memref<1x16x64xf32, #tpu.memory_space<vmem>>, vector<1x16x64xf32>
    %50 = vector.shape_cast %49 : vector<1x16x64xf32> to vector<16x64xf32>
    %51 = vector.shape_cast %48 : vector<16x64xf32> to vector<1x16x64xf32>
    tpu.vector_store %arg5[%c0_19, %c0_20, %c0_21], %51 {strides = array<i32>} : memref<1x16x64xf32, #tpu.memory_space<vmem>>, vector<1x16x64xf32>,
    return
  }
  func.func @transform_0(%arg0: i32) -> (i32, i32, i32) {
    %c0_i32 = arith.constant 0 : i32
    %c0_i32_0 = arith.constant 0 : i32
    %c0_i32_1 = arith.constant 0 : i32
    return %arg0, %c0_i32, %c0_i32_0 : i32, i32, i32
  }
  func.func @transform_1(%arg0: i32) -> (i32, i32) {
    %c0_i32 = arith.constant 0 : i32
    %c0_i32_0 = arith.constant 0 : i32
    %c0_i32_1 = arith.constant 0 : i32
    return %c0_i32, %c0_i32_0 : i32, i32
  }
  func.func @transform_2(%arg0: i32) -> (i32, i32) {
    %c0_i32 = arith.constant 0 : i32
    %c0_i32_0 = arith.constant 0 : i32
    %c0_i32_1 = arith.constant 0 : i32
    return %c0_i32, %c0_i32_0 : i32, i32
  }
  func.func @transform_3(%arg0: i32) -> (i32, i32) {
    %c0_i32 = arith.constant 0 : i32
    %c0_i32_0 = arith.constant 0 : i32
    %c0_i32_1 = arith.constant 0 : i32
    return %c0_i32, %c0_i32_0 : i32, i32
  }
  func.func @transform_4(%arg0: i32) -> (i32, i32, i32) {
    %c0_i32 = arith.constant 0 : i32
    %c0_i32_0 = arith.constant 0 : i32
    %c0_i32_1 = arith.constant 0 : i32
    return %arg0, %c0_i32, %c0_i32_0 : i32, i32, i32
  }
}

module attributes {stable_mosaic.version = 11 : i64} {
  func.func @_upsample_kernel(%arg0: i32, %arg1: memref<1x16x64xf32, #tpu.memory_space<vmem>>, %arg2: memref<64x256xf32, #tpu.memory_space<vmem>>, %arg3: memref<1x16x256xf32, #tpu.memory_space<vmem>>) attributes {dimension_semantics = [#tpu.dimension_semantics<parallel>], iteration_bounds = array<i64: 2>, scalar_prefetch = 0 : i64, scratch_operands = 0 : i64, tpu.core_type = #tpu.core_type<tc>, window_params = [{transform_indices = @transform_0, window_bounds = array<i64: 1, 16, 64>}, {pipeline_mode = #tpu.pipeline_mode<synchronous>, transform_indices = @transform_1, window_bounds = array<i64: 64, 256>}, {transform_indices = @transform_2, window_bounds = array<i64: 1, 16, 256>}]} {
    %c0 = arith.constant 0 : index
    %c0_0 = arith.constant 0 : index
    %c0_1 = arith.constant 0 : index
    %0 = vector.load %arg1[%c0, %c0_0, %c0_1] : memref<1x16x64xf32, #tpu.memory_space<vmem>>, vector<1x16x64xf32>
    %1 = vector.shape_cast %0 : vector<1x16x64xf32> to vector<16x64xf32>
    %c0_2 = arith.constant 0 : index
    %c0_3 = arith.constant 0 : index
    %2 = vector.load %arg2[%c0_2, %c0_3] : memref<64x256xf32, #tpu.memory_space<vmem>>, vector<64x256xf32>
    %cst = arith.constant dense<0.000000e+00> : vector<16x256xf32>
    %3 = tpu.matmul %1, %2, %cst {dimension_numbers = #tpu.dot_dimension_numbers<[1], [0], [0], [1], [0, 0, 1, 1], [], []>} : vector<16x64xf32>, vector<64x256xf32>, vector<16x256xf32> -> vector<16x256xf32>
    %c0_4 = arith.constant 0 : index
    %c0_5 = arith.constant 0 : index
    %c0_6 = arith.constant 0 : index
    %4 = vector.load %arg3[%c0_4, %c0_5, %c0_6] : memref<1x16x256xf32, #tpu.memory_space<vmem>>, vector<1x16x256xf32>
    %5 = vector.shape_cast %4 : vector<1x16x256xf32> to vector<16x256xf32>
    %6 = vector.shape_cast %3 : vector<16x256xf32> to vector<1x16x256xf32>
    tpu.vector_store %arg3[%c0_4, %c0_5, %c0_6], %6 {strides = array<i32>} : memref<1x16x256xf32, #tpu.memory_space<vmem>>, vector<1x16x256xf32>,
    return
  }
  func.func @transform_0(%arg0: i32) -> (i32, i32, i32) {
    %c0_i32 = arith.constant 0 : i32
    %c0_i32_0 = arith.constant 0 : i32
    %c0_i32_1 = arith.constant 0 : i32
    return %arg0, %c0_i32, %c0_i32_0 : i32, i32, i32
  }
  func.func @transform_1(%arg0: i32) -> (i32, i32) {
    %c0_i32 = arith.constant 0 : i32
    %c0_i32_0 = arith.constant 0 : i32
    %c0_i32_1 = arith.constant 0 : i32
    return %c0_i32, %c0_i32_0 : i32, i32
  }
  func.func @transform_2(%arg0: i32) -> (i32, i32, i32) {
    %c0_i32 = arith.constant 0 : i32
    %c0_i32_0 = arith.constant 0 : i32
    %c0_i32_1 = arith.constant 0 : i32
    return %arg0, %c0_i32, %c0_i32_0 : i32, i32, i32
  }
}

module attributes {stable_mosaic.version = 11 : i64} {
  func.func @_conv_in_relu_sa_kernel(%arg0: i32, %arg1: memref<1x144x256xbf16, #tpu.memory_space<vmem>>, %arg2: memref<8x144xbf16, #tpu.memory_space<vmem>>, %arg3: memref<24x8xbf16, #tpu.memory_space<vmem>>, %arg4: memref<24x1xf32, #tpu.memory_space<vmem>>, %arg5: memref<1x8x256xf32, #tpu.memory_space<vmem>>) attributes {dimension_semantics = [#tpu.dimension_semantics<parallel>], iteration_bounds = array<i64: 2>, scalar_prefetch = 0 : i64, scratch_operands = 0 : i64, tpu.core_type = #tpu.core_type<tc>, window_params = [{transform_indices = @transform_0, window_bounds = array<i64: 1, 144, 256>}, {pipeline_mode = #tpu.pipeline_mode<synchronous>, transform_indices = @transform_1, window_bounds = array<i64: 8, 144>}, {pipeline_mode = #tpu.pipeline_mode<synchronous>, transform_indices = @transform_2, window_bounds = array<i64: 24, 8>}, {pipeline_mode = #tpu.pipeline_mode<synchronous>, transform_indices = @transform_3, window_bounds = array<i64: 24, 1>}, {transform_indices = @transform_4, window_bounds = array<i64: 1, 8, 256>}]} {
    %c0 = arith.constant 0 : index
    %c0_0 = arith.constant 0 : index
    %0 = vector.load %arg2[%c0, %c0_0] : memref<8x144xbf16, #tpu.memory_space<vmem>>, vector<8x144xbf16>
    %c0_1 = arith.constant 0 : index
    %c0_2 = arith.constant 0 : index
    %c0_3 = arith.constant 0 : index
    %1 = vector.load %arg1[%c0_1, %c0_2, %c0_3] : memref<1x144x256xbf16, #tpu.memory_space<vmem>>, vector<1x144x256xbf16>
    %2 = vector.shape_cast %1 : vector<1x144x256xbf16> to vector<144x256xbf16>
    %cst = arith.constant dense<0.000000e+00> : vector<8x256xf32>
    %3 = tpu.matmul %0, %2, %cst {dimension_numbers = #tpu.dot_dimension_numbers<[1], [0], [0], [1], [0, 0, 1, 1], [], []>} : vector<8x144xbf16>, vector<144x256xbf16>, vector<8x256xf32> -> vector<8x256xf32>
    %cst_4 = arith.constant dense<0.000000e+00> : vector<8xf32>
    %4 = vector.multi_reduction <add>, %3, %cst_4 [1] : vector<8x256xf32> to vector<8xf32>
    %5 = vector.shape_cast %4 : vector<8xf32> to vector<8x1xf32>
    %cst_5 = arith.constant 2.560000e+02 : f32
    %6 = vector.broadcast %cst_5 : f32 to vector<8x1xf32>
    %7 = arith.divf %5, %6 : vector<8x1xf32>
    %8 = vector.broadcast %7 : vector<8x1xf32> to vector<8x256xf32>
    %9 = arith.subf %3, %8 : vector<8x256xf32>
    %10 = arith.mulf %9, %9 : vector<8x256xf32>
    %cst_6 = arith.constant dense<0.000000e+00> : vector<8xf32>
    %11 = vector.multi_reduction <add>, %10, %cst_6 [1] : vector<8x256xf32> to vector<8xf32>
    %12 = vector.shape_cast %11 : vector<8xf32> to vector<8x1xf32>
    %cst_7 = arith.constant 2.560000e+02 : f32
    %13 = vector.broadcast %cst_7 : f32 to vector<8x1xf32>
    %14 = arith.divf %12, %13 : vector<8x1xf32>
    %15 = vector.broadcast %7 : vector<8x1xf32> to vector<8x256xf32>
    %16 = arith.subf %3, %15 : vector<8x256xf32>
    %cst_8 = arith.constant 9.99999974E-6 : f32
    %17 = vector.broadcast %cst_8 : f32 to vector<8x1xf32>
    %18 = arith.addf %14, %17 : vector<8x1xf32>
    %19 = math.rsqrt %18 : vector<8x1xf32>
    %20 = vector.broadcast %19 : vector<8x1xf32> to vector<8x256xf32>
    %21 = arith.mulf %16, %20 : vector<8x256xf32>
    %cst_9 = arith.constant 0.000000e+00 : f32
    %22 = vector.broadcast %cst_9 : f32 to vector<8x256xf32>
    %23 = arith.maximumf %21, %22 : vector<8x256xf32>
    %c0_10 = arith.constant 0 : index
    %c0_11 = arith.constant 0 : index
    %24 = vector.load %arg3[%c0_10, %c0_11] : memref<24x8xbf16, #tpu.memory_space<vmem>>, vector<24x8xbf16>
    %25 = arith.truncf %23 : vector<8x256xf32> to vector<8x256xbf16>
    %cst_12 = arith.constant dense<0.000000e+00> : vector<24x256xf32>
    %26 = tpu.matmul %24, %25, %cst_12 {dimension_numbers = #tpu.dot_dimension_numbers<[1], [0], [0], [1], [0, 0, 1, 1], [], []>} : vector<24x8xbf16>, vector<8x256xbf16>, vector<24x256xf32> -> vector<24x256xf32>
    %c0_13 = arith.constant 0 : index
    %c0_14 = arith.constant 0 : index
    %27 = vector.load %arg4[%c0_13, %c0_14] : memref<24x1xf32, #tpu.memory_space<vmem>>, vector<24x1xf32>
    %28 = vector.broadcast %27 : vector<24x1xf32> to vector<24x256xf32>
    %29 = arith.addf %26, %28 : vector<24x256xf32>
    %30 = vector.extract_strided_slice %29 {offsets = [0, 0], sizes = [8, 256], strides = [1, 1]} : vector<24x256xf32> to vector<8x256xf32>
    %31 = vector.extract_strided_slice %29 {offsets = [8, 0], sizes = [8, 256], strides = [1, 1]} : vector<24x256xf32> to vector<8x256xf32>
    %32 = vector.extract_strided_slice %29 {offsets = [16, 0], sizes = [8, 256], strides = [1, 1]} : vector<24x256xf32> to vector<8x256xf32>
    %33 = tpu.transpose %30, [1, 0] : vector<8x256xf32> -> vector<256x8xf32>
    %cst_15 = arith.constant dense<0.000000e+00> : vector<256x256xf32>
    %34 = tpu.matmul %33, %31, %cst_15 {dimension_numbers = #tpu.dot_dimension_numbers<[1], [0], [0], [1], [0, 0, 1, 1], [], []>} : vector<256x8xf32>, vector<8x256xf32>, vector<256x256xf32> -> vector<256x256xf32>
    %cst_16 = arith.constant dense<0xFF800000> : vector<256xf32>
    %35 = vector.multi_reduction <maximumf>, %34, %cst_16 [1] : vector<256x256xf32> to vector<256xf32>
    %36 = vector.shape_cast %35 : vector<256xf32> to vector<256x1xf32>
    %37 = vector.broadcast %36 : vector<256x1xf32> to vector<256x256xf32>
    %38 = arith.subf %34, %37 : vector<256x256xf32>
    %39 = math.exp %38 : vector<256x256xf32>
    %cst_17 = arith.constant dense<0.000000e+00> : vector<256xf32>
    %40 = vector.multi_reduction <add>, %39, %cst_17 [1] : vector<256x256xf32> to vector<256xf32>
    %41 = vector.shape_cast %40 : vector<256xf32> to vector<256x1xf32>
    %42 = tpu.reciprocal %41 {approx = true} : vector<256x1xf32> -> vector<256x1xf32>
    %43 = vector.broadcast %42 : vector<256x1xf32> to vector<256x256xf32>
    %44 = arith.mulf %39, %43 : vector<256x256xf32>
    %45 = arith.truncf %32 : vector<8x256xf32> to vector<8x256xbf16>
    %46 = arith.truncf %44 : vector<256x256xf32> to vector<256x256xbf16>
    %cst_18 = arith.constant dense<0.000000e+00> : vector<8x256xf32>
    %47 = tpu.matmul %45, %46, %cst_18 {dimension_numbers = #tpu.dot_dimension_numbers<[1], [1], [0], [0], [0, 0, 1, 0], [], []>} : vector<8x256xbf16>, vector<256x256xbf16>, vector<8x256xf32> -> vector<8x256xf32>
    %48 = arith.addf %47, %23 : vector<8x256xf32>
    %c0_19 = arith.constant 0 : index
    %c0_20 = arith.constant 0 : index
    %c0_21 = arith.constant 0 : index
    %49 = vector.load %arg5[%c0_19, %c0_20, %c0_21] : memref<1x8x256xf32, #tpu.memory_space<vmem>>, vector<1x8x256xf32>
    %50 = vector.shape_cast %49 : vector<1x8x256xf32> to vector<8x256xf32>
    %51 = vector.shape_cast %48 : vector<8x256xf32> to vector<1x8x256xf32>
    tpu.vector_store %arg5[%c0_19, %c0_20, %c0_21], %51 {strides = array<i32>} : memref<1x8x256xf32, #tpu.memory_space<vmem>>, vector<1x8x256xf32>,
    return
  }
  func.func @transform_0(%arg0: i32) -> (i32, i32, i32) {
    %c0_i32 = arith.constant 0 : i32
    %c0_i32_0 = arith.constant 0 : i32
    %c0_i32_1 = arith.constant 0 : i32
    return %arg0, %c0_i32, %c0_i32_0 : i32, i32, i32
  }
  func.func @transform_1(%arg0: i32) -> (i32, i32) {
    %c0_i32 = arith.constant 0 : i32
    %c0_i32_0 = arith.constant 0 : i32
    %c0_i32_1 = arith.constant 0 : i32
    return %c0_i32, %c0_i32_0 : i32, i32
  }
  func.func @transform_2(%arg0: i32) -> (i32, i32) {
    %c0_i32 = arith.constant 0 : i32
    %c0_i32_0 = arith.constant 0 : i32
    %c0_i32_1 = arith.constant 0 : i32
    return %c0_i32, %c0_i32_0 : i32, i32
  }
  func.func @transform_3(%arg0: i32) -> (i32, i32) {
    %c0_i32 = arith.constant 0 : i32
    %c0_i32_0 = arith.constant 0 : i32
    %c0_i32_1 = arith.constant 0 : i32
    return %c0_i32, %c0_i32_0 : i32, i32
  }
  func.func @transform_4(%arg0: i32) -> (i32, i32, i32) {
    %c0_i32 = arith.constant 0 : i32
    %c0_i32_0 = arith.constant 0 : i32
    %c0_i32_1 = arith.constant 0 : i32
    return %arg0, %c0_i32, %c0_i32_0 : i32, i32, i32
  }
}

module attributes {stable_mosaic.version = 11 : i64} {
  func.func @_conv_bias_tanh_kernel(%arg0: i32, %arg1: memref<1x392x256xbf16, #tpu.memory_space<vmem>>, %arg2: memref<3x392xbf16, #tpu.memory_space<vmem>>, %arg3: memref<3x1xf32, #tpu.memory_space<vmem>>, %arg4: memref<1x3x256xf32, #tpu.memory_space<vmem>>) attributes {dimension_semantics = [#tpu.dimension_semantics<parallel>], iteration_bounds = array<i64: 2>, scalar_prefetch = 0 : i64, scratch_operands = 0 : i64, tpu.core_type = #tpu.core_type<tc>, window_params = [{transform_indices = @transform_0, window_bounds = array<i64: 1, 392, 256>}, {pipeline_mode = #tpu.pipeline_mode<synchronous>, transform_indices = @transform_1, window_bounds = array<i64: 3, 392>}, {pipeline_mode = #tpu.pipeline_mode<synchronous>, transform_indices = @transform_2, window_bounds = array<i64: 3, 1>}, {transform_indices = @transform_3, window_bounds = array<i64: 1, 3, 256>}]} {
    %c0 = arith.constant 0 : index
    %c0_0 = arith.constant 0 : index
    %0 = vector.load %arg2[%c0, %c0_0] : memref<3x392xbf16, #tpu.memory_space<vmem>>, vector<3x392xbf16>
    %c0_1 = arith.constant 0 : index
    %c0_2 = arith.constant 0 : index
    %c0_3 = arith.constant 0 : index
    %1 = vector.load %arg1[%c0_1, %c0_2, %c0_3] : memref<1x392x256xbf16, #tpu.memory_space<vmem>>, vector<1x392x256xbf16>
    %2 = vector.shape_cast %1 : vector<1x392x256xbf16> to vector<392x256xbf16>
    %cst = arith.constant dense<0.000000e+00> : vector<3x256xf32>
    %3 = tpu.matmul %0, %2, %cst {dimension_numbers = #tpu.dot_dimension_numbers<[1], [0], [0], [1], [0, 0, 1, 1], [], []>} : vector<3x392xbf16>, vector<392x256xbf16>, vector<3x256xf32> -> vector<3x256xf32>
    %c0_4 = arith.constant 0 : index
    %c0_5 = arith.constant 0 : index
    %4 = vector.load %arg3[%c0_4, %c0_5] : memref<3x1xf32, #tpu.memory_space<vmem>>, vector<3x1xf32>
    %5 = vector.broadcast %4 : vector<3x1xf32> to vector<3x256xf32>
    %6 = arith.addf %3, %5 : vector<3x256xf32>
    %7 = math.tanh %6 : vector<3x256xf32>
    %c0_6 = arith.constant 0 : index
    %c0_7 = arith.constant 0 : index
    %c0_8 = arith.constant 0 : index
    %8 = vector.load %arg4[%c0_6, %c0_7, %c0_8] : memref<1x3x256xf32, #tpu.memory_space<vmem>>, vector<1x3x256xf32>
    %9 = vector.shape_cast %8 : vector<1x3x256xf32> to vector<3x256xf32>
    %10 = vector.shape_cast %7 : vector<3x256xf32> to vector<1x3x256xf32>
    tpu.vector_store %arg4[%c0_6, %c0_7, %c0_8], %10 {strides = array<i32>} : memref<1x3x256xf32, #tpu.memory_space<vmem>>, vector<1x3x256xf32>,
    return
  }
  func.func @transform_0(%arg0: i32) -> (i32, i32, i32) {
    %c0_i32 = arith.constant 0 : i32
    %c0_i32_0 = arith.constant 0 : i32
    %c0_i32_1 = arith.constant 0 : i32
    return %arg0, %c0_i32, %c0_i32_0 : i32, i32, i32
  }
  func.func @transform_1(%arg0: i32) -> (i32, i32) {
    %c0_i32 = arith.constant 0 : i32
    %c0_i32_0 = arith.constant 0 : i32
    %c0_i32_1 = arith.constant 0 : i32
    return %c0_i32, %c0_i32_0 : i32, i32
  }
  func.func @transform_2(%arg0: i32) -> (i32, i32) {
    %c0_i32 = arith.constant 0 : i32
    %c0_i32_0 = arith.constant 0 : i32
    %c0_i32_1 = arith.constant 0 : i32
    return %c0_i32, %c0_i32_0 : i32, i32
  }
  func.func @transform_3(%arg0: i32) -> (i32, i32, i32) {
    %c0_i32 = arith.constant 0 : i32
    %c0_i32_0 = arith.constant 0 : i32
    %c0_i32_1 = arith.constant 0 : i32
    return %arg0, %c0_i32, %c0_i32_0 : i32, i32, i32
  }
}

</mosaic_0001>

<llo_original>
// kernel: attn_resnet_generator.10
$region0: #{attn_resnet_generator.10}
  #allocation0 [shape = 'u32[]', space=smem, size = 0x4, offset = 0x4, fixed_abs, tag = 'smem constant byte address 0x4 - core index']
  #allocation1 [shape = 'u32[144,128]{1,0:T(1,128)}', space=vmem, size = 0x12000, scoped, tag = 'internal scratch']
  %s0 = inlined_call_operand.vmem [shape: bf16[2,147,256], index: 0, kind: input, shape index: {}]
  %s1 = inlined_call_operand.vmem [shape: bf16[8,147], index: 1, kind: input, shape index: {}]
  %s2 = inlined_call_operand.vmem [shape: f32[2,8,256], index: 2, kind: output, shape index: {}]
  %s3 = sld [smem:[#allocation0]]
  $region41: #{attn_resnet_generator.10} parent=0
    _
  %s5 = ssub.s32 1, %s3
  %s6 = scalar_select 0, %s5, %s3
  loop: start=0, step=1, limit=4
  $region2: #{attn_resnet_generator.10} parent=0 // loop_pre_header
    _
  $region3: #{attn_resnet_generator.10} parent=0 // loop_header
    %s8 = sphi 0, %s12
    %p9 = scmp.ge.s32.totalorder %s8, 4
    %s18 = sphi 0, %s20
    %s21 = sphi 0, %s18
    %s22 = sphi 0, %s21
    %s38 = sphi 0, %s22
    %s42 = sphi 0, %s42
    %s44 = sphi 0, %s42
    %s45 = sphi 0, %s44
    %s59 = sphi 0, %s45
    %s65 = sphi 0, %s67
    %s68 = sphi 0, %s65
    %s69 = sphi 0, %s68
    %s85 = sphi 0, %s69
  $region4: #{attn_resnet_generator.10} parent=0 // loop_header_branch
    %11 = sbr.rel (%p9) target = $region8
  $region5: #{attn_resnet_generator.10} parent=0 // loop_body
    %s13 = ssub.s32 %s8, 1
    %s14 = ssub.s32 %s8, 2
    %s15 = sadd.s32 %s8, 1
    %s16 = ssub.s32 %s8, %s15
    %p17 = scmp.eq.s32.totalorder %s16, 0
    %s19 = sadd.s32 %s18, 1
    %s20 = scalar_select %p17, %s18, %s19
    %p23 = pneg %p17
    %p24 = scmp.eq.s32.totalorder %s8, 1
    %p25 = por %p23, %p24
    %p26 = scmp.ne.s32.totalorder %s18, %s21
    %p27 = scmp.eq.s32.totalorder %s8, 0
    %p28 = por %p26, %p27
    %p29 = scmp.ne.s32.totalorder %s18, %s21
    %p30 = scmp.eq.s32.totalorder %s13, 1
    %p31 = por %p29, %p30
    %p32 = scmp.ne.s32.totalorder %s21, %s22
    %p33 = scmp.eq.s32.totalorder %s13, 0
    %p34 = por %p32, %p33
    %p35 = scmp.ne.s32.totalorder %s21, %s22
    %p36 = scmp.eq.s32.totalorder %s14, 1
    %p37 = por %p35, %p36
    %p39 = scmp.ne.s32.totalorder %s22, %s38
    %p40 = scmp.eq.s32.totalorder %s14, 0
    %p41 = por %p39, %p40
    %s43 = sadd.s32 %s42, 1
    %p46 = scmp.eq.s32.totalorder %s8, 1
    %p47 = scmp.ne.s32.totalorder %s42, %s44
    %p48 = scmp.eq.s32.totalorder %s8, 0
    %p49 = por %p47, %p48
    %p50 = scmp.ne.s32.totalorder %s42, %s44
    %p51 = scmp.eq.s32.totalorder %s13, 1
    %p52 = por %p50, %p51
    %p53 = scmp.ne.s32.totalorder %s44, %s45
    %p54 = scmp.eq.s32.totalorder %s13, 0
    %p55 = por %p53, %p54
    %p56 = scmp.ne.s32.totalorder %s44, %s45
    %p57 = scmp.eq.s32.totalorder %s14, 1
    %p58 = por %p56, %p57
    %p60 = scmp.ne.s32.totalorder %s45, %s59
    %p61 = scmp.eq.s32.totalorder %s14, 0
    %p62 = por %p60, %p61
    %s63 = ssub.s32 %s8, %s15
    %p64 = scmp.eq.s32.totalorder %s63, 0
    %s66 = sadd.s32 %s65, 1
    %s67 = scalar_select %p64, %s65, %s66
    %p70 = pneg %p64
    %p71 = scmp.eq.s32.totalorder %s8, 1
    %p72 = por %p70, %p71
    %p73 = scmp.ne.s32.totalorder %s65, %s68
    %p74 = scmp.eq.s32.totalorder %s8, 0
    %p75 = por %p73, %p74
    %p76 = scmp.ne.s32.totalorder %s65, %s68
    %p77 = scmp.eq.s32.totalorder %s13, 1
    %p78 = por %p76, %p77
    %p79 = scmp.ne.s32.totalorder %s68, %s69
    %p80 = scmp.eq.s32.totalorder %s13, 0
    %p81 = por %p79, %p80
    %p82 = scmp.ne.s32.totalorder %s68, %s69
    %p83 = scmp.eq.s32.totalorder %s14, 1
    %p84 = por %p82, %p83
    %p86 = scmp.ne.s32.totalorder %s69, %s85
    %p87 = scmp.eq.s32.totalorder %s14, 0
    %p88 = por %p86, %p87
    %p89 = scmp.le.s32.totalorder 1, %s8
    %p90 = scmp.lt.s32.totalorder %s8, 3
    %p91 = pnand %p89, %p90
    %p92 = pneg %p91
    // Predicated region
    $region9: #{attn_resnet_generator.10} parent=5 // pred_check
      _
    $region10: #{attn_resnet_generator.10} parent=5 // pred_check_branch
      %94 = sbr.rel (%p91) target = $region12
    $region11: #{attn_resnet_generator.10} parent=5 // pred_region
      %s95 = ssub.s32 %s8, 1
      // Predicated region
      $region13: #{attn_resnet_generator.10} parent=11 // pred_check
        %p96 = pneg %p55
      $region14: #{attn_resnet_generator.10} parent=11 // pred_check_branch
        %98 = sbr.rel (%p96) target = $region16
      $region15: #{attn_resnet_generator.10} parent=11 // pred_region
        _
      $region16: #{attn_resnet_generator.10} parent=11 // pred_fallthru
        _
    $region12: #{attn_resnet_generator.10} parent=5 // pred_fallthru
      _
    %p99 = scmp.lt.s32.totalorder %s8, 2
    // Predicated region
    $region17: #{attn_resnet_generator.10} parent=5 // pred_check
      %p100 = pneg %p99
    $region18: #{attn_resnet_generator.10} parent=5 // pred_check_branch
      %102 = sbr.rel (%p100) target = $region20
    $region19: #{attn_resnet_generator.10} parent=5 // pred_region
      // Predicated region
      $region21: #{attn_resnet_generator.10} parent=19 // pred_check
        %p103 = pneg %p28
      $region22: #{attn_resnet_generator.10} parent=19 // pred_check_branch
        %105 = sbr.rel (%p103) target = $region24
      $region23: #{attn_resnet_generator.10} parent=19 // pred_region
        %p106 = scmp.lt.s32.totalorder %s8, 1
        %s107 = scalar_select %p106, %s8, 1
        %s108 = smul.addr %s107, 38
        %s109 = smul.addr %s108, 4
        %s110 = scalar_lea.vmem %s0, %s109
      $region24: #{attn_resnet_generator.10} parent=19 // pred_fallthru
        _
    $region20: #{attn_resnet_generator.10} parent=5 // pred_fallthru
      _
    %p111 = scmp.le.s32.totalorder 1, %s8
    %p112 = scmp.lt.s32.totalorder %s8, 3
    %p113 = pnand %p111, %p112
    %p114 = pneg %p113
    // Predicated region
    $region25: #{attn_resnet_generator.10} parent=5 // pred_check
      _
    $region26: #{attn_resnet_generator.10} parent=5 // pred_check_branch
      %116 = sbr.rel (%p113) target = $region28
    $region27: #{attn_resnet_generator.10} parent=5 // pred_region
      %s117 = ssub.s32 %s8, 1
      %p118 = scmp.lt.s32.totalorder %s13, 1
      %s119 = scalar_select %p118, %s13, 1
      %s120 = smul.addr %s119, 38
      %s121 = smul.addr %s120, 4
      %s122 = scalar_lea.vmem %s0, %s121
      %p123 = pneg %p34
      %p124 = pneg %p31
      %p125 = pneg %p55
      %p126 = pneg %p52
      %p127 = pneg %p81
      %p128 = pneg %p78
      %p129 = scmp.lt.s32.totalorder %s13, 1
      %s130 = scalar_select %p129, %s13, 1
      %s131 = smul.addr %s130, 2
      %s132 = smul.addr %s131, 8
      %s133 = scalar_lea.vmem %s2, %s132
      %p134 = scmp.lt.s32.totalorder %s13, 1
      %s135 = scalar_select %p134, %s13, 1
      %s136 = smul.addr %s135, 38
      %s137 = smul.addr %s136, 4
      %s138 = scalar_lea.vmem %s0, %s137
      %p139 = scmp.lt.s32.totalorder %s13, 1
      %s140 = scalar_select %p139, %s13, 1
      %s141 = smul.addr %s140, 2
      %s142 = smul.addr %s141, 8
      %s143 = scalar_lea.vmem %s2, %s142
      %v145 = vld [vmem:[%s1] sm:$0xff]
      %v146 = vld [vmem:[%s138] sm:$0xff]
      %v147 = vld [vmem:[%s138 + $0x8] sm:$0xff]
      %v148 = vld [vmem:[%s138 + $0x10] sm:$0xff]
      %v149 = vld [vmem:[%s138 + $0x18] sm:$0xff]
      %v150 = vld [vmem:[%s138 + $0x20] sm:$0xff]
      %v151 = vld [vmem:[%s138 + $0x28] sm:$0xff]
      %v152 = vld [vmem:[%s138 + $0x30] sm:$0xff]
      %v153 = vld [vmem:[%s138 + $0x38] sm:$0xff]
      %v154 = vld [vmem:[%s138 + $0x40] sm:$0xff]
      %v155 = vld [vmem:[%s138 + $0x48] sm:$0xff]
      %v156 = vld [vmem:[%s138 + $0x50] sm:$0xff]
      %v157 = vld [vmem:[%s138 + $0x58] sm:$0xff]
      %v158 = vld [vmem:[%s138 + $0x60] sm:$0xff]
      %v159 = vld [vmem:[%s138 + $0x68] sm:$0xff]
      %v160 = vld [vmem:[%s138 + $0x70] sm:$0xff]
      %v161 = vld [vmem:[%s138 + $0x78] sm:$0xff]
      %v162 = vld [vmem:[%s138 + $0x80] sm:$0xff]
      %v163 = vld [vmem:[%s138 + $0x88] sm:$0xff]
      %v164 = vld [vmem:[%s138 + $0x90] sm:$0x33]
      %v166 = vunpack.c.l.b16 %v145
      %v167 = vunpack.c.h.b16 %v145
      %v168 = vpack.c.b16 %v166, %v166
      %v169 = vpack.c.b16 %v167, %v167
      %v190 = vunpack.c.l.b16 %v146
      %v191 = vunpack.c.h.b16 %v146
      %v192 = vunpack.c.l.b16 %v147
      %v193 = vunpack.c.h.b16 %v147
      %v194 = vunpack.c.l.b16 %v148
      %v195 = vunpack.c.h.b16 %v148
      %v196 = vunpack.c.l.b16 %v149
      %v197 = vunpack.c.h.b16 %v149
      %v198 = vunpack.c.l.b16 %v150
      %v199 = vunpack.c.h.b16 %v150
      %v200 = vunpack.c.l.b16 %v151
      %v201 = vunpack.c.h.b16 %v151
      %v202 = vunpack.c.l.b16 %v152
      %v203 = vunpack.c.h.b16 %v152
      %v204 = vunpack.c.l.b16 %v153
      %v205 = vunpack.c.h.b16 %v153
      %v206 = vunpack.c.l.b16 %v154
      %v207 = vunpack.c.h.b16 %v154
      %v208 = vunpack.c.l.b16 %v155
      %v209 = vunpack.c.h.b16 %v155
      %v210 = vunpack.c.l.b16 %v156
      %v211 = vunpack.c.h.b16 %v156
      %v212 = vunpack.c.l.b16 %v157
      %v213 = vunpack.c.h.b16 %v157
      %v214 = vunpack.c.l.b16 %v158
      %v215 = vunpack.c.h.b16 %v158
      %v216 = vunpack.c.l.b16 %v159
      %v217 = vunpack.c.h.b16 %v159
      %v218 = vunpack.c.l.b16 %v160
      %v219 = vunpack.c.h.b16 %v160
      %v220 = vunpack.c.l.b16 %v161
      %v221 = vunpack.c.h.b16 %v161
      %v222 = vunpack.c.l.b16 %v162
      %v223 = vunpack.c.h.b16 %v162
      %v224 = vunpack.c.l.b16 %v163
      %v225 = vunpack.c.h.b16 %v163
      %v226 = vunpack.c.l.b16 %v164
      %v227 = vunpack.c.h.b16 %v164
      %v228 = vpack.c.b16 %v192, %v190
      %v229 = vpack.c.b16 %v193, %v191
      %v230 = vpack.c.b16 %v196, %v194
      %v231 = vpack.c.b16 %v197, %v195
      %v232 = vpack.c.b16 %v200, %v198
      %v233 = vpack.c.b16 %v201, %v199
      %v234 = vpack.c.b16 %v204, %v202
      %v235 = vpack.c.b16 %v205, %v203
      %v236 = vpack.c.b16 %v208, %v206
      %v237 = vpack.c.b16 %v209, %v207
      %v238 = vpack.c.b16 %v212, %v210
      %v239 = vpack.c.b16 %v213, %v211
      %v240 = vpack.c.b16 %v216, %v214
      %v241 = vpack.c.b16 %v217, %v215
      %v242 = vpack.c.b16 %v220, %v218
      %v243 = vpack.c.b16 %v221, %v219
      %v244 = vpack.c.b16 %v224, %v222
      %v245 = vpack.c.b16 %v225, %v223
      %v246 = vpack.c.b16 %v226, %v226
      %v247 = vpack.c.b16 %v227, %v227
      %vm266 = vcmask 154624
      %v268 = vsel %vm266, %v169, 0
      %vm270 = vcmask 1040384
      %vm271 = vcmask 1041408
      %v272 = vsel %vm270, 4294967295, 65535
      %v273 = vsel %vm271, %v272, 0
      %v275 = vand.u32 %v246, %v273
      %v278 = vand.u32 %v247, %v273
      %280 = vmatprep.subr.bf16.mxu0 %v229
      %281 = vmatpush1.bf16.msra.mxu0 %v228
      %282 = vmatprep.subr.bf16.mxu0 %v231
      %283 = vmatpush1.bf16.msra.mxu0 %v230
      %284 = vmatprep.subr.bf16.mxu0 %v233
      %285 = vmatpush1.bf16.msra.mxu0 %v232
      %286 = vmatprep.subr.bf16.mxu0 %v235
      %287 = vmatpush1.bf16.msra.mxu0 %v234
      %288 = vmatprep.subr.bf16.mxu0 %v237
      %289 = vmatpush1.bf16.msra.mxu0 %v236
      %290 = vmatprep.subr.bf16.mxu0 %v239
      %291 = vmatpush1.bf16.msra.mxu0 %v238
      %292 = vmatprep.subr.bf16.mxu0 %v241
      %293 = vmatpush1.bf16.msra.mxu0 %v240
      %294 = vmatprep.subr.bf16.mxu0 %v243
      %295 = vmatpush1.bf16.msra.mxu0 %v242
      %296 = vmatprep.subr.bf16.mxu0 %v245
      %297 = vmatpush1.bf16.msra.mxu0 %v244
      %298 = vmatprep.subr.bf16.mxu0 %v278
      %299 = vmatpush1.bf16.msra.mxu0 %v275
      %300 = vmatprep.subr.bf16.mxu0 0
      %301 = vmatpush1.bf16.msra.mxu0 0
      %302 = vmatprep.subr.bf16.mxu0 0
      %303 = vmatpush1.bf16.msra.mxu0 0
      %304 = vmatprep.subr.bf16.mxu0 0
      %305 = vmatpush1.bf16.msra.mxu0 0
      %306 = vmatprep.subr.bf16.mxu0 0
      %307 = vmatpush1.bf16.msra.mxu0 0
      %308 = vmatprep.subr.bf16.mxu0 0
      %309 = vmatpush1.bf16.msra.mxu0 0
      %310 = vmatprep.subr.bf16.mxu0 0
      %311 = vmatpush1.bf16.msra.mxu0 0
      %312 = vmatprep.mubr.bf16.mxu0 %v268
      %313 = vmatmul.mubr.bf16.gmra.mrb[0].mxu0 %v168
      %v314 = vpop.f32.mrb[0].mxu0
      %v315 = vadd.f32 0.0, %v314
      %v316 = vpop.f32.mrb[0].mxu0
      %v317 = vadd.f32 0.0, %v316
      %v318 = vpop.f32.mrb[0].mxu0
      %v319 = vpop.f32.mrb[0].mxu0
      %320 = vdwg.mxu0
      %v321 = vadd.f32 %v315, %v317
      %322 = vadd.xlane.f32.xlu0 %v321
      %v323 = vpop.xlane.xlu0 %322
      %v324 = vrcp.pop 256.0
      %v325 = vmul.f32 %v323, %v324
      %v326 = vsub.f32 %v315, %v325
      %v327 = vsub.f32 %v317, %v325
      %v328 = vmul.f32 %v326, %v326
      %v329 = vmul.f32 %v327, %v327
      %v330 = vadd.f32 %v328, %v329
      %331 = vadd.xlane.f32.xlu0 %v330
      %v332 = vpop.xlane.xlu0 %331
      %v333 = vmul.f32 %v332, %v324
      %v334 = vadd.f32 %v333, 1e-05
      %v335 = vrsqrt.pop %v334
      %v336 = vmul.f32 %v326, %v335
      %v337 = vmul.f32 %v327, %v335
      %v338 = vmax.f32 %v336, 0.0
      %v339 = vmax.f32 %v337, 0.0
      %340 = vst [vmem:[%s143] sm:$0xff] %v338
      %341 = vst [vmem:[%s143 + $0x8] sm:$0xff] %v339
      %p342 = scmp.lt.s32.totalorder %s13, 1
      %s343 = scalar_select %p342, %s13, 1
      %s344 = smul.addr %s343, 2
      %s345 = smul.addr %s344, 8
      %s346 = scalar_lea.vmem %s2, %s345
      // Predicated region
      $region29: #{attn_resnet_generator.10} parent=27 // pred_check
        %p347 = pneg %p78
      $region30: #{attn_resnet_generator.10} parent=27 // pred_check_branch
        %349 = sbr.rel (%p347) target = $region32
      $region31: #{attn_resnet_generator.10} parent=27 // pred_region
        _
      $region32: #{attn_resnet_generator.10} parent=27 // pred_fallthru
        _
    $region28: #{attn_resnet_generator.10} parent=5 // pred_fallthru
      _
    %p350 = scmp.le.s32.totalorder 2, %s8
    // Predicated region
    $region33: #{attn_resnet_generator.10} parent=5 // pred_check
      %p351 = pneg %p350
    $region34: #{attn_resnet_generator.10} parent=5 // pred_check_branch
      %353 = sbr.rel (%p351) target = $region36
    $region35: #{attn_resnet_generator.10} parent=5 // pred_region
      %s354 = ssub.s32 %s8, 2
      // Predicated region
      $region37: #{attn_resnet_generator.10} parent=35 // pred_check
        %p355 = pneg %p84
      $region38: #{attn_resnet_generator.10} parent=35 // pred_check_branch
        %357 = sbr.rel (%p355) target = $region40
      $region39: #{attn_resnet_generator.10} parent=35 // pred_region
        %p358 = scmp.lt.s32.totalorder %s14, 1
        %s359 = scalar_select %p358, %s14, 1
        %s360 = smul.addr %s359, 2
        %s361 = smul.addr %s360, 8
        %s362 = scalar_lea.vmem %s2, %s361
      $region40: #{attn_resnet_generator.10} parent=35 // pred_fallthru
        _
    $region36: #{attn_resnet_generator.10} parent=5 // pred_fallthru
      _
  $region6: #{attn_resnet_generator.10} parent=0 // loop_footer
    %s12 = sadd.s32 1, %s8
  $region7: #{attn_resnet_generator.10} parent=0 // loop_footer_branch
    %7 = sbr.rel target = $region3
  $region8: #{attn_resnet_generator.10} parent=0 // loop_exit
    _

// kernel: attn_resnet_generator.11
$region0: #{attn_resnet_generator.11}
  #allocation0 [shape = 'u32[]', space=smem, size = 0x4, offset = 0x4, fixed_abs, tag = 'smem constant byte address 0x4 - core index']
  #allocation1 [shape = 'u32[144,128]{1,0:T(1,128)}', space=vmem, size = 0x12000, scoped, tag = 'internal scratch']
  %s0 = inlined_call_operand.vmem [shape: bf16[2,72,64], index: 0, kind: input, shape index: {}]
  %s1 = inlined_call_operand.vmem [shape: bf16[16,72], index: 1, kind: input, shape index: {}]
  %s2 = inlined_call_operand.vmem [shape: bf16[32,16], index: 2, kind: input, shape index: {}]
  %s3 = inlined_call_operand.vmem [shape: f32[32,1], index: 3, kind: input, shape index: {}]
  %s4 = inlined_call_operand.vmem [shape: f32[2,16,64], index: 4, kind: output, shape index: {}]
  %s5 = sld [smem:[#allocation0]]
  $region49: #{attn_resnet_generator.11} parent=0
    _
  %s7 = ssub.s32 1, %s5
  %s8 = scalar_select 0, %s7, %s5
  loop: start=0, step=1, limit=4
  $region2: #{attn_resnet_generator.11} parent=0 // loop_pre_header
    _
  $region3: #{attn_resnet_generator.11} parent=0 // loop_header
    %s10 = sphi 0, %s14
    %p11 = scmp.ge.s32.totalorder %s10, 4
    %s20 = sphi 0, %s22
    %s23 = sphi 0, %s20
    %s24 = sphi 0, %s23
    %s40 = sphi 0, %s24
    %s44 = sphi 0, %s44
    %s46 = sphi 0, %s44
    %s47 = sphi 0, %s46
    %s61 = sphi 0, %s47
    %s65 = sphi 0, %s65
    %s67 = sphi 0, %s65
    %s68 = sphi 0, %s67
    %s82 = sphi 0, %s68
    %s86 = sphi 0, %s86
    %s88 = sphi 0, %s86
    %s89 = sphi 0, %s88
    %s103 = sphi 0, %s89
    %s109 = sphi 0, %s111
    %s112 = sphi 0, %s109
    %s113 = sphi 0, %s112
    %s129 = sphi 0, %s113
  $region4: #{attn_resnet_generator.11} parent=0 // loop_header_branch
    %13 = sbr.rel (%p11) target = $region8
  $region5: #{attn_resnet_generator.11} parent=0 // loop_body
    %s15 = ssub.s32 %s10, 1
    %s16 = ssub.s32 %s10, 2
    %s17 = sadd.s32 %s10, 1
    %s18 = ssub.s32 %s10, %s17
    %p19 = scmp.eq.s32.totalorder %s18, 0
    %s21 = sadd.s32 %s20, 1
    %s22 = scalar_select %p19, %s20, %s21
    %p25 = pneg %p19
    %p26 = scmp.eq.s32.totalorder %s10, 1
    %p27 = por %p25, %p26
    %p28 = scmp.ne.s32.totalorder %s20, %s23
    %p29 = scmp.eq.s32.totalorder %s10, 0
    %p30 = por %p28, %p29
    %p31 = scmp.ne.s32.totalorder %s20, %s23
    %p32 = scmp.eq.s32.totalorder %s15, 1
    %p33 = por %p31, %p32
    %p34 = scmp.ne.s32.totalorder %s23, %s24
    %p35 = scmp.eq.s32.totalorder %s15, 0
    %p36 = por %p34, %p35
    %p37 = scmp.ne.s32.totalorder %s23, %s24
    %p38 = scmp.eq.s32.totalorder %s16, 1
    %p39 = por %p37, %p38
    %p41 = scmp.ne.s32.totalorder %s24, %s40
    %p42 = scmp.eq.s32.totalorder %s16, 0
    %p43 = por %p41, %p42
    %s45 = sadd.s32 %s44, 1
    %p48 = scmp.eq.s32.totalorder %s10, 1
    %p49 = scmp.ne.s32.totalorder %s44, %s46
    %p50 = scmp.eq.s32.totalorder %s10, 0
    %p51 = por %p49, %p50
    %p52 = scmp.ne.s32.totalorder %s44, %s46
    %p53 = scmp.eq.s32.totalorder %s15, 1
    %p54 = por %p52, %p53
    %p55 = scmp.ne.s32.totalorder %s46, %s47
    %p56 = scmp.eq.s32.totalorder %s15, 0
    %p57 = por %p55, %p56
    %p58 = scmp.ne.s32.totalorder %s46, %s47
    %p59 = scmp.eq.s32.totalorder %s16, 1
    %p60 = por %p58, %p59
    %p62 = scmp.ne.s32.totalorder %s47, %s61
    %p63 = scmp.eq.s32.totalorder %s16, 0
    %p64 = por %p62, %p63
    %s66 = sadd.s32 %s65, 1
    %p69 = scmp.eq.s32.totalorder %s10, 1
    %p70 = scmp.ne.s32.totalorder %s65, %s67
    %p71 = scmp.eq.s32.totalorder %s10, 0
    %p72 = por %p70, %p71
    %p73 = scmp.ne.s32.totalorder %s65, %s67
    %p74 = scmp.eq.s32.totalorder %s15, 1
    %p75 = por %p73, %p74
    %p76 = scmp.ne.s32.totalorder %s67, %s68
    %p77 = scmp.eq.s32.totalorder %s15, 0
    %p78 = por %p76, %p77
    %p79 = scmp.ne.s32.totalorder %s67, %s68
    %p80 = scmp.eq.s32.totalorder %s16, 1
    %p81 = por %p79, %p80
    %p83 = scmp.ne.s32.totalorder %s68, %s82
    %p84 = scmp.eq.s32.totalorder %s16, 0
    %p85 = por %p83, %p84
    %s87 = sadd.s32 %s86, 1
    %p90 = scmp.eq.s32.totalorder %s10, 1
    %p91 = scmp.ne.s32.totalorder %s86, %s88
    %p92 = scmp.eq.s32.totalorder %s10, 0
    %p93 = por %p91, %p92
    %p94 = scmp.ne.s32.totalorder %s86, %s88
    %p95 = scmp.eq.s32.totalorder %s15, 1
    %p96 = por %p94, %p95
    %p97 = scmp.ne.s32.totalorder %s88, %s89
    %p98 = scmp.eq.s32.totalorder %s15, 0
    %p99 = por %p97, %p98
    %p100 = scmp.ne.s32.totalorder %s88, %s89
    %p101 = scmp.eq.s32.totalorder %s16, 1
    %p102 = por %p100, %p101
    %p104 = scmp.ne.s32.totalorder %s89, %s103
    %p105 = scmp.eq.s32.totalorder %s16, 0
    %p106 = por %p104, %p105
    %s107 = ssub.s32 %s10, %s17
    %p108 = scmp.eq.s32.totalorder %s107, 0
    %s110 = sadd.s32 %s109, 1
    %s111 = scalar_select %p108, %s109, %s110
    %p114 = pneg %p108
    %p115 = scmp.eq.s32.totalorder %s10, 1
    %p116 = por %p114, %p115
    %p117 = scmp.ne.s32.totalorder %s109, %s112
    %p118 = scmp.eq.s32.totalorder %s10, 0
    %p119 = por %p117, %p118
    %p120 = scmp.ne.s32.totalorder %s109, %s112
    %p121 = scmp.eq.s32.totalorder %s15, 1
    %p122 = por %p120, %p121
    %p123 = scmp.ne.s32.totalorder %s112, %s113
    %p124 = scmp.eq.s32.totalorder %s15, 0
    %p125 = por %p123, %p124
    %p126 = scmp.ne.s32.totalorder %s112, %s113
    %p127 = scmp.eq.s32.totalorder %s16, 1
    %p128 = por %p126, %p127
    %p130 = scmp.ne.s32.totalorder %s113, %s129
    %p131 = scmp.eq.s32.totalorder %s16, 0
    %p132 = por %p130, %p131
    %p133 = scmp.le.s32.totalorder 1, %s10
    %p134 = scmp.lt.s32.totalorder %s10, 3
    %p135 = pnand %p133, %p134
    %p136 = pneg %p135
    // Predicated region
    $region9: #{attn_resnet_generator.11} parent=5 // pred_check
      _
    $region10: #{attn_resnet_generator.11} parent=5 // pred_check_branch
      %138 = sbr.rel (%p135) target = $region12
    $region11: #{attn_resnet_generator.11} parent=5 // pred_region
      %s139 = ssub.s32 %s10, 1
      // Predicated region
      $region13: #{attn_resnet_generator.11} parent=11 // pred_check
        %p140 = pneg %p57
      $region14: #{attn_resnet_generator.11} parent=11 // pred_check_branch
        %142 = sbr.rel (%p140) target = $region16
      $region15: #{attn_resnet_generator.11} parent=11 // pred_region
        _
      $region16: #{attn_resnet_generator.11} parent=11 // pred_fallthru
        _
      // Predicated region
      $region17: #{attn_resnet_generator.11} parent=11 // pred_check
        %p143 = pneg %p78
      $region18: #{attn_resnet_generator.11} parent=11 // pred_check_branch
        %145 = sbr.rel (%p143) target = $region20
      $region19: #{attn_resnet_generator.11} parent=11 // pred_region
        _
      $region20: #{attn_resnet_generator.11} parent=11 // pred_fallthru
        _
      // Predicated region
      $region21: #{attn_resnet_generator.11} parent=11 // pred_check
        %p146 = pneg %p99
      $region22: #{attn_resnet_generator.11} parent=11 // pred_check_branch
        %148 = sbr.rel (%p146) target = $region24
      $region23: #{attn_resnet_generator.11} parent=11 // pred_region
        _
      $region24: #{attn_resnet_generator.11} parent=11 // pred_fallthru
        _
    $region12: #{attn_resnet_generator.11} parent=5 // pred_fallthru
      _
    %p149 = scmp.lt.s32.totalorder %s10, 2
    // Predicated region
    $region25: #{attn_resnet_generator.11} parent=5 // pred_check
      %p150 = pneg %p149
    $region26: #{attn_resnet_generator.11} parent=5 // pred_check_branch
      %152 = sbr.rel (%p150) target = $region28
    $region27: #{attn_resnet_generator.11} parent=5 // pred_region
      // Predicated region
      $region29: #{attn_resnet_generator.11} parent=27 // pred_check
        %p153 = pneg %p30
      $region30: #{attn_resnet_generator.11} parent=27 // pred_check_branch
        %155 = sbr.rel (%p153) target = $region32
      $region31: #{attn_resnet_generator.11} parent=27 // pred_region
        %p156 = scmp.lt.s32.totalorder %s10, 1
        %s157 = scalar_select %p156, %s10, 1
        %s158 = smul.addr %s157, 9
        %s159 = smul.addr %s158, 4
        %s160 = scalar_lea.vmem %s0, %s159
      $region32: #{attn_resnet_generator.11} parent=27 // pred_fallthru
        _
    $region28: #{attn_resnet_generator.11} parent=5 // pred_fallthru
      _
    %p161 = scmp.le.s32.totalorder 1, %s10
    %p162 = scmp.lt.s32.totalorder %s10, 3
    %p163 = pnand %p161, %p162
    %p164 = pneg %p163
    // Predicated region
    $region33: #{attn_resnet_generator.11} parent=5 // pred_check
      _
    $region34: #{attn_resnet_generator.11} parent=5 // pred_check_branch
      %166 = sbr.rel (%p163) target = $region36
    $region35: #{attn_resnet_generator.11} parent=5 // pred_region
      %s167 = ssub.s32 %s10, 1
      %p168 = scmp.lt.s32.totalorder %s15, 1
      %s169 = scalar_select %p168, %s15, 1
      %s170 = smul.addr %s169, 9
      %s171 = smul.addr %s170, 4
      %s172 = scalar_lea.vmem %s0, %s171
      %p173 = pneg %p36
      %p174 = pneg %p33
      %p175 = pneg %p57
      %p176 = pneg %p54
      %p177 = pneg %p78
      %p178 = pneg %p75
      %p179 = pneg %p99
      %p180 = pneg %p96
      %p181 = pneg %p125
      %p182 = pneg %p122
      %p183 = scmp.lt.s32.totalorder %s15, 1
      %s184 = scalar_select %p183, %s15, 1
      %s185 = smul.addr %s184, 2
      %s186 = smul.addr %s185, 8
      %s187 = scalar_lea.vmem %s4, %s186
      %p188 = scmp.lt.s32.totalorder %s15, 1
      %s189 = scalar_select %p188, %s15, 1
      %s190 = smul.addr %s189, 9
      %s191 = smul.addr %s190, 4
      %s192 = scalar_lea.vmem %s0, %s191
      %p193 = scmp.lt.s32.totalorder %s15, 1
      %s194 = scalar_select %p193, %s15, 1
      %s195 = smul.addr %s194, 2
      %s196 = smul.addr %s195, 8
      %s197 = scalar_lea.vmem %s4, %s196
      %v199 = vld [vmem:[%s1] sm:$0xf]
      %v200 = vld [vmem:[%s1 + $0x4] sm:$0xf]
      %v201 = vld [vmem:[%s192] sm:$0xf]
      %v202 = vld [vmem:[%s192 + $0x4] sm:$0xf]
      %v203 = vld [vmem:[%s192 + $0x8] sm:$0xf]
      %v204 = vld [vmem:[%s192 + $0xc] sm:$0xf]
      %v205 = vld [vmem:[%s192 + $0x10] sm:$0xf]
      %v206 = vld [vmem:[%s192 + $0x14] sm:$0xf]
      %v207 = vld [vmem:[%s192 + $0x18] sm:$0xf]
      %v208 = vld [vmem:[%s192 + $0x1c] sm:$0xf]
      %v209 = vld [vmem:[%s192 + $0x20] sm:$0xf]
      %v212 = vunpack.c.l.b16 %v199
      %v213 = vunpack.c.l.b16 %v200
      %v214 = vpack.c.b16 %v213, %v212
      %v224 = vunpack.c.l.b16 %v201
      %v225 = vunpack.c.l.b16 %v202
      %v226 = vunpack.c.l.b16 %v203
      %v227 = vunpack.c.l.b16 %v204
      %v228 = vunpack.c.l.b16 %v205
      %v229 = vunpack.c.l.b16 %v206
      %v230 = vunpack.c.l.b16 %v207
      %v231 = vunpack.c.l.b16 %v208
      %v232 = vunpack.c.l.b16 %v209
      %v233 = vpack.c.b16 %v225, %v224
      %v234 = vpack.c.b16 %v227, %v226
      %v235 = vpack.c.b16 %v229, %v228
      %v236 = vpack.c.b16 %v231, %v230
      %v237 = vpack.c.b16 %v232, %v232
      %vm242 = vcmask 588800
      %v244 = vsel %vm242, %v214, 0
      %vm246 = vcmask 1043456
      %v248 = vsel %vm246, %v237, 0
      %250 = vmatprep.subr.bf16.mxu0 0
      %251 = vmatpush1.bf16.msra.mxu0 %v233
      %252 = vmatprep.subr.bf16.mxu0 0
      %253 = vmatpush1.bf16.msra.mxu0 %v234
      %254 = vmatprep.subr.bf16.mxu0 0
      %255 = vmatpush1.bf16.msra.mxu0 %v235
      %256 = vmatprep.subr.bf16.mxu0 0
      %257 = vmatpush1.bf16.msra.mxu0 %v236
      %258 = vmatprep.subr.bf16.mxu0 0
      %259 = vmatpush1.bf16.msra.mxu0 %v248
      %260 = vmatprep.subr.bf16.mxu0 0
      %261 = vmatpush1.bf16.msra.mxu0 0
      %262 = vmatprep.subr.bf16.mxu0 0
      %263 = vmatpush1.bf16.msra.mxu0 0
      %264 = vmatprep.subr.bf16.mxu0 0
      %265 = vmatpush1.bf16.msra.mxu0 0
      %266 = vmatprep.subr.bf16.mxu0 0
      %267 = vmatpush1.bf16.msra.mxu0 0
      %268 = vmatprep.subr.bf16.mxu0 0
      %269 = vmatpush1.bf16.msra.mxu0 0
      %270 = vmatprep.subr.bf16.mxu0 0
      %271 = vmatpush1.bf16.msra.mxu0 0
      %272 = vmatprep.subr.bf16.mxu0 0
      %273 = vmatpush1.bf16.msra.mxu0 0
      %274 = vmatprep.subr.bf16.mxu0 0
      %275 = vmatpush1.bf16.msra.mxu0 0
      %276 = vmatprep.subr.bf16.mxu0 0
      %277 = vmatpush1.bf16.msra.mxu0 0
      %278 = vmatprep.subr.bf16.mxu0 0
      %279 = vmatpush1.bf16.msra.mxu0 0
      %280 = vmatprep.subr.bf16.mxu0 0
      %281 = vmatpush1.bf16.msra.mxu0 0
      %282 = vmatprep.mubr.bf16.mxu0 0
      %283 = vmatmul.mubr.bf16.gmra.mrb[0].mxu0 %v244
      %v284 = vpop.f32.mrb[0].mxu0
      %v285 = vadd.f32 0.0, %v284
      %v286 = vpop.f32.mrb[0].mxu0
      %v287 = vpop.f32.mrb[0].mxu0
      %v288 = vadd.f32 0.0, %v287
      %v289 = vpop.f32.mrb[0].mxu0
      %290 = vdwg.mxu0
      %vm291 = vcmask 523264
      %v292 = vsel %vm291, %v285, 0.0
      %293 = vadd.xlane.f32.xlu0 %v292
      %v294 = vpop.xlane.xlu0 %293
      %v295 = vsel %vm291, %v288, 0.0
      %296 = vadd.xlane.f32.xlu0 %v295
      %v297 = vpop.xlane.xlu0 %296
      %v298 = vrcp.pop 64.0
      %v299 = vmul.f32 %v294, %v298
      %v300 = vmul.f32 %v297, %v298
      %v301 = vsub.f32 %v285, %v299
      %v302 = vsub.f32 %v288, %v300
      %v303 = vmul.f32 %v301, %v301
      %v304 = vmul.f32 %v302, %v302
      %v305 = vsel %vm291, %v303, 0.0
      %306 = vadd.xlane.f32.xlu0 %v305
      %v307 = vpop.xlane.xlu0 %306
      %v308 = vsel %vm291, %v304, 0.0
      %309 = vadd.xlane.f32.xlu0 %v308
      %v310 = vpop.xlane.xlu0 %309
      %v311 = vmul.f32 %v307, %v298
      %v312 = vmul.f32 %v310, %v298
      %v313 = vadd.f32 %v311, 1e-05
      %v314 = vadd.f32 %v312, 1e-05
      %v315 = vrsqrt.pop %v313
      %v316 = vrsqrt.pop %v314
      %v317 = vmul.f32 %v301, %v315
      %v318 = vmul.f32 %v302, %v316
      %v319 = vmax.f32 %v317, 0.0
      %v320 = vmax.f32 %v318, 0.0
      %v321 = vld [vmem:[%s2] sm:$0xf]
      %v322 = vld [vmem:[%s2 + $0x4] sm:$0xf]
      %v323 = vld [vmem:[%s2 + $0x8] sm:$0xf]
      %v324 = vld [vmem:[%s2 + $0xc] sm:$0xf]
      %v325 = vpack.c.bf16 %v320, %v319
      %v326 = vld [vmem:[%s3] sm:$0xff]
      %v327 = vld [vmem:[%s3 + $0x8] sm:$0xff]
      %v328 = vld [vmem:[%s3 + $0x10] sm:$0xff]
      %v329 = vld [vmem:[%s3 + $0x18] sm:$0xff]
      %331 = vset.pattern.permute.xlu0 0
      %332 = vperm.xlu0 %331, %v326
      %v333 = vpop.permute.xlu0 %332
      %336 = vset.pattern.permute.xlu0 0
      %337 = vperm.xlu0 %336, %v327
      %v338 = vpop.permute.xlu0 %337
      %341 = vset.pattern.permute.xlu0 0
      %342 = vperm.xlu0 %341, %v328
      %v343 = vpop.permute.xlu0 %342
      %346 = vset.pattern.permute.xlu0 0
      %347 = vperm.xlu0 %346, %v329
      %v348 = vpop.permute.xlu0 %347
      %v354 = vunpack.c.l.b16 %v321
      %v355 = vunpack.c.l.b16 %v322
      %v356 = vunpack.c.l.b16 %v323
      %v357 = vunpack.c.l.b16 %v324
      %v358 = vpack.c.b16 %v355, %v354
      %v359 = vpack.c.b16 %v357, %v356
      %vm360 = vcmask 130048
      %v362 = vsel %vm360, %v358, 0
      %v365 = vsel %vm360, %v359, 0
      %367 = vmatprep.subr.bf16.mxu0 0
      %368 = vmatpush1.bf16.msra.mxu0 %v325
      %369 = vmatprep.subr.bf16.mxu0 0
      %370 = vmatpush1.bf16.msra.mxu0 0
      %371 = vmatprep.subr.bf16.mxu0 0
      %372 = vmatpush1.bf16.msra.mxu0 0
      %373 = vmatprep.subr.bf16.mxu0 0
      %374 = vmatpush1.bf16.msra.mxu0 0
      %375 = vmatprep.subr.bf16.mxu0 0
      %376 = vmatpush1.bf16.msra.mxu0 0
      %377 = vmatprep.subr.bf16.mxu0 0
      %378 = vmatpush1.bf16.msra.mxu0 0
      %379 = vmatprep.subr.bf16.mxu0 0
      %380 = vmatpush1.bf16.msra.mxu0 0
      %381 = vmatprep.subr.bf16.mxu0 0
      %382 = vmatpush1.bf16.msra.mxu0 0
      %383 = vmatprep.subr.bf16.mxu0 0
      %384 = vmatpush1.bf16.msra.mxu0 0
      %385 = vmatprep.subr.bf16.mxu0 0
      %386 = vmatpush1.bf16.msra.mxu0 0
      %387 = vmatprep.subr.bf16.mxu0 0
      %388 = vmatpush1.bf16.msra.mxu0 0
      %389 = vmatprep.subr.bf16.mxu0 0
      %390 = vmatpush1.bf16.msra.mxu0 0
      %391 = vmatprep.subr.bf16.mxu0 0
      %392 = vmatpush1.bf16.msra.mxu0 0
      %393 = vmatprep.subr.bf16.mxu0 0
      %394 = vmatpush1.bf16.msra.mxu0 0
      %395 = vmatprep.subr.bf16.mxu0 0
      %396 = vmatpush1.bf16.msra.mxu0 0
      %397 = vmatprep.subr.bf16.mxu0 0
      %398 = vmatpush1.bf16.msra.mxu0 0
      %399 = vmatprep.mubr.bf16.mxu0 0
      %400 = vmatmul.mubr.bf16.gmra.mrb[0].mxu0 %v362
      %v401 = vpop.f32.mrb[0].mxu0
      %v402 = vadd.f32 %v333, %v401
      %v403 = vpop.f32.mrb[0].mxu0
      %v404 = vpop.f32.mrb[0].mxu0
      %v405 = vadd.f32 %v338, %v404
      %v406 = vpop.f32.mrb[0].mxu0
      %407 = vmatprep.mubr.bf16.mxu0 0
      %408 = vmatmul.mubr.bf16.gmra.mrb[0].mxu0 %v365
      %v409 = vpop.f32.mrb[0].mxu0
      %v410 = vadd.f32 %v343, %v409
      %v411 = vpop.f32.mrb[0].mxu0
      %v412 = vpop.f32.mrb[0].mxu0
      %v413 = vadd.f32 %v348, %v412
      %v414 = vpop.f32.mrb[0].mxu0
      %415 = vdwg.mxu0
      %416 = vxpose.xlu0.b32.start [1/16] %v402, 128
      %417 = vxpose.xlu0.b32.cont [2/16] 0.0, 128
      %418 = vxpose.xlu0.b32.cont [3/16] 0.0, 128
      %419 = vxpose.xlu0.b32.cont [4/16] 0.0, 128
      %420 = vxpose.xlu0.b32.cont [5/16] 0.0, 128
      %421 = vxpose.xlu0.b32.cont [6/16] 0.0, 128
      %422 = vxpose.xlu0.b32.cont [7/16] 0.0, 128
      %423 = vxpose.xlu0.b32.cont [8/16] 0.0, 128
      %424 = vxpose.xlu0.b32.cont [9/16] 0.0, 128
      %425 = vxpose.xlu0.b32.cont [10/16] 0.0, 128
      %426 = vxpose.xlu0.b32.cont [11/16] 0.0, 128
      %427 = vxpose.xlu0.b32.cont [12/16] 0.0, 128
      %428 = vxpose.xlu0.b32.cont [13/16] 0.0, 128
      %429 = vxpose.xlu0.b32.cont [14/16] 0.0, 128
      %430 = vxpose.xlu0.b32.cont [15/16] 0.0, 128
      %431 = vxpose.xlu0.b32.end [16/16] 0.0, 128
      %v432 = vpop.trf.xlu0
      %v433 = vpop.trf.xlu0
      %v434 = vpop.trf.xlu0
      %v435 = vpop.trf.xlu0
      %v436 = vpop.trf.xlu0
      %v437 = vpop.trf.xlu0
      %v438 = vpop.trf.xlu0
      %v439 = vpop.trf.xlu0
      %v440 = vpop.trf.xlu0
      %v441 = vpop.trf.xlu0
      %v442 = vpop.trf.xlu0
      %v443 = vpop.trf.xlu0
      %v444 = vpop.trf.xlu0
      %v445 = vpop.trf.xlu0
      %v446 = vpop.trf.xlu0
      %v447 = vpop.trf.xlu0
      %vm448 = vcmask 64512
      %v450 = vsel %vm448, %v432, 0
      %v453 = vsel %vm448, %v433, 0
      %v456 = vsel %vm448, %v434, 0
      %v459 = vsel %vm448, %v435, 0
      %v462 = vsel %vm448, %v436, 0
      %v465 = vsel %vm448, %v437, 0
      %v468 = vsel %vm448, %v438, 0
      %v471 = vsel %vm448, %v439, 0
      %473 = vmatprep.subr.mxu0 0.0
      %474 = vmatpush1.msra.mxu0 %v405
      %475 = vmatprep.subr.mxu0 0.0
      %476 = vmatpush1.msra.mxu0 0.0
      %477 = vmatprep.subr.mxu0 0.0
      %478 = vmatpush1.msra.mxu0 0.0
      %479 = vmatprep.subr.mxu0 0.0
      %480 = vmatpush1.msra.mxu0 0.0
      %481 = vmatprep.subr.mxu0 0.0
      %482 = vmatpush1.msra.mxu0 0.0
      %483 = vmatprep.subr.mxu0 0.0
      %484 = vmatpush1.msra.mxu0 0.0
      %485 = vmatprep.subr.mxu0 0.0
      %486 = vmatpush1.msra.mxu0 0.0
      %487 = vmatprep.subr.mxu0 0.0
      %488 = vmatpush1.msra.mxu0 0.0
      %489 = vmatprep.subr.mxu0 0.0
      %490 = vmatpush1.msra.mxu0 0.0
      %491 = vmatprep.subr.mxu0 0.0
      %492 = vmatpush1.msra.mxu0 0.0
      %493 = vmatprep.subr.mxu0 0.0
      %494 = vmatpush1.msra.mxu0 0.0
      %495 = vmatprep.subr.mxu0 0.0
      %496 = vmatpush1.msra.mxu0 0.0
      %497 = vmatprep.subr.mxu0 0.0
      %498 = vmatpush1.msra.mxu0 0.0
      %499 = vmatprep.subr.mxu0 0.0
      %500 = vmatpush1.msra.mxu0 0.0
      %501 = vmatprep.subr.mxu0 0.0
      %502 = vmatpush1.msra.mxu0 0.0
      %503 = vmatprep.subr.mxu0 0.0
      %504 = vmatpush1.msra.mxu0 0.0
      %505 = vmatprep.subr.mxu0 0.0
      %506 = vmatpush1.msra.mxu0 0.0
      %507 = vmatprep.subr.mxu0 0.0
      %508 = vmatpush1.msra.mxu0 0.0
      %509 = vmatprep.subr.mxu0 0.0
      %510 = vmatpush1.msra.mxu0 0.0
      %511 = vmatprep.subr.mxu0 0.0
      %512 = vmatpush1.msra.mxu0 0.0
      %513 = vmatprep.subr.mxu0 0.0
      %514 = vmatpush1.msra.mxu0 0.0
      %515 = vmatprep.subr.mxu0 0.0
      %516 = vmatpush1.msra.mxu0 0.0
      %517 = vmatprep.subr.mxu0 0.0
      %518 = vmatpush1.msra.mxu0 0.0
      %519 = vmatprep.subr.mxu0 0.0
      %520 = vmatpush1.msra.mxu0 0.0
      %521 = vmatprep.subr.mxu0 0.0
      %522 = vmatpush1.msra.mxu0 0.0
      %523 = vmatprep.subr.mxu0 0.0
      %524 = vmatpush1.msra.mxu0 0.0
      %525 = vmatprep.subr.mxu0 0.0
      %526 = vmatpush1.msra.mxu0 0.0
      %527 = vmatprep.subr.mxu0 0.0
      %528 = vmatpush1.msra.mxu0 0.0
      %529 = vmatprep.subr.mxu0 0.0
      %530 = vmatpush1.msra.mxu0 0.0
      %531 = vmatprep.subr.mxu0 0.0
      %532 = vmatpush1.msra.mxu0 0.0
      %533 = vmatprep.subr.mxu0 0.0
      %534 = vmatpush1.msra.mxu0 0.0
      %535 = vmatprep.subr.mxu0 0.0
      %536 = vmatpush1.msra.mxu0 0.0
      %537 = vmatprep.mubr.f32.mxu0 0.0
      %538 = vmatmul.mubr.f32.gmra.mrb[0].mxu0 %v450
      %v539 = vpop.f32.mrb[0].mxu0
      %v540 = vadd.f32 0.0, %v539
      %v541 = vpop.f32.mrb[0].mxu0
      %542 = vmatprep.mubr.f32.mxu0 0.0
      %543 = vmatmul.mubr.f32.gmra.mrb[0].mxu0 %v453
      %v544 = vpop.f32.mrb[0].mxu0
      %v545 = vadd.f32 0.0, %v544
      %v546 = vpop.f32.mrb[0].mxu0
      %547 = vmatprep.mubr.f32.mxu0 0.0
      %548 = vmatmul.mubr.f32.gmra.mrb[0].mxu0 %v456
      %v549 = vpop.f32.mrb[0].mxu0
      %v550 = vadd.f32 0.0, %v549
      %v551 = vpop.f32.mrb[0].mxu0
      %552 = vmatprep.mubr.f32.mxu0 0.0
      %553 = vmatmul.mubr.f32.gmra.mrb[0].mxu0 %v459
      %v554 = vpop.f32.mrb[0].mxu0
      %v555 = vadd.f32 0.0, %v554
      %v556 = vpop.f32.mrb[0].mxu0
      %557 = vmatprep.mubr.f32.mxu0 0.0
      %558 = vmatmul.mubr.f32.gmra.mrb[0].mxu0 %v462
      %v559 = vpop.f32.mrb[0].mxu0
      %v560 = vadd.f32 0.0, %v559
      %v561 = vpop.f32.mrb[0].mxu0
      %562 = vmatprep.mubr.f32.mxu0 0.0
      %563 = vmatmul.mubr.f32.gmra.mrb[0].mxu0 %v465
      %v564 = vpop.f32.mrb[0].mxu0
      %v565 = vadd.f32 0.0, %v564
      %v566 = vpop.f32.mrb[0].mxu0
      %567 = vmatprep.mubr.f32.mxu0 0.0
      %568 = vmatmul.mubr.f32.gmra.mrb[0].mxu0 %v468
      %v569 = vpop.f32.mrb[0].mxu0
      %v570 = vadd.f32 0.0, %v569
      %v571 = vpop.f32.mrb[0].mxu0
      %572 = vmatprep.mubr.f32.mxu0 0.0
      %573 = vmatmul.mubr.f32.gmra.mrb[0].mxu0 %v471
      %v574 = vpop.f32.mrb[0].mxu0
      %v575 = vadd.f32 0.0, %v574
      %v576 = vpop.f32.mrb[0].mxu0
      %577 = vdwg.mxu0
      %v578 = vsel %vm291, %v540, -inf
      %579 = vmax.xlane.f32.xlu0 %v578
      %v580 = vpop.xlane.xlu0 %579
      %v581 = vsel %vm291, %v545, -inf
      %582 = vmax.xlane.f32.xlu0 %v581
      %v583 = vpop.xlane.xlu0 %582
      %v584 = vsel %vm291, %v550, -inf
      %585 = vmax.xlane.f32.xlu0 %v584
      %v586 = vpop.xlane.xlu0 %585
      %v587 = vsel %vm291, %v555, -inf
      %588 = vmax.xlane.f32.xlu0 %v587
      %v589 = vpop.xlane.xlu0 %588
      %v590 = vsel %vm291, %v560, -inf
      %591 = vmax.xlane.f32.xlu0 %v590
      %v592 = vpop.xlane.xlu0 %591
      %v593 = vsel %vm291, %v565, -inf
      %594 = vmax.xlane.f32.xlu0 %v593
      %v595 = vpop.xlane.xlu0 %594
      %v596 = vsel %vm291, %v570, -inf
      %597 = vmax.xlane.f32.xlu0 %v596
      %v598 = vpop.xlane.xlu0 %597
      %v599 = vsel %vm291, %v575, -inf
      %600 = vmax.xlane.f32.xlu0 %v599
      %v601 = vpop.xlane.xlu0 %600
      %v602 = vsub.f32 %v540, %v580
      %v603 = vsub.f32 %v545, %v583
      %v604 = vsub.f32 %v550, %v586
      %v605 = vsub.f32 %v555, %v589
      %v606 = vsub.f32 %v560, %v592
      %v607 = vsub.f32 %v565, %v595
      %v608 = vsub.f32 %v570, %v598
      %v609 = vsub.f32 %v575, %v601
      %v610 = vmul.f32 %v602, 1.442695
      %v611 = vpow.pop %v610
      %v612 = vmul.f32 %v603, 1.442695
      %v613 = vpow.pop %v612
      %v614 = vmul.f32 %v604, 1.442695
      %v615 = vpow.pop %v614
      %v616 = vmul.f32 %v605, 1.442695
      %v617 = vpow.pop %v616
      %v618 = vmul.f32 %v606, 1.442695
      %v619 = vpow.pop %v618
      %v620 = vmul.f32 %v607, 1.442695
      %v621 = vpow.pop %v620
      %v622 = vmul.f32 %v608, 1.442695
      %v623 = vpow.pop %v622
      %v624 = vmul.f32 %v609, 1.442695
      %v625 = vpow.pop %v624
      %v626 = vsel %vm291, %v611, 0.0
      %627 = vadd.xlane.f32.xlu0 %v626
      %v628 = vpop.xlane.xlu0 %627
      %v629 = vsel %vm291, %v613, 0.0
      %630 = vadd.xlane.f32.xlu0 %v629
      %v631 = vpop.xlane.xlu0 %630
      %v632 = vsel %vm291, %v615, 0.0
      %633 = vadd.xlane.f32.xlu0 %v632
      %v634 = vpop.xlane.xlu0 %633
      %v635 = vsel %vm291, %v617, 0.0
      %636 = vadd.xlane.f32.xlu0 %v635
      %v637 = vpop.xlane.xlu0 %636
      %v638 = vsel %vm291, %v619, 0.0
      %639 = vadd.xlane.f32.xlu0 %v638
      %v640 = vpop.xlane.xlu0 %639
      %v641 = vsel %vm291, %v621, 0.0
      %642 = vadd.xlane.f32.xlu0 %v641
      %v643 = vpop.xlane.xlu0 %642
      %v644 = vsel %vm291, %v623, 0.0
      %645 = vadd.xlane.f32.xlu0 %v644
      %v646 = vpop.xlane.xlu0 %645
      %v647 = vsel %vm291, %v625, 0.0
      %648 = vadd.xlane.f32.xlu0 %v647
      %v649 = vpop.xlane.xlu0 %648
      %v650 = vrcp.pop %v628
      %v651 = vrcp.pop %v631
      %v652 = vrcp.pop %v634
      %v653 = vrcp.pop %v637
      %v654 = vrcp.pop %v640
      %v655 = vrcp.pop %v643
      %v656 = vrcp.pop %v646
      %v657 = vrcp.pop %v649
      %v658 = vmul.f32 %v611, %v650
      %v659 = vmul.f32 %v613, %v651
      %v660 = vmul.f32 %v615, %v652
      %v661 = vmul.f32 %v617, %v653
      %v662 = vmul.f32 %v619, %v654
      %v663 = vmul.f32 %v621, %v655
      %v664 = vmul.f32 %v623, %v656
      %v665 = vmul.f32 %v625, %v657
      %v666 = vpack.c.bf16 %v413, %v410
      %v667 = vpack.c.bf16 %v659, %v658
      %v668 = vpack.c.bf16 %v661, %v660
      %v669 = vpack.c.bf16 %v663, %v662
      %v670 = vpack.c.bf16 %v665, %v664
      %v672 = vsel %vm291, %v666, 0
      %v675 = vsel %vm291, %v667, 0
      %v678 = vsel %vm291, %v668, 0
      %v681 = vsel %vm291, %v669, 0
      %v684 = vsel %vm291, %v670, 0
      %686 = vmatprep.subr.bf16.mxu0 0
      %687 = vmatpush1.bf16.xpose.msra.mxu0 %v675
      %688 = vmatprep.subr.bf16.mxu0 0
      %689 = vmatpush1.bf16.xpose.msra.mxu0 %v678
      %690 = vmatprep.subr.bf16.mxu0 0
      %691 = vmatpush1.bf16.xpose.msra.mxu0 %v681
      %692 = vmatprep.subr.bf16.mxu0 0
      %693 = vmatpush1.bf16.xpose.msra.mxu0 %v684
      %694 = vmatprep.subr.bf16.mxu0 0
      %695 = vmatpush1.bf16.xpose.msra.mxu0 0
      %696 = vmatprep.subr.bf16.mxu0 0
      %697 = vmatpush1.bf16.xpose.msra.mxu0 0
      %698 = vmatprep.subr.bf16.mxu0 0
      %699 = vmatpush1.bf16.xpose.msra.mxu0 0
      %700 = vmatprep.subr.bf16.mxu0 0
      %701 = vmatpush1.bf16.xpose.msra.mxu0 0
      %702 = vmatprep.subr.bf16.mxu0 0
      %703 = vmatpush1.bf16.xpose.msra.mxu0 0
      %704 = vmatprep.subr.bf16.mxu0 0
      %705 = vmatpush1.bf16.xpose.msra.mxu0 0
      %706 = vmatprep.subr.bf16.mxu0 0
      %707 = vmatpush1.bf16.xpose.msra.mxu0 0
      %708 = vmatprep.subr.bf16.mxu0 0
      %709 = vmatpush1.bf16.xpose.msra.mxu0 0
      %710 = vmatprep.subr.bf16.mxu0 0
      %711 = vmatpush1.bf16.xpose.msra.mxu0 0
      %712 = vmatprep.subr.bf16.mxu0 0
      %713 = vmatpush1.bf16.xpose.msra.mxu0 0
      %714 = vmatprep.subr.bf16.mxu0 0
      %715 = vmatpush1.bf16.xpose.msra.mxu0 0
      %716 = vmatprep.subr.bf16.mxu0 0
      %717 = vmatpush1.bf16.xpose.msra.mxu0 0
      %718 = vmatprep.mubr.bf16.mxu0 0
      %719 = vmatmul.mubr.bf16.gmra.mrb[0].mxu0 %v672
      %v720 = vpop.f32.mrb[0].mxu0
      %v721 = vadd.f32 %v319, %v720
      %v722 = vpop.f32.mrb[0].mxu0
      %v723 = vpop.f32.mrb[0].mxu0
      %v724 = vadd.f32 %v320, %v723
      %v725 = vpop.f32.mrb[0].mxu0
      %726 = vdwg.mxu0
      %727 = vst.msk [vmem:[%s197] sm:$0xff] %vm291, %v721
      %728 = vst.msk [vmem:[%s197 + $0x8] sm:$0xff] %vm291, %v724
      %p729 = scmp.lt.s32.totalorder %s15, 1
      %s730 = scalar_select %p729, %s15, 1
      %s731 = smul.addr %s730, 2
      %s732 = smul.addr %s731, 8
      %s733 = scalar_lea.vmem %s4, %s732
      // Predicated region
      $region37: #{attn_resnet_generator.11} parent=35 // pred_check
        %p734 = pneg %p122
      $region38: #{attn_resnet_generator.11} parent=35 // pred_check_branch
        %736 = sbr.rel (%p734) target = $region40
      $region39: #{attn_resnet_generator.11} parent=35 // pred_region
        _
      $region40: #{attn_resnet_generator.11} parent=35 // pred_fallthru
        _
    $region36: #{attn_resnet_generator.11} parent=5 // pred_fallthru
      _
    %p737 = scmp.le.s32.totalorder 2, %s10
    // Predicated region
    $region41: #{attn_resnet_generator.11} parent=5 // pred_check
      %p738 = pneg %p737
    $region42: #{attn_resnet_generator.11} parent=5 // pred_check_branch
      %740 = sbr.rel (%p738) target = $region44
    $region43: #{attn_resnet_generator.11} parent=5 // pred_region
      %s741 = ssub.s32 %s10, 2
      // Predicated region
      $region45: #{attn_resnet_generator.11} parent=43 // pred_check
        %p742 = pneg %p128
      $region46: #{attn_resnet_generator.11} parent=43 // pred_check_branch
        %744 = sbr.rel (%p742) target = $region48
      $region47: #{attn_resnet_generator.11} parent=43 // pred_region
        %p745 = scmp.lt.s32.totalorder %s16, 1
        %s746 = scalar_select %p745, %s16, 1
        %s747 = smul.addr %s746, 2
        %s748 = smul.addr %s747, 8
        %s749 = scalar_lea.vmem %s4, %s748
      $region48: #{attn_resnet_generator.11} parent=43 // pred_fallthru
        _
    $region44: #{attn_resnet_generator.11} parent=5 // pred_fallthru
      _
  $region6: #{attn_resnet_generator.11} parent=0 // loop_footer
    %s14 = sadd.s32 1, %s10
  $region7: #{attn_resnet_generator.11} parent=0 // loop_footer_branch
    %9 = sbr.rel target = $region3
  $region8: #{attn_resnet_generator.11} parent=0 // loop_exit
    _

// kernel: attn_resnet_generator.12
$region0: #{attn_resnet_generator.12}
  #allocation0 [shape = 'u32[]', space=smem, size = 0x4, offset = 0x4, fixed_abs, tag = 'smem constant byte address 0x4 - core index']
  #allocation1 [shape = 'u32[144,128]{1,0:T(1,128)}', space=vmem, size = 0x12000, scoped, tag = 'internal scratch']
  %s0 = inlined_call_operand.vmem [shape: bf16[2,144,16], index: 0, kind: input, shape index: {}]
  %s1 = inlined_call_operand.vmem [shape: bf16[32,144], index: 1, kind: input, shape index: {}]
  %s2 = inlined_call_operand.vmem [shape: bf16[48,32], index: 2, kind: input, shape index: {}]
  %s3 = inlined_call_operand.vmem [shape: f32[48,1], index: 3, kind: input, shape index: {}]
  %s4 = inlined_call_operand.vmem [shape: f32[2,32,16], index: 4, kind: output, shape index: {}]
  %s5 = sld [smem:[#allocation0]]
  $region49: #{attn_resnet_generator.12} parent=0
    _
  %s7 = ssub.s32 1, %s5
  %s8 = scalar_select 0, %s7, %s5
  loop: start=0, step=1, limit=4
  $region2: #{attn_resnet_generator.12} parent=0 // loop_pre_header
    _
  $region3: #{attn_resnet_generator.12} parent=0 // loop_header
    %s10 = sphi 0, %s14
    %p11 = scmp.ge.s32.totalorder %s10, 4
    %s20 = sphi 0, %s22
    %s23 = sphi 0, %s20
    %s24 = sphi 0, %s23
    %s40 = sphi 0, %s24
    %s44 = sphi 0, %s44
    %s46 = sphi 0, %s44
    %s47 = sphi 0, %s46
    %s61 = sphi 0, %s47
    %s65 = sphi 0, %s65
    %s67 = sphi 0, %s65
    %s68 = sphi 0, %s67
    %s82 = sphi 0, %s68
    %s86 = sphi 0, %s86
    %s88 = sphi 0, %s86
    %s89 = sphi 0, %s88
    %s103 = sphi 0, %s89
    %s109 = sphi 0, %s111
    %s112 = sphi 0, %s109
    %s113 = sphi 0, %s112
    %s129 = sphi 0, %s113
  $region4: #{attn_resnet_generator.12} parent=0 // loop_header_branch
    %13 = sbr.rel (%p11) target = $region8
  $region5: #{attn_resnet_generator.12} parent=0 // loop_body
    %s15 = ssub.s32 %s10, 1
    %s16 = ssub.s32 %s10, 2
    %s17 = sadd.s32 %s10, 1
    %s18 = ssub.s32 %s10, %s17
    %p19 = scmp.eq.s32.totalorder %s18, 0
    %s21 = sadd.s32 %s20, 1
    %s22 = scalar_select %p19, %s20, %s21
    %p25 = pneg %p19
    %p26 = scmp.eq.s32.totalorder %s10, 1
    %p27 = por %p25, %p26
    %p28 = scmp.ne.s32.totalorder %s20, %s23
    %p29 = scmp.eq.s32.totalorder %s10, 0
    %p30 = por %p28, %p29
    %p31 = scmp.ne.s32.totalorder %s20, %s23
    %p32 = scmp.eq.s32.totalorder %s15, 1
    %p33 = por %p31, %p32
    %p34 = scmp.ne.s32.totalorder %s23, %s24
    %p35 = scmp.eq.s32.totalorder %s15, 0
    %p36 = por %p34, %p35
    %p37 = scmp.ne.s32.totalorder %s23, %s24
    %p38 = scmp.eq.s32.totalorder %s16, 1
    %p39 = por %p37, %p38
    %p41 = scmp.ne.s32.totalorder %s24, %s40
    %p42 = scmp.eq.s32.totalorder %s16, 0
    %p43 = por %p41, %p42
    %s45 = sadd.s32 %s44, 1
    %p48 = scmp.eq.s32.totalorder %s10, 1
    %p49 = scmp.ne.s32.totalorder %s44, %s46
    %p50 = scmp.eq.s32.totalorder %s10, 0
    %p51 = por %p49, %p50
    %p52 = scmp.ne.s32.totalorder %s44, %s46
    %p53 = scmp.eq.s32.totalorder %s15, 1
    %p54 = por %p52, %p53
    %p55 = scmp.ne.s32.totalorder %s46, %s47
    %p56 = scmp.eq.s32.totalorder %s15, 0
    %p57 = por %p55, %p56
    %p58 = scmp.ne.s32.totalorder %s46, %s47
    %p59 = scmp.eq.s32.totalorder %s16, 1
    %p60 = por %p58, %p59
    %p62 = scmp.ne.s32.totalorder %s47, %s61
    %p63 = scmp.eq.s32.totalorder %s16, 0
    %p64 = por %p62, %p63
    %s66 = sadd.s32 %s65, 1
    %p69 = scmp.eq.s32.totalorder %s10, 1
    %p70 = scmp.ne.s32.totalorder %s65, %s67
    %p71 = scmp.eq.s32.totalorder %s10, 0
    %p72 = por %p70, %p71
    %p73 = scmp.ne.s32.totalorder %s65, %s67
    %p74 = scmp.eq.s32.totalorder %s15, 1
    %p75 = por %p73, %p74
    %p76 = scmp.ne.s32.totalorder %s67, %s68
    %p77 = scmp.eq.s32.totalorder %s15, 0
    %p78 = por %p76, %p77
    %p79 = scmp.ne.s32.totalorder %s67, %s68
    %p80 = scmp.eq.s32.totalorder %s16, 1
    %p81 = por %p79, %p80
    %p83 = scmp.ne.s32.totalorder %s68, %s82
    %p84 = scmp.eq.s32.totalorder %s16, 0
    %p85 = por %p83, %p84
    %s87 = sadd.s32 %s86, 1
    %p90 = scmp.eq.s32.totalorder %s10, 1
    %p91 = scmp.ne.s32.totalorder %s86, %s88
    %p92 = scmp.eq.s32.totalorder %s10, 0
    %p93 = por %p91, %p92
    %p94 = scmp.ne.s32.totalorder %s86, %s88
    %p95 = scmp.eq.s32.totalorder %s15, 1
    %p96 = por %p94, %p95
    %p97 = scmp.ne.s32.totalorder %s88, %s89
    %p98 = scmp.eq.s32.totalorder %s15, 0
    %p99 = por %p97, %p98
    %p100 = scmp.ne.s32.totalorder %s88, %s89
    %p101 = scmp.eq.s32.totalorder %s16, 1
    %p102 = por %p100, %p101
    %p104 = scmp.ne.s32.totalorder %s89, %s103
    %p105 = scmp.eq.s32.totalorder %s16, 0
    %p106 = por %p104, %p105
    %s107 = ssub.s32 %s10, %s17
    %p108 = scmp.eq.s32.totalorder %s107, 0
    %s110 = sadd.s32 %s109, 1
    %s111 = scalar_select %p108, %s109, %s110
    %p114 = pneg %p108
    %p115 = scmp.eq.s32.totalorder %s10, 1
    %p116 = por %p114, %p115
    %p117 = scmp.ne.s32.totalorder %s109, %s112
    %p118 = scmp.eq.s32.totalorder %s10, 0
    %p119 = por %p117, %p118
    %p120 = scmp.ne.s32.totalorder %s109, %s112
    %p121 = scmp.eq.s32.totalorder %s15, 1
    %p122 = por %p120, %p121
    %p123 = scmp.ne.s32.totalorder %s112, %s113
    %p124 = scmp.eq.s32.totalorder %s15, 0
    %p125 = por %p123, %p124
    %p126 = scmp.ne.s32.totalorder %s112, %s113
    %p127 = scmp.eq.s32.totalorder %s16, 1
    %p128 = por %p126, %p127
    %p130 = scmp.ne.s32.totalorder %s113, %s129
    %p131 = scmp.eq.s32.totalorder %s16, 0
    %p132 = por %p130, %p131
    %p133 = scmp.le.s32.totalorder 1, %s10
    %p134 = scmp.lt.s32.totalorder %s10, 3
    %p135 = pnand %p133, %p134
    %p136 = pneg %p135
    // Predicated region
    $region9: #{attn_resnet_generator.12} parent=5 // pred_check
      _
    $region10: #{attn_resnet_generator.12} parent=5 // pred_check_branch
      %138 = sbr.rel (%p135) target = $region12
    $region11: #{attn_resnet_generator.12} parent=5 // pred_region
      %s139 = ssub.s32 %s10, 1
      // Predicated region
      $region13: #{attn_resnet_generator.12} parent=11 // pred_check
        %p140 = pneg %p57
      $region14: #{attn_resnet_generator.12} parent=11 // pred_check_branch
        %142 = sbr.rel (%p140) target = $region16
      $region15: #{attn_resnet_generator.12} parent=11 // pred_region
        _
      $region16: #{attn_resnet_generator.12} parent=11 // pred_fallthru
        _
      // Predicated region
      $region17: #{attn_resnet_generator.12} parent=11 // pred_check
        %p143 = pneg %p78
      $region18: #{attn_resnet_generator.12} parent=11 // pred_check_branch
        %145 = sbr.rel (%p143) target = $region20
      $region19: #{attn_resnet_generator.12} parent=11 // pred_region
        _
      $region20: #{attn_resnet_generator.12} parent=11 // pred_fallthru
        _
      // Predicated region
      $region21: #{attn_resnet_generator.12} parent=11 // pred_check
        %p146 = pneg %p99
      $region22: #{attn_resnet_generator.12} parent=11 // pred_check_branch
        %148 = sbr.rel (%p146) target = $region24
      $region23: #{attn_resnet_generator.12} parent=11 // pred_region
        _
      $region24: #{attn_resnet_generator.12} parent=11 // pred_fallthru
        _
    $region12: #{attn_resnet_generator.12} parent=5 // pred_fallthru
      _
    %p149 = scmp.lt.s32.totalorder %s10, 2
    // Predicated region
    $region25: #{attn_resnet_generator.12} parent=5 // pred_check
      %p150 = pneg %p149
    $region26: #{attn_resnet_generator.12} parent=5 // pred_check_branch
      %152 = sbr.rel (%p150) target = $region28
    $region27: #{attn_resnet_generator.12} parent=5 // pred_region
      // Predicated region
      $region29: #{attn_resnet_generator.12} parent=27 // pred_check
        %p153 = pneg %p30
      $region30: #{attn_resnet_generator.12} parent=27 // pred_check_branch
        %155 = sbr.rel (%p153) target = $region32
      $region31: #{attn_resnet_generator.12} parent=27 // pred_region
        %p156 = scmp.lt.s32.totalorder %s10, 1
        %s157 = scalar_select %p156, %s10, 1
        %s158 = smul.addr %s157, 18
        %s159 = smul.addr %s158, 4
        %s160 = scalar_lea.vmem %s0, %s159
      $region32: #{attn_resnet_generator.12} parent=27 // pred_fallthru
        _
    $region28: #{attn_resnet_generator.12} parent=5 // pred_fallthru
      _
    %p161 = scmp.le.s32.totalorder 1, %s10
    %p162 = scmp.lt.s32.totalorder %s10, 3
    %p163 = pnand %p161, %p162
    %p164 = pneg %p163
    // Predicated region
    $region33: #{attn_resnet_generator.12} parent=5 // pred_check
      _
    $region34: #{attn_resnet_generator.12} parent=5 // pred_check_branch
      %166 = sbr.rel (%p163) target = $region36
    $region35: #{attn_resnet_generator.12} parent=5 // pred_region
      %s167 = ssub.s32 %s10, 1
      %p168 = scmp.lt.s32.totalorder %s15, 1
      %s169 = scalar_select %p168, %s15, 1
      %s170 = smul.addr %s169, 18
      %s171 = smul.addr %s170, 4
      %s172 = scalar_lea.vmem %s0, %s171
      %p173 = pneg %p36
      %p174 = pneg %p33
      %p175 = pneg %p57
      %p176 = pneg %p54
      %p177 = pneg %p78
      %p178 = pneg %p75
      %p179 = pneg %p99
      %p180 = pneg %p96
      %p181 = pneg %p125
      %p182 = pneg %p122
      %p183 = scmp.lt.s32.totalorder %s15, 1
      %s184 = scalar_select %p183, %s15, 1
      %s185 = smul.addr %s184, 4
      %s186 = smul.addr %s185, 8
      %s187 = scalar_lea.vmem %s4, %s186
      %p188 = scmp.lt.s32.totalorder %s15, 1
      %s189 = scalar_select %p188, %s15, 1
      %s190 = smul.addr %s189, 18
      %s191 = smul.addr %s190, 4
      %s192 = scalar_lea.vmem %s0, %s191
      %p193 = scmp.lt.s32.totalorder %s15, 1
      %s194 = scalar_select %p193, %s15, 1
      %s195 = smul.addr %s194, 4
      %s196 = smul.addr %s195, 8
      %s197 = scalar_lea.vmem %s4, %s196
      %v199 = vld [vmem:[%s1] sm:$0xff]
      %v200 = vld [vmem:[%s1 + $0x8] sm:$0xff]
      %v201 = vld [vmem:[%s1 + $0x10] sm:$0xff]
      %v202 = vld [vmem:[%s1 + $0x18] sm:$0xff]
      %v203 = vld [vmem:[%s192] sm:$0xf]
      %v204 = vld [vmem:[%s192 + $0x4] sm:$0xf]
      %v205 = vld [vmem:[%s192 + $0x8] sm:$0xf]
      %v206 = vld [vmem:[%s192 + $0xc] sm:$0xf]
      %v207 = vld [vmem:[%s192 + $0x10] sm:$0xf]
      %v208 = vld [vmem:[%s192 + $0x14] sm:$0xf]
      %v209 = vld [vmem:[%s192 + $0x18] sm:$0xf]
      %v210 = vld [vmem:[%s192 + $0x1c] sm:$0xf]
      %v211 = vld [vmem:[%s192 + $0x20] sm:$0xf]
      %v212 = vld [vmem:[%s192 + $0x24] sm:$0xf]
      %v213 = vld [vmem:[%s192 + $0x28] sm:$0xf]
      %v214 = vld [vmem:[%s192 + $0x2c] sm:$0xf]
      %v215 = vld [vmem:[%s192 + $0x30] sm:$0xf]
      %v216 = vld [vmem:[%s192 + $0x34] sm:$0xf]
      %v217 = vld [vmem:[%s192 + $0x38] sm:$0xf]
      %v218 = vld [vmem:[%s192 + $0x3c] sm:$0xf]
      %v219 = vld [vmem:[%s192 + $0x40] sm:$0xf]
      %v220 = vld [vmem:[%s192 + $0x44] sm:$0xf]
      %v225 = vunpack.c.l.b16 %v199
      %v226 = vunpack.c.h.b16 %v199
      %v227 = vunpack.c.l.b16 %v200
      %v228 = vunpack.c.h.b16 %v200
      %v229 = vunpack.c.l.b16 %v201
      %v230 = vunpack.c.h.b16 %v201
      %v231 = vunpack.c.l.b16 %v202
      %v232 = vunpack.c.h.b16 %v202
      %v233 = vpack.c.b16 %v227, %v225
      %v234 = vpack.c.b16 %v228, %v226
      %v235 = vpack.c.b16 %v231, %v229
      %v236 = vpack.c.b16 %v232, %v230
      %v257 = vunpack.c.l.b16 %v203
      %v258 = vunpack.c.l.b16 %v204
      %v259 = vunpack.c.l.b16 %v205
      %v260 = vunpack.c.l.b16 %v206
      %v261 = vunpack.c.l.b16 %v207
      %v262 = vunpack.c.l.b16 %v208
      %v263 = vunpack.c.l.b16 %v209
      %v264 = vunpack.c.l.b16 %v210
      %v265 = vunpack.c.l.b16 %v211
      %v266 = vunpack.c.l.b16 %v212
      %v267 = vunpack.c.l.b16 %v213
      %v268 = vunpack.c.l.b16 %v214
      %v269 = vunpack.c.l.b16 %v215
      %v270 = vunpack.c.l.b16 %v216
      %v271 = vunpack.c.l.b16 %v217
      %v272 = vunpack.c.l.b16 %v218
      %v273 = vunpack.c.l.b16 %v219
      %v274 = vunpack.c.l.b16 %v220
      %v275 = vpack.c.b16 %v258, %v257
      %v276 = vpack.c.b16 %v260, %v259
      %v277 = vpack.c.b16 %v262, %v261
      %v278 = vpack.c.b16 %v264, %v263
      %v279 = vpack.c.b16 %v266, %v265
      %v280 = vpack.c.b16 %v268, %v267
      %v281 = vpack.c.b16 %v270, %v269
      %v282 = vpack.c.b16 %v272, %v271
      %v283 = vpack.c.b16 %v274, %v273
      %vm293 = vcmask 130048
      %v295 = vsel %vm293, %v234, 0
      %v298 = vsel %vm293, %v236, 0
      %300 = vmatprep.subr.bf16.mxu0 0
      %301 = vmatpush1.bf16.msra.mxu0 %v275
      %302 = vmatprep.subr.bf16.mxu0 0
      %303 = vmatpush1.bf16.msra.mxu0 %v276
      %304 = vmatprep.subr.bf16.mxu0 0
      %305 = vmatpush1.bf16.msra.mxu0 %v277
      %306 = vmatprep.subr.bf16.mxu0 0
      %307 = vmatpush1.bf16.msra.mxu0 %v278
      %308 = vmatprep.subr.bf16.mxu0 0
      %309 = vmatpush1.bf16.msra.mxu0 %v279
      %310 = vmatprep.subr.bf16.mxu0 0
      %311 = vmatpush1.bf16.msra.mxu0 %v280
      %312 = vmatprep.subr.bf16.mxu0 0
      %313 = vmatpush1.bf16.msra.mxu0 %v281
      %314 = vmatprep.subr.bf16.mxu0 0
      %315 = vmatpush1.bf16.msra.mxu0 %v282
      %316 = vmatprep.subr.bf16.mxu0 0
      %317 = vmatpush1.bf16.msra.mxu0 %v283
      %318 = vmatprep.subr.bf16.mxu0 0
      %319 = vmatpush1.bf16.msra.mxu0 0
      %320 = vmatprep.subr.bf16.mxu0 0
      %321 = vmatpush1.bf16.msra.mxu0 0
      %322 = vmatprep.subr.bf16.mxu0 0
      %323 = vmatpush1.bf16.msra.mxu0 0
      %324 = vmatprep.subr.bf16.mxu0 0
      %325 = vmatpush1.bf16.msra.mxu0 0
      %326 = vmatprep.subr.bf16.mxu0 0
      %327 = vmatpush1.bf16.msra.mxu0 0
      %328 = vmatprep.subr.bf16.mxu0 0
      %329 = vmatpush1.bf16.msra.mxu0 0
      %330 = vmatprep.subr.bf16.mxu0 0
      %331 = vmatpush1.bf16.msra.mxu0 0
      %332 = vmatprep.mubr.bf16.mxu0 %v295
      %333 = vmatmul.mubr.bf16.gmra.mrb[0].mxu0 %v233
      %v334 = vpop.f32.mrb[0].mxu0
      %v335 = vadd.f32 0.0, %v334
      %v336 = vpop.f32.mrb[0].mxu0
      %v337 = vpop.f32.mrb[0].mxu0
      %v338 = vadd.f32 0.0, %v337
      %v339 = vpop.f32.mrb[0].mxu0
      %340 = vmatprep.mubr.bf16.mxu0 %v298
      %341 = vmatmul.mubr.bf16.gmra.mrb[0].mxu0 %v235
      %v342 = vpop.f32.mrb[0].mxu0
      %v343 = vadd.f32 0.0, %v342
      %v344 = vpop.f32.mrb[0].mxu0
      %v345 = vpop.f32.mrb[0].mxu0
      %v346 = vadd.f32 0.0, %v345
      %v347 = vpop.f32.mrb[0].mxu0
      %348 = vdwg.mxu0
      %v349 = vsel %vm293, %v335, 0.0
      %350 = vadd.xlane.f32.xlu0 %v349
      %v351 = vpop.xlane.xlu0 %350
      %v352 = vsel %vm293, %v338, 0.0
      %353 = vadd.xlane.f32.xlu0 %v352
      %v354 = vpop.xlane.xlu0 %353
      %v355 = vsel %vm293, %v343, 0.0
      %356 = vadd.xlane.f32.xlu0 %v355
      %v357 = vpop.xlane.xlu0 %356
      %v358 = vsel %vm293, %v346, 0.0
      %359 = vadd.xlane.f32.xlu0 %v358
      %v360 = vpop.xlane.xlu0 %359
      %v361 = vrcp.pop 16.0
      %v362 = vmul.f32 %v351, %v361
      %v363 = vmul.f32 %v354, %v361
      %v364 = vmul.f32 %v357, %v361
      %v365 = vmul.f32 %v360, %v361
      %v366 = vsub.f32 %v335, %v362
      %v367 = vsub.f32 %v338, %v363
      %v368 = vsub.f32 %v343, %v364
      %v369 = vsub.f32 %v346, %v365
      %v370 = vmul.f32 %v366, %v366
      %v371 = vmul.f32 %v367, %v367
      %v372 = vmul.f32 %v368, %v368
      %v373 = vmul.f32 %v369, %v369
      %v374 = vsel %vm293, %v370, 0.0
      %375 = vadd.xlane.f32.xlu0 %v374
      %v376 = vpop.xlane.xlu0 %375
      %v377 = vsel %vm293, %v371, 0.0
      %378 = vadd.xlane.f32.xlu0 %v377
      %v379 = vpop.xlane.xlu0 %378
      %v380 = vsel %vm293, %v372, 0.0
      %381 = vadd.xlane.f32.xlu0 %v380
      %v382 = vpop.xlane.xlu0 %381
      %v383 = vsel %vm293, %v373, 0.0
      %384 = vadd.xlane.f32.xlu0 %v383
      %v385 = vpop.xlane.xlu0 %384
      %v386 = vmul.f32 %v376, %v361
      %v387 = vmul.f32 %v379, %v361
      %v388 = vmul.f32 %v382, %v361
      %v389 = vmul.f32 %v385, %v361
      %v390 = vadd.f32 %v386, 1e-05
      %v391 = vadd.f32 %v387, 1e-05
      %v392 = vadd.f32 %v388, 1e-05
      %v393 = vadd.f32 %v389, 1e-05
      %v394 = vrsqrt.pop %v390
      %v395 = vrsqrt.pop %v391
      %v396 = vrsqrt.pop %v392
      %v397 = vrsqrt.pop %v393
      %v398 = vmul.f32 %v366, %v394
      %v399 = vmul.f32 %v367, %v395
      %v400 = vmul.f32 %v368, %v396
      %v401 = vmul.f32 %v369, %v397
      %v402 = vmax.f32 %v398, 0.0
      %v403 = vmax.f32 %v399, 0.0
      %v404 = vmax.f32 %v400, 0.0
      %v405 = vmax.f32 %v401, 0.0
      %v406 = vld [vmem:[%s2] sm:$0xf]
      %v407 = vld [vmem:[%s2 + $0x4] sm:$0xf]
      %v408 = vld [vmem:[%s2 + $0x8] sm:$0xf]
      %v409 = vld [vmem:[%s2 + $0xc] sm:$0xf]
      %v410 = vld [vmem:[%s2 + $0x10] sm:$0xf]
      %v411 = vld [vmem:[%s2 + $0x14] sm:$0xf]
      %v412 = vpack.c.bf16 %v403, %v402
      %v413 = vpack.c.bf16 %v405, %v404
      %v414 = vld [vmem:[%s3] sm:$0xff]
      %v415 = vld [vmem:[%s3 + $0x8] sm:$0xff]
      %v416 = vld [vmem:[%s3 + $0x10] sm:$0xff]
      %v417 = vld [vmem:[%s3 + $0x18] sm:$0xff]
      %v418 = vld [vmem:[%s3 + $0x20] sm:$0xff]
      %v419 = vld [vmem:[%s3 + $0x28] sm:$0xff]
      %421 = vset.pattern.permute.xlu0 0
      %422 = vperm.xlu0 %421, %v414
      %v423 = vpop.permute.xlu0 %422
      %426 = vset.pattern.permute.xlu0 0
      %427 = vperm.xlu0 %426, %v415
      %v428 = vpop.permute.xlu0 %427
      %431 = vset.pattern.permute.xlu0 0
      %432 = vperm.xlu0 %431, %v416
      %v433 = vpop.permute.xlu0 %432
      %436 = vset.pattern.permute.xlu0 0
      %437 = vperm.xlu0 %436, %v417
      %v438 = vpop.permute.xlu0 %437
      %441 = vset.pattern.permute.xlu0 0
      %442 = vperm.xlu0 %441, %v418
      %v443 = vpop.permute.xlu0 %442
      %446 = vset.pattern.permute.xlu0 0
      %447 = vperm.xlu0 %446, %v419
      %v448 = vpop.permute.xlu0 %447
      %v456 = vunpack.c.l.b16 %v406
      %v457 = vunpack.c.l.b16 %v407
      %v458 = vunpack.c.l.b16 %v408
      %v459 = vunpack.c.l.b16 %v409
      %v460 = vunpack.c.l.b16 %v410
      %v461 = vunpack.c.l.b16 %v411
      %v462 = vpack.c.b16 %v457, %v456
      %v463 = vpack.c.b16 %v459, %v458
      %v464 = vpack.c.b16 %v461, %v460
      %vm465 = vcmask 261120
      %v467 = vsel %vm465, %v462, 0
      %v470 = vsel %vm465, %v463, 0
      %v473 = vsel %vm465, %v464, 0
      %475 = vmatprep.subr.bf16.mxu0 0
      %476 = vmatpush1.bf16.msra.mxu0 %v412
      %477 = vmatprep.subr.bf16.mxu0 0
      %478 = vmatpush1.bf16.msra.mxu0 %v413
      %479 = vmatprep.subr.bf16.mxu0 0
      %480 = vmatpush1.bf16.msra.mxu0 0
      %481 = vmatprep.subr.bf16.mxu0 0
      %482 = vmatpush1.bf16.msra.mxu0 0
      %483 = vmatprep.subr.bf16.mxu0 0
      %484 = vmatpush1.bf16.msra.mxu0 0
      %485 = vmatprep.subr.bf16.mxu0 0
      %486 = vmatpush1.bf16.msra.mxu0 0
      %487 = vmatprep.subr.bf16.mxu0 0
      %488 = vmatpush1.bf16.msra.mxu0 0
      %489 = vmatprep.subr.bf16.mxu0 0
      %490 = vmatpush1.bf16.msra.mxu0 0
      %491 = vmatprep.subr.bf16.mxu0 0
      %492 = vmatpush1.bf16.msra.mxu0 0
      %493 = vmatprep.subr.bf16.mxu0 0
      %494 = vmatpush1.bf16.msra.mxu0 0
      %495 = vmatprep.subr.bf16.mxu0 0
      %496 = vmatpush1.bf16.msra.mxu0 0
      %497 = vmatprep.subr.bf16.mxu0 0
      %498 = vmatpush1.bf16.msra.mxu0 0
      %499 = vmatprep.subr.bf16.mxu0 0
      %500 = vmatpush1.bf16.msra.mxu0 0
      %501 = vmatprep.subr.bf16.mxu0 0
      %502 = vmatpush1.bf16.msra.mxu0 0
      %503 = vmatprep.subr.bf16.mxu0 0
      %504 = vmatpush1.bf16.msra.mxu0 0
      %505 = vmatprep.subr.bf16.mxu0 0
      %506 = vmatpush1.bf16.msra.mxu0 0
      %507 = vmatprep.mubr.bf16.mxu0 0
      %508 = vmatmul.mubr.bf16.gmra.mrb[0].mxu0 %v467
      %v509 = vpop.f32.mrb[0].mxu0
      %v510 = vadd.f32 %v423, %v509
      %v511 = vpop.f32.mrb[0].mxu0
      %v512 = vpop.f32.mrb[0].mxu0
      %v513 = vadd.f32 %v428, %v512
      %v514 = vpop.f32.mrb[0].mxu0
      %515 = vmatprep.mubr.bf16.mxu0 0
      %516 = vmatmul.mubr.bf16.gmra.mrb[0].mxu0 %v470
      %v517 = vpop.f32.mrb[0].mxu0
      %v518 = vadd.f32 %v433, %v517
      %v519 = vpop.f32.mrb[0].mxu0
      %v520 = vpop.f32.mrb[0].mxu0
      %v521 = vadd.f32 %v438, %v520
      %v522 = vpop.f32.mrb[0].mxu0
      %523 = vmatprep.mubr.bf16.mxu0 0
      %524 = vmatmul.mubr.bf16.gmra.mrb[0].mxu0 %v473
      %v525 = vpop.f32.mrb[0].mxu0
      %v526 = vadd.f32 %v443, %v525
      %v527 = vpop.f32.mrb[0].mxu0
      %v528 = vpop.f32.mrb[0].mxu0
      %v529 = vadd.f32 %v448, %v528
      %v530 = vpop.f32.mrb[0].mxu0
      %531 = vdwg.mxu0
      %532 = vxpose.xlu0.b32.start [1/16] %v510, 128
      %533 = vxpose.xlu0.b32.cont [2/16] 0.0, 128
      %534 = vxpose.xlu0.b32.cont [3/16] 0.0, 128
      %535 = vxpose.xlu0.b32.cont [4/16] 0.0, 128
      %536 = vxpose.xlu0.b32.cont [5/16] 0.0, 128
      %537 = vxpose.xlu0.b32.cont [6/16] 0.0, 128
      %538 = vxpose.xlu0.b32.cont [7/16] 0.0, 128
      %539 = vxpose.xlu0.b32.cont [8/16] 0.0, 128
      %540 = vxpose.xlu0.b32.cont [9/16] 0.0, 128
      %541 = vxpose.xlu0.b32.cont [10/16] 0.0, 128
      %542 = vxpose.xlu0.b32.cont [11/16] 0.0, 128
      %543 = vxpose.xlu0.b32.cont [12/16] 0.0, 128
      %544 = vxpose.xlu0.b32.cont [13/16] 0.0, 128
      %545 = vxpose.xlu0.b32.cont [14/16] 0.0, 128
      %546 = vxpose.xlu0.b32.cont [15/16] 0.0, 128
      %547 = vxpose.xlu0.b32.end [16/16] 0.0, 128
      %v548 = vpop.trf.xlu0
      %v549 = vpop.trf.xlu0
      %v550 = vpop.trf.xlu0
      %v551 = vpop.trf.xlu0
      %v552 = vpop.trf.xlu0
      %v553 = vpop.trf.xlu0
      %v554 = vpop.trf.xlu0
      %v555 = vpop.trf.xlu0
      %v556 = vpop.trf.xlu0
      %v557 = vpop.trf.xlu0
      %v558 = vpop.trf.xlu0
      %v559 = vpop.trf.xlu0
      %v560 = vpop.trf.xlu0
      %v561 = vpop.trf.xlu0
      %v562 = vpop.trf.xlu0
      %v563 = vpop.trf.xlu0
      %vm564 = vcmask 64512
      %v566 = vsel %vm564, %v548, 0
      %v569 = vsel %vm564, %v549, 0
      %571 = vmatprep.subr.mxu0 0.0
      %572 = vmatpush1.msra.mxu0 %v513
      %573 = vmatprep.subr.mxu0 0.0
      %574 = vmatpush1.msra.mxu0 0.0
      %575 = vmatprep.subr.mxu0 0.0
      %576 = vmatpush1.msra.mxu0 0.0
      %577 = vmatprep.subr.mxu0 0.0
      %578 = vmatpush1.msra.mxu0 0.0
      %579 = vmatprep.subr.mxu0 0.0
      %580 = vmatpush1.msra.mxu0 0.0
      %581 = vmatprep.subr.mxu0 0.0
      %582 = vmatpush1.msra.mxu0 0.0
      %583 = vmatprep.subr.mxu0 0.0
      %584 = vmatpush1.msra.mxu0 0.0
      %585 = vmatprep.subr.mxu0 0.0
      %586 = vmatpush1.msra.mxu0 0.0
      %587 = vmatprep.subr.mxu0 0.0
      %588 = vmatpush1.msra.mxu0 0.0
      %589 = vmatprep.subr.mxu0 0.0
      %590 = vmatpush1.msra.mxu0 0.0
      %591 = vmatprep.subr.mxu0 0.0
      %592 = vmatpush1.msra.mxu0 0.0
      %593 = vmatprep.subr.mxu0 0.0
      %594 = vmatpush1.msra.mxu0 0.0
      %595 = vmatprep.subr.mxu0 0.0
      %596 = vmatpush1.msra.mxu0 0.0
      %597 = vmatprep.subr.mxu0 0.0
      %598 = vmatpush1.msra.mxu0 0.0
      %599 = vmatprep.subr.mxu0 0.0
      %600 = vmatpush1.msra.mxu0 0.0
      %601 = vmatprep.subr.mxu0 0.0
      %602 = vmatpush1.msra.mxu0 0.0
      %603 = vmatprep.subr.mxu0 0.0
      %604 = vmatpush1.msra.mxu0 0.0
      %605 = vmatprep.subr.mxu0 0.0
      %606 = vmatpush1.msra.mxu0 0.0
      %607 = vmatprep.subr.mxu0 0.0
      %608 = vmatpush1.msra.mxu0 0.0
      %609 = vmatprep.subr.mxu0 0.0
      %610 = vmatpush1.msra.mxu0 0.0
      %611 = vmatprep.subr.mxu0 0.0
      %612 = vmatpush1.msra.mxu0 0.0
      %613 = vmatprep.subr.mxu0 0.0
      %614 = vmatpush1.msra.mxu0 0.0
      %615 = vmatprep.subr.mxu0 0.0
      %616 = vmatpush1.msra.mxu0 0.0
      %617 = vmatprep.subr.mxu0 0.0
      %618 = vmatpush1.msra.mxu0 0.0
      %619 = vmatprep.subr.mxu0 0.0
      %620 = vmatpush1.msra.mxu0 0.0
      %621 = vmatprep.subr.mxu0 0.0
      %622 = vmatpush1.msra.mxu0 0.0
      %623 = vmatprep.subr.mxu0 0.0
      %624 = vmatpush1.msra.mxu0 0.0
      %625 = vmatprep.subr.mxu0 0.0
      %626 = vmatpush1.msra.mxu0 0.0
      %627 = vmatprep.subr.mxu0 0.0
      %628 = vmatpush1.msra.mxu0 0.0
      %629 = vmatprep.subr.mxu0 0.0
      %630 = vmatpush1.msra.mxu0 0.0
      %631 = vmatprep.subr.mxu0 0.0
      %632 = vmatpush1.msra.mxu0 0.0
      %633 = vmatprep.subr.mxu0 0.0
      %634 = vmatpush1.msra.mxu0 0.0
      %635 = vmatprep.mubr.f32.mxu0 0.0
      %636 = vmatmul.mubr.f32.gmra.mrb[0].mxu0 %v566
      %v637 = vpop.f32.mrb[0].mxu0
      %v638 = vadd.f32 0.0, %v637
      %v639 = vpop.f32.mrb[0].mxu0
      %640 = vmatprep.mubr.f32.mxu0 0.0
      %641 = vmatmul.mubr.f32.gmra.mrb[0].mxu0 %v569
      %v642 = vpop.f32.mrb[0].mxu0
      %v643 = vadd.f32 0.0, %v642
      %v644 = vpop.f32.mrb[0].mxu0
      %645 = vdwg.mxu0
      %v646 = vsel %vm293, %v638, -inf
      %647 = vmax.xlane.f32.xlu0 %v646
      %v648 = vpop.xlane.xlu0 %647
      %v649 = vsel %vm293, %v643, -inf
      %650 = vmax.xlane.f32.xlu0 %v649
      %v651 = vpop.xlane.xlu0 %650
      %v652 = vsub.f32 %v638, %v648
      %v653 = vsub.f32 %v643, %v651
      %v654 = vmul.f32 %v652, 1.442695
      %v655 = vpow.pop %v654
      %v656 = vmul.f32 %v653, 1.442695
      %v657 = vpow.pop %v656
      %v658 = vsel %vm293, %v655, 0.0
      %659 = vadd.xlane.f32.xlu0 %v658
      %v660 = vpop.xlane.xlu0 %659
      %v661 = vsel %vm293, %v657, 0.0
      %662 = vadd.xlane.f32.xlu0 %v661
      %v663 = vpop.xlane.xlu0 %662
      %v664 = vrcp.pop %v660
      %v665 = vrcp.pop %v663
      %v666 = vmul.f32 %v655, %v664
      %v667 = vmul.f32 %v657, %v665
      %v668 = vpack.c.bf16 %v521, %v518
      %v669 = vpack.c.bf16 %v529, %v526
      %v670 = vpack.c.bf16 %v667, %v666
      %v672 = vsel %vm293, %v668, 0
      %v675 = vsel %vm293, %v669, 0
      %v678 = vsel %vm293, %v670, 0
      %680 = vmatprep.subr.bf16.mxu0 0
      %681 = vmatpush1.bf16.xpose.msra.mxu0 %v678
      %682 = vmatprep.subr.bf16.mxu0 0
      %683 = vmatpush1.bf16.xpose.msra.mxu0 0
      %684 = vmatprep.subr.bf16.mxu0 0
      %685 = vmatpush1.bf16.xpose.msra.mxu0 0
      %686 = vmatprep.subr.bf16.mxu0 0
      %687 = vmatpush1.bf16.xpose.msra.mxu0 0
      %688 = vmatprep.subr.bf16.mxu0 0
      %689 = vmatpush1.bf16.xpose.msra.mxu0 0
      %690 = vmatprep.subr.bf16.mxu0 0
      %691 = vmatpush1.bf16.xpose.msra.mxu0 0
      %692 = vmatprep.subr.bf16.mxu0 0
      %693 = vmatpush1.bf16.xpose.msra.mxu0 0
      %694 = vmatprep.subr.bf16.mxu0 0
      %695 = vmatpush1.bf16.xpose.msra.mxu0 0
      %696 = vmatprep.subr.bf16.mxu0 0
      %697 = vmatpush1.bf16.xpose.msra.mxu0 0
      %698 = vmatprep.subr.bf16.mxu0 0
      %699 = vmatpush1.bf16.xpose.msra.mxu0 0
      %700 = vmatprep.subr.bf16.mxu0 0
      %701 = vmatpush1.bf16.xpose.msra.mxu0 0
      %702 = vmatprep.subr.bf16.mxu0 0
      %703 = vmatpush1.bf16.xpose.msra.mxu0 0
      %704 = vmatprep.subr.bf16.mxu0 0
      %705 = vmatpush1.bf16.xpose.msra.mxu0 0
      %706 = vmatprep.subr.bf16.mxu0 0
      %707 = vmatpush1.bf16.xpose.msra.mxu0 0
      %708 = vmatprep.subr.bf16.mxu0 0
      %709 = vmatpush1.bf16.xpose.msra.mxu0 0
      %710 = vmatprep.subr.bf16.mxu0 0
      %711 = vmatpush1.bf16.xpose.msra.mxu0 0
      %712 = vmatprep.mubr.bf16.mxu0 0
      %713 = vmatmul.mubr.bf16.gmra.mrb[0].mxu0 %v672
      %v714 = vpop.f32.mrb[0].mxu0
      %v715 = vadd.f32 %v402, %v714
      %v716 = vpop.f32.mrb[0].mxu0
      %v717 = vpop.f32.mrb[0].mxu0
      %v718 = vadd.f32 %v403, %v717
      %v719 = vpop.f32.mrb[0].mxu0
      %720 = vmatprep.mubr.bf16.mxu0 0
      %721 = vmatmul.mubr.bf16.gmra.mrb[0].mxu0 %v675
      %v722 = vpop.f32.mrb[0].mxu0
      %v723 = vadd.f32 %v404, %v722
      %v724 = vpop.f32.mrb[0].mxu0
      %v725 = vpop.f32.mrb[0].mxu0
      %v726 = vadd.f32 %v405, %v725
      %v727 = vpop.f32.mrb[0].mxu0
      %728 = vdwg.mxu0
      %729 = vst.msk [vmem:[%s197] sm:$0xff] %vm293, %v715
      %730 = vst.msk [vmem:[%s197 + $0x8] sm:$0xff] %vm293, %v718
      %731 = vst.msk [vmem:[%s197 + $0x10] sm:$0xff] %vm293, %v723
      %732 = vst.msk [vmem:[%s197 + $0x18] sm:$0xff] %vm293, %v726
      %p733 = scmp.lt.s32.totalorder %s15, 1
      %s734 = scalar_select %p733, %s15, 1
      %s735 = smul.addr %s734, 4
      %s736 = smul.addr %s735, 8
      %s737 = scalar_lea.vmem %s4, %s736
      // Predicated region
      $region37: #{attn_resnet_generator.12} parent=35 // pred_check
        %p738 = pneg %p122
      $region38: #{attn_resnet_generator.12} parent=35 // pred_check_branch
        %740 = sbr.rel (%p738) target = $region40
      $region39: #{attn_resnet_generator.12} parent=35 // pred_region
        _
      $region40: #{attn_resnet_generator.12} parent=35 // pred_fallthru
        _
    $region36: #{attn_resnet_generator.12} parent=5 // pred_fallthru
      _
    %p741 = scmp.le.s32.totalorder 2, %s10
    // Predicated region
    $region41: #{attn_resnet_generator.12} parent=5 // pred_check
      %p742 = pneg %p741
    $region42: #{attn_resnet_generator.12} parent=5 // pred_check_branch
      %744 = sbr.rel (%p742) target = $region44
    $region43: #{attn_resnet_generator.12} parent=5 // pred_region
      %s745 = ssub.s32 %s10, 2
      // Predicated region
      $region45: #{attn_resnet_generator.12} parent=43 // pred_check
        %p746 = pneg %p128
      $region46: #{attn_resnet_generator.12} parent=43 // pred_check_branch
        %748 = sbr.rel (%p746) target = $region48
      $region47: #{attn_resnet_generator.12} parent=43 // pred_region
        %p749 = scmp.lt.s32.totalorder %s16, 1
        %s750 = scalar_select %p749, %s16, 1
        %s751 = smul.addr %s750, 4
        %s752 = smul.addr %s751, 8
        %s753 = scalar_lea.vmem %s4, %s752
      $region48: #{attn_resnet_generator.12} parent=43 // pred_fallthru
        _
    $region44: #{attn_resnet_generator.12} parent=5 // pred_fallthru
      _
  $region6: #{attn_resnet_generator.12} parent=0 // loop_footer
    %s14 = sadd.s32 1, %s10
  $region7: #{attn_resnet_generator.12} parent=0 // loop_footer_branch
    %9 = sbr.rel target = $region3
  $region8: #{attn_resnet_generator.12} parent=0 // loop_exit
    _

// kernel: attn_resnet_generator.13
$region0: #{attn_resnet_generator.13}
  #allocation0 [shape = 'u32[]', space=smem, size = 0x4, offset = 0x4, fixed_abs, tag = 'smem constant byte address 0x4 - core index']
  #allocation1 [shape = 'u32[144,128]{1,0:T(1,128)}', space=vmem, size = 0x12000, scoped, tag = 'internal scratch']
  %s0 = inlined_call_operand.vmem [shape: bf16[2,288,16], index: 0, kind: input, shape index: {}]
  %s1 = inlined_call_operand.vmem [shape: bf16[32,288], index: 1, kind: input, shape index: {}]
  %s2 = inlined_call_operand.vmem [shape: bf16[48,32], index: 2, kind: input, shape index: {}]
  %s3 = inlined_call_operand.vmem [shape: f32[48,1], index: 3, kind: input, shape index: {}]
  %s4 = inlined_call_operand.vmem [shape: f32[2,32,16], index: 4, kind: output, shape index: {}]
  %s5 = sld [smem:[#allocation0]]
  $region49: #{attn_resnet_generator.13} parent=0
    _
  %s7 = ssub.s32 1, %s5
  %s8 = scalar_select 0, %s7, %s5
  loop: start=0, step=1, limit=4
  $region2: #{attn_resnet_generator.13} parent=0 // loop_pre_header
    _
  $region3: #{attn_resnet_generator.13} parent=0 // loop_header
    %s10 = sphi 0, %s14
    %p11 = scmp.ge.s32.totalorder %s10, 4
    %s20 = sphi 0, %s22
    %s23 = sphi 0, %s20
    %s24 = sphi 0, %s23
    %s40 = sphi 0, %s24
    %s44 = sphi 0, %s44
    %s46 = sphi 0, %s44
    %s47 = sphi 0, %s46
    %s61 = sphi 0, %s47
    %s65 = sphi 0, %s65
    %s67 = sphi 0, %s65
    %s68 = sphi 0, %s67
    %s82 = sphi 0, %s68
    %s86 = sphi 0, %s86
    %s88 = sphi 0, %s86
    %s89 = sphi 0, %s88
    %s103 = sphi 0, %s89
    %s109 = sphi 0, %s111
    %s112 = sphi 0, %s109
    %s113 = sphi 0, %s112
    %s129 = sphi 0, %s113
  $region4: #{attn_resnet_generator.13} parent=0 // loop_header_branch
    %13 = sbr.rel (%p11) target = $region8
  $region5: #{attn_resnet_generator.13} parent=0 // loop_body
    %s15 = ssub.s32 %s10, 1
    %s16 = ssub.s32 %s10, 2
    %s17 = sadd.s32 %s10, 1
    %s18 = ssub.s32 %s10, %s17
    %p19 = scmp.eq.s32.totalorder %s18, 0
    %s21 = sadd.s32 %s20, 1
    %s22 = scalar_select %p19, %s20, %s21
    %p25 = pneg %p19
    %p26 = scmp.eq.s32.totalorder %s10, 1
    %p27 = por %p25, %p26
    %p28 = scmp.ne.s32.totalorder %s20, %s23
    %p29 = scmp.eq.s32.totalorder %s10, 0
    %p30 = por %p28, %p29
    %p31 = scmp.ne.s32.totalorder %s20, %s23
    %p32 = scmp.eq.s32.totalorder %s15, 1
    %p33 = por %p31, %p32
    %p34 = scmp.ne.s32.totalorder %s23, %s24
    %p35 = scmp.eq.s32.totalorder %s15, 0
    %p36 = por %p34, %p35
    %p37 = scmp.ne.s32.totalorder %s23, %s24
    %p38 = scmp.eq.s32.totalorder %s16, 1
    %p39 = por %p37, %p38
    %p41 = scmp.ne.s32.totalorder %s24, %s40
    %p42 = scmp.eq.s32.totalorder %s16, 0
    %p43 = por %p41, %p42
    %s45 = sadd.s32 %s44, 1
    %p48 = scmp.eq.s32.totalorder %s10, 1
    %p49 = scmp.ne.s32.totalorder %s44, %s46
    %p50 = scmp.eq.s32.totalorder %s10, 0
    %p51 = por %p49, %p50
    %p52 = scmp.ne.s32.totalorder %s44, %s46
    %p53 = scmp.eq.s32.totalorder %s15, 1
    %p54 = por %p52, %p53
    %p55 = scmp.ne.s32.totalorder %s46, %s47
    %p56 = scmp.eq.s32.totalorder %s15, 0
    %p57 = por %p55, %p56
    %p58 = scmp.ne.s32.totalorder %s46, %s47
    %p59 = scmp.eq.s32.totalorder %s16, 1
    %p60 = por %p58, %p59
    %p62 = scmp.ne.s32.totalorder %s47, %s61
    %p63 = scmp.eq.s32.totalorder %s16, 0
    %p64 = por %p62, %p63
    %s66 = sadd.s32 %s65, 1
    %p69 = scmp.eq.s32.totalorder %s10, 1
    %p70 = scmp.ne.s32.totalorder %s65, %s67
    %p71 = scmp.eq.s32.totalorder %s10, 0
    %p72 = por %p70, %p71
    %p73 = scmp.ne.s32.totalorder %s65, %s67
    %p74 = scmp.eq.s32.totalorder %s15, 1
    %p75 = por %p73, %p74
    %p76 = scmp.ne.s32.totalorder %s67, %s68
    %p77 = scmp.eq.s32.totalorder %s15, 0
    %p78 = por %p76, %p77
    %p79 = scmp.ne.s32.totalorder %s67, %s68
    %p80 = scmp.eq.s32.totalorder %s16, 1
    %p81 = por %p79, %p80
    %p83 = scmp.ne.s32.totalorder %s68, %s82
    %p84 = scmp.eq.s32.totalorder %s16, 0
    %p85 = por %p83, %p84
    %s87 = sadd.s32 %s86, 1
    %p90 = scmp.eq.s32.totalorder %s10, 1
    %p91 = scmp.ne.s32.totalorder %s86, %s88
    %p92 = scmp.eq.s32.totalorder %s10, 0
    %p93 = por %p91, %p92
    %p94 = scmp.ne.s32.totalorder %s86, %s88
    %p95 = scmp.eq.s32.totalorder %s15, 1
    %p96 = por %p94, %p95
    %p97 = scmp.ne.s32.totalorder %s88, %s89
    %p98 = scmp.eq.s32.totalorder %s15, 0
    %p99 = por %p97, %p98
    %p100 = scmp.ne.s32.totalorder %s88, %s89
    %p101 = scmp.eq.s32.totalorder %s16, 1
    %p102 = por %p100, %p101
    %p104 = scmp.ne.s32.totalorder %s89, %s103
    %p105 = scmp.eq.s32.totalorder %s16, 0
    %p106 = por %p104, %p105
    %s107 = ssub.s32 %s10, %s17
    %p108 = scmp.eq.s32.totalorder %s107, 0
    %s110 = sadd.s32 %s109, 1
    %s111 = scalar_select %p108, %s109, %s110
    %p114 = pneg %p108
    %p115 = scmp.eq.s32.totalorder %s10, 1
    %p116 = por %p114, %p115
    %p117 = scmp.ne.s32.totalorder %s109, %s112
    %p118 = scmp.eq.s32.totalorder %s10, 0
    %p119 = por %p117, %p118
    %p120 = scmp.ne.s32.totalorder %s109, %s112
    %p121 = scmp.eq.s32.totalorder %s15, 1
    %p122 = por %p120, %p121
    %p123 = scmp.ne.s32.totalorder %s112, %s113
    %p124 = scmp.eq.s32.totalorder %s15, 0
    %p125 = por %p123, %p124
    %p126 = scmp.ne.s32.totalorder %s112, %s113
    %p127 = scmp.eq.s32.totalorder %s16, 1
    %p128 = por %p126, %p127
    %p130 = scmp.ne.s32.totalorder %s113, %s129
    %p131 = scmp.eq.s32.totalorder %s16, 0
    %p132 = por %p130, %p131
    %p133 = scmp.le.s32.totalorder 1, %s10
    %p134 = scmp.lt.s32.totalorder %s10, 3
    %p135 = pnand %p133, %p134
    %p136 = pneg %p135
    // Predicated region
    $region9: #{attn_resnet_generator.13} parent=5 // pred_check
      _
    $region10: #{attn_resnet_generator.13} parent=5 // pred_check_branch
      %138 = sbr.rel (%p135) target = $region12
    $region11: #{attn_resnet_generator.13} parent=5 // pred_region
      %s139 = ssub.s32 %s10, 1
      // Predicated region
      $region13: #{attn_resnet_generator.13} parent=11 // pred_check
        %p140 = pneg %p57
      $region14: #{attn_resnet_generator.13} parent=11 // pred_check_branch
        %142 = sbr.rel (%p140) target = $region16
      $region15: #{attn_resnet_generator.13} parent=11 // pred_region
        _
      $region16: #{attn_resnet_generator.13} parent=11 // pred_fallthru
        _
      // Predicated region
      $region17: #{attn_resnet_generator.13} parent=11 // pred_check
        %p143 = pneg %p78
      $region18: #{attn_resnet_generator.13} parent=11 // pred_check_branch
        %145 = sbr.rel (%p143) target = $region20
      $region19: #{attn_resnet_generator.13} parent=11 // pred_region
        _
      $region20: #{attn_resnet_generator.13} parent=11 // pred_fallthru
        _
      // Predicated region
      $region21: #{attn_resnet_generator.13} parent=11 // pred_check
        %p146 = pneg %p99
      $region22: #{attn_resnet_generator.13} parent=11 // pred_check_branch
        %148 = sbr.rel (%p146) target = $region24
      $region23: #{attn_resnet_generator.13} parent=11 // pred_region
        _
      $region24: #{attn_resnet_generator.13} parent=11 // pred_fallthru
        _
    $region12: #{attn_resnet_generator.13} parent=5 // pred_fallthru
      _
    %p149 = scmp.lt.s32.totalorder %s10, 2
    // Predicated region
    $region25: #{attn_resnet_generator.13} parent=5 // pred_check
      %p150 = pneg %p149
    $region26: #{attn_resnet_generator.13} parent=5 // pred_check_branch
      %152 = sbr.rel (%p150) target = $region28
    $region27: #{attn_resnet_generator.13} parent=5 // pred_region
      // Predicated region
      $region29: #{attn_resnet_generator.13} parent=27 // pred_check
        %p153 = pneg %p30
      $region30: #{attn_resnet_generator.13} parent=27 // pred_check_branch
        %155 = sbr.rel (%p153) target = $region32
      $region31: #{attn_resnet_generator.13} parent=27 // pred_region
        %p156 = scmp.lt.s32.totalorder %s10, 1
        %s157 = scalar_select %p156, %s10, 1
        %s158 = smul.addr %s157, 36
        %s159 = smul.addr %s158, 4
        %s160 = scalar_lea.vmem %s0, %s159
      $region32: #{attn_resnet_generator.13} parent=27 // pred_fallthru
        _
    $region28: #{attn_resnet_generator.13} parent=5 // pred_fallthru
      _
    %p161 = scmp.le.s32.totalorder 1, %s10
    %p162 = scmp.lt.s32.totalorder %s10, 3
    %p163 = pnand %p161, %p162
    %p164 = pneg %p163
    // Predicated region
    $region33: #{attn_resnet_generator.13} parent=5 // pred_check
      _
    $region34: #{attn_resnet_generator.13} parent=5 // pred_check_branch
      %166 = sbr.rel (%p163) target = $region36
    $region35: #{attn_resnet_generator.13} parent=5 // pred_region
      %s167 = ssub.s32 %s10, 1
      %p168 = scmp.lt.s32.totalorder %s15, 1
      %s169 = scalar_select %p168, %s15, 1
      %s170 = smul.addr %s169, 36
      %s171 = smul.addr %s170, 4
      %s172 = scalar_lea.vmem %s0, %s171
      %p173 = pneg %p36
      %p174 = pneg %p33
      %p175 = pneg %p57
      %p176 = pneg %p54
      %p177 = pneg %p78
      %p178 = pneg %p75
      %p179 = pneg %p99
      %p180 = pneg %p96
      %p181 = pneg %p125
      %p182 = pneg %p122
      %p183 = scmp.lt.s32.totalorder %s15, 1
      %s184 = scalar_select %p183, %s15, 1
      %s185 = smul.addr %s184, 4
      %s186 = smul.addr %s185, 8
      %s187 = scalar_lea.vmem %s4, %s186
      %p188 = scmp.lt.s32.totalorder %s15, 1
      %s189 = scalar_select %p188, %s15, 1
      %s190 = smul.addr %s189, 36
      %s191 = smul.addr %s190, 4
      %s192 = scalar_lea.vmem %s0, %s191
      %p193 = scmp.lt.s32.totalorder %s15, 1
      %s194 = scalar_select %p193, %s15, 1
      %s195 = smul.addr %s194, 4
      %s196 = smul.addr %s195, 8
      %s197 = scalar_lea.vmem %s4, %s196
      %v199 = vld [vmem:[%s1] sm:$0xff]
      %v200 = vld [vmem:[%s1 + $0x8] sm:$0xf]
      %v201 = vld [vmem:[%s1 + $0xc] sm:$0xff]
      %v202 = vld [vmem:[%s1 + $0x14] sm:$0xf]
      %v203 = vld [vmem:[%s1 + $0x18] sm:$0xff]
      %v204 = vld [vmem:[%s1 + $0x20] sm:$0xf]
      %v205 = vld [vmem:[%s1 + $0x24] sm:$0xff]
      %v206 = vld [vmem:[%s1 + $0x2c] sm:$0xf]
      %v207 = vld [vmem:[%s192] sm:$0xf]
      %v208 = vld [vmem:[%s192 + $0x4] sm:$0xf]
      %v209 = vld [vmem:[%s192 + $0x8] sm:$0xf]
      %v210 = vld [vmem:[%s192 + $0xc] sm:$0xf]
      %v211 = vld [vmem:[%s192 + $0x10] sm:$0xf]
      %v212 = vld [vmem:[%s192 + $0x14] sm:$0xf]
      %v213 = vld [vmem:[%s192 + $0x18] sm:$0xf]
      %v214 = vld [vmem:[%s192 + $0x1c] sm:$0xf]
      %v215 = vld [vmem:[%s192 + $0x20] sm:$0xf]
      %v216 = vld [vmem:[%s192 + $0x24] sm:$0xf]
      %v217 = vld [vmem:[%s192 + $0x28] sm:$0xf]
      %v218 = vld [vmem:[%s192 + $0x2c] sm:$0xf]
      %v219 = vld [vmem:[%s192 + $0x30] sm:$0xf]
      %v220 = vld [vmem:[%s192 + $0x34] sm:$0xf]
      %v221 = vld [vmem:[%s192 + $0x38] sm:$0xf]
      %v222 = vld [vmem:[%s192 + $0x3c] sm:$0xf]
      %v223 = vld [vmem:[%s192 + $0x40] sm:$0xf]
      %v224 = vld [vmem:[%s192 + $0x44] sm:$0xf]
      %v225 = vld [vmem:[%s192 + $0x48] sm:$0xf]
      %v226 = vld [vmem:[%s192 + $0x4c] sm:$0xf]
      %v227 = vld [vmem:[%s192 + $0x50] sm:$0xf]
      %v228 = vld [vmem:[%s192 + $0x54] sm:$0xf]
      %v229 = vld [vmem:[%s192 + $0x58] sm:$0xf]
      %v230 = vld [vmem:[%s192 + $0x5c] sm:$0xf]
      %v231 = vld [vmem:[%s192 + $0x60] sm:$0xf]
      %v232 = vld [vmem:[%s192 + $0x64] sm:$0xf]
      %v233 = vld [vmem:[%s192 + $0x68] sm:$0xf]
      %v234 = vld [vmem:[%s192 + $0x6c] sm:$0xf]
      %v235 = vld [vmem:[%s192 + $0x70] sm:$0xf]
      %v236 = vld [vmem:[%s192 + $0x74] sm:$0xf]
      %v237 = vld [vmem:[%s192 + $0x78] sm:$0xf]
      %v238 = vld [vmem:[%s192 + $0x7c] sm:$0xf]
      %v239 = vld [vmem:[%s192 + $0x80] sm:$0xf]
      %v240 = vld [vmem:[%s192 + $0x84] sm:$0xf]
      %v241 = vld [vmem:[%s192 + $0x88] sm:$0xf]
      %v242 = vld [vmem:[%s192 + $0x8c] sm:$0xf]
      %v251 = vunpack.c.l.b16 %v199
      %v252 = vunpack.c.h.b16 %v199
      %v253 = vunpack.c.l.b16 %v200
      %v254 = vunpack.c.l.b16 %v201
      %v255 = vunpack.c.h.b16 %v201
      %v256 = vunpack.c.l.b16 %v202
      %v257 = vunpack.c.l.b16 %v203
      %v258 = vunpack.c.h.b16 %v203
      %v259 = vunpack.c.l.b16 %v204
      %v260 = vunpack.c.l.b16 %v205
      %v261 = vunpack.c.h.b16 %v205
      %v262 = vunpack.c.l.b16 %v206
      %v263 = vpack.c.b16 %v254, %v251
      %v264 = vpack.c.b16 %v255, %v252
      %v265 = vpack.c.b16 %v256, %v253
      %v266 = vpack.c.b16 %v260, %v257
      %v267 = vpack.c.b16 %v261, %v258
      %v268 = vpack.c.b16 %v262, %v259
      %v309 = vunpack.c.l.b16 %v207
      %v310 = vunpack.c.l.b16 %v208
      %v311 = vunpack.c.l.b16 %v209
      %v312 = vunpack.c.l.b16 %v210
      %v313 = vunpack.c.l.b16 %v211
      %v314 = vunpack.c.l.b16 %v212
      %v315 = vunpack.c.l.b16 %v213
      %v316 = vunpack.c.l.b16 %v214
      %v317 = vunpack.c.l.b16 %v215
      %v318 = vunpack.c.l.b16 %v216
      %v319 = vunpack.c.l.b16 %v217
      %v320 = vunpack.c.l.b16 %v218
      %v321 = vunpack.c.l.b16 %v219
      %v322 = vunpack.c.l.b16 %v220
      %v323 = vunpack.c.l.b16 %v221
      %v324 = vunpack.c.l.b16 %v222
      %v325 = vunpack.c.l.b16 %v223
      %v326 = vunpack.c.l.b16 %v224
      %v327 = vunpack.c.l.b16 %v225
      %v328 = vunpack.c.l.b16 %v226
      %v329 = vunpack.c.l.b16 %v227
      %v330 = vunpack.c.l.b16 %v228
      %v331 = vunpack.c.l.b16 %v229
      %v332 = vunpack.c.l.b16 %v230
      %v333 = vunpack.c.l.b16 %v231
      %v334 = vunpack.c.l.b16 %v232
      %v335 = vunpack.c.l.b16 %v233
      %v336 = vunpack.c.l.b16 %v234
      %v337 = vunpack.c.l.b16 %v235
      %v338 = vunpack.c.l.b16 %v236
      %v339 = vunpack.c.l.b16 %v237
      %v340 = vunpack.c.l.b16 %v238
      %v341 = vunpack.c.l.b16 %v239
      %v342 = vunpack.c.l.b16 %v240
      %v343 = vunpack.c.l.b16 %v241
      %v344 = vunpack.c.l.b16 %v242
      %v345 = vpack.c.b16 %v310, %v309
      %v346 = vpack.c.b16 %v312, %v311
      %v347 = vpack.c.b16 %v314, %v313
      %v348 = vpack.c.b16 %v316, %v315
      %v349 = vpack.c.b16 %v318, %v317
      %v350 = vpack.c.b16 %v320, %v319
      %v351 = vpack.c.b16 %v322, %v321
      %v352 = vpack.c.b16 %v324, %v323
      %v353 = vpack.c.b16 %v326, %v325
      %v354 = vpack.c.b16 %v328, %v327
      %v355 = vpack.c.b16 %v330, %v329
      %v356 = vpack.c.b16 %v332, %v331
      %v357 = vpack.c.b16 %v334, %v333
      %v358 = vpack.c.b16 %v336, %v335
      %v359 = vpack.c.b16 %v338, %v337
      %v360 = vpack.c.b16 %v340, %v339
      %v361 = vpack.c.b16 %v342, %v341
      %v362 = vpack.c.b16 %v344, %v343
      %vm381 = vcmask 261120
      %v383 = vsel %vm381, %v265, 0
      %v386 = vsel %vm381, %v268, 0
      %388 = vmatprep.subr.bf16.mxu0 0
      %389 = vmatpush1.bf16.msra.mxu0 %v345
      %390 = vmatprep.subr.bf16.mxu0 0
      %391 = vmatpush1.bf16.msra.mxu0 %v346
      %392 = vmatprep.subr.bf16.mxu0 0
      %393 = vmatpush1.bf16.msra.mxu0 %v347
      %394 = vmatprep.subr.bf16.mxu0 0
      %395 = vmatpush1.bf16.msra.mxu0 %v348
      %396 = vmatprep.subr.bf16.mxu0 0
      %397 = vmatpush1.bf16.msra.mxu0 %v349
      %398 = vmatprep.subr.bf16.mxu0 0
      %399 = vmatpush1.bf16.msra.mxu0 %v350
      %400 = vmatprep.subr.bf16.mxu0 0
      %401 = vmatpush1.bf16.msra.mxu0 %v351
      %402 = vmatprep.subr.bf16.mxu0 0
      %403 = vmatpush1.bf16.msra.mxu0 %v352
      %404 = vmatprep.subr.bf16.mxu0 0
      %405 = vmatpush1.bf16.msra.mxu0 %v353
      %406 = vmatprep.subr.bf16.mxu0 0
      %407 = vmatpush1.bf16.msra.mxu0 %v354
      %408 = vmatprep.subr.bf16.mxu0 0
      %409 = vmatpush1.bf16.msra.mxu0 %v355
      %410 = vmatprep.subr.bf16.mxu0 0
      %411 = vmatpush1.bf16.msra.mxu0 %v356
      %412 = vmatprep.subr.bf16.mxu0 0
      %413 = vmatpush1.bf16.msra.mxu0 %v357
      %414 = vmatprep.subr.bf16.mxu0 0
      %415 = vmatpush1.bf16.msra.mxu0 %v358
      %416 = vmatprep.subr.bf16.mxu0 0
      %417 = vmatpush1.bf16.msra.mxu0 %v359
      %418 = vmatprep.subr.bf16.mxu0 0
      %419 = vmatpush1.bf16.msra.mxu0 %v360
      %420 = vmatprep.mubr.bf16.mxu0 %v264
      %421 = vmatmul.mubr.bf16.gmra.mrb[0].mxu0 %v263
      %v422 = vpop.f32.mrb[0].mxu0
      %v423 = vadd.f32 0.0, %v422
      %v424 = vpop.f32.mrb[0].mxu0
      %v425 = vpop.f32.mrb[0].mxu0
      %v426 = vadd.f32 0.0, %v425
      %v427 = vpop.f32.mrb[0].mxu0
      %428 = vmatprep.mubr.bf16.mxu0 %v267
      %429 = vmatmul.mubr.bf16.gmra.mrb[0].mxu0 %v266
      %v430 = vpop.f32.mrb[0].mxu0
      %v431 = vadd.f32 0.0, %v430
      %v432 = vpop.f32.mrb[0].mxu0
      %v433 = vpop.f32.mrb[0].mxu0
      %v434 = vadd.f32 0.0, %v433
      %v435 = vpop.f32.mrb[0].mxu0
      %436 = vdwg.mxu0
      %437 = vmatprep.subr.bf16.mxu0 0
      %438 = vmatpush1.bf16.msra.mxu0 %v361
      %439 = vmatprep.subr.bf16.mxu0 0
      %440 = vmatpush1.bf16.msra.mxu0 %v362
      %441 = vmatprep.subr.bf16.mxu0 0
      %442 = vmatpush1.bf16.msra.mxu0 0
      %443 = vmatprep.subr.bf16.mxu0 0
      %444 = vmatpush1.bf16.msra.mxu0 0
      %445 = vmatprep.subr.bf16.mxu0 0
      %446 = vmatpush1.bf16.msra.mxu0 0
      %447 = vmatprep.subr.bf16.mxu0 0
      %448 = vmatpush1.bf16.msra.mxu0 0
      %449 = vmatprep.subr.bf16.mxu0 0
      %450 = vmatpush1.bf16.msra.mxu0 0
      %451 = vmatprep.subr.bf16.mxu0 0
      %452 = vmatpush1.bf16.msra.mxu0 0
      %453 = vmatprep.subr.bf16.mxu0 0
      %454 = vmatpush1.bf16.msra.mxu0 0
      %455 = vmatprep.subr.bf16.mxu0 0
      %456 = vmatpush1.bf16.msra.mxu0 0
      %457 = vmatprep.subr.bf16.mxu0 0
      %458 = vmatpush1.bf16.msra.mxu0 0
      %459 = vmatprep.subr.bf16.mxu0 0
      %460 = vmatpush1.bf16.msra.mxu0 0
      %461 = vmatprep.subr.bf16.mxu0 0
      %462 = vmatpush1.bf16.msra.mxu0 0
      %463 = vmatprep.subr.bf16.mxu0 0
      %464 = vmatpush1.bf16.msra.mxu0 0
      %465 = vmatprep.subr.bf16.mxu0 0
      %466 = vmatpush1.bf16.msra.mxu0 0
      %467 = vmatprep.subr.bf16.mxu0 0
      %468 = vmatpush1.bf16.msra.mxu0 0
      %469 = vmatprep.mubr.bf16.mxu0 0
      %470 = vmatmul.mubr.bf16.gmra.mrb[0].mxu0 %v383
      %v471 = vpop.f32.mrb[0].mxu0
      %v472 = vadd.f32 %v423, %v471
      %v473 = vpop.f32.mrb[0].mxu0
      %v474 = vpop.f32.mrb[0].mxu0
      %v475 = vadd.f32 %v426, %v474
      %v476 = vpop.f32.mrb[0].mxu0
      %477 = vmatprep.mubr.bf16.mxu0 0
      %478 = vmatmul.mubr.bf16.gmra.mrb[0].mxu0 %v386
      %v479 = vpop.f32.mrb[0].mxu0
      %v480 = vadd.f32 %v431, %v479
      %v481 = vpop.f32.mrb[0].mxu0
      %v482 = vpop.f32.mrb[0].mxu0
      %v483 = vadd.f32 %v434, %v482
      %v484 = vpop.f32.mrb[0].mxu0
      %485 = vdwg.mxu0
      %vm486 = vcmask 130048
      %v487 = vsel %vm486, %v472, 0.0
      %488 = vadd.xlane.f32.xlu0 %v487
      %v489 = vpop.xlane.xlu0 %488
      %v490 = vsel %vm486, %v475, 0.0
      %491 = vadd.xlane.f32.xlu0 %v490
      %v492 = vpop.xlane.xlu0 %491
      %v493 = vsel %vm486, %v480, 0.0
      %494 = vadd.xlane.f32.xlu0 %v493
      %v495 = vpop.xlane.xlu0 %494
      %v496 = vsel %vm486, %v483, 0.0
      %497 = vadd.xlane.f32.xlu0 %v496
      %v498 = vpop.xlane.xlu0 %497
      %v499 = vrcp.pop 16.0
      %v500 = vmul.f32 %v489, %v499
      %v501 = vmul.f32 %v492, %v499
      %v502 = vmul.f32 %v495, %v499
      %v503 = vmul.f32 %v498, %v499
      %v504 = vsub.f32 %v472, %v500
      %v505 = vsub.f32 %v475, %v501
      %v506 = vsub.f32 %v480, %v502
      %v507 = vsub.f32 %v483, %v503
      %v508 = vmul.f32 %v504, %v504
      %v509 = vmul.f32 %v505, %v505
      %v510 = vmul.f32 %v506, %v506
      %v511 = vmul.f32 %v507, %v507
      %v512 = vsel %vm486, %v508, 0.0
      %513 = vadd.xlane.f32.xlu0 %v512
      %v514 = vpop.xlane.xlu0 %513
      %v515 = vsel %vm486, %v509, 0.0
      %516 = vadd.xlane.f32.xlu0 %v515
      %v517 = vpop.xlane.xlu0 %516
      %v518 = vsel %vm486, %v510, 0.0
      %519 = vadd.xlane.f32.xlu0 %v518
      %v520 = vpop.xlane.xlu0 %519
      %v521 = vsel %vm486, %v511, 0.0
      %522 = vadd.xlane.f32.xlu0 %v521
      %v523 = vpop.xlane.xlu0 %522
      %v524 = vmul.f32 %v514, %v499
      %v525 = vmul.f32 %v517, %v499
      %v526 = vmul.f32 %v520, %v499
      %v527 = vmul.f32 %v523, %v499
      %v528 = vadd.f32 %v524, 1e-05
      %v529 = vadd.f32 %v525, 1e-05
      %v530 = vadd.f32 %v526, 1e-05
      %v531 = vadd.f32 %v527, 1e-05
      %v532 = vrsqrt.pop %v528
      %v533 = vrsqrt.pop %v529
      %v534 = vrsqrt.pop %v530
      %v535 = vrsqrt.pop %v531
      %v536 = vmul.f32 %v504, %v532
      %v537 = vmul.f32 %v505, %v533
      %v538 = vmul.f32 %v506, %v534
      %v539 = vmul.f32 %v507, %v535
      %v540 = vmax.f32 %v536, 0.0
      %v541 = vmax.f32 %v537, 0.0
      %v542 = vmax.f32 %v538, 0.0
      %v543 = vmax.f32 %v539, 0.0
      %v544 = vld [vmem:[%s2] sm:$0xf]
      %v545 = vld [vmem:[%s2 + $0x4] sm:$0xf]
      %v546 = vld [vmem:[%s2 + $0x8] sm:$0xf]
      %v547 = vld [vmem:[%s2 + $0xc] sm:$0xf]
      %v548 = vld [vmem:[%s2 + $0x10] sm:$0xf]
      %v549 = vld [vmem:[%s2 + $0x14] sm:$0xf]
      %v550 = vpack.c.bf16 %v541, %v540
      %v551 = vpack.c.bf16 %v543, %v542
      %v552 = vld [vmem:[%s3] sm:$0xff]
      %v553 = vld [vmem:[%s3 + $0x8] sm:$0xff]
      %v554 = vld [vmem:[%s3 + $0x10] sm:$0xff]
      %v555 = vld [vmem:[%s3 + $0x18] sm:$0xff]
      %v556 = vld [vmem:[%s3 + $0x20] sm:$0xff]
      %v557 = vld [vmem:[%s3 + $0x28] sm:$0xff]
      %559 = vset.pattern.permute.xlu0 0
      %560 = vperm.xlu0 %559, %v552
      %v561 = vpop.permute.xlu0 %560
      %564 = vset.pattern.permute.xlu0 0
      %565 = vperm.xlu0 %564, %v553
      %v566 = vpop.permute.xlu0 %565
      %569 = vset.pattern.permute.xlu0 0
      %570 = vperm.xlu0 %569, %v554
      %v571 = vpop.permute.xlu0 %570
      %574 = vset.pattern.permute.xlu0 0
      %575 = vperm.xlu0 %574, %v555
      %v576 = vpop.permute.xlu0 %575
      %579 = vset.pattern.permute.xlu0 0
      %580 = vperm.xlu0 %579, %v556
      %v581 = vpop.permute.xlu0 %580
      %584 = vset.pattern.permute.xlu0 0
      %585 = vperm.xlu0 %584, %v557
      %v586 = vpop.permute.xlu0 %585
      %v594 = vunpack.c.l.b16 %v544
      %v595 = vunpack.c.l.b16 %v545
      %v596 = vunpack.c.l.b16 %v546
      %v597 = vunpack.c.l.b16 %v547
      %v598 = vunpack.c.l.b16 %v548
      %v599 = vunpack.c.l.b16 %v549
      %v600 = vpack.c.b16 %v595, %v594
      %v601 = vpack.c.b16 %v597, %v596
      %v602 = vpack.c.b16 %v599, %v598
      %v604 = vsel %vm381, %v600, 0
      %v607 = vsel %vm381, %v601, 0
      %v610 = vsel %vm381, %v602, 0
      %612 = vmatprep.subr.bf16.mxu0 0
      %613 = vmatpush1.bf16.msra.mxu0 %v550
      %614 = vmatprep.subr.bf16.mxu0 0
      %615 = vmatpush1.bf16.msra.mxu0 %v551
      %616 = vmatprep.subr.bf16.mxu0 0
      %617 = vmatpush1.bf16.msra.mxu0 0
      %618 = vmatprep.subr.bf16.mxu0 0
      %619 = vmatpush1.bf16.msra.mxu0 0
      %620 = vmatprep.subr.bf16.mxu0 0
      %621 = vmatpush1.bf16.msra.mxu0 0
      %622 = vmatprep.subr.bf16.mxu0 0
      %623 = vmatpush1.bf16.msra.mxu0 0
      %624 = vmatprep.subr.bf16.mxu0 0
      %625 = vmatpush1.bf16.msra.mxu0 0
      %626 = vmatprep.subr.bf16.mxu0 0
      %627 = vmatpush1.bf16.msra.mxu0 0
      %628 = vmatprep.subr.bf16.mxu0 0
      %629 = vmatpush1.bf16.msra.mxu0 0
      %630 = vmatprep.subr.bf16.mxu0 0
      %631 = vmatpush1.bf16.msra.mxu0 0
      %632 = vmatprep.subr.bf16.mxu0 0
      %633 = vmatpush1.bf16.msra.mxu0 0
      %634 = vmatprep.subr.bf16.mxu0 0
      %635 = vmatpush1.bf16.msra.mxu0 0
      %636 = vmatprep.subr.bf16.mxu0 0
      %637 = vmatpush1.bf16.msra.mxu0 0
      %638 = vmatprep.subr.bf16.mxu0 0
      %639 = vmatpush1.bf16.msra.mxu0 0
      %640 = vmatprep.subr.bf16.mxu0 0
      %641 = vmatpush1.bf16.msra.mxu0 0
      %642 = vmatprep.subr.bf16.mxu0 0
      %643 = vmatpush1.bf16.msra.mxu0 0
      %644 = vmatprep.mubr.bf16.mxu0 0
      %645 = vmatmul.mubr.bf16.gmra.mrb[0].mxu0 %v604
      %v646 = vpop.f32.mrb[0].mxu0
      %v647 = vadd.f32 %v561, %v646
      %v648 = vpop.f32.mrb[0].mxu0
      %v649 = vpop.f32.mrb[0].mxu0
      %v650 = vadd.f32 %v566, %v649
      %v651 = vpop.f32.mrb[0].mxu0
      %652 = vmatprep.mubr.bf16.mxu0 0
      %653 = vmatmul.mubr.bf16.gmra.mrb[0].mxu0 %v607
      %v654 = vpop.f32.mrb[0].mxu0
      %v655 = vadd.f32 %v571, %v654
      %v656 = vpop.f32.mrb[0].mxu0
      %v657 = vpop.f32.mrb[0].mxu0
      %v658 = vadd.f32 %v576, %v657
      %v659 = vpop.f32.mrb[0].mxu0
      %660 = vmatprep.mubr.bf16.mxu0 0
      %661 = vmatmul.mubr.bf16.gmra.mrb[0].mxu0 %v610
      %v662 = vpop.f32.mrb[0].mxu0
      %v663 = vadd.f32 %v581, %v662
      %v664 = vpop.f32.mrb[0].mxu0
      %v665 = vpop.f32.mrb[0].mxu0
      %v666 = vadd.f32 %v586, %v665
      %v667 = vpop.f32.mrb[0].mxu0
      %668 = vdwg.mxu0
      %669 = vxpose.xlu0.b32.start [1/16] %v647, 128
      %670 = vxpose.xlu0.b32.cont [2/16] 0.0, 128
      %671 = vxpose.xlu0.b32.cont [3/16] 0.0, 128
      %672 = vxpose.xlu0.b32.cont [4/16] 0.0, 128
      %673 = vxpose.xlu0.b32.cont [5/16] 0.0, 128
      %674 = vxpose.xlu0.b32.cont [6/16] 0.0, 128
      %675 = vxpose.xlu0.b32.cont [7/16] 0.0, 128
      %676 = vxpose.xlu0.b32.cont [8/16] 0.0, 128
      %677 = vxpose.xlu0.b32.cont [9/16] 0.0, 128
      %678 = vxpose.xlu0.b32.cont [10/16] 0.0, 128
      %679 = vxpose.xlu0.b32.cont [11/16] 0.0, 128
      %680 = vxpose.xlu0.b32.cont [12/16] 0.0, 128
      %681 = vxpose.xlu0.b32.cont [13/16] 0.0, 128
      %682 = vxpose.xlu0.b32.cont [14/16] 0.0, 128
      %683 = vxpose.xlu0.b32.cont [15/16] 0.0, 128
      %684 = vxpose.xlu0.b32.end [16/16] 0.0, 128
      %v685 = vpop.trf.xlu0
      %v686 = vpop.trf.xlu0
      %v687 = vpop.trf.xlu0
      %v688 = vpop.trf.xlu0
      %v689 = vpop.trf.xlu0
      %v690 = vpop.trf.xlu0
      %v691 = vpop.trf.xlu0
      %v692 = vpop.trf.xlu0
      %v693 = vpop.trf.xlu0
      %v694 = vpop.trf.xlu0
      %v695 = vpop.trf.xlu0
      %v696 = vpop.trf.xlu0
      %v697 = vpop.trf.xlu0
      %v698 = vpop.trf.xlu0
      %v699 = vpop.trf.xlu0
      %v700 = vpop.trf.xlu0
      %vm701 = vcmask 64512
      %v703 = vsel %vm701, %v685, 0
      %v706 = vsel %vm701, %v686, 0
      %708 = vmatprep.subr.mxu0 0.0
      %709 = vmatpush1.msra.mxu0 %v650
      %710 = vmatprep.subr.mxu0 0.0
      %711 = vmatpush1.msra.mxu0 0.0
      %712 = vmatprep.subr.mxu0 0.0
      %713 = vmatpush1.msra.mxu0 0.0
      %714 = vmatprep.subr.mxu0 0.0
      %715 = vmatpush1.msra.mxu0 0.0
      %716 = vmatprep.subr.mxu0 0.0
      %717 = vmatpush1.msra.mxu0 0.0
      %718 = vmatprep.subr.mxu0 0.0
      %719 = vmatpush1.msra.mxu0 0.0
      %720 = vmatprep.subr.mxu0 0.0
      %721 = vmatpush1.msra.mxu0 0.0
      %722 = vmatprep.subr.mxu0 0.0
      %723 = vmatpush1.msra.mxu0 0.0
      %724 = vmatprep.subr.mxu0 0.0
      %725 = vmatpush1.msra.mxu0 0.0
      %726 = vmatprep.subr.mxu0 0.0
      %727 = vmatpush1.msra.mxu0 0.0
      %728 = vmatprep.subr.mxu0 0.0
      %729 = vmatpush1.msra.mxu0 0.0
      %730 = vmatprep.subr.mxu0 0.0
      %731 = vmatpush1.msra.mxu0 0.0
      %732 = vmatprep.subr.mxu0 0.0
      %733 = vmatpush1.msra.mxu0 0.0
      %734 = vmatprep.subr.mxu0 0.0
      %735 = vmatpush1.msra.mxu0 0.0
      %736 = vmatprep.subr.mxu0 0.0
      %737 = vmatpush1.msra.mxu0 0.0
      %738 = vmatprep.subr.mxu0 0.0
      %739 = vmatpush1.msra.mxu0 0.0
      %740 = vmatprep.subr.mxu0 0.0
      %741 = vmatpush1.msra.mxu0 0.0
      %742 = vmatprep.subr.mxu0 0.0
      %743 = vmatpush1.msra.mxu0 0.0
      %744 = vmatprep.subr.mxu0 0.0
      %745 = vmatpush1.msra.mxu0 0.0
      %746 = vmatprep.subr.mxu0 0.0
      %747 = vmatpush1.msra.mxu0 0.0
      %748 = vmatprep.subr.mxu0 0.0
      %749 = vmatpush1.msra.mxu0 0.0
      %750 = vmatprep.subr.mxu0 0.0
      %751 = vmatpush1.msra.mxu0 0.0
      %752 = vmatprep.subr.mxu0 0.0
      %753 = vmatpush1.msra.mxu0 0.0
      %754 = vmatprep.subr.mxu0 0.0
      %755 = vmatpush1.msra.mxu0 0.0
      %756 = vmatprep.subr.mxu0 0.0
      %757 = vmatpush1.msra.mxu0 0.0
      %758 = vmatprep.subr.mxu0 0.0
      %759 = vmatpush1.msra.mxu0 0.0
      %760 = vmatprep.subr.mxu0 0.0
      %761 = vmatpush1.msra.mxu0 0.0
      %762 = vmatprep.subr.mxu0 0.0
      %763 = vmatpush1.msra.mxu0 0.0
      %764 = vmatprep.subr.mxu0 0.0
      %765 = vmatpush1.msra.mxu0 0.0
      %766 = vmatprep.subr.mxu0 0.0
      %767 = vmatpush1.msra.mxu0 0.0
      %768 = vmatprep.subr.mxu0 0.0
      %769 = vmatpush1.msra.mxu0 0.0
      %770 = vmatprep.subr.mxu0 0.0
      %771 = vmatpush1.msra.mxu0 0.0
      %772 = vmatprep.mubr.f32.mxu0 0.0
      %773 = vmatmul.mubr.f32.gmra.mrb[0].mxu0 %v703
      %v774 = vpop.f32.mrb[0].mxu0
      %v775 = vadd.f32 0.0, %v774
      %v776 = vpop.f32.mrb[0].mxu0
      %777 = vmatprep.mubr.f32.mxu0 0.0
      %778 = vmatmul.mubr.f32.gmra.mrb[0].mxu0 %v706
      %v779 = vpop.f32.mrb[0].mxu0
      %v780 = vadd.f32 0.0, %v779
      %v781 = vpop.f32.mrb[0].mxu0
      %782 = vdwg.mxu0
      %v783 = vsel %vm486, %v775, -inf
      %784 = vmax.xlane.f32.xlu0 %v783
      %v785 = vpop.xlane.xlu0 %784
      %v786 = vsel %vm486, %v780, -inf
      %787 = vmax.xlane.f32.xlu0 %v786
      %v788 = vpop.xlane.xlu0 %787
      %v789 = vsub.f32 %v775, %v785
      %v790 = vsub.f32 %v780, %v788
      %v791 = vmul.f32 %v789, 1.442695
      %v792 = vpow.pop %v791
      %v793 = vmul.f32 %v790, 1.442695
      %v794 = vpow.pop %v793
      %v795 = vsel %vm486, %v792, 0.0
      %796 = vadd.xlane.f32.xlu0 %v795
      %v797 = vpop.xlane.xlu0 %796
      %v798 = vsel %vm486, %v794, 0.0
      %799 = vadd.xlane.f32.xlu0 %v798
      %v800 = vpop.xlane.xlu0 %799
      %v801 = vrcp.pop %v797
      %v802 = vrcp.pop %v800
      %v803 = vmul.f32 %v792, %v801
      %v804 = vmul.f32 %v794, %v802
      %v805 = vpack.c.bf16 %v658, %v655
      %v806 = vpack.c.bf16 %v666, %v663
      %v807 = vpack.c.bf16 %v804, %v803
      %v809 = vsel %vm486, %v805, 0
      %v812 = vsel %vm486, %v806, 0
      %v815 = vsel %vm486, %v807, 0
      %817 = vmatprep.subr.bf16.mxu0 0
      %818 = vmatpush1.bf16.xpose.msra.mxu0 %v815
      %819 = vmatprep.subr.bf16.mxu0 0
      %820 = vmatpush1.bf16.xpose.msra.mxu0 0
      %821 = vmatprep.subr.bf16.mxu0 0
      %822 = vmatpush1.bf16.xpose.msra.mxu0 0
      %823 = vmatprep.subr.bf16.mxu0 0
      %824 = vmatpush1.bf16.xpose.msra.mxu0 0
      %825 = vmatprep.subr.bf16.mxu0 0
      %826 = vmatpush1.bf16.xpose.msra.mxu0 0
      %827 = vmatprep.subr.bf16.mxu0 0
      %828 = vmatpush1.bf16.xpose.msra.mxu0 0
      %829 = vmatprep.subr.bf16.mxu0 0
      %830 = vmatpush1.bf16.xpose.msra.mxu0 0
      %831 = vmatprep.subr.bf16.mxu0 0
      %832 = vmatpush1.bf16.xpose.msra.mxu0 0
      %833 = vmatprep.subr.bf16.mxu0 0
      %834 = vmatpush1.bf16.xpose.msra.mxu0 0
      %835 = vmatprep.subr.bf16.mxu0 0
      %836 = vmatpush1.bf16.xpose.msra.mxu0 0
      %837 = vmatprep.subr.bf16.mxu0 0
      %838 = vmatpush1.bf16.xpose.msra.mxu0 0
      %839 = vmatprep.subr.bf16.mxu0 0
      %840 = vmatpush1.bf16.xpose.msra.mxu0 0
      %841 = vmatprep.subr.bf16.mxu0 0
      %842 = vmatpush1.bf16.xpose.msra.mxu0 0
      %843 = vmatprep.subr.bf16.mxu0 0
      %844 = vmatpush1.bf16.xpose.msra.mxu0 0
      %845 = vmatprep.subr.bf16.mxu0 0
      %846 = vmatpush1.bf16.xpose.msra.mxu0 0
      %847 = vmatprep.subr.bf16.mxu0 0
      %848 = vmatpush1.bf16.xpose.msra.mxu0 0
      %849 = vmatprep.mubr.bf16.mxu0 0
      %850 = vmatmul.mubr.bf16.gmra.mrb[0].mxu0 %v809
      %v851 = vpop.f32.mrb[0].mxu0
      %v852 = vadd.f32 %v540, %v851
      %v853 = vpop.f32.mrb[0].mxu0
      %v854 = vpop.f32.mrb[0].mxu0
      %v855 = vadd.f32 %v541, %v854
      %v856 = vpop.f32.mrb[0].mxu0
      %857 = vmatprep.mubr.bf16.mxu0 0
      %858 = vmatmul.mubr.bf16.gmra.mrb[0].mxu0 %v812
      %v859 = vpop.f32.mrb[0].mxu0
      %v860 = vadd.f32 %v542, %v859
      %v861 = vpop.f32.mrb[0].mxu0
      %v862 = vpop.f32.mrb[0].mxu0
      %v863 = vadd.f32 %v543, %v862
      %v864 = vpop.f32.mrb[0].mxu0
      %865 = vdwg.mxu0
      %866 = vst.msk [vmem:[%s197] sm:$0xff] %vm486, %v852
      %867 = vst.msk [vmem:[%s197 + $0x8] sm:$0xff] %vm486, %v855
      %868 = vst.msk [vmem:[%s197 + $0x10] sm:$0xff] %vm486, %v860
      %869 = vst.msk [vmem:[%s197 + $0x18] sm:$0xff] %vm486, %v863
      %p870 = scmp.lt.s32.totalorder %s15, 1
      %s871 = scalar_select %p870, %s15, 1
      %s872 = smul.addr %s871, 4
      %s873 = smul.addr %s872, 8
      %s874 = scalar_lea.vmem %s4, %s873
      // Predicated region
      $region37: #{attn_resnet_generator.13} parent=35 // pred_check
        %p875 = pneg %p122
      $region38: #{attn_resnet_generator.13} parent=35 // pred_check_branch
        %877 = sbr.rel (%p875) target = $region40
      $region39: #{attn_resnet_generator.13} parent=35 // pred_region
        _
      $region40: #{attn_resnet_generator.13} parent=35 // pred_fallthru
        _
    $region36: #{attn_resnet_generator.13} parent=5 // pred_fallthru
      _
    %p878 = scmp.le.s32.totalorder 2, %s10
    // Predicated region
    $region41: #{attn_resnet_generator.13} parent=5 // pred_check
      %p879 = pneg %p878
    $region42: #{attn_resnet_generator.13} parent=5 // pred_check_branch
      %881 = sbr.rel (%p879) target = $region44
    $region43: #{attn_resnet_generator.13} parent=5 // pred_region
      %s882 = ssub.s32 %s10, 2
      // Predicated region
      $region45: #{attn_resnet_generator.13} parent=43 // pred_check
        %p883 = pneg %p128
      $region46: #{attn_resnet_generator.13} parent=43 // pred_check_branch
        %885 = sbr.rel (%p883) target = $region48
      $region47: #{attn_resnet_generator.13} parent=43 // pred_region
        %p886 = scmp.lt.s32.totalorder %s16, 1
        %s887 = scalar_select %p886, %s16, 1
        %s888 = smul.addr %s887, 4
        %s889 = smul.addr %s888, 8
        %s890 = scalar_lea.vmem %s4, %s889
      $region48: #{attn_resnet_generator.13} parent=43 // pred_fallthru
        _
    $region44: #{attn_resnet_generator.13} parent=5 // pred_fallthru
      _
  $region6: #{attn_resnet_generator.13} parent=0 // loop_footer
    %s14 = sadd.s32 1, %s10
  $region7: #{attn_resnet_generator.13} parent=0 // loop_footer_branch
    %9 = sbr.rel target = $region3
  $region8: #{attn_resnet_generator.13} parent=0 // loop_exit
    _

// kernel: attn_resnet_generator.15
$region0: #{attn_resnet_generator.15}
  #allocation0 [shape = 'u32[]', space=smem, size = 0x4, offset = 0x4, fixed_abs, tag = 'smem constant byte address 0x4 - core index']
  #allocation1 [shape = 'u32[144,128]{1,0:T(1,128)}', space=vmem, size = 0x12000, scoped, tag = 'internal scratch']
  %s0 = inlined_call_operand.vmem [shape: f32[2,32,16], index: 0, kind: input, shape index: {}]
  %s1 = inlined_call_operand.vmem [shape: f32[16,64], index: 1, kind: input, shape index: {}]
  %s2 = inlined_call_operand.vmem [shape: f32[2,32,64], index: 2, kind: output, shape index: {}]
  %s3 = sld [smem:[#allocation0]]
  $region41: #{attn_resnet_generator.15} parent=0
    _
  %s5 = ssub.s32 1, %s3
  %s6 = scalar_select 0, %s5, %s3
  loop: start=0, step=1, limit=4
  $region2: #{attn_resnet_generator.15} parent=0 // loop_pre_header
    _
  $region3: #{attn_resnet_generator.15} parent=0 // loop_header
    %s8 = sphi 0, %s12
    %p9 = scmp.ge.s32.totalorder %s8, 4
    %s18 = sphi 0, %s20
    %s21 = sphi 0, %s18
    %s22 = sphi 0, %s21
    %s38 = sphi 0, %s22
    %s42 = sphi 0, %s42
    %s44 = sphi 0, %s42
    %s45 = sphi 0, %s44
    %s59 = sphi 0, %s45
    %s65 = sphi 0, %s67
    %s68 = sphi 0, %s65
    %s69 = sphi 0, %s68
    %s85 = sphi 0, %s69
  $region4: #{attn_resnet_generator.15} parent=0 // loop_header_branch
    %11 = sbr.rel (%p9) target = $region8
  $region5: #{attn_resnet_generator.15} parent=0 // loop_body
    %s13 = ssub.s32 %s8, 1
    %s14 = ssub.s32 %s8, 2
    %s15 = sadd.s32 %s8, 1
    %s16 = ssub.s32 %s8, %s15
    %p17 = scmp.eq.s32.totalorder %s16, 0
    %s19 = sadd.s32 %s18, 1
    %s20 = scalar_select %p17, %s18, %s19
    %p23 = pneg %p17
    %p24 = scmp.eq.s32.totalorder %s8, 1
    %p25 = por %p23, %p24
    %p26 = scmp.ne.s32.totalorder %s18, %s21
    %p27 = scmp.eq.s32.totalorder %s8, 0
    %p28 = por %p26, %p27
    %p29 = scmp.ne.s32.totalorder %s18, %s21
    %p30 = scmp.eq.s32.totalorder %s13, 1
    %p31 = por %p29, %p30
    %p32 = scmp.ne.s32.totalorder %s21, %s22
    %p33 = scmp.eq.s32.totalorder %s13, 0
    %p34 = por %p32, %p33
    %p35 = scmp.ne.s32.totalorder %s21, %s22
    %p36 = scmp.eq.s32.totalorder %s14, 1
    %p37 = por %p35, %p36
    %p39 = scmp.ne.s32.totalorder %s22, %s38
    %p40 = scmp.eq.s32.totalorder %s14, 0
    %p41 = por %p39, %p40
    %s43 = sadd.s32 %s42, 1
    %p46 = scmp.eq.s32.totalorder %s8, 1
    %p47 = scmp.ne.s32.totalorder %s42, %s44
    %p48 = scmp.eq.s32.totalorder %s8, 0
    %p49 = por %p47, %p48
    %p50 = scmp.ne.s32.totalorder %s42, %s44
    %p51 = scmp.eq.s32.totalorder %s13, 1
    %p52 = por %p50, %p51
    %p53 = scmp.ne.s32.totalorder %s44, %s45
    %p54 = scmp.eq.s32.totalorder %s13, 0
    %p55 = por %p53, %p54
    %p56 = scmp.ne.s32.totalorder %s44, %s45
    %p57 = scmp.eq.s32.totalorder %s14, 1
    %p58 = por %p56, %p57
    %p60 = scmp.ne.s32.totalorder %s45, %s59
    %p61 = scmp.eq.s32.totalorder %s14, 0
    %p62 = por %p60, %p61
    %s63 = ssub.s32 %s8, %s15
    %p64 = scmp.eq.s32.totalorder %s63, 0
    %s66 = sadd.s32 %s65, 1
    %s67 = scalar_select %p64, %s65, %s66
    %p70 = pneg %p64
    %p71 = scmp.eq.s32.totalorder %s8, 1
    %p72 = por %p70, %p71
    %p73 = scmp.ne.s32.totalorder %s65, %s68
    %p74 = scmp.eq.s32.totalorder %s8, 0
    %p75 = por %p73, %p74
    %p76 = scmp.ne.s32.totalorder %s65, %s68
    %p77 = scmp.eq.s32.totalorder %s13, 1
    %p78 = por %p76, %p77
    %p79 = scmp.ne.s32.totalorder %s68, %s69
    %p80 = scmp.eq.s32.totalorder %s13, 0
    %p81 = por %p79, %p80
    %p82 = scmp.ne.s32.totalorder %s68, %s69
    %p83 = scmp.eq.s32.totalorder %s14, 1
    %p84 = por %p82, %p83
    %p86 = scmp.ne.s32.totalorder %s69, %s85
    %p87 = scmp.eq.s32.totalorder %s14, 0
    %p88 = por %p86, %p87
    %p89 = scmp.le.s32.totalorder 1, %s8
    %p90 = scmp.lt.s32.totalorder %s8, 3
    %p91 = pnand %p89, %p90
    %p92 = pneg %p91
    // Predicated region
    $region9: #{attn_resnet_generator.15} parent=5 // pred_check
      _
    $region10: #{attn_resnet_generator.15} parent=5 // pred_check_branch
      %94 = sbr.rel (%p91) target = $region12
    $region11: #{attn_resnet_generator.15} parent=5 // pred_region
      %s95 = ssub.s32 %s8, 1
      // Predicated region
      $region13: #{attn_resnet_generator.15} parent=11 // pred_check
        %p96 = pneg %p55
      $region14: #{attn_resnet_generator.15} parent=11 // pred_check_branch
        %98 = sbr.rel (%p96) target = $region16
      $region15: #{attn_resnet_generator.15} parent=11 // pred_region
        _
      $region16: #{attn_resnet_generator.15} parent=11 // pred_fallthru
        _
    $region12: #{attn_resnet_generator.15} parent=5 // pred_fallthru
      _
    %p99 = scmp.lt.s32.totalorder %s8, 2
    // Predicated region
    $region17: #{attn_resnet_generator.15} parent=5 // pred_check
      %p100 = pneg %p99
    $region18: #{attn_resnet_generator.15} parent=5 // pred_check_branch
      %102 = sbr.rel (%p100) target = $region20
    $region19: #{attn_resnet_generator.15} parent=5 // pred_region
      // Predicated region
      $region21: #{attn_resnet_generator.15} parent=19 // pred_check
        %p103 = pneg %p28
      $region22: #{attn_resnet_generator.15} parent=19 // pred_check_branch
        %105 = sbr.rel (%p103) target = $region24
      $region23: #{attn_resnet_generator.15} parent=19 // pred_region
        %p106 = scmp.lt.s32.totalorder %s8, 1
        %s107 = scalar_select %p106, %s8, 1
        %s108 = smul.addr %s107, 4
        %s109 = smul.addr %s108, 8
        %s110 = scalar_lea.vmem %s0, %s109
      $region24: #{attn_resnet_generator.15} parent=19 // pred_fallthru
        _
    $region20: #{attn_resnet_generator.15} parent=5 // pred_fallthru
      _
    %p111 = scmp.le.s32.totalorder 1, %s8
    %p112 = scmp.lt.s32.totalorder %s8, 3
    %p113 = pnand %p111, %p112
    %p114 = pneg %p113
    // Predicated region
    $region25: #{attn_resnet_generator.15} parent=5 // pred_check
      _
    $region26: #{attn_resnet_generator.15} parent=5 // pred_check_branch
      %116 = sbr.rel (%p113) target = $region28
    $region27: #{attn_resnet_generator.15} parent=5 // pred_region
      %s117 = ssub.s32 %s8, 1
      %p118 = scmp.lt.s32.totalorder %s13, 1
      %s119 = scalar_select %p118, %s13, 1
      %s120 = smul.addr %s119, 4
      %s121 = smul.addr %s120, 8
      %s122 = scalar_lea.vmem %s0, %s121
      %p123 = pneg %p34
      %p124 = pneg %p31
      %p125 = pneg %p55
      %p126 = pneg %p52
      %p127 = pneg %p81
      %p128 = pneg %p78
      %p129 = scmp.lt.s32.totalorder %s13, 1
      %s130 = scalar_select %p129, %s13, 1
      %s131 = smul.addr %s130, 4
      %s132 = smul.addr %s131, 8
      %s133 = scalar_lea.vmem %s2, %s132
      %p134 = scmp.lt.s32.totalorder %s13, 1
      %s135 = scalar_select %p134, %s13, 1
      %s136 = smul.addr %s135, 4
      %s137 = smul.addr %s136, 8
      %s138 = scalar_lea.vmem %s0, %s137
      %p139 = scmp.lt.s32.totalorder %s13, 1
      %s140 = scalar_select %p139, %s13, 1
      %s141 = smul.addr %s140, 4
      %s142 = smul.addr %s141, 8
      %s143 = scalar_lea.vmem %s2, %s142
      %v144 = vld [vmem:[%s138] sm:$0xff]
      %v145 = vld [vmem:[%s138 + $0x8] sm:$0xff]
      %v146 = vld [vmem:[%s138 + $0x10] sm:$0xff]
      %v147 = vld [vmem:[%s138 + $0x18] sm:$0xff]
      %v148 = vld [vmem:[%s1] sm:$0xff]
      %v149 = vld [vmem:[%s1 + $0x8] sm:$0xff]
      %vm150 = vcmask 130048
      %v152 = vsel %vm150, %v144, 0
      %v155 = vsel %vm150, %v145, 0
      %v158 = vsel %vm150, %v146, 0
      %v161 = vsel %vm150, %v147, 0
      %163 = vmatprep.subr.mxu0 0.0
      %164 = vmatpush1.msra.mxu0 %v148
      %165 = vmatprep.subr.mxu0 0.0
      %166 = vmatpush1.msra.mxu0 %v149
      %167 = vmatprep.subr.mxu0 0.0
      %168 = vmatpush1.msra.mxu0 0.0
      %169 = vmatprep.subr.mxu0 0.0
      %170 = vmatpush1.msra.mxu0 0.0
      %171 = vmatprep.subr.mxu0 0.0
      %172 = vmatpush1.msra.mxu0 0.0
      %173 = vmatprep.subr.mxu0 0.0
      %174 = vmatpush1.msra.mxu0 0.0
      %175 = vmatprep.subr.mxu0 0.0
      %176 = vmatpush1.msra.mxu0 0.0
      %177 = vmatprep.subr.mxu0 0.0
      %178 = vmatpush1.msra.mxu0 0.0
      %179 = vmatprep.subr.mxu0 0.0
      %180 = vmatpush1.msra.mxu0 0.0
      %181 = vmatprep.subr.mxu0 0.0
      %182 = vmatpush1.msra.mxu0 0.0
      %183 = vmatprep.subr.mxu0 0.0
      %184 = vmatpush1.msra.mxu0 0.0
      %185 = vmatprep.subr.mxu0 0.0
      %186 = vmatpush1.msra.mxu0 0.0
      %187 = vmatprep.subr.mxu0 0.0
      %188 = vmatpush1.msra.mxu0 0.0
      %189 = vmatprep.subr.mxu0 0.0
      %190 = vmatpush1.msra.mxu0 0.0
      %191 = vmatprep.subr.mxu0 0.0
      %192 = vmatpush1.msra.mxu0 0.0
      %193 = vmatprep.subr.mxu0 0.0
      %194 = vmatpush1.msra.mxu0 0.0
      %195 = vmatprep.subr.mxu0 0.0
      %196 = vmatpush1.msra.mxu0 0.0
      %197 = vmatprep.subr.mxu0 0.0
      %198 = vmatpush1.msra.mxu0 0.0
      %199 = vmatprep.subr.mxu0 0.0
      %200 = vmatpush1.msra.mxu0 0.0
      %201 = vmatprep.subr.mxu0 0.0
      %202 = vmatpush1.msra.mxu0 0.0
      %203 = vmatprep.subr.mxu0 0.0
      %204 = vmatpush1.msra.mxu0 0.0
      %205 = vmatprep.subr.mxu0 0.0
      %206 = vmatpush1.msra.mxu0 0.0
      %207 = vmatprep.subr.mxu0 0.0
      %208 = vmatpush1.msra.mxu0 0.0
      %209 = vmatprep.subr.mxu0 0.0
      %210 = vmatpush1.msra.mxu0 0.0
      %211 = vmatprep.subr.mxu0 0.0
      %212 = vmatpush1.msra.mxu0 0.0
      %213 = vmatprep.subr.mxu0 0.0
      %214 = vmatpush1.msra.mxu0 0.0
      %215 = vmatprep.subr.mxu0 0.0
      %216 = vmatpush1.msra.mxu0 0.0
      %217 = vmatprep.subr.mxu0 0.0
      %218 = vmatpush1.msra.mxu0 0.0
      %219 = vmatprep.subr.mxu0 0.0
      %220 = vmatpush1.msra.mxu0 0.0
      %221 = vmatprep.subr.mxu0 0.0
      %222 = vmatpush1.msra.mxu0 0.0
      %223 = vmatprep.subr.mxu0 0.0
      %224 = vmatpush1.msra.mxu0 0.0
      %225 = vmatprep.subr.mxu0 0.0
      %226 = vmatpush1.msra.mxu0 0.0
      %227 = vmatprep.mubr.f32.mxu0 0.0
      %228 = vmatmul.mubr.f32.gmra.mrb[0].mxu0 %v152
      %v229 = vpop.f32.mrb[0].mxu0
      %v230 = vadd.f32 0.0, %v229
      %v231 = vpop.f32.mrb[0].mxu0
      %232 = vmatprep.mubr.f32.mxu0 0.0
      %233 = vmatmul.mubr.f32.gmra.mrb[0].mxu0 %v155
      %v234 = vpop.f32.mrb[0].mxu0
      %v235 = vadd.f32 0.0, %v234
      %v236 = vpop.f32.mrb[0].mxu0
      %237 = vmatprep.mubr.f32.mxu0 0.0
      %238 = vmatmul.mubr.f32.gmra.mrb[0].mxu0 %v158
      %v239 = vpop.f32.mrb[0].mxu0
      %v240 = vadd.f32 0.0, %v239
      %v241 = vpop.f32.mrb[0].mxu0
      %242 = vmatprep.mubr.f32.mxu0 0.0
      %243 = vmatmul.mubr.f32.gmra.mrb[0].mxu0 %v161
      %v244 = vpop.f32.mrb[0].mxu0
      %v245 = vadd.f32 0.0, %v244
      %v246 = vpop.f32.mrb[0].mxu0
      %247 = vdwg.mxu0
      %vm248 = vcmask 523264
      %249 = vst.msk [vmem:[%s143] sm:$0xff] %vm248, %v230
      %250 = vst.msk [vmem:[%s143 + $0x8] sm:$0xff] %vm248, %v235
      %251 = vst.msk [vmem:[%s143 + $0x10] sm:$0xff] %vm248, %v240
      %252 = vst.msk [vmem:[%s143 + $0x18] sm:$0xff] %vm248, %v245
      %p253 = scmp.lt.s32.totalorder %s13, 1
      %s254 = scalar_select %p253, %s13, 1
      %s255 = smul.addr %s254, 4
      %s256 = smul.addr %s255, 8
      %s257 = scalar_lea.vmem %s2, %s256
      // Predicated region
      $region29: #{attn_resnet_generator.15} parent=27 // pred_check
        %p258 = pneg %p78
      $region30: #{attn_resnet_generator.15} parent=27 // pred_check_branch
        %260 = sbr.rel (%p258) target = $region32
      $region31: #{attn_resnet_generator.15} parent=27 // pred_region
        _
      $region32: #{attn_resnet_generator.15} parent=27 // pred_fallthru
        _
    $region28: #{attn_resnet_generator.15} parent=5 // pred_fallthru
      _
    %p261 = scmp.le.s32.totalorder 2, %s8
    // Predicated region
    $region33: #{attn_resnet_generator.15} parent=5 // pred_check
      %p262 = pneg %p261
    $region34: #{attn_resnet_generator.15} parent=5 // pred_check_branch
      %264 = sbr.rel (%p262) target = $region36
    $region35: #{attn_resnet_generator.15} parent=5 // pred_region
      %s265 = ssub.s32 %s8, 2
      // Predicated region
      $region37: #{attn_resnet_generator.15} parent=35 // pred_check
        %p266 = pneg %p84
      $region38: #{attn_resnet_generator.15} parent=35 // pred_check_branch
        %268 = sbr.rel (%p266) target = $region40
      $region39: #{attn_resnet_generator.15} parent=35 // pred_region
        %p269 = scmp.lt.s32.totalorder %s14, 1
        %s270 = scalar_select %p269, %s14, 1
        %s271 = smul.addr %s270, 4
        %s272 = smul.addr %s271, 8
        %s273 = scalar_lea.vmem %s2, %s272
      $region40: #{attn_resnet_generator.15} parent=35 // pred_fallthru
        _
    $region36: #{attn_resnet_generator.15} parent=5 // pred_fallthru
      _
  $region6: #{attn_resnet_generator.15} parent=0 // loop_footer
    %s12 = sadd.s32 1, %s8
  $region7: #{attn_resnet_generator.15} parent=0 // loop_footer_branch
    %7 = sbr.rel target = $region3
  $region8: #{attn_resnet_generator.15} parent=0 // loop_exit
    _

// kernel: attn_resnet_generator.16
$region0: #{attn_resnet_generator.16}
  #allocation0 [shape = 'u32[]', space=smem, size = 0x4, offset = 0x4, fixed_abs, tag = 'smem constant byte address 0x4 - core index']
  #allocation1 [shape = 'u32[144,128]{1,0:T(1,128)}', space=vmem, size = 0x12000, scoped, tag = 'internal scratch']
  %s0 = inlined_call_operand.vmem [shape: bf16[2,288,64], index: 0, kind: input, shape index: {}]
  %s1 = inlined_call_operand.vmem [shape: bf16[16,288], index: 1, kind: input, shape index: {}]
  %s2 = inlined_call_operand.vmem [shape: bf16[32,16], index: 2, kind: input, shape index: {}]
  %s3 = inlined_call_operand.vmem [shape: f32[32,1], index: 3, kind: input, shape index: {}]
  %s4 = inlined_call_operand.vmem [shape: f32[2,16,64], index: 4, kind: output, shape index: {}]
  %s5 = sld [smem:[#allocation0]]
  $region49: #{attn_resnet_generator.16} parent=0
    _
  %s7 = ssub.s32 1, %s5
  %s8 = scalar_select 0, %s7, %s5
  loop: start=0, step=1, limit=4
  $region2: #{attn_resnet_generator.16} parent=0 // loop_pre_header
    _
  $region3: #{attn_resnet_generator.16} parent=0 // loop_header
    %s10 = sphi 0, %s14
    %p11 = scmp.ge.s32.totalorder %s10, 4
    %s20 = sphi 0, %s22
    %s23 = sphi 0, %s20
    %s24 = sphi 0, %s23
    %s40 = sphi 0, %s24
    %s44 = sphi 0, %s44
    %s46 = sphi 0, %s44
    %s47 = sphi 0, %s46
    %s61 = sphi 0, %s47
    %s65 = sphi 0, %s65
    %s67 = sphi 0, %s65
    %s68 = sphi 0, %s67
    %s82 = sphi 0, %s68
    %s86 = sphi 0, %s86
    %s88 = sphi 0, %s86
    %s89 = sphi 0, %s88
    %s103 = sphi 0, %s89
    %s109 = sphi 0, %s111
    %s112 = sphi 0, %s109
    %s113 = sphi 0, %s112
    %s129 = sphi 0, %s113
  $region4: #{attn_resnet_generator.16} parent=0 // loop_header_branch
    %13 = sbr.rel (%p11) target = $region8
  $region5: #{attn_resnet_generator.16} parent=0 // loop_body
    %s15 = ssub.s32 %s10, 1
    %s16 = ssub.s32 %s10, 2
    %s17 = sadd.s32 %s10, 1
    %s18 = ssub.s32 %s10, %s17
    %p19 = scmp.eq.s32.totalorder %s18, 0
    %s21 = sadd.s32 %s20, 1
    %s22 = scalar_select %p19, %s20, %s21
    %p25 = pneg %p19
    %p26 = scmp.eq.s32.totalorder %s10, 1
    %p27 = por %p25, %p26
    %p28 = scmp.ne.s32.totalorder %s20, %s23
    %p29 = scmp.eq.s32.totalorder %s10, 0
    %p30 = por %p28, %p29
    %p31 = scmp.ne.s32.totalorder %s20, %s23
    %p32 = scmp.eq.s32.totalorder %s15, 1
    %p33 = por %p31, %p32
    %p34 = scmp.ne.s32.totalorder %s23, %s24
    %p35 = scmp.eq.s32.totalorder %s15, 0
    %p36 = por %p34, %p35
    %p37 = scmp.ne.s32.totalorder %s23, %s24
    %p38 = scmp.eq.s32.totalorder %s16, 1
    %p39 = por %p37, %p38
    %p41 = scmp.ne.s32.totalorder %s24, %s40
    %p42 = scmp.eq.s32.totalorder %s16, 0
    %p43 = por %p41, %p42
    %s45 = sadd.s32 %s44, 1
    %p48 = scmp.eq.s32.totalorder %s10, 1
    %p49 = scmp.ne.s32.totalorder %s44, %s46
    %p50 = scmp.eq.s32.totalorder %s10, 0
    %p51 = por %p49, %p50
    %p52 = scmp.ne.s32.totalorder %s44, %s46
    %p53 = scmp.eq.s32.totalorder %s15, 1
    %p54 = por %p52, %p53
    %p55 = scmp.ne.s32.totalorder %s46, %s47
    %p56 = scmp.eq.s32.totalorder %s15, 0
    %p57 = por %p55, %p56
    %p58 = scmp.ne.s32.totalorder %s46, %s47
    %p59 = scmp.eq.s32.totalorder %s16, 1
    %p60 = por %p58, %p59
    %p62 = scmp.ne.s32.totalorder %s47, %s61
    %p63 = scmp.eq.s32.totalorder %s16, 0
    %p64 = por %p62, %p63
    %s66 = sadd.s32 %s65, 1
    %p69 = scmp.eq.s32.totalorder %s10, 1
    %p70 = scmp.ne.s32.totalorder %s65, %s67
    %p71 = scmp.eq.s32.totalorder %s10, 0
    %p72 = por %p70, %p71
    %p73 = scmp.ne.s32.totalorder %s65, %s67
    %p74 = scmp.eq.s32.totalorder %s15, 1
    %p75 = por %p73, %p74
    %p76 = scmp.ne.s32.totalorder %s67, %s68
    %p77 = scmp.eq.s32.totalorder %s15, 0
    %p78 = por %p76, %p77
    %p79 = scmp.ne.s32.totalorder %s67, %s68
    %p80 = scmp.eq.s32.totalorder %s16, 1
    %p81 = por %p79, %p80
    %p83 = scmp.ne.s32.totalorder %s68, %s82
    %p84 = scmp.eq.s32.totalorder %s16, 0
    %p85 = por %p83, %p84
    %s87 = sadd.s32 %s86, 1
    %p90 = scmp.eq.s32.totalorder %s10, 1
    %p91 = scmp.ne.s32.totalorder %s86, %s88
    %p92 = scmp.eq.s32.totalorder %s10, 0
    %p93 = por %p91, %p92
    %p94 = scmp.ne.s32.totalorder %s86, %s88
    %p95 = scmp.eq.s32.totalorder %s15, 1
    %p96 = por %p94, %p95
    %p97 = scmp.ne.s32.totalorder %s88, %s89
    %p98 = scmp.eq.s32.totalorder %s15, 0
    %p99 = por %p97, %p98
    %p100 = scmp.ne.s32.totalorder %s88, %s89
    %p101 = scmp.eq.s32.totalorder %s16, 1
    %p102 = por %p100, %p101
    %p104 = scmp.ne.s32.totalorder %s89, %s103
    %p105 = scmp.eq.s32.totalorder %s16, 0
    %p106 = por %p104, %p105
    %s107 = ssub.s32 %s10, %s17
    %p108 = scmp.eq.s32.totalorder %s107, 0
    %s110 = sadd.s32 %s109, 1
    %s111 = scalar_select %p108, %s109, %s110
    %p114 = pneg %p108
    %p115 = scmp.eq.s32.totalorder %s10, 1
    %p116 = por %p114, %p115
    %p117 = scmp.ne.s32.totalorder %s109, %s112
    %p118 = scmp.eq.s32.totalorder %s10, 0
    %p119 = por %p117, %p118
    %p120 = scmp.ne.s32.totalorder %s109, %s112
    %p121 = scmp.eq.s32.totalorder %s15, 1
    %p122 = por %p120, %p121
    %p123 = scmp.ne.s32.totalorder %s112, %s113
    %p124 = scmp.eq.s32.totalorder %s15, 0
    %p125 = por %p123, %p124
    %p126 = scmp.ne.s32.totalorder %s112, %s113
    %p127 = scmp.eq.s32.totalorder %s16, 1
    %p128 = por %p126, %p127
    %p130 = scmp.ne.s32.totalorder %s113, %s129
    %p131 = scmp.eq.s32.totalorder %s16, 0
    %p132 = por %p130, %p131
    %p133 = scmp.le.s32.totalorder 1, %s10
    %p134 = scmp.lt.s32.totalorder %s10, 3
    %p135 = pnand %p133, %p134
    %p136 = pneg %p135
    // Predicated region
    $region9: #{attn_resnet_generator.16} parent=5 // pred_check
      _
    $region10: #{attn_resnet_generator.16} parent=5 // pred_check_branch
      %138 = sbr.rel (%p135) target = $region12
    $region11: #{attn_resnet_generator.16} parent=5 // pred_region
      %s139 = ssub.s32 %s10, 1
      // Predicated region
      $region13: #{attn_resnet_generator.16} parent=11 // pred_check
        %p140 = pneg %p57
      $region14: #{attn_resnet_generator.16} parent=11 // pred_check_branch
        %142 = sbr.rel (%p140) target = $region16
      $region15: #{attn_resnet_generator.16} parent=11 // pred_region
        _
      $region16: #{attn_resnet_generator.16} parent=11 // pred_fallthru
        _
      // Predicated region
      $region17: #{attn_resnet_generator.16} parent=11 // pred_check
        %p143 = pneg %p78
      $region18: #{attn_resnet_generator.16} parent=11 // pred_check_branch
        %145 = sbr.rel (%p143) target = $region20
      $region19: #{attn_resnet_generator.16} parent=11 // pred_region
        _
      $region20: #{attn_resnet_generator.16} parent=11 // pred_fallthru
        _
      // Predicated region
      $region21: #{attn_resnet_generator.16} parent=11 // pred_check
        %p146 = pneg %p99
      $region22: #{attn_resnet_generator.16} parent=11 // pred_check_branch
        %148 = sbr.rel (%p146) target = $region24
      $region23: #{attn_resnet_generator.16} parent=11 // pred_region
        _
      $region24: #{attn_resnet_generator.16} parent=11 // pred_fallthru
        _
    $region12: #{attn_resnet_generator.16} parent=5 // pred_fallthru
      _
    %p149 = scmp.lt.s32.totalorder %s10, 2
    // Predicated region
    $region25: #{attn_resnet_generator.16} parent=5 // pred_check
      %p150 = pneg %p149
    $region26: #{attn_resnet_generator.16} parent=5 // pred_check_branch
      %152 = sbr.rel (%p150) target = $region28
    $region27: #{attn_resnet_generator.16} parent=5 // pred_region
      // Predicated region
      $region29: #{attn_resnet_generator.16} parent=27 // pred_check
        %p153 = pneg %p30
      $region30: #{attn_resnet_generator.16} parent=27 // pred_check_branch
        %155 = sbr.rel (%p153) target = $region32
      $region31: #{attn_resnet_generator.16} parent=27 // pred_region
        %p156 = scmp.lt.s32.totalorder %s10, 1
        %s157 = scalar_select %p156, %s10, 1
        %s158 = smul.addr %s157, 36
        %s159 = smul.addr %s158, 4
        %s160 = scalar_lea.vmem %s0, %s159
      $region32: #{attn_resnet_generator.16} parent=27 // pred_fallthru
        _
    $region28: #{attn_resnet_generator.16} parent=5 // pred_fallthru
      _
    %p161 = scmp.le.s32.totalorder 1, %s10
    %p162 = scmp.lt.s32.totalorder %s10, 3
    %p163 = pnand %p161, %p162
    %p164 = pneg %p163
    // Predicated region
    $region33: #{attn_resnet_generator.16} parent=5 // pred_check
      _
    $region34: #{attn_resnet_generator.16} parent=5 // pred_check_branch
      %166 = sbr.rel (%p163) target = $region36
    $region35: #{attn_resnet_generator.16} parent=5 // pred_region
      %s167 = ssub.s32 %s10, 1
      %p168 = scmp.lt.s32.totalorder %s15, 1
      %s169 = scalar_select %p168, %s15, 1
      %s170 = smul.addr %s169, 36
      %s171 = smul.addr %s170, 4
      %s172 = scalar_lea.vmem %s0, %s171
      %p173 = pneg %p36
      %p174 = pneg %p33
      %p175 = pneg %p57
      %p176 = pneg %p54
      %p177 = pneg %p78
      %p178 = pneg %p75
      %p179 = pneg %p99
      %p180 = pneg %p96
      %p181 = pneg %p125
      %p182 = pneg %p122
      %p183 = scmp.lt.s32.totalorder %s15, 1
      %s184 = scalar_select %p183, %s15, 1
      %s185 = smul.addr %s184, 2
      %s186 = smul.addr %s185, 8
      %s187 = scalar_lea.vmem %s4, %s186
      %p188 = scmp.lt.s32.totalorder %s15, 1
      %s189 = scalar_select %p188, %s15, 1
      %s190 = smul.addr %s189, 36
      %s191 = smul.addr %s190, 4
      %s192 = scalar_lea.vmem %s0, %s191
      %p193 = scmp.lt.s32.totalorder %s15, 1
      %s194 = scalar_select %p193, %s15, 1
      %s195 = smul.addr %s194, 2
      %s196 = smul.addr %s195, 8
      %s197 = scalar_lea.vmem %s4, %s196
      %v199 = vld [vmem:[%s1] sm:$0xff]
      %v200 = vld [vmem:[%s1 + $0x8] sm:$0xf]
      %v201 = vld [vmem:[%s1 + $0xc] sm:$0xff]
      %v202 = vld [vmem:[%s1 + $0x14] sm:$0xf]
      %v203 = vld [vmem:[%s192] sm:$0xf]
      %v204 = vld [vmem:[%s192 + $0x4] sm:$0xf]
      %v205 = vld [vmem:[%s192 + $0x8] sm:$0xf]
      %v206 = vld [vmem:[%s192 + $0xc] sm:$0xf]
      %v207 = vld [vmem:[%s192 + $0x10] sm:$0xf]
      %v208 = vld [vmem:[%s192 + $0x14] sm:$0xf]
      %v209 = vld [vmem:[%s192 + $0x18] sm:$0xf]
      %v210 = vld [vmem:[%s192 + $0x1c] sm:$0xf]
      %v211 = vld [vmem:[%s192 + $0x20] sm:$0xf]
      %v212 = vld [vmem:[%s192 + $0x24] sm:$0xf]
      %v213 = vld [vmem:[%s192 + $0x28] sm:$0xf]
      %v214 = vld [vmem:[%s192 + $0x2c] sm:$0xf]
      %v215 = vld [vmem:[%s192 + $0x30] sm:$0xf]
      %v216 = vld [vmem:[%s192 + $0x34] sm:$0xf]
      %v217 = vld [vmem:[%s192 + $0x38] sm:$0xf]
      %v218 = vld [vmem:[%s192 + $0x3c] sm:$0xf]
      %v219 = vld [vmem:[%s192 + $0x40] sm:$0xf]
      %v220 = vld [vmem:[%s192 + $0x44] sm:$0xf]
      %v221 = vld [vmem:[%s192 + $0x48] sm:$0xf]
      %v222 = vld [vmem:[%s192 + $0x4c] sm:$0xf]
      %v223 = vld [vmem:[%s192 + $0x50] sm:$0xf]
      %v224 = vld [vmem:[%s192 + $0x54] sm:$0xf]
      %v225 = vld [vmem:[%s192 + $0x58] sm:$0xf]
      %v226 = vld [vmem:[%s192 + $0x5c] sm:$0xf]
      %v227 = vld [vmem:[%s192 + $0x60] sm:$0xf]
      %v228 = vld [vmem:[%s192 + $0x64] sm:$0xf]
      %v229 = vld [vmem:[%s192 + $0x68] sm:$0xf]
      %v230 = vld [vmem:[%s192 + $0x6c] sm:$0xf]
      %v231 = vld [vmem:[%s192 + $0x70] sm:$0xf]
      %v232 = vld [vmem:[%s192 + $0x74] sm:$0xf]
      %v233 = vld [vmem:[%s192 + $0x78] sm:$0xf]
      %v234 = vld [vmem:[%s192 + $0x7c] sm:$0xf]
      %v235 = vld [vmem:[%s192 + $0x80] sm:$0xf]
      %v236 = vld [vmem:[%s192 + $0x84] sm:$0xf]
      %v237 = vld [vmem:[%s192 + $0x88] sm:$0xf]
      %v238 = vld [vmem:[%s192 + $0x8c] sm:$0xf]
      %v243 = vunpack.c.l.b16 %v199
      %v244 = vunpack.c.h.b16 %v199
      %v245 = vunpack.c.l.b16 %v200
      %v246 = vunpack.c.l.b16 %v201
      %v247 = vunpack.c.h.b16 %v201
      %v248 = vunpack.c.l.b16 %v202
      %v249 = vpack.c.b16 %v246, %v243
      %v250 = vpack.c.b16 %v247, %v244
      %v251 = vpack.c.b16 %v248, %v245
      %v290 = vunpack.c.l.b16 %v203
      %v291 = vunpack.c.l.b16 %v204
      %v292 = vunpack.c.l.b16 %v205
      %v293 = vunpack.c.l.b16 %v206
      %v294 = vunpack.c.l.b16 %v207
      %v295 = vunpack.c.l.b16 %v208
      %v296 = vunpack.c.l.b16 %v209
      %v297 = vunpack.c.l.b16 %v210
      %v298 = vunpack.c.l.b16 %v211
      %v299 = vunpack.c.l.b16 %v212
      %v300 = vunpack.c.l.b16 %v213
      %v301 = vunpack.c.l.b16 %v214
      %v302 = vunpack.c.l.b16 %v215
      %v303 = vunpack.c.l.b16 %v216
      %v304 = vunpack.c.l.b16 %v217
      %v305 = vunpack.c.l.b16 %v218
      %v306 = vunpack.c.l.b16 %v219
      %v307 = vunpack.c.l.b16 %v220
      %v308 = vunpack.c.l.b16 %v221
      %v309 = vunpack.c.l.b16 %v222
      %v310 = vunpack.c.l.b16 %v223
      %v311 = vunpack.c.l.b16 %v224
      %v312 = vunpack.c.l.b16 %v225
      %v313 = vunpack.c.l.b16 %v226
      %v314 = vunpack.c.l.b16 %v227
      %v315 = vunpack.c.l.b16 %v228
      %v316 = vunpack.c.l.b16 %v229
      %v317 = vunpack.c.l.b16 %v230
      %v318 = vunpack.c.l.b16 %v231
      %v319 = vunpack.c.l.b16 %v232
      %v320 = vunpack.c.l.b16 %v233
      %v321 = vunpack.c.l.b16 %v234
      %v322 = vunpack.c.l.b16 %v235
      %v323 = vunpack.c.l.b16 %v236
      %v324 = vunpack.c.l.b16 %v237
      %v325 = vunpack.c.l.b16 %v238
      %v326 = vpack.c.b16 %v291, %v290
      %v327 = vpack.c.b16 %v293, %v292
      %v328 = vpack.c.b16 %v295, %v294
      %v329 = vpack.c.b16 %v297, %v296
      %v330 = vpack.c.b16 %v299, %v298
      %v331 = vpack.c.b16 %v301, %v300
      %v332 = vpack.c.b16 %v303, %v302
      %v333 = vpack.c.b16 %v305, %v304
      %v334 = vpack.c.b16 %v307, %v306
      %v335 = vpack.c.b16 %v309, %v308
      %v336 = vpack.c.b16 %v311, %v310
      %v337 = vpack.c.b16 %v313, %v312
      %v338 = vpack.c.b16 %v315, %v314
      %v339 = vpack.c.b16 %v317, %v316
      %v340 = vpack.c.b16 %v319, %v318
      %v341 = vpack.c.b16 %v321, %v320
      %v342 = vpack.c.b16 %v323, %v322
      %v343 = vpack.c.b16 %v325, %v324
      %vm362 = vcmask 261120
      %v364 = vsel %vm362, %v251, 0
      %366 = vmatprep.subr.bf16.mxu0 0
      %367 = vmatpush1.bf16.msra.mxu0 %v326
      %368 = vmatprep.subr.bf16.mxu0 0
      %369 = vmatpush1.bf16.msra.mxu0 %v327
      %370 = vmatprep.subr.bf16.mxu0 0
      %371 = vmatpush1.bf16.msra.mxu0 %v328
      %372 = vmatprep.subr.bf16.mxu0 0
      %373 = vmatpush1.bf16.msra.mxu0 %v329
      %374 = vmatprep.subr.bf16.mxu0 0
      %375 = vmatpush1.bf16.msra.mxu0 %v330
      %376 = vmatprep.subr.bf16.mxu0 0
      %377 = vmatpush1.bf16.msra.mxu0 %v331
      %378 = vmatprep.subr.bf16.mxu0 0
      %379 = vmatpush1.bf16.msra.mxu0 %v332
      %380 = vmatprep.subr.bf16.mxu0 0
      %381 = vmatpush1.bf16.msra.mxu0 %v333
      %382 = vmatprep.subr.bf16.mxu0 0
      %383 = vmatpush1.bf16.msra.mxu0 %v334
      %384 = vmatprep.subr.bf16.mxu0 0
      %385 = vmatpush1.bf16.msra.mxu0 %v335
      %386 = vmatprep.subr.bf16.mxu0 0
      %387 = vmatpush1.bf16.msra.mxu0 %v336
      %388 = vmatprep.subr.bf16.mxu0 0
      %389 = vmatpush1.bf16.msra.mxu0 %v337
      %390 = vmatprep.subr.bf16.mxu0 0
      %391 = vmatpush1.bf16.msra.mxu0 %v338
      %392 = vmatprep.subr.bf16.mxu0 0
      %393 = vmatpush1.bf16.msra.mxu0 %v339
      %394 = vmatprep.subr.bf16.mxu0 0
      %395 = vmatpush1.bf16.msra.mxu0 %v340
      %396 = vmatprep.subr.bf16.mxu0 0
      %397 = vmatpush1.bf16.msra.mxu0 %v341
      %398 = vmatprep.mubr.bf16.mxu0 %v250
      %399 = vmatmul.mubr.bf16.gmra.mrb[0].mxu0 %v249
      %v400 = vpop.f32.mrb[0].mxu0
      %v401 = vadd.f32 0.0, %v400
      %v402 = vpop.f32.mrb[0].mxu0
      %v403 = vpop.f32.mrb[0].mxu0
      %v404 = vadd.f32 0.0, %v403
      %v405 = vpop.f32.mrb[0].mxu0
      %406 = vdwg.mxu0
      %407 = vmatprep.subr.bf16.mxu0 0
      %408 = vmatpush1.bf16.msra.mxu0 %v342
      %409 = vmatprep.subr.bf16.mxu0 0
      %410 = vmatpush1.bf16.msra.mxu0 %v343
      %411 = vmatprep.subr.bf16.mxu0 0
      %412 = vmatpush1.bf16.msra.mxu0 0
      %413 = vmatprep.subr.bf16.mxu0 0
      %414 = vmatpush1.bf16.msra.mxu0 0
      %415 = vmatprep.subr.bf16.mxu0 0
      %416 = vmatpush1.bf16.msra.mxu0 0
      %417 = vmatprep.subr.bf16.mxu0 0
      %418 = vmatpush1.bf16.msra.mxu0 0
      %419 = vmatprep.subr.bf16.mxu0 0
      %420 = vmatpush1.bf16.msra.mxu0 0
      %421 = vmatprep.subr.bf16.mxu0 0
      %422 = vmatpush1.bf16.msra.mxu0 0
      %423 = vmatprep.subr.bf16.mxu0 0
      %424 = vmatpush1.bf16.msra.mxu0 0
      %425 = vmatprep.subr.bf16.mxu0 0
      %426 = vmatpush1.bf16.msra.mxu0 0
      %427 = vmatprep.subr.bf16.mxu0 0
      %428 = vmatpush1.bf16.msra.mxu0 0
      %429 = vmatprep.subr.bf16.mxu0 0
      %430 = vmatpush1.bf16.msra.mxu0 0
      %431 = vmatprep.subr.bf16.mxu0 0
      %432 = vmatpush1.bf16.msra.mxu0 0
      %433 = vmatprep.subr.bf16.mxu0 0
      %434 = vmatpush1.bf16.msra.mxu0 0
      %435 = vmatprep.subr.bf16.mxu0 0
      %436 = vmatpush1.bf16.msra.mxu0 0
      %437 = vmatprep.subr.bf16.mxu0 0
      %438 = vmatpush1.bf16.msra.mxu0 0
      %439 = vmatprep.mubr.bf16.mxu0 0
      %440 = vmatmul.mubr.bf16.gmra.mrb[0].mxu0 %v364
      %v441 = vpop.f32.mrb[0].mxu0
      %v442 = vadd.f32 %v401, %v441
      %v443 = vpop.f32.mrb[0].mxu0
      %v444 = vpop.f32.mrb[0].mxu0
      %v445 = vadd.f32 %v404, %v444
      %v446 = vpop.f32.mrb[0].mxu0
      %447 = vdwg.mxu0
      %vm448 = vcmask 523264
      %v449 = vsel %vm448, %v442, 0.0
      %450 = vadd.xlane.f32.xlu0 %v449
      %v451 = vpop.xlane.xlu0 %450
      %v452 = vsel %vm448, %v445, 0.0
      %453 = vadd.xlane.f32.xlu0 %v452
      %v454 = vpop.xlane.xlu0 %453
      %v455 = vrcp.pop 64.0
      %v456 = vmul.f32 %v451, %v455
      %v457 = vmul.f32 %v454, %v455
      %v458 = vsub.f32 %v442, %v456
      %v459 = vsub.f32 %v445, %v457
      %v460 = vmul.f32 %v458, %v458
      %v461 = vmul.f32 %v459, %v459
      %v462 = vsel %vm448, %v460, 0.0
      %463 = vadd.xlane.f32.xlu0 %v462
      %v464 = vpop.xlane.xlu0 %463
      %v465 = vsel %vm448, %v461, 0.0
      %466 = vadd.xlane.f32.xlu0 %v465
      %v467 = vpop.xlane.xlu0 %466
      %v468 = vmul.f32 %v464, %v455
      %v469 = vmul.f32 %v467, %v455
      %v470 = vadd.f32 %v468, 1e-05
      %v471 = vadd.f32 %v469, 1e-05
      %v472 = vrsqrt.pop %v470
      %v473 = vrsqrt.pop %v471
      %v474 = vmul.f32 %v458, %v472
      %v475 = vmul.f32 %v459, %v473
      %v476 = vmax.f32 %v474, 0.0
      %v477 = vmax.f32 %v475, 0.0
      %v478 = vld [vmem:[%s2] sm:$0xf]
      %v479 = vld [vmem:[%s2 + $0x4] sm:$0xf]
      %v480 = vld [vmem:[%s2 + $0x8] sm:$0xf]
      %v481 = vld [vmem:[%s2 + $0xc] sm:$0xf]
      %v482 = vpack.c.bf16 %v477, %v476
      %v483 = vld [vmem:[%s3] sm:$0xff]
      %v484 = vld [vmem:[%s3 + $0x8] sm:$0xff]
      %v485 = vld [vmem:[%s3 + $0x10] sm:$0xff]
      %v486 = vld [vmem:[%s3 + $0x18] sm:$0xff]
      %488 = vset.pattern.permute.xlu0 0
      %489 = vperm.xlu0 %488, %v483
      %v490 = vpop.permute.xlu0 %489
      %493 = vset.pattern.permute.xlu0 0
      %494 = vperm.xlu0 %493, %v484
      %v495 = vpop.permute.xlu0 %494
      %498 = vset.pattern.permute.xlu0 0
      %499 = vperm.xlu0 %498, %v485
      %v500 = vpop.permute.xlu0 %499
      %503 = vset.pattern.permute.xlu0 0
      %504 = vperm.xlu0 %503, %v486
      %v505 = vpop.permute.xlu0 %504
      %v511 = vunpack.c.l.b16 %v478
      %v512 = vunpack.c.l.b16 %v479
      %v513 = vunpack.c.l.b16 %v480
      %v514 = vunpack.c.l.b16 %v481
      %v515 = vpack.c.b16 %v512, %v511
      %v516 = vpack.c.b16 %v514, %v513
      %vm517 = vcmask 130048
      %v519 = vsel %vm517, %v515, 0
      %v522 = vsel %vm517, %v516, 0
      %524 = vmatprep.subr.bf16.mxu0 0
      %525 = vmatpush1.bf16.msra.mxu0 %v482
      %526 = vmatprep.subr.bf16.mxu0 0
      %527 = vmatpush1.bf16.msra.mxu0 0
      %528 = vmatprep.subr.bf16.mxu0 0
      %529 = vmatpush1.bf16.msra.mxu0 0
      %530 = vmatprep.subr.bf16.mxu0 0
      %531 = vmatpush1.bf16.msra.mxu0 0
      %532 = vmatprep.subr.bf16.mxu0 0
      %533 = vmatpush1.bf16.msra.mxu0 0
      %534 = vmatprep.subr.bf16.mxu0 0
      %535 = vmatpush1.bf16.msra.mxu0 0
      %536 = vmatprep.subr.bf16.mxu0 0
      %537 = vmatpush1.bf16.msra.mxu0 0
      %538 = vmatprep.subr.bf16.mxu0 0
      %539 = vmatpush1.bf16.msra.mxu0 0
      %540 = vmatprep.subr.bf16.mxu0 0
      %541 = vmatpush1.bf16.msra.mxu0 0
      %542 = vmatprep.subr.bf16.mxu0 0
      %543 = vmatpush1.bf16.msra.mxu0 0
      %544 = vmatprep.subr.bf16.mxu0 0
      %545 = vmatpush1.bf16.msra.mxu0 0
      %546 = vmatprep.subr.bf16.mxu0 0
      %547 = vmatpush1.bf16.msra.mxu0 0
      %548 = vmatprep.subr.bf16.mxu0 0
      %549 = vmatpush1.bf16.msra.mxu0 0
      %550 = vmatprep.subr.bf16.mxu0 0
      %551 = vmatpush1.bf16.msra.mxu0 0
      %552 = vmatprep.subr.bf16.mxu0 0
      %553 = vmatpush1.bf16.msra.mxu0 0
      %554 = vmatprep.subr.bf16.mxu0 0
      %555 = vmatpush1.bf16.msra.mxu0 0
      %556 = vmatprep.mubr.bf16.mxu0 0
      %557 = vmatmul.mubr.bf16.gmra.mrb[0].mxu0 %v519
      %v558 = vpop.f32.mrb[0].mxu0
      %v559 = vadd.f32 %v490, %v558
      %v560 = vpop.f32.mrb[0].mxu0
      %v561 = vpop.f32.mrb[0].mxu0
      %v562 = vadd.f32 %v495, %v561
      %v563 = vpop.f32.mrb[0].mxu0
      %564 = vmatprep.mubr.bf16.mxu0 0
      %565 = vmatmul.mubr.bf16.gmra.mrb[0].mxu0 %v522
      %v566 = vpop.f32.mrb[0].mxu0
      %v567 = vadd.f32 %v500, %v566
      %v568 = vpop.f32.mrb[0].mxu0
      %v569 = vpop.f32.mrb[0].mxu0
      %v570 = vadd.f32 %v505, %v569
      %v571 = vpop.f32.mrb[0].mxu0
      %572 = vdwg.mxu0
      %573 = vxpose.xlu0.b32.start [1/16] %v559, 128
      %574 = vxpose.xlu0.b32.cont [2/16] 0.0, 128
      %575 = vxpose.xlu0.b32.cont [3/16] 0.0, 128
      %576 = vxpose.xlu0.b32.cont [4/16] 0.0, 128
      %577 = vxpose.xlu0.b32.cont [5/16] 0.0, 128
      %578 = vxpose.xlu0.b32.cont [6/16] 0.0, 128
      %579 = vxpose.xlu0.b32.cont [7/16] 0.0, 128
      %580 = vxpose.xlu0.b32.cont [8/16] 0.0, 128
      %581 = vxpose.xlu0.b32.cont [9/16] 0.0, 128
      %582 = vxpose.xlu0.b32.cont [10/16] 0.0, 128
      %583 = vxpose.xlu0.b32.cont [11/16] 0.0, 128
      %584 = vxpose.xlu0.b32.cont [12/16] 0.0, 128
      %585 = vxpose.xlu0.b32.cont [13/16] 0.0, 128
      %586 = vxpose.xlu0.b32.cont [14/16] 0.0, 128
      %587 = vxpose.xlu0.b32.cont [15/16] 0.0, 128
      %588 = vxpose.xlu0.b32.end [16/16] 0.0, 128
      %v589 = vpop.trf.xlu0
      %v590 = vpop.trf.xlu0
      %v591 = vpop.trf.xlu0
      %v592 = vpop.trf.xlu0
      %v593 = vpop.trf.xlu0
      %v594 = vpop.trf.xlu0
      %v595 = vpop.trf.xlu0
      %v596 = vpop.trf.xlu0
      %v597 = vpop.trf.xlu0
      %v598 = vpop.trf.xlu0
      %v599 = vpop.trf.xlu0
      %v600 = vpop.trf.xlu0
      %v601 = vpop.trf.xlu0
      %v602 = vpop.trf.xlu0
      %v603 = vpop.trf.xlu0
      %v604 = vpop.trf.xlu0
      %vm605 = vcmask 64512
      %v607 = vsel %vm605, %v589, 0
      %v610 = vsel %vm605, %v590, 0
      %v613 = vsel %vm605, %v591, 0
      %v616 = vsel %vm605, %v592, 0
      %v619 = vsel %vm605, %v593, 0
      %v622 = vsel %vm605, %v594, 0
      %v625 = vsel %vm605, %v595, 0
      %v628 = vsel %vm605, %v596, 0
      %630 = vmatprep.subr.mxu0 0.0
      %631 = vmatpush1.msra.mxu0 %v562
      %632 = vmatprep.subr.mxu0 0.0
      %633 = vmatpush1.msra.mxu0 0.0
      %634 = vmatprep.subr.mxu0 0.0
      %635 = vmatpush1.msra.mxu0 0.0
      %636 = vmatprep.subr.mxu0 0.0
      %637 = vmatpush1.msra.mxu0 0.0
      %638 = vmatprep.subr.mxu0 0.0
      %639 = vmatpush1.msra.mxu0 0.0
      %640 = vmatprep.subr.mxu0 0.0
      %641 = vmatpush1.msra.mxu0 0.0
      %642 = vmatprep.subr.mxu0 0.0
      %643 = vmatpush1.msra.mxu0 0.0
      %644 = vmatprep.subr.mxu0 0.0
      %645 = vmatpush1.msra.mxu0 0.0
      %646 = vmatprep.subr.mxu0 0.0
      %647 = vmatpush1.msra.mxu0 0.0
      %648 = vmatprep.subr.mxu0 0.0
      %649 = vmatpush1.msra.mxu0 0.0
      %650 = vmatprep.subr.mxu0 0.0
      %651 = vmatpush1.msra.mxu0 0.0
      %652 = vmatprep.subr.mxu0 0.0
      %653 = vmatpush1.msra.mxu0 0.0
      %654 = vmatprep.subr.mxu0 0.0
      %655 = vmatpush1.msra.mxu0 0.0
      %656 = vmatprep.subr.mxu0 0.0
      %657 = vmatpush1.msra.mxu0 0.0
      %658 = vmatprep.subr.mxu0 0.0
      %659 = vmatpush1.msra.mxu0 0.0
      %660 = vmatprep.subr.mxu0 0.0
      %661 = vmatpush1.msra.mxu0 0.0
      %662 = vmatprep.subr.mxu0 0.0
      %663 = vmatpush1.msra.mxu0 0.0
      %664 = vmatprep.subr.mxu0 0.0
      %665 = vmatpush1.msra.mxu0 0.0
      %666 = vmatprep.subr.mxu0 0.0
      %667 = vmatpush1.msra.mxu0 0.0
      %668 = vmatprep.subr.mxu0 0.0
      %669 = vmatpush1.msra.mxu0 0.0
      %670 = vmatprep.subr.mxu0 0.0
      %671 = vmatpush1.msra.mxu0 0.0
      %672 = vmatprep.subr.mxu0 0.0
      %673 = vmatpush1.msra.mxu0 0.0
      %674 = vmatprep.subr.mxu0 0.0
      %675 = vmatpush1.msra.mxu0 0.0
      %676 = vmatprep.subr.mxu0 0.0
      %677 = vmatpush1.msra.mxu0 0.0
      %678 = vmatprep.subr.mxu0 0.0
      %679 = vmatpush1.msra.mxu0 0.0
      %680 = vmatprep.subr.mxu0 0.0
      %681 = vmatpush1.msra.mxu0 0.0
      %682 = vmatprep.subr.mxu0 0.0
      %683 = vmatpush1.msra.mxu0 0.0
      %684 = vmatprep.subr.mxu0 0.0
      %685 = vmatpush1.msra.mxu0 0.0
      %686 = vmatprep.subr.mxu0 0.0
      %687 = vmatpush1.msra.mxu0 0.0
      %688 = vmatprep.subr.mxu0 0.0
      %689 = vmatpush1.msra.mxu0 0.0
      %690 = vmatprep.subr.mxu0 0.0
      %691 = vmatpush1.msra.mxu0 0.0
      %692 = vmatprep.subr.mxu0 0.0
      %693 = vmatpush1.msra.mxu0 0.0
      %694 = vmatprep.mubr.f32.mxu0 0.0
      %695 = vmatmul.mubr.f32.gmra.mrb[0].mxu0 %v607
      %v696 = vpop.f32.mrb[0].mxu0
      %v697 = vadd.f32 0.0, %v696
      %v698 = vpop.f32.mrb[0].mxu0
      %699 = vmatprep.mubr.f32.mxu0 0.0
      %700 = vmatmul.mubr.f32.gmra.mrb[0].mxu0 %v610
      %v701 = vpop.f32.mrb[0].mxu0
      %v702 = vadd.f32 0.0, %v701
      %v703 = vpop.f32.mrb[0].mxu0
      %704 = vmatprep.mubr.f32.mxu0 0.0
      %705 = vmatmul.mubr.f32.gmra.mrb[0].mxu0 %v613
      %v706 = vpop.f32.mrb[0].mxu0
      %v707 = vadd.f32 0.0, %v706
      %v708 = vpop.f32.mrb[0].mxu0
      %709 = vmatprep.mubr.f32.mxu0 0.0
      %710 = vmatmul.mubr.f32.gmra.mrb[0].mxu0 %v616
      %v711 = vpop.f32.mrb[0].mxu0
      %v712 = vadd.f32 0.0, %v711
      %v713 = vpop.f32.mrb[0].mxu0
      %714 = vmatprep.mubr.f32.mxu0 0.0
      %715 = vmatmul.mubr.f32.gmra.mrb[0].mxu0 %v619
      %v716 = vpop.f32.mrb[0].mxu0
      %v717 = vadd.f32 0.0, %v716
      %v718 = vpop.f32.mrb[0].mxu0
      %719 = vmatprep.mubr.f32.mxu0 0.0
      %720 = vmatmul.mubr.f32.gmra.mrb[0].mxu0 %v622
      %v721 = vpop.f32.mrb[0].mxu0
      %v722 = vadd.f32 0.0, %v721
      %v723 = vpop.f32.mrb[0].mxu0
      %724 = vmatprep.mubr.f32.mxu0 0.0
      %725 = vmatmul.mubr.f32.gmra.mrb[0].mxu0 %v625
      %v726 = vpop.f32.mrb[0].mxu0
      %v727 = vadd.f32 0.0, %v726
      %v728 = vpop.f32.mrb[0].mxu0
      %729 = vmatprep.mubr.f32.mxu0 0.0
      %730 = vmatmul.mubr.f32.gmra.mrb[0].mxu0 %v628
      %v731 = vpop.f32.mrb[0].mxu0
      %v732 = vadd.f32 0.0, %v731
      %v733 = vpop.f32.mrb[0].mxu0
      %734 = vdwg.mxu0
      %v735 = vsel %vm448, %v697, -inf
      %736 = vmax.xlane.f32.xlu0 %v735
      %v737 = vpop.xlane.xlu0 %736
      %v738 = vsel %vm448, %v702, -inf
      %739 = vmax.xlane.f32.xlu0 %v738
      %v740 = vpop.xlane.xlu0 %739
      %v741 = vsel %vm448, %v707, -inf
      %742 = vmax.xlane.f32.xlu0 %v741
      %v743 = vpop.xlane.xlu0 %742
      %v744 = vsel %vm448, %v712, -inf
      %745 = vmax.xlane.f32.xlu0 %v744
      %v746 = vpop.xlane.xlu0 %745
      %v747 = vsel %vm448, %v717, -inf
      %748 = vmax.xlane.f32.xlu0 %v747
      %v749 = vpop.xlane.xlu0 %748
      %v750 = vsel %vm448, %v722, -inf
      %751 = vmax.xlane.f32.xlu0 %v750
      %v752 = vpop.xlane.xlu0 %751
      %v753 = vsel %vm448, %v727, -inf
      %754 = vmax.xlane.f32.xlu0 %v753
      %v755 = vpop.xlane.xlu0 %754
      %v756 = vsel %vm448, %v732, -inf
      %757 = vmax.xlane.f32.xlu0 %v756
      %v758 = vpop.xlane.xlu0 %757
      %v759 = vsub.f32 %v697, %v737
      %v760 = vsub.f32 %v702, %v740
      %v761 = vsub.f32 %v707, %v743
      %v762 = vsub.f32 %v712, %v746
      %v763 = vsub.f32 %v717, %v749
      %v764 = vsub.f32 %v722, %v752
      %v765 = vsub.f32 %v727, %v755
      %v766 = vsub.f32 %v732, %v758
      %v767 = vmul.f32 %v759, 1.442695
      %v768 = vpow.pop %v767
      %v769 = vmul.f32 %v760, 1.442695
      %v770 = vpow.pop %v769
      %v771 = vmul.f32 %v761, 1.442695
      %v772 = vpow.pop %v771
      %v773 = vmul.f32 %v762, 1.442695
      %v774 = vpow.pop %v773
      %v775 = vmul.f32 %v763, 1.442695
      %v776 = vpow.pop %v775
      %v777 = vmul.f32 %v764, 1.442695
      %v778 = vpow.pop %v777
      %v779 = vmul.f32 %v765, 1.442695
      %v780 = vpow.pop %v779
      %v781 = vmul.f32 %v766, 1.442695
      %v782 = vpow.pop %v781
      %v783 = vsel %vm448, %v768, 0.0
      %784 = vadd.xlane.f32.xlu0 %v783
      %v785 = vpop.xlane.xlu0 %784
      %v786 = vsel %vm448, %v770, 0.0
      %787 = vadd.xlane.f32.xlu0 %v786
      %v788 = vpop.xlane.xlu0 %787
      %v789 = vsel %vm448, %v772, 0.0
      %790 = vadd.xlane.f32.xlu0 %v789
      %v791 = vpop.xlane.xlu0 %790
      %v792 = vsel %vm448, %v774, 0.0
      %793 = vadd.xlane.f32.xlu0 %v792
      %v794 = vpop.xlane.xlu0 %793
      %v795 = vsel %vm448, %v776, 0.0
      %796 = vadd.xlane.f32.xlu0 %v795
      %v797 = vpop.xlane.xlu0 %796
      %v798 = vsel %vm448, %v778, 0.0
      %799 = vadd.xlane.f32.xlu0 %v798
      %v800 = vpop.xlane.xlu0 %799
      %v801 = vsel %vm448, %v780, 0.0
      %802 = vadd.xlane.f32.xlu0 %v801
      %v803 = vpop.xlane.xlu0 %802
      %v804 = vsel %vm448, %v782, 0.0
      %805 = vadd.xlane.f32.xlu0 %v804
      %v806 = vpop.xlane.xlu0 %805
      %v807 = vrcp.pop %v785
      %v808 = vrcp.pop %v788
      %v809 = vrcp.pop %v791
      %v810 = vrcp.pop %v794
      %v811 = vrcp.pop %v797
      %v812 = vrcp.pop %v800
      %v813 = vrcp.pop %v803
      %v814 = vrcp.pop %v806
      %v815 = vmul.f32 %v768, %v807
      %v816 = vmul.f32 %v770, %v808
      %v817 = vmul.f32 %v772, %v809
      %v818 = vmul.f32 %v774, %v810
      %v819 = vmul.f32 %v776, %v811
      %v820 = vmul.f32 %v778, %v812
      %v821 = vmul.f32 %v780, %v813
      %v822 = vmul.f32 %v782, %v814
      %v823 = vpack.c.bf16 %v570, %v567
      %v824 = vpack.c.bf16 %v816, %v815
      %v825 = vpack.c.bf16 %v818, %v817
      %v826 = vpack.c.bf16 %v820, %v819
      %v827 = vpack.c.bf16 %v822, %v821
      %v829 = vsel %vm448, %v823, 0
      %v832 = vsel %vm448, %v824, 0
      %v835 = vsel %vm448, %v825, 0
      %v838 = vsel %vm448, %v826, 0
      %v841 = vsel %vm448, %v827, 0
      %843 = vmatprep.subr.bf16.mxu0 0
      %844 = vmatpush1.bf16.xpose.msra.mxu0 %v832
      %845 = vmatprep.subr.bf16.mxu0 0
      %846 = vmatpush1.bf16.xpose.msra.mxu0 %v835
      %847 = vmatprep.subr.bf16.mxu0 0
      %848 = vmatpush1.bf16.xpose.msra.mxu0 %v838
      %849 = vmatprep.subr.bf16.mxu0 0
      %850 = vmatpush1.bf16.xpose.msra.mxu0 %v841
      %851 = vmatprep.subr.bf16.mxu0 0
      %852 = vmatpush1.bf16.xpose.msra.mxu0 0
      %853 = vmatprep.subr.bf16.mxu0 0
      %854 = vmatpush1.bf16.xpose.msra.mxu0 0
      %855 = vmatprep.subr.bf16.mxu0 0
      %856 = vmatpush1.bf16.xpose.msra.mxu0 0
      %857 = vmatprep.subr.bf16.mxu0 0
      %858 = vmatpush1.bf16.xpose.msra.mxu0 0
      %859 = vmatprep.subr.bf16.mxu0 0
      %860 = vmatpush1.bf16.xpose.msra.mxu0 0
      %861 = vmatprep.subr.bf16.mxu0 0
      %862 = vmatpush1.bf16.xpose.msra.mxu0 0
      %863 = vmatprep.subr.bf16.mxu0 0
      %864 = vmatpush1.bf16.xpose.msra.mxu0 0
      %865 = vmatprep.subr.bf16.mxu0 0
      %866 = vmatpush1.bf16.xpose.msra.mxu0 0
      %867 = vmatprep.subr.bf16.mxu0 0
      %868 = vmatpush1.bf16.xpose.msra.mxu0 0
      %869 = vmatprep.subr.bf16.mxu0 0
      %870 = vmatpush1.bf16.xpose.msra.mxu0 0
      %871 = vmatprep.subr.bf16.mxu0 0
      %872 = vmatpush1.bf16.xpose.msra.mxu0 0
      %873 = vmatprep.subr.bf16.mxu0 0
      %874 = vmatpush1.bf16.xpose.msra.mxu0 0
      %875 = vmatprep.mubr.bf16.mxu0 0
      %876 = vmatmul.mubr.bf16.gmra.mrb[0].mxu0 %v829
      %v877 = vpop.f32.mrb[0].mxu0
      %v878 = vadd.f32 %v476, %v877
      %v879 = vpop.f32.mrb[0].mxu0
      %v880 = vpop.f32.mrb[0].mxu0
      %v881 = vadd.f32 %v477, %v880
      %v882 = vpop.f32.mrb[0].mxu0
      %883 = vdwg.mxu0
      %884 = vst.msk [vmem:[%s197] sm:$0xff] %vm448, %v878
      %885 = vst.msk [vmem:[%s197 + $0x8] sm:$0xff] %vm448, %v881
      %p886 = scmp.lt.s32.totalorder %s15, 1
      %s887 = scalar_select %p886, %s15, 1
      %s888 = smul.addr %s887, 2
      %s889 = smul.addr %s888, 8
      %s890 = scalar_lea.vmem %s4, %s889
      // Predicated region
      $region37: #{attn_resnet_generator.16} parent=35 // pred_check
        %p891 = pneg %p122
      $region38: #{attn_resnet_generator.16} parent=35 // pred_check_branch
        %893 = sbr.rel (%p891) target = $region40
      $region39: #{attn_resnet_generator.16} parent=35 // pred_region
        _
      $region40: #{attn_resnet_generator.16} parent=35 // pred_fallthru
        _
    $region36: #{attn_resnet_generator.16} parent=5 // pred_fallthru
      _
    %p894 = scmp.le.s32.totalorder 2, %s10
    // Predicated region
    $region41: #{attn_resnet_generator.16} parent=5 // pred_check
      %p895 = pneg %p894
    $region42: #{attn_resnet_generator.16} parent=5 // pred_check_branch
      %897 = sbr.rel (%p895) target = $region44
    $region43: #{attn_resnet_generator.16} parent=5 // pred_region
      %s898 = ssub.s32 %s10, 2
      // Predicated region
      $region45: #{attn_resnet_generator.16} parent=43 // pred_check
        %p899 = pneg %p128
      $region46: #{attn_resnet_generator.16} parent=43 // pred_check_branch
        %901 = sbr.rel (%p899) target = $region48
      $region47: #{attn_resnet_generator.16} parent=43 // pred_region
        %p902 = scmp.lt.s32.totalorder %s16, 1
        %s903 = scalar_select %p902, %s16, 1
        %s904 = smul.addr %s903, 2
        %s905 = smul.addr %s904, 8
        %s906 = scalar_lea.vmem %s4, %s905
      $region48: #{attn_resnet_generator.16} parent=43 // pred_fallthru
        _
    $region44: #{attn_resnet_generator.16} parent=5 // pred_fallthru
      _
  $region6: #{attn_resnet_generator.16} parent=0 // loop_footer
    %s14 = sadd.s32 1, %s10
  $region7: #{attn_resnet_generator.16} parent=0 // loop_footer_branch
    %9 = sbr.rel target = $region3
  $region8: #{attn_resnet_generator.16} parent=0 // loop_exit
    _

// kernel: attn_resnet_generator.17
$region0: #{attn_resnet_generator.17}
  #allocation0 [shape = 'u32[]', space=smem, size = 0x4, offset = 0x4, fixed_abs, tag = 'smem constant byte address 0x4 - core index']
  #allocation1 [shape = 'u32[144,128]{1,0:T(1,128)}', space=vmem, size = 0x12000, scoped, tag = 'internal scratch']
  %s0 = inlined_call_operand.vmem [shape: f32[2,16,64], index: 0, kind: input, shape index: {}]
  %s1 = inlined_call_operand.vmem [shape: f32[64,256], index: 1, kind: input, shape index: {}]
  %s2 = inlined_call_operand.vmem [shape: f32[2,16,256], index: 2, kind: output, shape index: {}]
  %s3 = sld [smem:[#allocation0]]
  $region41: #{attn_resnet_generator.17} parent=0
    _
  %s5 = ssub.s32 1, %s3
  %s6 = scalar_select 0, %s5, %s3
  loop: start=0, step=1, limit=4
  $region2: #{attn_resnet_generator.17} parent=0 // loop_pre_header
    _
  $region3: #{attn_resnet_generator.17} parent=0 // loop_header
    %s8 = sphi 0, %s12
    %p9 = scmp.ge.s32.totalorder %s8, 4
    %s18 = sphi 0, %s20
    %s21 = sphi 0, %s18
    %s22 = sphi 0, %s21
    %s38 = sphi 0, %s22
    %s42 = sphi 0, %s42
    %s44 = sphi 0, %s42
    %s45 = sphi 0, %s44
    %s59 = sphi 0, %s45
    %s65 = sphi 0, %s67
    %s68 = sphi 0, %s65
    %s69 = sphi 0, %s68
    %s85 = sphi 0, %s69
  $region4: #{attn_resnet_generator.17} parent=0 // loop_header_branch
    %11 = sbr.rel (%p9) target = $region8
  $region5: #{attn_resnet_generator.17} parent=0 // loop_body
    %s13 = ssub.s32 %s8, 1
    %s14 = ssub.s32 %s8, 2
    %s15 = sadd.s32 %s8, 1
    %s16 = ssub.s32 %s8, %s15
    %p17 = scmp.eq.s32.totalorder %s16, 0
    %s19 = sadd.s32 %s18, 1
    %s20 = scalar_select %p17, %s18, %s19
    %p23 = pneg %p17
    %p24 = scmp.eq.s32.totalorder %s8, 1
    %p25 = por %p23, %p24
    %p26 = scmp.ne.s32.totalorder %s18, %s21
    %p27 = scmp.eq.s32.totalorder %s8, 0
    %p28 = por %p26, %p27
    %p29 = scmp.ne.s32.totalorder %s18, %s21
    %p30 = scmp.eq.s32.totalorder %s13, 1
    %p31 = por %p29, %p30
    %p32 = scmp.ne.s32.totalorder %s21, %s22
    %p33 = scmp.eq.s32.totalorder %s13, 0
    %p34 = por %p32, %p33
    %p35 = scmp.ne.s32.totalorder %s21, %s22
    %p36 = scmp.eq.s32.totalorder %s14, 1
    %p37 = por %p35, %p36
    %p39 = scmp.ne.s32.totalorder %s22, %s38
    %p40 = scmp.eq.s32.totalorder %s14, 0
    %p41 = por %p39, %p40
    %s43 = sadd.s32 %s42, 1
    %p46 = scmp.eq.s32.totalorder %s8, 1
    %p47 = scmp.ne.s32.totalorder %s42, %s44
    %p48 = scmp.eq.s32.totalorder %s8, 0
    %p49 = por %p47, %p48
    %p50 = scmp.ne.s32.totalorder %s42, %s44
    %p51 = scmp.eq.s32.totalorder %s13, 1
    %p52 = por %p50, %p51
    %p53 = scmp.ne.s32.totalorder %s44, %s45
    %p54 = scmp.eq.s32.totalorder %s13, 0
    %p55 = por %p53, %p54
    %p56 = scmp.ne.s32.totalorder %s44, %s45
    %p57 = scmp.eq.s32.totalorder %s14, 1
    %p58 = por %p56, %p57
    %p60 = scmp.ne.s32.totalorder %s45, %s59
    %p61 = scmp.eq.s32.totalorder %s14, 0
    %p62 = por %p60, %p61
    %s63 = ssub.s32 %s8, %s15
    %p64 = scmp.eq.s32.totalorder %s63, 0
    %s66 = sadd.s32 %s65, 1
    %s67 = scalar_select %p64, %s65, %s66
    %p70 = pneg %p64
    %p71 = scmp.eq.s32.totalorder %s8, 1
    %p72 = por %p70, %p71
    %p73 = scmp.ne.s32.totalorder %s65, %s68
    %p74 = scmp.eq.s32.totalorder %s8, 0
    %p75 = por %p73, %p74
    %p76 = scmp.ne.s32.totalorder %s65, %s68
    %p77 = scmp.eq.s32.totalorder %s13, 1
    %p78 = por %p76, %p77
    %p79 = scmp.ne.s32.totalorder %s68, %s69
    %p80 = scmp.eq.s32.totalorder %s13, 0
    %p81 = por %p79, %p80
    %p82 = scmp.ne.s32.totalorder %s68, %s69
    %p83 = scmp.eq.s32.totalorder %s14, 1
    %p84 = por %p82, %p83
    %p86 = scmp.ne.s32.totalorder %s69, %s85
    %p87 = scmp.eq.s32.totalorder %s14, 0
    %p88 = por %p86, %p87
    %p89 = scmp.le.s32.totalorder 1, %s8
    %p90 = scmp.lt.s32.totalorder %s8, 3
    %p91 = pnand %p89, %p90
    %p92 = pneg %p91
    // Predicated region
    $region9: #{attn_resnet_generator.17} parent=5 // pred_check
      _
    $region10: #{attn_resnet_generator.17} parent=5 // pred_check_branch
      %94 = sbr.rel (%p91) target = $region12
    $region11: #{attn_resnet_generator.17} parent=5 // pred_region
      %s95 = ssub.s32 %s8, 1
      // Predicated region
      $region13: #{attn_resnet_generator.17} parent=11 // pred_check
        %p96 = pneg %p55
      $region14: #{attn_resnet_generator.17} parent=11 // pred_check_branch
        %98 = sbr.rel (%p96) target = $region16
      $region15: #{attn_resnet_generator.17} parent=11 // pred_region
        _
      $region16: #{attn_resnet_generator.17} parent=11 // pred_fallthru
        _
    $region12: #{attn_resnet_generator.17} parent=5 // pred_fallthru
      _
    %p99 = scmp.lt.s32.totalorder %s8, 2
    // Predicated region
    $region17: #{attn_resnet_generator.17} parent=5 // pred_check
      %p100 = pneg %p99
    $region18: #{attn_resnet_generator.17} parent=5 // pred_check_branch
      %102 = sbr.rel (%p100) target = $region20
    $region19: #{attn_resnet_generator.17} parent=5 // pred_region
      // Predicated region
      $region21: #{attn_resnet_generator.17} parent=19 // pred_check
        %p103 = pneg %p28
      $region22: #{attn_resnet_generator.17} parent=19 // pred_check_branch
        %105 = sbr.rel (%p103) target = $region24
      $region23: #{attn_resnet_generator.17} parent=19 // pred_region
        %p106 = scmp.lt.s32.totalorder %s8, 1
        %s107 = scalar_select %p106, %s8, 1
        %s108 = smul.addr %s107, 2
        %s109 = smul.addr %s108, 8
        %s110 = scalar_lea.vmem %s0, %s109
      $region24: #{attn_resnet_generator.17} parent=19 // pred_fallthru
        _
    $region20: #{attn_resnet_generator.17} parent=5 // pred_fallthru
      _
    %p111 = scmp.le.s32.totalorder 1, %s8
    %p112 = scmp.lt.s32.totalorder %s8, 3
    %p113 = pnand %p111, %p112
    %p114 = pneg %p113
    // Predicated region
    $region25: #{attn_resnet_generator.17} parent=5 // pred_check
      _
    $region26: #{attn_resnet_generator.17} parent=5 // pred_check_branch
      %116 = sbr.rel (%p113) target = $region28
    $region27: #{attn_resnet_generator.17} parent=5 // pred_region
      %s117 = ssub.s32 %s8, 1
      %p118 = scmp.lt.s32.totalorder %s13, 1
      %s119 = scalar_select %p118, %s13, 1
      %s120 = smul.addr %s119, 2
      %s121 = smul.addr %s120, 8
      %s122 = scalar_lea.vmem %s0, %s121
      %p123 = pneg %p34
      %p124 = pneg %p31
      %p125 = pneg %p55
      %p126 = pneg %p52
      %p127 = pneg %p81
      %p128 = pneg %p78
      %p129 = scmp.lt.s32.totalorder %s13, 1
      %s130 = scalar_select %p129, %s13, 1
      %s131 = smul.addr %s130, 4
      %s132 = smul.addr %s131, 8
      %s133 = scalar_lea.vmem %s2, %s132
      %p134 = scmp.lt.s32.totalorder %s13, 1
      %s135 = scalar_select %p134, %s13, 1
      %s136 = smul.addr %s135, 2
      %s137 = smul.addr %s136, 8
      %s138 = scalar_lea.vmem %s0, %s137
      %p139 = scmp.lt.s32.totalorder %s13, 1
      %s140 = scalar_select %p139, %s13, 1
      %s141 = smul.addr %s140, 4
      %s142 = smul.addr %s141, 8
      %s143 = scalar_lea.vmem %s2, %s142
      %v144 = vld [vmem:[%s138] sm:$0xff]
      %v145 = vld [vmem:[%s138 + $0x8] sm:$0xff]
      %v146 = vld [vmem:[%s1] sm:$0xff]
      %v147 = vld [vmem:[%s1 + $0x8] sm:$0xff]
      %v148 = vld [vmem:[%s1 + $0x10] sm:$0xff]
      %v149 = vld [vmem:[%s1 + $0x18] sm:$0xff]
      %v150 = vld [vmem:[%s1 + $0x20] sm:$0xff]
      %v151 = vld [vmem:[%s1 + $0x28] sm:$0xff]
      %v152 = vld [vmem:[%s1 + $0x30] sm:$0xff]
      %v153 = vld [vmem:[%s1 + $0x38] sm:$0xff]
      %v154 = vld [vmem:[%s1 + $0x40] sm:$0xff]
      %v155 = vld [vmem:[%s1 + $0x48] sm:$0xff]
      %v156 = vld [vmem:[%s1 + $0x50] sm:$0xff]
      %v157 = vld [vmem:[%s1 + $0x58] sm:$0xff]
      %v158 = vld [vmem:[%s1 + $0x60] sm:$0xff]
      %v159 = vld [vmem:[%s1 + $0x68] sm:$0xff]
      %v160 = vld [vmem:[%s1 + $0x70] sm:$0xff]
      %v161 = vld [vmem:[%s1 + $0x78] sm:$0xff]
      %vm162 = vcmask 523264
      %v164 = vsel %vm162, %v144, 0
      %v167 = vsel %vm162, %v145, 0
      %169 = vmatprep.subr.mxu0 %v147
      %170 = vmatpush1.msra.mxu0 %v146
      %171 = vmatprep.subr.mxu0 %v149
      %172 = vmatpush1.msra.mxu0 %v148
      %173 = vmatprep.subr.mxu0 %v151
      %174 = vmatpush1.msra.mxu0 %v150
      %175 = vmatprep.subr.mxu0 %v153
      %176 = vmatpush1.msra.mxu0 %v152
      %177 = vmatprep.subr.mxu0 %v155
      %178 = vmatpush1.msra.mxu0 %v154
      %179 = vmatprep.subr.mxu0 %v157
      %180 = vmatpush1.msra.mxu0 %v156
      %181 = vmatprep.subr.mxu0 %v159
      %182 = vmatpush1.msra.mxu0 %v158
      %183 = vmatprep.subr.mxu0 %v161
      %184 = vmatpush1.msra.mxu0 %v160
      %185 = vmatprep.subr.mxu0 0.0
      %186 = vmatpush1.msra.mxu0 0.0
      %187 = vmatprep.subr.mxu0 0.0
      %188 = vmatpush1.msra.mxu0 0.0
      %189 = vmatprep.subr.mxu0 0.0
      %190 = vmatpush1.msra.mxu0 0.0
      %191 = vmatprep.subr.mxu0 0.0
      %192 = vmatpush1.msra.mxu0 0.0
      %193 = vmatprep.subr.mxu0 0.0
      %194 = vmatpush1.msra.mxu0 0.0
      %195 = vmatprep.subr.mxu0 0.0
      %196 = vmatpush1.msra.mxu0 0.0
      %197 = vmatprep.subr.mxu0 0.0
      %198 = vmatpush1.msra.mxu0 0.0
      %199 = vmatprep.subr.mxu0 0.0
      %200 = vmatpush1.msra.mxu0 0.0
      %201 = vmatprep.subr.mxu0 0.0
      %202 = vmatpush1.msra.mxu0 0.0
      %203 = vmatprep.subr.mxu0 0.0
      %204 = vmatpush1.msra.mxu0 0.0
      %205 = vmatprep.subr.mxu0 0.0
      %206 = vmatpush1.msra.mxu0 0.0
      %207 = vmatprep.subr.mxu0 0.0
      %208 = vmatpush1.msra.mxu0 0.0
      %209 = vmatprep.subr.mxu0 0.0
      %210 = vmatpush1.msra.mxu0 0.0
      %211 = vmatprep.subr.mxu0 0.0
      %212 = vmatpush1.msra.mxu0 0.0
      %213 = vmatprep.subr.mxu0 0.0
      %214 = vmatpush1.msra.mxu0 0.0
      %215 = vmatprep.subr.mxu0 0.0
      %216 = vmatpush1.msra.mxu0 0.0
      %217 = vmatprep.subr.mxu0 0.0
      %218 = vmatpush1.msra.mxu0 0.0
      %219 = vmatprep.subr.mxu0 0.0
      %220 = vmatpush1.msra.mxu0 0.0
      %221 = vmatprep.subr.mxu0 0.0
      %222 = vmatpush1.msra.mxu0 0.0
      %223 = vmatprep.subr.mxu0 0.0
      %224 = vmatpush1.msra.mxu0 0.0
      %225 = vmatprep.subr.mxu0 0.0
      %226 = vmatpush1.msra.mxu0 0.0
      %227 = vmatprep.subr.mxu0 0.0
      %228 = vmatpush1.msra.mxu0 0.0
      %229 = vmatprep.subr.mxu0 0.0
      %230 = vmatpush1.msra.mxu0 0.0
      %231 = vmatprep.subr.mxu0 0.0
      %232 = vmatpush1.msra.mxu0 0.0
      %233 = vmatprep.mubr.f32.mxu0 0.0
      %234 = vmatmul.mubr.f32.gmra.mrb[0].mxu0 %v164
      %v235 = vpop.f32.mrb[0].mxu0
      %v236 = vadd.f32 0.0, %v235
      %v237 = vpop.f32.mrb[0].mxu0
      %v238 = vadd.f32 0.0, %v237
      %239 = vmatprep.mubr.f32.mxu0 0.0
      %240 = vmatmul.mubr.f32.gmra.mrb[0].mxu0 %v167
      %v241 = vpop.f32.mrb[0].mxu0
      %v242 = vadd.f32 0.0, %v241
      %v243 = vpop.f32.mrb[0].mxu0
      %v244 = vadd.f32 0.0, %v243
      %245 = vdwg.mxu0
      %246 = vst [vmem:[%s143] sm:$0xff] %v236
      %247 = vst [vmem:[%s143 + $0x8] sm:$0xff] %v238
      %248 = vst [vmem:[%s143 + $0x10] sm:$0xff] %v242
      %249 = vst [vmem:[%s143 + $0x18] sm:$0xff] %v244
      %p250 = scmp.lt.s32.totalorder %s13, 1
      %s251 = scalar_select %p250, %s13, 1
      %s252 = smul.addr %s251, 4
      %s253 = smul.addr %s252, 8
      %s254 = scalar_lea.vmem %s2, %s253
      // Predicated region
      $region29: #{attn_resnet_generator.17} parent=27 // pred_check
        %p255 = pneg %p78
      $region30: #{attn_resnet_generator.17} parent=27 // pred_check_branch
        %257 = sbr.rel (%p255) target = $region32
      $region31: #{attn_resnet_generator.17} parent=27 // pred_region
        _
      $region32: #{attn_resnet_generator.17} parent=27 // pred_fallthru
        _
    $region28: #{attn_resnet_generator.17} parent=5 // pred_fallthru
      _
    %p258 = scmp.le.s32.totalorder 2, %s8
    // Predicated region
    $region33: #{attn_resnet_generator.17} parent=5 // pred_check
      %p259 = pneg %p258
    $region34: #{attn_resnet_generator.17} parent=5 // pred_check_branch
      %261 = sbr.rel (%p259) target = $region36
    $region35: #{attn_resnet_generator.17} parent=5 // pred_region
      %s262 = ssub.s32 %s8, 2
      // Predicated region
      $region37: #{attn_resnet_generator.17} parent=35 // pred_check
        %p263 = pneg %p84
      $region38: #{attn_resnet_generator.17} parent=35 // pred_check_branch
        %265 = sbr.rel (%p263) target = $region40
      $region39: #{attn_resnet_generator.17} parent=35 // pred_region
        %p266 = scmp.lt.s32.totalorder %s14, 1
        %s267 = scalar_select %p266, %s14, 1
        %s268 = smul.addr %s267, 4
        %s269 = smul.addr %s268, 8
        %s270 = scalar_lea.vmem %s2, %s269
      $region40: #{attn_resnet_generator.17} parent=35 // pred_fallthru
        _
    $region36: #{attn_resnet_generator.17} parent=5 // pred_fallthru
      _
  $region6: #{attn_resnet_generator.17} parent=0 // loop_footer
    %s12 = sadd.s32 1, %s8
  $region7: #{attn_resnet_generator.17} parent=0 // loop_footer_branch
    %7 = sbr.rel target = $region3
  $region8: #{attn_resnet_generator.17} parent=0 // loop_exit
    _

// kernel: attn_resnet_generator.18
$region0: #{attn_resnet_generator.18}
  #allocation0 [shape = 'u32[]', space=smem, size = 0x4, offset = 0x4, fixed_abs, tag = 'smem constant byte address 0x4 - core index']
  #allocation1 [shape = 'u32[144,128]{1,0:T(1,128)}', space=vmem, size = 0x12000, scoped, tag = 'internal scratch']
  %s0 = inlined_call_operand.vmem [shape: bf16[2,144,256], index: 0, kind: input, shape index: {}]
  %s1 = inlined_call_operand.vmem [shape: bf16[8,144], index: 1, kind: input, shape index: {}]
  %s2 = inlined_call_operand.vmem [shape: bf16[24,8], index: 2, kind: input, shape index: {}]
  %s3 = inlined_call_operand.vmem [shape: f32[24,1], index: 3, kind: input, shape index: {}]
  %s4 = inlined_call_operand.vmem [shape: f32[2,8,256], index: 4, kind: output, shape index: {}]
  %s5 = sld [smem:[#allocation0]]
  $region49: #{attn_resnet_generator.18} parent=0
    _
  %s7 = ssub.s32 1, %s5
  %s8 = scalar_select 0, %s7, %s5
  loop: start=0, step=1, limit=4
  $region2: #{attn_resnet_generator.18} parent=0 // loop_pre_header
    _
  $region3: #{attn_resnet_generator.18} parent=0 // loop_header
    %s10 = sphi 0, %s14
    %p11 = scmp.ge.s32.totalorder %s10, 4
    %s20 = sphi 0, %s22
    %s23 = sphi 0, %s20
    %s24 = sphi 0, %s23
    %s40 = sphi 0, %s24
    %s44 = sphi 0, %s44
    %s46 = sphi 0, %s44
    %s47 = sphi 0, %s46
    %s61 = sphi 0, %s47
    %s65 = sphi 0, %s65
    %s67 = sphi 0, %s65
    %s68 = sphi 0, %s67
    %s82 = sphi 0, %s68
    %s86 = sphi 0, %s86
    %s88 = sphi 0, %s86
    %s89 = sphi 0, %s88
    %s103 = sphi 0, %s89
    %s109 = sphi 0, %s111
    %s112 = sphi 0, %s109
    %s113 = sphi 0, %s112
    %s129 = sphi 0, %s113
  $region4: #{attn_resnet_generator.18} parent=0 // loop_header_branch
    %13 = sbr.rel (%p11) target = $region8
  $region5: #{attn_resnet_generator.18} parent=0 // loop_body
    %s15 = ssub.s32 %s10, 1
    %s16 = ssub.s32 %s10, 2
    %s17 = sadd.s32 %s10, 1
    %s18 = ssub.s32 %s10, %s17
    %p19 = scmp.eq.s32.totalorder %s18, 0
    %s21 = sadd.s32 %s20, 1
    %s22 = scalar_select %p19, %s20, %s21
    %p25 = pneg %p19
    %p26 = scmp.eq.s32.totalorder %s10, 1
    %p27 = por %p25, %p26
    %p28 = scmp.ne.s32.totalorder %s20, %s23
    %p29 = scmp.eq.s32.totalorder %s10, 0
    %p30 = por %p28, %p29
    %p31 = scmp.ne.s32.totalorder %s20, %s23
    %p32 = scmp.eq.s32.totalorder %s15, 1
    %p33 = por %p31, %p32
    %p34 = scmp.ne.s32.totalorder %s23, %s24
    %p35 = scmp.eq.s32.totalorder %s15, 0
    %p36 = por %p34, %p35
    %p37 = scmp.ne.s32.totalorder %s23, %s24
    %p38 = scmp.eq.s32.totalorder %s16, 1
    %p39 = por %p37, %p38
    %p41 = scmp.ne.s32.totalorder %s24, %s40
    %p42 = scmp.eq.s32.totalorder %s16, 0
    %p43 = por %p41, %p42
    %s45 = sadd.s32 %s44, 1
    %p48 = scmp.eq.s32.totalorder %s10, 1
    %p49 = scmp.ne.s32.totalorder %s44, %s46
    %p50 = scmp.eq.s32.totalorder %s10, 0
    %p51 = por %p49, %p50
    %p52 = scmp.ne.s32.totalorder %s44, %s46
    %p53 = scmp.eq.s32.totalorder %s15, 1
    %p54 = por %p52, %p53
    %p55 = scmp.ne.s32.totalorder %s46, %s47
    %p56 = scmp.eq.s32.totalorder %s15, 0
    %p57 = por %p55, %p56
    %p58 = scmp.ne.s32.totalorder %s46, %s47
    %p59 = scmp.eq.s32.totalorder %s16, 1
    %p60 = por %p58, %p59
    %p62 = scmp.ne.s32.totalorder %s47, %s61
    %p63 = scmp.eq.s32.totalorder %s16, 0
    %p64 = por %p62, %p63
    %s66 = sadd.s32 %s65, 1
    %p69 = scmp.eq.s32.totalorder %s10, 1
    %p70 = scmp.ne.s32.totalorder %s65, %s67
    %p71 = scmp.eq.s32.totalorder %s10, 0
    %p72 = por %p70, %p71
    %p73 = scmp.ne.s32.totalorder %s65, %s67
    %p74 = scmp.eq.s32.totalorder %s15, 1
    %p75 = por %p73, %p74
    %p76 = scmp.ne.s32.totalorder %s67, %s68
    %p77 = scmp.eq.s32.totalorder %s15, 0
    %p78 = por %p76, %p77
    %p79 = scmp.ne.s32.totalorder %s67, %s68
    %p80 = scmp.eq.s32.totalorder %s16, 1
    %p81 = por %p79, %p80
    %p83 = scmp.ne.s32.totalorder %s68, %s82
    %p84 = scmp.eq.s32.totalorder %s16, 0
    %p85 = por %p83, %p84
    %s87 = sadd.s32 %s86, 1
    %p90 = scmp.eq.s32.totalorder %s10, 1
    %p91 = scmp.ne.s32.totalorder %s86, %s88
    %p92 = scmp.eq.s32.totalorder %s10, 0
    %p93 = por %p91, %p92
    %p94 = scmp.ne.s32.totalorder %s86, %s88
    %p95 = scmp.eq.s32.totalorder %s15, 1
    %p96 = por %p94, %p95
    %p97 = scmp.ne.s32.totalorder %s88, %s89
    %p98 = scmp.eq.s32.totalorder %s15, 0
    %p99 = por %p97, %p98
    %p100 = scmp.ne.s32.totalorder %s88, %s89
    %p101 = scmp.eq.s32.totalorder %s16, 1
    %p102 = por %p100, %p101
    %p104 = scmp.ne.s32.totalorder %s89, %s103
    %p105 = scmp.eq.s32.totalorder %s16, 0
    %p106 = por %p104, %p105
    %s107 = ssub.s32 %s10, %s17
    %p108 = scmp.eq.s32.totalorder %s107, 0
    %s110 = sadd.s32 %s109, 1
    %s111 = scalar_select %p108, %s109, %s110
    %p114 = pneg %p108
    %p115 = scmp.eq.s32.totalorder %s10, 1
    %p116 = por %p114, %p115
    %p117 = scmp.ne.s32.totalorder %s109, %s112
    %p118 = scmp.eq.s32.totalorder %s10, 0
    %p119 = por %p117, %p118
    %p120 = scmp.ne.s32.totalorder %s109, %s112
    %p121 = scmp.eq.s32.totalorder %s15, 1
    %p122 = por %p120, %p121
    %p123 = scmp.ne.s32.totalorder %s112, %s113
    %p124 = scmp.eq.s32.totalorder %s15, 0
    %p125 = por %p123, %p124
    %p126 = scmp.ne.s32.totalorder %s112, %s113
    %p127 = scmp.eq.s32.totalorder %s16, 1
    %p128 = por %p126, %p127
    %p130 = scmp.ne.s32.totalorder %s113, %s129
    %p131 = scmp.eq.s32.totalorder %s16, 0
    %p132 = por %p130, %p131
    %p133 = scmp.le.s32.totalorder 1, %s10
    %p134 = scmp.lt.s32.totalorder %s10, 3
    %p135 = pnand %p133, %p134
    %p136 = pneg %p135
    // Predicated region
    $region9: #{attn_resnet_generator.18} parent=5 // pred_check
      _
    $region10: #{attn_resnet_generator.18} parent=5 // pred_check_branch
      %138 = sbr.rel (%p135) target = $region12
    $region11: #{attn_resnet_generator.18} parent=5 // pred_region
      %s139 = ssub.s32 %s10, 1
      // Predicated region
      $region13: #{attn_resnet_generator.18} parent=11 // pred_check
        %p140 = pneg %p57
      $region14: #{attn_resnet_generator.18} parent=11 // pred_check_branch
        %142 = sbr.rel (%p140) target = $region16
      $region15: #{attn_resnet_generator.18} parent=11 // pred_region
        _
      $region16: #{attn_resnet_generator.18} parent=11 // pred_fallthru
        _
      // Predicated region
      $region17: #{attn_resnet_generator.18} parent=11 // pred_check
        %p143 = pneg %p78
      $region18: #{attn_resnet_generator.18} parent=11 // pred_check_branch
        %145 = sbr.rel (%p143) target = $region20
      $region19: #{attn_resnet_generator.18} parent=11 // pred_region
        _
      $region20: #{attn_resnet_generator.18} parent=11 // pred_fallthru
        _
      // Predicated region
      $region21: #{attn_resnet_generator.18} parent=11 // pred_check
        %p146 = pneg %p99
      $region22: #{attn_resnet_generator.18} parent=11 // pred_check_branch
        %148 = sbr.rel (%p146) target = $region24
      $region23: #{attn_resnet_generator.18} parent=11 // pred_region
        _
      $region24: #{attn_resnet_generator.18} parent=11 // pred_fallthru
        _
    $region12: #{attn_resnet_generator.18} parent=5 // pred_fallthru
      _
    %p149 = scmp.lt.s32.totalorder %s10, 2
    // Predicated region
    $region25: #{attn_resnet_generator.18} parent=5 // pred_check
      %p150 = pneg %p149
    $region26: #{attn_resnet_generator.18} parent=5 // pred_check_branch
      %152 = sbr.rel (%p150) target = $region28
    $region27: #{attn_resnet_generator.18} parent=5 // pred_region
      // Predicated region
      $region29: #{attn_resnet_generator.18} parent=27 // pred_check
        %p153 = pneg %p30
      $region30: #{attn_resnet_generator.18} parent=27 // pred_check_branch
        %155 = sbr.rel (%p153) target = $region32
      $region31: #{attn_resnet_generator.18} parent=27 // pred_region
        %p156 = scmp.lt.s32.totalorder %s10, 1
        %s157 = scalar_select %p156, %s10, 1
        %s158 = smul.addr %s157, 36
        %s159 = smul.addr %s158, 4
        %s160 = scalar_lea.vmem %s0, %s159
      $region32: #{attn_resnet_generator.18} parent=27 // pred_fallthru
        _
    $region28: #{attn_resnet_generator.18} parent=5 // pred_fallthru
      _
    %p161 = scmp.le.s32.totalorder 1, %s10
    %p162 = scmp.lt.s32.totalorder %s10, 3
    %p163 = pnand %p161, %p162
    %p164 = pneg %p163
    // Predicated region
    $region33: #{attn_resnet_generator.18} parent=5 // pred_check
      _
    $region34: #{attn_resnet_generator.18} parent=5 // pred_check_branch
      %166 = sbr.rel (%p163) target = $region36
    $region35: #{attn_resnet_generator.18} parent=5 // pred_region
      %s167 = ssub.s32 %s10, 1
      %p168 = scmp.lt.s32.totalorder %s15, 1
      %s169 = scalar_select %p168, %s15, 1
      %s170 = smul.addr %s169, 36
      %s171 = smul.addr %s170, 4
      %s172 = scalar_lea.vmem %s0, %s171
      %p173 = pneg %p36
      %p174 = pneg %p33
      %p175 = pneg %p57
      %p176 = pneg %p54
      %p177 = pneg %p78
      %p178 = pneg %p75
      %p179 = pneg %p99
      %p180 = pneg %p96
      %p181 = pneg %p125
      %p182 = pneg %p122
      %p183 = scmp.lt.s32.totalorder %s15, 1
      %s184 = scalar_select %p183, %s15, 1
      %s185 = smul.addr %s184, 2
      %s186 = smul.addr %s185, 8
      %s187 = scalar_lea.vmem %s4, %s186
      %p188 = scmp.lt.s32.totalorder %s15, 1
      %s189 = scalar_select %p188, %s15, 1
      %s190 = smul.addr %s189, 36
      %s191 = smul.addr %s190, 4
      %s192 = scalar_lea.vmem %s0, %s191
      %p193 = scmp.lt.s32.totalorder %s15, 1
      %s194 = scalar_select %p193, %s15, 1
      %s195 = smul.addr %s194, 2
      %s196 = smul.addr %s195, 8
      %s197 = scalar_lea.vmem %s4, %s196
      %v199 = vld [vmem:[%s1] sm:$0xff]
      %v200 = vld [vmem:[%s192] sm:$0xff]
      %v201 = vld [vmem:[%s192 + $0x8] sm:$0xff]
      %v202 = vld [vmem:[%s192 + $0x10] sm:$0xff]
      %v203 = vld [vmem:[%s192 + $0x18] sm:$0xff]
      %v204 = vld [vmem:[%s192 + $0x20] sm:$0xff]
      %v205 = vld [vmem:[%s192 + $0x28] sm:$0xff]
      %v206 = vld [vmem:[%s192 + $0x30] sm:$0xff]
      %v207 = vld [vmem:[%s192 + $0x38] sm:$0xff]
      %v208 = vld [vmem:[%s192 + $0x40] sm:$0xff]
      %v209 = vld [vmem:[%s192 + $0x48] sm:$0xff]
      %v210 = vld [vmem:[%s192 + $0x50] sm:$0xff]
      %v211 = vld [vmem:[%s192 + $0x58] sm:$0xff]
      %v212 = vld [vmem:[%s192 + $0x60] sm:$0xff]
      %v213 = vld [vmem:[%s192 + $0x68] sm:$0xff]
      %v214 = vld [vmem:[%s192 + $0x70] sm:$0xff]
      %v215 = vld [vmem:[%s192 + $0x78] sm:$0xff]
      %v216 = vld [vmem:[%s192 + $0x80] sm:$0xff]
      %v217 = vld [vmem:[%s192 + $0x88] sm:$0xff]
      %v219 = vunpack.c.l.b16 %v199
      %v220 = vunpack.c.h.b16 %v199
      %v221 = vpack.c.b16 %v219, %v219
      %v222 = vpack.c.b16 %v220, %v220
      %v242 = vunpack.c.l.b16 %v200
      %v243 = vunpack.c.h.b16 %v200
      %v244 = vunpack.c.l.b16 %v201
      %v245 = vunpack.c.h.b16 %v201
      %v246 = vunpack.c.l.b16 %v202
      %v247 = vunpack.c.h.b16 %v202
      %v248 = vunpack.c.l.b16 %v203
      %v249 = vunpack.c.h.b16 %v203
      %v250 = vunpack.c.l.b16 %v204
      %v251 = vunpack.c.h.b16 %v204
      %v252 = vunpack.c.l.b16 %v205
      %v253 = vunpack.c.h.b16 %v205
      %v254 = vunpack.c.l.b16 %v206
      %v255 = vunpack.c.h.b16 %v206
      %v256 = vunpack.c.l.b16 %v207
      %v257 = vunpack.c.h.b16 %v207
      %v258 = vunpack.c.l.b16 %v208
      %v259 = vunpack.c.h.b16 %v208
      %v260 = vunpack.c.l.b16 %v209
      %v261 = vunpack.c.h.b16 %v209
      %v262 = vunpack.c.l.b16 %v210
      %v263 = vunpack.c.h.b16 %v210
      %v264 = vunpack.c.l.b16 %v211
      %v265 = vunpack.c.h.b16 %v211
      %v266 = vunpack.c.l.b16 %v212
      %v267 = vunpack.c.h.b16 %v212
      %v268 = vunpack.c.l.b16 %v213
      %v269 = vunpack.c.h.b16 %v213
      %v270 = vunpack.c.l.b16 %v214
      %v271 = vunpack.c.h.b16 %v214
      %v272 = vunpack.c.l.b16 %v215
      %v273 = vunpack.c.h.b16 %v215
      %v274 = vunpack.c.l.b16 %v216
      %v275 = vunpack.c.h.b16 %v216
      %v276 = vunpack.c.l.b16 %v217
      %v277 = vunpack.c.h.b16 %v217
      %v278 = vpack.c.b16 %v244, %v242
      %v279 = vpack.c.b16 %v245, %v243
      %v280 = vpack.c.b16 %v248, %v246
      %v281 = vpack.c.b16 %v249, %v247
      %v282 = vpack.c.b16 %v252, %v250
      %v283 = vpack.c.b16 %v253, %v251
      %v284 = vpack.c.b16 %v256, %v254
      %v285 = vpack.c.b16 %v257, %v255
      %v286 = vpack.c.b16 %v260, %v258
      %v287 = vpack.c.b16 %v261, %v259
      %v288 = vpack.c.b16 %v264, %v262
      %v289 = vpack.c.b16 %v265, %v263
      %v290 = vpack.c.b16 %v268, %v266
      %v291 = vpack.c.b16 %v269, %v267
      %v292 = vpack.c.b16 %v272, %v270
      %v293 = vpack.c.b16 %v273, %v271
      %v294 = vpack.c.b16 %v276, %v274
      %v295 = vpack.c.b16 %v277, %v275
      %vm314 = vcmask 130048
      %v316 = vsel %vm314, %v222, 0
      %318 = vmatprep.subr.bf16.mxu0 %v279
      %319 = vmatpush1.bf16.msra.mxu0 %v278
      %320 = vmatprep.subr.bf16.mxu0 %v281
      %321 = vmatpush1.bf16.msra.mxu0 %v280
      %322 = vmatprep.subr.bf16.mxu0 %v283
      %323 = vmatpush1.bf16.msra.mxu0 %v282
      %324 = vmatprep.subr.bf16.mxu0 %v285
      %325 = vmatpush1.bf16.msra.mxu0 %v284
      %326 = vmatprep.subr.bf16.mxu0 %v287
      %327 = vmatpush1.bf16.msra.mxu0 %v286
      %328 = vmatprep.subr.bf16.mxu0 %v289
      %329 = vmatpush1.bf16.msra.mxu0 %v288
      %330 = vmatprep.subr.bf16.mxu0 %v291
      %331 = vmatpush1.bf16.msra.mxu0 %v290
      %332 = vmatprep.subr.bf16.mxu0 %v293
      %333 = vmatpush1.bf16.msra.mxu0 %v292
      %334 = vmatprep.subr.bf16.mxu0 %v295
      %335 = vmatpush1.bf16.msra.mxu0 %v294
      %336 = vmatprep.subr.bf16.mxu0 0
      %337 = vmatpush1.bf16.msra.mxu0 0
      %338 = vmatprep.subr.bf16.mxu0 0
      %339 = vmatpush1.bf16.msra.mxu0 0
      %340 = vmatprep.subr.bf16.mxu0 0
      %341 = vmatpush1.bf16.msra.mxu0 0
      %342 = vmatprep.subr.bf16.mxu0 0
      %343 = vmatpush1.bf16.msra.mxu0 0
      %344 = vmatprep.subr.bf16.mxu0 0
      %345 = vmatpush1.bf16.msra.mxu0 0
      %346 = vmatprep.subr.bf16.mxu0 0
      %347 = vmatpush1.bf16.msra.mxu0 0
      %348 = vmatprep.subr.bf16.mxu0 0
      %349 = vmatpush1.bf16.msra.mxu0 0
      %350 = vmatprep.mubr.bf16.mxu0 %v316
      %351 = vmatmul.mubr.bf16.gmra.mrb[0].mxu0 %v221
      %v352 = vpop.f32.mrb[0].mxu0
      %v353 = vadd.f32 0.0, %v352
      %v354 = vpop.f32.mrb[0].mxu0
      %v355 = vadd.f32 0.0, %v354
      %v356 = vpop.f32.mrb[0].mxu0
      %v357 = vpop.f32.mrb[0].mxu0
      %358 = vdwg.mxu0
      %v359 = vadd.f32 %v353, %v355
      %360 = vadd.xlane.f32.xlu0 %v359
      %v361 = vpop.xlane.xlu0 %360
      %v362 = vrcp.pop 256.0
      %v363 = vmul.f32 %v361, %v362
      %v364 = vsub.f32 %v353, %v363
      %v365 = vsub.f32 %v355, %v363
      %v366 = vmul.f32 %v364, %v364
      %v367 = vmul.f32 %v365, %v365
      %v368 = vadd.f32 %v366, %v367
      %369 = vadd.xlane.f32.xlu0 %v368
      %v370 = vpop.xlane.xlu0 %369
      %v371 = vmul.f32 %v370, %v362
      %v372 = vadd.f32 %v371, 1e-05
      %v373 = vrsqrt.pop %v372
      %v374 = vmul.f32 %v364, %v373
      %v375 = vmul.f32 %v365, %v373
      %v376 = vmax.f32 %v374, 0.0
      %v377 = vmax.f32 %v375, 0.0
      %v378 = vld [vmem:[%s2] sm:$0xf]
      %v379 = vld [vmem:[%s2 + $0x4] sm:$0xf]
      %v380 = vld [vmem:[%s2 + $0x8] sm:$0xf]
      %v381 = vpack.c.bf16 %v376, %v376
      %v382 = vpack.c.bf16 %v377, %v377
      %v383 = vld [vmem:[%s3] sm:$0xff]
      %v384 = vld [vmem:[%s3 + $0x8] sm:$0xff]
      %v385 = vld [vmem:[%s3 + $0x10] sm:$0xff]
      %387 = vset.pattern.permute.xlu0 0
      %388 = vperm.xlu0 %387, %v383
      %v389 = vpop.permute.xlu0 %388
      %392 = vset.pattern.permute.xlu0 0
      %393 = vperm.xlu0 %392, %v384
      %v394 = vpop.permute.xlu0 %393
      %397 = vset.pattern.permute.xlu0 0
      %398 = vperm.xlu0 %397, %v385
      %v399 = vpop.permute.xlu0 %398
      %v404 = vunpack.c.l.b16 %v378
      %v405 = vunpack.c.l.b16 %v379
      %v406 = vunpack.c.l.b16 %v380
      %v407 = vpack.c.b16 %v405, %v404
      %v408 = vpack.c.b16 %v406, %v406
      %vm409 = vcmask 64512
      %v411 = vsel %vm409, %v407, 0
      %v414 = vsel %vm409, %v408, 0
      %vm416 = vcmask 1043456
      %v418 = vsel %vm416, %v381, 0
      %v421 = vsel %vm416, %v382, 0
      %423 = vmatprep.subr.bf16.mxu0 %v421
      %424 = vmatpush1.bf16.msra.mxu0 %v418
      %425 = vmatprep.subr.bf16.mxu0 0
      %426 = vmatpush1.bf16.msra.mxu0 0
      %427 = vmatprep.subr.bf16.mxu0 0
      %428 = vmatpush1.bf16.msra.mxu0 0
      %429 = vmatprep.subr.bf16.mxu0 0
      %430 = vmatpush1.bf16.msra.mxu0 0
      %431 = vmatprep.subr.bf16.mxu0 0
      %432 = vmatpush1.bf16.msra.mxu0 0
      %433 = vmatprep.subr.bf16.mxu0 0
      %434 = vmatpush1.bf16.msra.mxu0 0
      %435 = vmatprep.subr.bf16.mxu0 0
      %436 = vmatpush1.bf16.msra.mxu0 0
      %437 = vmatprep.subr.bf16.mxu0 0
      %438 = vmatpush1.bf16.msra.mxu0 0
      %439 = vmatprep.subr.bf16.mxu0 0
      %440 = vmatpush1.bf16.msra.mxu0 0
      %441 = vmatprep.subr.bf16.mxu0 0
      %442 = vmatpush1.bf16.msra.mxu0 0
      %443 = vmatprep.subr.bf16.mxu0 0
      %444 = vmatpush1.bf16.msra.mxu0 0
      %445 = vmatprep.subr.bf16.mxu0 0
      %446 = vmatpush1.bf16.msra.mxu0 0
      %447 = vmatprep.subr.bf16.mxu0 0
      %448 = vmatpush1.bf16.msra.mxu0 0
      %449 = vmatprep.subr.bf16.mxu0 0
      %450 = vmatpush1.bf16.msra.mxu0 0
      %451 = vmatprep.subr.bf16.mxu0 0
      %452 = vmatpush1.bf16.msra.mxu0 0
      %453 = vmatprep.subr.bf16.mxu0 0
      %454 = vmatpush1.bf16.msra.mxu0 0
      %455 = vmatprep.mubr.bf16.mxu0 0
      %456 = vmatmul.mubr.bf16.gmra.mrb[0].mxu0 %v411
      %v457 = vpop.f32.mrb[0].mxu0
      %v458 = vadd.f32 %v389, %v457
      %v459 = vpop.f32.mrb[0].mxu0
      %v460 = vadd.f32 %v389, %v459
      %v461 = vpop.f32.mrb[0].mxu0
      %v462 = vadd.f32 %v394, %v461
      %v463 = vpop.f32.mrb[0].mxu0
      %v464 = vadd.f32 %v394, %v463
      %465 = vmatprep.mubr.bf16.mxu0 0
      %466 = vmatmul.mubr.bf16.gmra.mrb[0].mxu0 %v414
      %v467 = vpop.f32.mrb[0].mxu0
      %v468 = vadd.f32 %v399, %v467
      %v469 = vpop.f32.mrb[0].mxu0
      %v470 = vadd.f32 %v399, %v469
      %v471 = vpop.f32.mrb[0].mxu0
      %v472 = vpop.f32.mrb[0].mxu0
      %473 = vdwg.mxu0
      %474 = vxpose.xlu0.b32.start [1/16] %v458, 128
      %475 = vxpose.xlu0.b32.cont [2/16] 0.0, 128
      %476 = vxpose.xlu0.b32.cont [3/16] 0.0, 128
      %477 = vxpose.xlu0.b32.cont [4/16] 0.0, 128
      %478 = vxpose.xlu0.b32.cont [5/16] 0.0, 128
      %479 = vxpose.xlu0.b32.cont [6/16] 0.0, 128
      %480 = vxpose.xlu0.b32.cont [7/16] 0.0, 128
      %481 = vxpose.xlu0.b32.cont [8/16] 0.0, 128
      %482 = vxpose.xlu0.b32.cont [9/16] 0.0, 128
      %483 = vxpose.xlu0.b32.cont [10/16] 0.0, 128
      %484 = vxpose.xlu0.b32.cont [11/16] 0.0, 128
      %485 = vxpose.xlu0.b32.cont [12/16] 0.0, 128
      %486 = vxpose.xlu0.b32.cont [13/16] 0.0, 128
      %487 = vxpose.xlu0.b32.cont [14/16] 0.0, 128
      %488 = vxpose.xlu0.b32.cont [15/16] 0.0, 128
      %489 = vxpose.xlu0.b32.end [16/16] 0.0, 128
      %v490 = vpop.trf.xlu0
      %v491 = vpop.trf.xlu0
      %v492 = vpop.trf.xlu0
      %v493 = vpop.trf.xlu0
      %v494 = vpop.trf.xlu0
      %v495 = vpop.trf.xlu0
      %v496 = vpop.trf.xlu0
      %v497 = vpop.trf.xlu0
      %v498 = vpop.trf.xlu0
      %v499 = vpop.trf.xlu0
      %v500 = vpop.trf.xlu0
      %v501 = vpop.trf.xlu0
      %v502 = vpop.trf.xlu0
      %v503 = vpop.trf.xlu0
      %v504 = vpop.trf.xlu0
      %v505 = vpop.trf.xlu0
      %506 = vxpose.xlu0.b32.start [1/16] %v460, 128
      %507 = vxpose.xlu0.b32.cont [2/16] 0.0, 128
      %508 = vxpose.xlu0.b32.cont [3/16] 0.0, 128
      %509 = vxpose.xlu0.b32.cont [4/16] 0.0, 128
      %510 = vxpose.xlu0.b32.cont [5/16] 0.0, 128
      %511 = vxpose.xlu0.b32.cont [6/16] 0.0, 128
      %512 = vxpose.xlu0.b32.cont [7/16] 0.0, 128
      %513 = vxpose.xlu0.b32.cont [8/16] 0.0, 128
      %514 = vxpose.xlu0.b32.cont [9/16] 0.0, 128
      %515 = vxpose.xlu0.b32.cont [10/16] 0.0, 128
      %516 = vxpose.xlu0.b32.cont [11/16] 0.0, 128
      %517 = vxpose.xlu0.b32.cont [12/16] 0.0, 128
      %518 = vxpose.xlu0.b32.cont [13/16] 0.0, 128
      %519 = vxpose.xlu0.b32.cont [14/16] 0.0, 128
      %520 = vxpose.xlu0.b32.cont [15/16] 0.0, 128
      %521 = vxpose.xlu0.b32.end [16/16] 0.0, 128
      %v522 = vpop.trf.xlu0
      %v523 = vpop.trf.xlu0
      %v524 = vpop.trf.xlu0
      %v525 = vpop.trf.xlu0
      %v526 = vpop.trf.xlu0
      %v527 = vpop.trf.xlu0
      %v528 = vpop.trf.xlu0
      %v529 = vpop.trf.xlu0
      %v530 = vpop.trf.xlu0
      %v531 = vpop.trf.xlu0
      %v532 = vpop.trf.xlu0
      %v533 = vpop.trf.xlu0
      %v534 = vpop.trf.xlu0
      %v535 = vpop.trf.xlu0
      %v536 = vpop.trf.xlu0
      %v537 = vpop.trf.xlu0
      %v539 = vsel %vm409, %v490, 0
      %v542 = vsel %vm409, %v491, 0
      %v545 = vsel %vm409, %v492, 0
      %v548 = vsel %vm409, %v493, 0
      %v551 = vsel %vm409, %v494, 0
      %v554 = vsel %vm409, %v495, 0
      %v557 = vsel %vm409, %v496, 0
      %v560 = vsel %vm409, %v497, 0
      %v563 = vsel %vm409, %v498, 0
      %v566 = vsel %vm409, %v499, 0
      %v569 = vsel %vm409, %v500, 0
      %v572 = vsel %vm409, %v501, 0
      %v575 = vsel %vm409, %v502, 0
      %v578 = vsel %vm409, %v503, 0
      %v581 = vsel %vm409, %v504, 0
      %v584 = vsel %vm409, %v505, 0
      %v587 = vsel %vm409, %v522, 0
      %v590 = vsel %vm409, %v523, 0
      %v593 = vsel %vm409, %v524, 0
      %v596 = vsel %vm409, %v525, 0
      %v599 = vsel %vm409, %v526, 0
      %v602 = vsel %vm409, %v527, 0
      %v605 = vsel %vm409, %v528, 0
      %v608 = vsel %vm409, %v529, 0
      %v611 = vsel %vm409, %v530, 0
      %v614 = vsel %vm409, %v531, 0
      %v617 = vsel %vm409, %v532, 0
      %v620 = vsel %vm409, %v533, 0
      %v623 = vsel %vm409, %v534, 0
      %v626 = vsel %vm409, %v535, 0
      %v629 = vsel %vm409, %v536, 0
      %v632 = vsel %vm409, %v537, 0
      %634 = vmatprep.subr.mxu0 %v464
      %635 = vmatpush1.msra.mxu0 %v462
      %636 = vmatprep.subr.mxu0 0.0
      %637 = vmatpush1.msra.mxu0 0.0
      %638 = vmatprep.subr.mxu0 0.0
      %639 = vmatpush1.msra.mxu0 0.0
      %640 = vmatprep.subr.mxu0 0.0
      %641 = vmatpush1.msra.mxu0 0.0
      %642 = vmatprep.subr.mxu0 0.0
      %643 = vmatpush1.msra.mxu0 0.0
      %644 = vmatprep.subr.mxu0 0.0
      %645 = vmatpush1.msra.mxu0 0.0
      %646 = vmatprep.subr.mxu0 0.0
      %647 = vmatpush1.msra.mxu0 0.0
      %648 = vmatprep.subr.mxu0 0.0
      %649 = vmatpush1.msra.mxu0 0.0
      %650 = vmatprep.subr.mxu0 0.0
      %651 = vmatpush1.msra.mxu0 0.0
      %652 = vmatprep.subr.mxu0 0.0
      %653 = vmatpush1.msra.mxu0 0.0
      %654 = vmatprep.subr.mxu0 0.0
      %655 = vmatpush1.msra.mxu0 0.0
      %656 = vmatprep.subr.mxu0 0.0
      %657 = vmatpush1.msra.mxu0 0.0
      %658 = vmatprep.subr.mxu0 0.0
      %659 = vmatpush1.msra.mxu0 0.0
      %660 = vmatprep.subr.mxu0 0.0
      %661 = vmatpush1.msra.mxu0 0.0
      %662 = vmatprep.subr.mxu0 0.0
      %663 = vmatpush1.msra.mxu0 0.0
      %664 = vmatprep.subr.mxu0 0.0
      %665 = vmatpush1.msra.mxu0 0.0
      %666 = vmatprep.subr.mxu0 0.0
      %667 = vmatpush1.msra.mxu0 0.0
      %668 = vmatprep.subr.mxu0 0.0
      %669 = vmatpush1.msra.mxu0 0.0
      %670 = vmatprep.subr.mxu0 0.0
      %671 = vmatpush1.msra.mxu0 0.0
      %672 = vmatprep.subr.mxu0 0.0
      %673 = vmatpush1.msra.mxu0 0.0
      %674 = vmatprep.subr.mxu0 0.0
      %675 = vmatpush1.msra.mxu0 0.0
      %676 = vmatprep.subr.mxu0 0.0
      %677 = vmatpush1.msra.mxu0 0.0
      %678 = vmatprep.subr.mxu0 0.0
      %679 = vmatpush1.msra.mxu0 0.0
      %680 = vmatprep.subr.mxu0 0.0
      %681 = vmatpush1.msra.mxu0 0.0
      %682 = vmatprep.subr.mxu0 0.0
      %683 = vmatpush1.msra.mxu0 0.0
      %684 = vmatprep.subr.mxu0 0.0
      %685 = vmatpush1.msra.mxu0 0.0
      %686 = vmatprep.subr.mxu0 0.0
      %687 = vmatpush1.msra.mxu0 0.0
      %688 = vmatprep.subr.mxu0 0.0
      %689 = vmatpush1.msra.mxu0 0.0
      %690 = vmatprep.subr.mxu0 0.0
      %691 = vmatpush1.msra.mxu0 0.0
      %692 = vmatprep.subr.mxu0 0.0
      %693 = vmatpush1.msra.mxu0 0.0
      %694 = vmatprep.subr.mxu0 0.0
      %695 = vmatpush1.msra.mxu0 0.0
      %696 = vmatprep.subr.mxu0 0.0
      %697 = vmatpush1.msra.mxu0 0.0
      %698 = vmatprep.mubr.f32.mxu0 0.0
      %699 = vmatmul.mubr.f32.gmra.mrb[0].mxu0 %v539
      %v700 = vpop.f32.mrb[0].mxu0
      %v701 = vadd.f32 0.0, %v700
      %v702 = vpop.f32.mrb[0].mxu0
      %v703 = vadd.f32 0.0, %v702
      %704 = vmatprep.mubr.f32.mxu0 0.0
      %705 = vmatmul.mubr.f32.gmra.mrb[0].mxu0 %v542
      %v706 = vpop.f32.mrb[0].mxu0
      %v707 = vadd.f32 0.0, %v706
      %v708 = vpop.f32.mrb[0].mxu0
      %v709 = vadd.f32 0.0, %v708
      %710 = vmatprep.mubr.f32.mxu0 0.0
      %711 = vmatmul.mubr.f32.gmra.mrb[0].mxu0 %v545
      %v712 = vpop.f32.mrb[0].mxu0
      %v713 = vadd.f32 0.0, %v712
      %v714 = vpop.f32.mrb[0].mxu0
      %v715 = vadd.f32 0.0, %v714
      %716 = vmatprep.mubr.f32.mxu0 0.0
      %717 = vmatmul.mubr.f32.gmra.mrb[0].mxu0 %v548
      %v718 = vpop.f32.mrb[0].mxu0
      %v719 = vadd.f32 0.0, %v718
      %v720 = vpop.f32.mrb[0].mxu0
      %v721 = vadd.f32 0.0, %v720
      %722 = vmatprep.mubr.f32.mxu0 0.0
      %723 = vmatmul.mubr.f32.gmra.mrb[0].mxu0 %v551
      %v724 = vpop.f32.mrb[0].mxu0
      %v725 = vadd.f32 0.0, %v724
      %v726 = vpop.f32.mrb[0].mxu0
      %v727 = vadd.f32 0.0, %v726
      %728 = vmatprep.mubr.f32.mxu0 0.0
      %729 = vmatmul.mubr.f32.gmra.mrb[0].mxu0 %v554
      %v730 = vpop.f32.mrb[0].mxu0
      %v731 = vadd.f32 0.0, %v730
      %v732 = vpop.f32.mrb[0].mxu0
      %v733 = vadd.f32 0.0, %v732
      %734 = vmatprep.mubr.f32.mxu0 0.0
      %735 = vmatmul.mubr.f32.gmra.mrb[0].mxu0 %v557
      %v736 = vpop.f32.mrb[0].mxu0
      %v737 = vadd.f32 0.0, %v736
      %v738 = vpop.f32.mrb[0].mxu0
      %v739 = vadd.f32 0.0, %v738
      %740 = vmatprep.mubr.f32.mxu0 0.0
      %741 = vmatmul.mubr.f32.gmra.mrb[0].mxu0 %v560
      %v742 = vpop.f32.mrb[0].mxu0
      %v743 = vadd.f32 0.0, %v742
      %v744 = vpop.f32.mrb[0].mxu0
      %v745 = vadd.f32 0.0, %v744
      %746 = vmatprep.mubr.f32.mxu0 0.0
      %747 = vmatmul.mubr.f32.gmra.mrb[0].mxu0 %v563
      %v748 = vpop.f32.mrb[0].mxu0
      %v749 = vadd.f32 0.0, %v748
      %v750 = vpop.f32.mrb[0].mxu0
      %v751 = vadd.f32 0.0, %v750
      %752 = vmatprep.mubr.f32.mxu0 0.0
      %753 = vmatmul.mubr.f32.gmra.mrb[0].mxu0 %v566
      %v754 = vpop.f32.mrb[0].mxu0
      %v755 = vadd.f32 0.0, %v754
      %v756 = vpop.f32.mrb[0].mxu0
      %v757 = vadd.f32 0.0, %v756
      %758 = vmatprep.mubr.f32.mxu0 0.0
      %759 = vmatmul.mubr.f32.gmra.mrb[0].mxu0 %v569
      %v760 = vpop.f32.mrb[0].mxu0
      %v761 = vadd.f32 0.0, %v760
      %v762 = vpop.f32.mrb[0].mxu0
      %v763 = vadd.f32 0.0, %v762
      %764 = vmatprep.mubr.f32.mxu0 0.0
      %765 = vmatmul.mubr.f32.gmra.mrb[0].mxu0 %v572
      %v766 = vpop.f32.mrb[0].mxu0
      %v767 = vadd.f32 0.0, %v766
      %v768 = vpop.f32.mrb[0].mxu0
      %v769 = vadd.f32 0.0, %v768
      %770 = vmatprep.mubr.f32.mxu0 0.0
      %771 = vmatmul.mubr.f32.gmra.mrb[0].mxu0 %v575
      %v772 = vpop.f32.mrb[0].mxu0
      %v773 = vadd.f32 0.0, %v772
      %v774 = vpop.f32.mrb[0].mxu0
      %v775 = vadd.f32 0.0, %v774
      %776 = vmatprep.mubr.f32.mxu0 0.0
      %777 = vmatmul.mubr.f32.gmra.mrb[0].mxu0 %v578
      %v778 = vpop.f32.mrb[0].mxu0
      %v779 = vadd.f32 0.0, %v778
      %v780 = vpop.f32.mrb[0].mxu0
      %v781 = vadd.f32 0.0, %v780
      %782 = vmatprep.mubr.f32.mxu0 0.0
      %783 = vmatmul.mubr.f32.gmra.mrb[0].mxu0 %v581
      %v784 = vpop.f32.mrb[0].mxu0
      %v785 = vadd.f32 0.0, %v784
      %v786 = vpop.f32.mrb[0].mxu0
      %v787 = vadd.f32 0.0, %v786
      %788 = vmatprep.mubr.f32.mxu0 0.0
      %789 = vmatmul.mubr.f32.gmra.mrb[0].mxu0 %v584
      %v790 = vpop.f32.mrb[0].mxu0
      %v791 = vadd.f32 0.0, %v790
      %v792 = vpop.f32.mrb[0].mxu0
      %v793 = vadd.f32 0.0, %v792
      %794 = vmatprep.mubr.f32.mxu0 0.0
      %795 = vmatmul.mubr.f32.gmra.mrb[0].mxu0 %v587
      %v796 = vpop.f32.mrb[0].mxu0
      %v797 = vadd.f32 0.0, %v796
      %v798 = vpop.f32.mrb[0].mxu0
      %v799 = vadd.f32 0.0, %v798
      %800 = vmatprep.mubr.f32.mxu0 0.0
      %801 = vmatmul.mubr.f32.gmra.mrb[0].mxu0 %v590
      %v802 = vpop.f32.mrb[0].mxu0
      %v803 = vadd.f32 0.0, %v802
      %v804 = vpop.f32.mrb[0].mxu0
      %v805 = vadd.f32 0.0, %v804
      %806 = vmatprep.mubr.f32.mxu0 0.0
      %807 = vmatmul.mubr.f32.gmra.mrb[0].mxu0 %v593
      %v808 = vpop.f32.mrb[0].mxu0
      %v809 = vadd.f32 0.0, %v808
      %v810 = vpop.f32.mrb[0].mxu0
      %v811 = vadd.f32 0.0, %v810
      %812 = vmatprep.mubr.f32.mxu0 0.0
      %813 = vmatmul.mubr.f32.gmra.mrb[0].mxu0 %v596
      %v814 = vpop.f32.mrb[0].mxu0
      %v815 = vadd.f32 0.0, %v814
      %v816 = vpop.f32.mrb[0].mxu0
      %v817 = vadd.f32 0.0, %v816
      %818 = vmatprep.mubr.f32.mxu0 0.0
      %819 = vmatmul.mubr.f32.gmra.mrb[0].mxu0 %v599
      %v820 = vpop.f32.mrb[0].mxu0
      %v821 = vadd.f32 0.0, %v820
      %v822 = vpop.f32.mrb[0].mxu0
      %v823 = vadd.f32 0.0, %v822
      %824 = vmatprep.mubr.f32.mxu0 0.0
      %825 = vmatmul.mubr.f32.gmra.mrb[0].mxu0 %v602
      %v826 = vpop.f32.mrb[0].mxu0
      %v827 = vadd.f32 0.0, %v826
      %v828 = vpop.f32.mrb[0].mxu0
      %v829 = vadd.f32 0.0, %v828
      %830 = vmatprep.mubr.f32.mxu0 0.0
      %831 = vmatmul.mubr.f32.gmra.mrb[0].mxu0 %v605
      %v832 = vpop.f32.mrb[0].mxu0
      %v833 = vadd.f32 0.0, %v832
      %v834 = vpop.f32.mrb[0].mxu0
      %v835 = vadd.f32 0.0, %v834
      %836 = vmatprep.mubr.f32.mxu0 0.0
      %837 = vmatmul.mubr.f32.gmra.mrb[0].mxu0 %v608
      %v838 = vpop.f32.mrb[0].mxu0
      %v839 = vadd.f32 0.0, %v838
      %v840 = vpop.f32.mrb[0].mxu0
      %v841 = vadd.f32 0.0, %v840
      %842 = vmatprep.mubr.f32.mxu0 0.0
      %843 = vmatmul.mubr.f32.gmra.mrb[0].mxu0 %v611
      %v844 = vpop.f32.mrb[0].mxu0
      %v845 = vadd.f32 0.0, %v844
      %v846 = vpop.f32.mrb[0].mxu0
      %v847 = vadd.f32 0.0, %v846
      %848 = vmatprep.mubr.f32.mxu0 0.0
      %849 = vmatmul.mubr.f32.gmra.mrb[0].mxu0 %v614
      %v850 = vpop.f32.mrb[0].mxu0
      %v851 = vadd.f32 0.0, %v850
      %v852 = vpop.f32.mrb[0].mxu0
      %v853 = vadd.f32 0.0, %v852
      %854 = vmatprep.mubr.f32.mxu0 0.0
      %855 = vmatmul.mubr.f32.gmra.mrb[0].mxu0 %v617
      %v856 = vpop.f32.mrb[0].mxu0
      %v857 = vadd.f32 0.0, %v856
      %v858 = vpop.f32.mrb[0].mxu0
      %v859 = vadd.f32 0.0, %v858
      %860 = vmatprep.mubr.f32.mxu0 0.0
      %861 = vmatmul.mubr.f32.gmra.mrb[0].mxu0 %v620
      %v862 = vpop.f32.mrb[0].mxu0
      %v863 = vadd.f32 0.0, %v862
      %v864 = vpop.f32.mrb[0].mxu0
      %v865 = vadd.f32 0.0, %v864
      %866 = vmatprep.mubr.f32.mxu0 0.0
      %867 = vmatmul.mubr.f32.gmra.mrb[0].mxu0 %v623
      %v868 = vpop.f32.mrb[0].mxu0
      %v869 = vadd.f32 0.0, %v868
      %v870 = vpop.f32.mrb[0].mxu0
      %v871 = vadd.f32 0.0, %v870
      %872 = vmatprep.mubr.f32.mxu0 0.0
      %873 = vmatmul.mubr.f32.gmra.mrb[0].mxu0 %v626
      %v874 = vpop.f32.mrb[0].mxu0
      %v875 = vadd.f32 0.0, %v874
      %v876 = vpop.f32.mrb[0].mxu0
      %v877 = vadd.f32 0.0, %v876
      %878 = vmatprep.mubr.f32.mxu0 0.0
      %879 = vmatmul.mubr.f32.gmra.mrb[0].mxu0 %v629
      %v880 = vpop.f32.mrb[0].mxu0
      %v881 = vadd.f32 0.0, %v880
      %v882 = vpop.f32.mrb[0].mxu0
      %v883 = vadd.f32 0.0, %v882
      %884 = vmatprep.mubr.f32.mxu0 0.0
      %885 = vmatmul.mubr.f32.gmra.mrb[0].mxu0 %v632
      %v886 = vpop.f32.mrb[0].mxu0
      %v887 = vadd.f32 0.0, %v886
      %v888 = vpop.f32.mrb[0].mxu0
      %v889 = vadd.f32 0.0, %v888
      %890 = vdwg.mxu0
      %v891 = vmax.f32 %v701, %v703
      %892 = vmax.xlane.f32.xlu0 %v891
      %v893 = vpop.xlane.xlu0 %892
      %v894 = vmax.f32 %v707, %v709
      %895 = vmax.xlane.f32.xlu0 %v894
      %v896 = vpop.xlane.xlu0 %895
      %v897 = vmax.f32 %v713, %v715
      %898 = vmax.xlane.f32.xlu0 %v897
      %v899 = vpop.xlane.xlu0 %898
      %v900 = vmax.f32 %v719, %v721
      %901 = vmax.xlane.f32.xlu0 %v900
      %v902 = vpop.xlane.xlu0 %901
      %v903 = vmax.f32 %v725, %v727
      %904 = vmax.xlane.f32.xlu0 %v903
      %v905 = vpop.xlane.xlu0 %904
      %v906 = vmax.f32 %v731, %v733
      %907 = vmax.xlane.f32.xlu0 %v906
      %v908 = vpop.xlane.xlu0 %907
      %v909 = vmax.f32 %v737, %v739
      %910 = vmax.xlane.f32.xlu0 %v909
      %v911 = vpop.xlane.xlu0 %910
      %v912 = vmax.f32 %v743, %v745
      %913 = vmax.xlane.f32.xlu0 %v912
      %v914 = vpop.xlane.xlu0 %913
      %v915 = vmax.f32 %v749, %v751
      %916 = vmax.xlane.f32.xlu0 %v915
      %v917 = vpop.xlane.xlu0 %916
      %v918 = vmax.f32 %v755, %v757
      %919 = vmax.xlane.f32.xlu0 %v918
      %v920 = vpop.xlane.xlu0 %919
      %v921 = vmax.f32 %v761, %v763
      %922 = vmax.xlane.f32.xlu0 %v921
      %v923 = vpop.xlane.xlu0 %922
      %v924 = vmax.f32 %v767, %v769
      %925 = vmax.xlane.f32.xlu0 %v924
      %v926 = vpop.xlane.xlu0 %925
      %v927 = vmax.f32 %v773, %v775
      %928 = vmax.xlane.f32.xlu0 %v927
      %v929 = vpop.xlane.xlu0 %928
      %v930 = vmax.f32 %v779, %v781
      %931 = vmax.xlane.f32.xlu0 %v930
      %v932 = vpop.xlane.xlu0 %931
      %v933 = vmax.f32 %v785, %v787
      %934 = vmax.xlane.f32.xlu0 %v933
      %v935 = vpop.xlane.xlu0 %934
      %v936 = vmax.f32 %v791, %v793
      %937 = vmax.xlane.f32.xlu0 %v936
      %v938 = vpop.xlane.xlu0 %937
      %v939 = vmax.f32 %v797, %v799
      %940 = vmax.xlane.f32.xlu0 %v939
      %v941 = vpop.xlane.xlu0 %940
      %v942 = vmax.f32 %v803, %v805
      %943 = vmax.xlane.f32.xlu0 %v942
      %v944 = vpop.xlane.xlu0 %943
      %v945 = vmax.f32 %v809, %v811
      %946 = vmax.xlane.f32.xlu0 %v945
      %v947 = vpop.xlane.xlu0 %946
      %v948 = vmax.f32 %v815, %v817
      %949 = vmax.xlane.f32.xlu0 %v948
      %v950 = vpop.xlane.xlu0 %949
      %v951 = vmax.f32 %v821, %v823
      %952 = vmax.xlane.f32.xlu0 %v951
      %v953 = vpop.xlane.xlu0 %952
      %v954 = vmax.f32 %v827, %v829
      %955 = vmax.xlane.f32.xlu0 %v954
      %v956 = vpop.xlane.xlu0 %955
      %v957 = vmax.f32 %v833, %v835
      %958 = vmax.xlane.f32.xlu0 %v957
      %v959 = vpop.xlane.xlu0 %958
      %v960 = vmax.f32 %v839, %v841
      %961 = vmax.xlane.f32.xlu0 %v960
      %v962 = vpop.xlane.xlu0 %961
      %v963 = vmax.f32 %v845, %v847
      %964 = vmax.xlane.f32.xlu0 %v963
      %v965 = vpop.xlane.xlu0 %964
      %v966 = vmax.f32 %v851, %v853
      %967 = vmax.xlane.f32.xlu0 %v966
      %v968 = vpop.xlane.xlu0 %967
      %v969 = vmax.f32 %v857, %v859
      %970 = vmax.xlane.f32.xlu0 %v969
      %v971 = vpop.xlane.xlu0 %970
      %v972 = vmax.f32 %v863, %v865
      %973 = vmax.xlane.f32.xlu0 %v972
      %v974 = vpop.xlane.xlu0 %973
      %v975 = vmax.f32 %v869, %v871
      %976 = vmax.xlane.f32.xlu0 %v975
      %v977 = vpop.xlane.xlu0 %976
      %v978 = vmax.f32 %v875, %v877
      %979 = vmax.xlane.f32.xlu0 %v978
      %v980 = vpop.xlane.xlu0 %979
      %v981 = vmax.f32 %v881, %v883
      %982 = vmax.xlane.f32.xlu0 %v981
      %v983 = vpop.xlane.xlu0 %982
      %v984 = vmax.f32 %v887, %v889
      %985 = vmax.xlane.f32.xlu0 %v984
      %v986 = vpop.xlane.xlu0 %985
      %v987 = vsub.f32 %v701, %v893
      %v988 = vsub.f32 %v703, %v893
      %v989 = vsub.f32 %v707, %v896
      %v990 = vsub.f32 %v709, %v896
      %v991 = vsub.f32 %v713, %v899
      %v992 = vsub.f32 %v715, %v899
      %v993 = vsub.f32 %v719, %v902
      %v994 = vsub.f32 %v721, %v902
      %v995 = vsub.f32 %v725, %v905
      %v996 = vsub.f32 %v727, %v905
      %v997 = vsub.f32 %v731, %v908
      %v998 = vsub.f32 %v733, %v908
      %v999 = vsub.f32 %v737, %v911
      %v1000 = vsub.f32 %v739, %v911
      %v1001 = vsub.f32 %v743, %v914
      %v1002 = vsub.f32 %v745, %v914
      %v1003 = vsub.f32 %v749, %v917
      %v1004 = vsub.f32 %v751, %v917
      %v1005 = vsub.f32 %v755, %v920
      %v1006 = vsub.f32 %v757, %v920
      %v1007 = vsub.f32 %v761, %v923
      %v1008 = vsub.f32 %v763, %v923
      %v1009 = vsub.f32 %v767, %v926
      %v1010 = vsub.f32 %v769, %v926
      %v1011 = vsub.f32 %v773, %v929
      %v1012 = vsub.f32 %v775, %v929
      %v1013 = vsub.f32 %v779, %v932
      %v1014 = vsub.f32 %v781, %v932
      %v1015 = vsub.f32 %v785, %v935
      %v1016 = vsub.f32 %v787, %v935
      %v1017 = vsub.f32 %v791, %v938
      %v1018 = vsub.f32 %v793, %v938
      %v1019 = vsub.f32 %v797, %v941
      %v1020 = vsub.f32 %v799, %v941
      %v1021 = vsub.f32 %v803, %v944
      %v1022 = vsub.f32 %v805, %v944
      %v1023 = vsub.f32 %v809, %v947
      %v1024 = vsub.f32 %v811, %v947
      %v1025 = vsub.f32 %v815, %v950
      %v1026 = vsub.f32 %v817, %v950
      %v1027 = vsub.f32 %v821, %v953
      %v1028 = vsub.f32 %v823, %v953
      %v1029 = vsub.f32 %v827, %v956
      %v1030 = vsub.f32 %v829, %v956
      %v1031 = vsub.f32 %v833, %v959
      %v1032 = vsub.f32 %v835, %v959
      %v1033 = vsub.f32 %v839, %v962
      %v1034 = vsub.f32 %v841, %v962
      %v1035 = vsub.f32 %v845, %v965
      %v1036 = vsub.f32 %v847, %v965
      %v1037 = vsub.f32 %v851, %v968
      %v1038 = vsub.f32 %v853, %v968
      %v1039 = vsub.f32 %v857, %v971
      %v1040 = vsub.f32 %v859, %v971
      %v1041 = vsub.f32 %v863, %v974
      %v1042 = vsub.f32 %v865, %v974
      %v1043 = vsub.f32 %v869, %v977
      %v1044 = vsub.f32 %v871, %v977
      %v1045 = vsub.f32 %v875, %v980
      %v1046 = vsub.f32 %v877, %v980
      %v1047 = vsub.f32 %v881, %v983
      %v1048 = vsub.f32 %v883, %v983
      %v1049 = vsub.f32 %v887, %v986
      %v1050 = vsub.f32 %v889, %v986
      %v1051 = vmul.f32 %v987, 1.442695
      %v1052 = vpow.pop %v1051
      %v1053 = vmul.f32 %v988, 1.442695
      %v1054 = vpow.pop %v1053
      %v1055 = vmul.f32 %v989, 1.442695
      %v1056 = vpow.pop %v1055
      %v1057 = vmul.f32 %v990, 1.442695
      %v1058 = vpow.pop %v1057
      %v1059 = vmul.f32 %v991, 1.442695
      %v1060 = vpow.pop %v1059
      %v1061 = vmul.f32 %v992, 1.442695
      %v1062 = vpow.pop %v1061
      %v1063 = vmul.f32 %v993, 1.442695
      %v1064 = vpow.pop %v1063
      %v1065 = vmul.f32 %v994, 1.442695
      %v1066 = vpow.pop %v1065
      %v1067 = vmul.f32 %v995, 1.442695
      %v1068 = vpow.pop %v1067
      %v1069 = vmul.f32 %v996, 1.442695
      %v1070 = vpow.pop %v1069
      %v1071 = vmul.f32 %v997, 1.442695
      %v1072 = vpow.pop %v1071
      %v1073 = vmul.f32 %v998, 1.442695
      %v1074 = vpow.pop %v1073
      %v1075 = vmul.f32 %v999, 1.442695
      %v1076 = vpow.pop %v1075
      %v1077 = vmul.f32 %v1000, 1.442695
      %v1078 = vpow.pop %v1077
      %v1079 = vmul.f32 %v1001, 1.442695
      %v1080 = vpow.pop %v1079
      %v1081 = vmul.f32 %v1002, 1.442695
      %v1082 = vpow.pop %v1081
      %v1083 = vmul.f32 %v1003, 1.442695
      %v1084 = vpow.pop %v1083
      %v1085 = vmul.f32 %v1004, 1.442695
      %v1086 = vpow.pop %v1085
      %v1087 = vmul.f32 %v1005, 1.442695
      %v1088 = vpow.pop %v1087
      %v1089 = vmul.f32 %v1006, 1.442695
      %v1090 = vpow.pop %v1089
      %v1091 = vmul.f32 %v1007, 1.442695
      %v1092 = vpow.pop %v1091
      %v1093 = vmul.f32 %v1008, 1.442695
      %v1094 = vpow.pop %v1093
      %v1095 = vmul.f32 %v1009, 1.442695
      %v1096 = vpow.pop %v1095
      %v1097 = vmul.f32 %v1010, 1.442695
      %v1098 = vpow.pop %v1097
      %v1099 = vmul.f32 %v1011, 1.442695
      %v1100 = vpow.pop %v1099
      %v1101 = vmul.f32 %v1012, 1.442695
      %v1102 = vpow.pop %v1101
      %v1103 = vmul.f32 %v1013, 1.442695
      %v1104 = vpow.pop %v1103
      %v1105 = vmul.f32 %v1014, 1.442695
      %v1106 = vpow.pop %v1105
      %v1107 = vmul.f32 %v1015, 1.442695
      %v1108 = vpow.pop %v1107
      %v1109 = vmul.f32 %v1016, 1.442695
      %v1110 = vpow.pop %v1109
      %v1111 = vmul.f32 %v1017, 1.442695
      %v1112 = vpow.pop %v1111
      %v1113 = vmul.f32 %v1018, 1.442695
      %v1114 = vpow.pop %v1113
      %v1115 = vmul.f32 %v1019, 1.442695
      %v1116 = vpow.pop %v1115
      %v1117 = vmul.f32 %v1020, 1.442695
      %v1118 = vpow.pop %v1117
      %v1119 = vmul.f32 %v1021, 1.442695
      %v1120 = vpow.pop %v1119
      %v1121 = vmul.f32 %v1022, 1.442695
      %v1122 = vpow.pop %v1121
      %v1123 = vmul.f32 %v1023, 1.442695
      %v1124 = vpow.pop %v1123
      %v1125 = vmul.f32 %v1024, 1.442695
      %v1126 = vpow.pop %v1125
      %v1127 = vmul.f32 %v1025, 1.442695
      %v1128 = vpow.pop %v1127
      %v1129 = vmul.f32 %v1026, 1.442695
      %v1130 = vpow.pop %v1129
      %v1131 = vmul.f32 %v1027, 1.442695
      %v1132 = vpow.pop %v1131
      %v1133 = vmul.f32 %v1028, 1.442695
      %v1134 = vpow.pop %v1133
      %v1135 = vmul.f32 %v1029, 1.442695
      %v1136 = vpow.pop %v1135
      %v1137 = vmul.f32 %v1030, 1.442695
      %v1138 = vpow.pop %v1137
      %v1139 = vmul.f32 %v1031, 1.442695
      %v1140 = vpow.pop %v1139
      %v1141 = vmul.f32 %v1032, 1.442695
      %v1142 = vpow.pop %v1141
      %v1143 = vmul.f32 %v1033, 1.442695
      %v1144 = vpow.pop %v1143
      %v1145 = vmul.f32 %v1034, 1.442695
      %v1146 = vpow.pop %v1145
      %v1147 = vmul.f32 %v1035, 1.442695
      %v1148 = vpow.pop %v1147
      %v1149 = vmul.f32 %v1036, 1.442695
      %v1150 = vpow.pop %v1149
      %v1151 = vmul.f32 %v1037, 1.442695
      %v1152 = vpow.pop %v1151
      %v1153 = vmul.f32 %v1038, 1.442695
      %v1154 = vpow.pop %v1153
      %v1155 = vmul.f32 %v1039, 1.442695
      %v1156 = vpow.pop %v1155
      %v1157 = vmul.f32 %v1040, 1.442695
      %v1158 = vpow.pop %v1157
      %v1159 = vmul.f32 %v1041, 1.442695
      %v1160 = vpow.pop %v1159
      %v1161 = vmul.f32 %v1042, 1.442695
      %v1162 = vpow.pop %v1161
      %v1163 = vmul.f32 %v1043, 1.442695
      %v1164 = vpow.pop %v1163
      %v1165 = vmul.f32 %v1044, 1.442695
      %v1166 = vpow.pop %v1165
      %v1167 = vmul.f32 %v1045, 1.442695
      %v1168 = vpow.pop %v1167
      %v1169 = vmul.f32 %v1046, 1.442695
      %v1170 = vpow.pop %v1169
      %v1171 = vmul.f32 %v1047, 1.442695
      %v1172 = vpow.pop %v1171
      %v1173 = vmul.f32 %v1048, 1.442695
      %v1174 = vpow.pop %v1173
      %v1175 = vmul.f32 %v1049, 1.442695
      %v1176 = vpow.pop %v1175
      %v1177 = vmul.f32 %v1050, 1.442695
      %v1178 = vpow.pop %v1177
      %v1179 = vadd.f32 %v1052, %v1054
      %1180 = vadd.xlane.f32.xlu0 %v1179
      %v1181 = vpop.xlane.xlu0 %1180
      %v1182 = vadd.f32 %v1056, %v1058
      %1183 = vadd.xlane.f32.xlu0 %v1182
      %v1184 = vpop.xlane.xlu0 %1183
      %v1185 = vadd.f32 %v1060, %v1062
      %1186 = vadd.xlane.f32.xlu0 %v1185
      %v1187 = vpop.xlane.xlu0 %1186
      %v1188 = vadd.f32 %v1064, %v1066
      %1189 = vadd.xlane.f32.xlu0 %v1188
      %v1190 = vpop.xlane.xlu0 %1189
      %v1191 = vadd.f32 %v1068, %v1070
      %1192 = vadd.xlane.f32.xlu0 %v1191
      %v1193 = vpop.xlane.xlu0 %1192
      %v1194 = vadd.f32 %v1072, %v1074
      %1195 = vadd.xlane.f32.xlu0 %v1194
      %v1196 = vpop.xlane.xlu0 %1195
      %v1197 = vadd.f32 %v1076, %v1078
      %1198 = vadd.xlane.f32.xlu0 %v1197
      %v1199 = vpop.xlane.xlu0 %1198
      %v1200 = vadd.f32 %v1080, %v1082
      %1201 = vadd.xlane.f32.xlu0 %v1200
      %v1202 = vpop.xlane.xlu0 %1201
      %v1203 = vadd.f32 %v1084, %v1086
      %1204 = vadd.xlane.f32.xlu0 %v1203
      %v1205 = vpop.xlane.xlu0 %1204
      %v1206 = vadd.f32 %v1088, %v1090
      %1207 = vadd.xlane.f32.xlu0 %v1206
      %v1208 = vpop.xlane.xlu0 %1207
      %v1209 = vadd.f32 %v1092, %v1094
      %1210 = vadd.xlane.f32.xlu0 %v1209
      %v1211 = vpop.xlane.xlu0 %1210
      %v1212 = vadd.f32 %v1096, %v1098
      %1213 = vadd.xlane.f32.xlu0 %v1212
      %v1214 = vpop.xlane.xlu0 %1213
      %v1215 = vadd.f32 %v1100, %v1102
      %1216 = vadd.xlane.f32.xlu0 %v1215
      %v1217 = vpop.xlane.xlu0 %1216
      %v1218 = vadd.f32 %v1104, %v1106
      %1219 = vadd.xlane.f32.xlu0 %v1218
      %v1220 = vpop.xlane.xlu0 %1219
      %v1221 = vadd.f32 %v1108, %v1110
      %1222 = vadd.xlane.f32.xlu0 %v1221
      %v1223 = vpop.xlane.xlu0 %1222
      %v1224 = vadd.f32 %v1112, %v1114
      %1225 = vadd.xlane.f32.xlu0 %v1224
      %v1226 = vpop.xlane.xlu0 %1225
      %v1227 = vadd.f32 %v1116, %v1118
      %1228 = vadd.xlane.f32.xlu0 %v1227
      %v1229 = vpop.xlane.xlu0 %1228
      %v1230 = vadd.f32 %v1120, %v1122
      %1231 = vadd.xlane.f32.xlu0 %v1230
      %v1232 = vpop.xlane.xlu0 %1231
      %v1233 = vadd.f32 %v1124, %v1126
      %1234 = vadd.xlane.f32.xlu0 %v1233
      %v1235 = vpop.xlane.xlu0 %1234
      %v1236 = vadd.f32 %v1128, %v1130
      %1237 = vadd.xlane.f32.xlu0 %v1236
      %v1238 = vpop.xlane.xlu0 %1237
      %v1239 = vadd.f32 %v1132, %v1134
      %1240 = vadd.xlane.f32.xlu0 %v1239
      %v1241 = vpop.xlane.xlu0 %1240
      %v1242 = vadd.f32 %v1136, %v1138
      %1243 = vadd.xlane.f32.xlu0 %v1242
      %v1244 = vpop.xlane.xlu0 %1243
      %v1245 = vadd.f32 %v1140, %v1142
      %1246 = vadd.xlane.f32.xlu0 %v1245
      %v1247 = vpop.xlane.xlu0 %1246
      %v1248 = vadd.f32 %v1144, %v1146
      %1249 = vadd.xlane.f32.xlu0 %v1248
      %v1250 = vpop.xlane.xlu0 %1249
      %v1251 = vadd.f32 %v1148, %v1150
      %1252 = vadd.xlane.f32.xlu0 %v1251
      %v1253 = vpop.xlane.xlu0 %1252
      %v1254 = vadd.f32 %v1152, %v1154
      %1255 = vadd.xlane.f32.xlu0 %v1254
      %v1256 = vpop.xlane.xlu0 %1255
      %v1257 = vadd.f32 %v1156, %v1158
      %1258 = vadd.xlane.f32.xlu0 %v1257
      %v1259 = vpop.xlane.xlu0 %1258
      %v1260 = vadd.f32 %v1160, %v1162
      %1261 = vadd.xlane.f32.xlu0 %v1260
      %v1262 = vpop.xlane.xlu0 %1261
      %v1263 = vadd.f32 %v1164, %v1166
      %1264 = vadd.xlane.f32.xlu0 %v1263
      %v1265 = vpop.xlane.xlu0 %1264
      %v1266 = vadd.f32 %v1168, %v1170
      %1267 = vadd.xlane.f32.xlu0 %v1266
      %v1268 = vpop.xlane.xlu0 %1267
      %v1269 = vadd.f32 %v1172, %v1174
      %1270 = vadd.xlane.f32.xlu0 %v1269
      %v1271 = vpop.xlane.xlu0 %1270
      %v1272 = vadd.f32 %v1176, %v1178
      %1273 = vadd.xlane.f32.xlu0 %v1272
      %v1274 = vpop.xlane.xlu0 %1273
      %v1275 = vrcp.pop %v1181
      %v1276 = vrcp.pop %v1184
      %v1277 = vrcp.pop %v1187
      %v1278 = vrcp.pop %v1190
      %v1279 = vrcp.pop %v1193
      %v1280 = vrcp.pop %v1196
      %v1281 = vrcp.pop %v1199
      %v1282 = vrcp.pop %v1202
      %v1283 = vrcp.pop %v1205
      %v1284 = vrcp.pop %v1208
      %v1285 = vrcp.pop %v1211
      %v1286 = vrcp.pop %v1214
      %v1287 = vrcp.pop %v1217
      %v1288 = vrcp.pop %v1220
      %v1289 = vrcp.pop %v1223
      %v1290 = vrcp.pop %v1226
      %v1291 = vrcp.pop %v1229
      %v1292 = vrcp.pop %v1232
      %v1293 = vrcp.pop %v1235
      %v1294 = vrcp.pop %v1238
      %v1295 = vrcp.pop %v1241
      %v1296 = vrcp.pop %v1244
      %v1297 = vrcp.pop %v1247
      %v1298 = vrcp.pop %v1250
      %v1299 = vrcp.pop %v1253
      %v1300 = vrcp.pop %v1256
      %v1301 = vrcp.pop %v1259
      %v1302 = vrcp.pop %v1262
      %v1303 = vrcp.pop %v1265
      %v1304 = vrcp.pop %v1268
      %v1305 = vrcp.pop %v1271
      %v1306 = vrcp.pop %v1274
      %v1307 = vmul.f32 %v1052, %v1275
      %v1308 = vmul.f32 %v1054, %v1275
      %v1309 = vmul.f32 %v1056, %v1276
      %v1310 = vmul.f32 %v1058, %v1276
      %v1311 = vmul.f32 %v1060, %v1277
      %v1312 = vmul.f32 %v1062, %v1277
      %v1313 = vmul.f32 %v1064, %v1278
      %v1314 = vmul.f32 %v1066, %v1278
      %v1315 = vmul.f32 %v1068, %v1279
      %v1316 = vmul.f32 %v1070, %v1279
      %v1317 = vmul.f32 %v1072, %v1280
      %v1318 = vmul.f32 %v1074, %v1280
      %v1319 = vmul.f32 %v1076, %v1281
      %v1320 = vmul.f32 %v1078, %v1281
      %v1321 = vmul.f32 %v1080, %v1282
      %v1322 = vmul.f32 %v1082, %v1282
      %v1323 = vmul.f32 %v1084, %v1283
      %v1324 = vmul.f32 %v1086, %v1283
      %v1325 = vmul.f32 %v1088, %v1284
      %v1326 = vmul.f32 %v1090, %v1284
      %v1327 = vmul.f32 %v1092, %v1285
      %v1328 = vmul.f32 %v1094, %v1285
      %v1329 = vmul.f32 %v1096, %v1286
      %v1330 = vmul.f32 %v1098, %v1286
      %v1331 = vmul.f32 %v1100, %v1287
      %v1332 = vmul.f32 %v1102, %v1287
      %v1333 = vmul.f32 %v1104, %v1288
      %v1334 = vmul.f32 %v1106, %v1288
      %v1335 = vmul.f32 %v1108, %v1289
      %v1336 = vmul.f32 %v1110, %v1289
      %v1337 = vmul.f32 %v1112, %v1290
      %v1338 = vmul.f32 %v1114, %v1290
      %v1339 = vmul.f32 %v1116, %v1291
      %v1340 = vmul.f32 %v1118, %v1291
      %v1341 = vmul.f32 %v1120, %v1292
      %v1342 = vmul.f32 %v1122, %v1292
      %v1343 = vmul.f32 %v1124, %v1293
      %v1344 = vmul.f32 %v1126, %v1293
      %v1345 = vmul.f32 %v1128, %v1294
      %v1346 = vmul.f32 %v1130, %v1294
      %v1347 = vmul.f32 %v1132, %v1295
      %v1348 = vmul.f32 %v1134, %v1295
      %v1349 = vmul.f32 %v1136, %v1296
      %v1350 = vmul.f32 %v1138, %v1296
      %v1351 = vmul.f32 %v1140, %v1297
      %v1352 = vmul.f32 %v1142, %v1297
      %v1353 = vmul.f32 %v1144, %v1298
      %v1354 = vmul.f32 %v1146, %v1298
      %v1355 = vmul.f32 %v1148, %v1299
      %v1356 = vmul.f32 %v1150, %v1299
      %v1357 = vmul.f32 %v1152, %v1300
      %v1358 = vmul.f32 %v1154, %v1300
      %v1359 = vmul.f32 %v1156, %v1301
      %v1360 = vmul.f32 %v1158, %v1301
      %v1361 = vmul.f32 %v1160, %v1302
      %v1362 = vmul.f32 %v1162, %v1302
      %v1363 = vmul.f32 %v1164, %v1303
      %v1364 = vmul.f32 %v1166, %v1303
      %v1365 = vmul.f32 %v1168, %v1304
      %v1366 = vmul.f32 %v1170, %v1304
      %v1367 = vmul.f32 %v1172, %v1305
      %v1368 = vmul.f32 %v1174, %v1305
      %v1369 = vmul.f32 %v1176, %v1306
      %v1370 = vmul.f32 %v1178, %v1306
      %v1371 = vpack.c.bf16 %v468, %v468
      %v1372 = vpack.c.bf16 %v470, %v470
      %v1373 = vpack.c.bf16 %v1309, %v1307
      %v1374 = vpack.c.bf16 %v1310, %v1308
      %v1375 = vpack.c.bf16 %v1313, %v1311
      %v1376 = vpack.c.bf16 %v1314, %v1312
      %v1377 = vpack.c.bf16 %v1317, %v1315
      %v1378 = vpack.c.bf16 %v1318, %v1316
      %v1379 = vpack.c.bf16 %v1321, %v1319
      %v1380 = vpack.c.bf16 %v1322, %v1320
      %v1381 = vpack.c.bf16 %v1325, %v1323
      %v1382 = vpack.c.bf16 %v1326, %v1324
      %v1383 = vpack.c.bf16 %v1329, %v1327
      %v1384 = vpack.c.bf16 %v1330, %v1328
      %v1385 = vpack.c.bf16 %v1333, %v1331
      %v1386 = vpack.c.bf16 %v1334, %v1332
      %v1387 = vpack.c.bf16 %v1337, %v1335
      %v1388 = vpack.c.bf16 %v1338, %v1336
      %v1389 = vpack.c.bf16 %v1341, %v1339
      %v1390 = vpack.c.bf16 %v1342, %v1340
      %v1391 = vpack.c.bf16 %v1345, %v1343
      %v1392 = vpack.c.bf16 %v1346, %v1344
      %v1393 = vpack.c.bf16 %v1349, %v1347
      %v1394 = vpack.c.bf16 %v1350, %v1348
      %v1395 = vpack.c.bf16 %v1353, %v1351
      %v1396 = vpack.c.bf16 %v1354, %v1352
      %v1397 = vpack.c.bf16 %v1357, %v1355
      %v1398 = vpack.c.bf16 %v1358, %v1356
      %v1399 = vpack.c.bf16 %v1361, %v1359
      %v1400 = vpack.c.bf16 %v1362, %v1360
      %v1401 = vpack.c.bf16 %v1365, %v1363
      %v1402 = vpack.c.bf16 %v1366, %v1364
      %v1403 = vpack.c.bf16 %v1369, %v1367
      %v1404 = vpack.c.bf16 %v1370, %v1368
      %1405 = vmatprep.subr.bf16.mxu0 %v1374
      %1406 = vmatpush1.bf16.xpose.msra.mxu0 %v1373
      %1407 = vmatprep.subr.bf16.mxu0 %v1376
      %1408 = vmatpush1.bf16.xpose.msra.mxu0 %v1375
      %1409 = vmatprep.subr.bf16.mxu0 %v1378
      %1410 = vmatpush1.bf16.xpose.msra.mxu0 %v1377
      %1411 = vmatprep.subr.bf16.mxu0 %v1380
      %1412 = vmatpush1.bf16.xpose.msra.mxu0 %v1379
      %1413 = vmatprep.subr.bf16.mxu0 %v1382
      %1414 = vmatpush1.bf16.xpose.msra.mxu0 %v1381
      %1415 = vmatprep.subr.bf16.mxu0 %v1384
      %1416 = vmatpush1.bf16.xpose.msra.mxu0 %v1383
      %1417 = vmatprep.subr.bf16.mxu0 %v1386
      %1418 = vmatpush1.bf16.xpose.msra.mxu0 %v1385
      %1419 = vmatprep.subr.bf16.mxu0 %v1388
      %1420 = vmatpush1.bf16.xpose.msra.mxu0 %v1387
      %1421 = vmatprep.subr.bf16.mxu0 %v1390
      %1422 = vmatpush1.bf16.xpose.msra.mxu0 %v1389
      %1423 = vmatprep.subr.bf16.mxu0 %v1392
      %1424 = vmatpush1.bf16.xpose.msra.mxu0 %v1391
      %1425 = vmatprep.subr.bf16.mxu0 %v1394
      %1426 = vmatpush1.bf16.xpose.msra.mxu0 %v1393
      %1427 = vmatprep.subr.bf16.mxu0 %v1396
      %1428 = vmatpush1.bf16.xpose.msra.mxu0 %v1395
      %1429 = vmatprep.subr.bf16.mxu0 %v1398
      %1430 = vmatpush1.bf16.xpose.msra.mxu0 %v1397
      %1431 = vmatprep.subr.bf16.mxu0 %v1400
      %1432 = vmatpush1.bf16.xpose.msra.mxu0 %v1399
      %1433 = vmatprep.subr.bf16.mxu0 %v1402
      %1434 = vmatpush1.bf16.xpose.msra.mxu0 %v1401
      %1435 = vmatprep.subr.bf16.mxu0 %v1404
      %1436 = vmatpush1.bf16.xpose.msra.mxu0 %v1403
      %1437 = vmatprep.mubr.bf16.mxu0 %v1372
      %1438 = vmatmul.mubr.bf16.gmra.mrb[0].mxu0 %v1371
      %v1439 = vpop.f32.mrb[0].mxu0
      %v1440 = vadd.f32 %v376, %v1439
      %v1441 = vpop.f32.mrb[0].mxu0
      %v1442 = vadd.f32 %v377, %v1441
      %v1443 = vpop.f32.mrb[0].mxu0
      %v1444 = vpop.f32.mrb[0].mxu0
      %1445 = vdwg.mxu0
      %1446 = vst [vmem:[%s197] sm:$0xff] %v1440
      %1447 = vst [vmem:[%s197 + $0x8] sm:$0xff] %v1442
      %p1448 = scmp.lt.s32.totalorder %s15, 1
      %s1449 = scalar_select %p1448, %s15, 1
      %s1450 = smul.addr %s1449, 2
      %s1451 = smul.addr %s1450, 8
      %s1452 = scalar_lea.vmem %s4, %s1451
      // Predicated region
      $region37: #{attn_resnet_generator.18} parent=35 // pred_check
        %p1453 = pneg %p122
      $region38: #{attn_resnet_generator.18} parent=35 // pred_check_branch
        %1455 = sbr.rel (%p1453) target = $region40
      $region39: #{attn_resnet_generator.18} parent=35 // pred_region
        _
      $region40: #{attn_resnet_generator.18} parent=35 // pred_fallthru
        _
    $region36: #{attn_resnet_generator.18} parent=5 // pred_fallthru
      _
    %p1456 = scmp.le.s32.totalorder 2, %s10
    // Predicated region
    $region41: #{attn_resnet_generator.18} parent=5 // pred_check
      %p1457 = pneg %p1456
    $region42: #{attn_resnet_generator.18} parent=5 // pred_check_branch
      %1459 = sbr.rel (%p1457) target = $region44
    $region43: #{attn_resnet_generator.18} parent=5 // pred_region
      %s1460 = ssub.s32 %s10, 2
      // Predicated region
      $region45: #{attn_resnet_generator.18} parent=43 // pred_check
        %p1461 = pneg %p128
      $region46: #{attn_resnet_generator.18} parent=43 // pred_check_branch
        %1463 = sbr.rel (%p1461) target = $region48
      $region47: #{attn_resnet_generator.18} parent=43 // pred_region
        %p1464 = scmp.lt.s32.totalorder %s16, 1
        %s1465 = scalar_select %p1464, %s16, 1
        %s1466 = smul.addr %s1465, 2
        %s1467 = smul.addr %s1466, 8
        %s1468 = scalar_lea.vmem %s4, %s1467
      $region48: #{attn_resnet_generator.18} parent=43 // pred_fallthru
        _
    $region44: #{attn_resnet_generator.18} parent=5 // pred_fallthru
      _
  $region6: #{attn_resnet_generator.18} parent=0 // loop_footer
    %s14 = sadd.s32 1, %s10
  $region7: #{attn_resnet_generator.18} parent=0 // loop_footer_branch
    %9 = sbr.rel target = $region3
  $region8: #{attn_resnet_generator.18} parent=0 // loop_exit
    _

// kernel: attn_resnet_generator.19
$region0: #{attn_resnet_generator.19}
  #allocation0 [shape = 'u32[]', space=smem, size = 0x4, offset = 0x4, fixed_abs, tag = 'smem constant byte address 0x4 - core index']
  #allocation1 [shape = 'u32[144,128]{1,0:T(1,128)}', space=vmem, size = 0x12000, scoped, tag = 'internal scratch']
  %s0 = inlined_call_operand.vmem [shape: bf16[2,392,256], index: 0, kind: input, shape index: {}]
  %s1 = inlined_call_operand.vmem [shape: bf16[3,392], index: 1, kind: input, shape index: {}]
  %s2 = inlined_call_operand.vmem [shape: f32[3,1], index: 2, kind: input, shape index: {}]
  %s3 = inlined_call_operand.vmem [shape: f32[2,3,256], index: 3, kind: output, shape index: {}]
  %s4 = sld [smem:[#allocation0]]
  $region45: #{attn_resnet_generator.19} parent=0
    _
  %s6 = ssub.s32 1, %s4
  %s7 = scalar_select 0, %s6, %s4
  loop: start=0, step=1, limit=4
  $region2: #{attn_resnet_generator.19} parent=0 // loop_pre_header
    _
  $region3: #{attn_resnet_generator.19} parent=0 // loop_header
    %s9 = sphi 0, %s13
    %p10 = scmp.ge.s32.totalorder %s9, 4
    %s19 = sphi 0, %s21
    %s22 = sphi 0, %s19
    %s23 = sphi 0, %s22
    %s39 = sphi 0, %s23
    %s43 = sphi 0, %s43
    %s45 = sphi 0, %s43
    %s46 = sphi 0, %s45
    %s60 = sphi 0, %s46
    %s64 = sphi 0, %s64
    %s66 = sphi 0, %s64
    %s67 = sphi 0, %s66
    %s81 = sphi 0, %s67
    %s87 = sphi 0, %s89
    %s90 = sphi 0, %s87
    %s91 = sphi 0, %s90
    %s107 = sphi 0, %s91
  $region4: #{attn_resnet_generator.19} parent=0 // loop_header_branch
    %12 = sbr.rel (%p10) target = $region8
  $region5: #{attn_resnet_generator.19} parent=0 // loop_body
    %s14 = ssub.s32 %s9, 1
    %s15 = ssub.s32 %s9, 2
    %s16 = sadd.s32 %s9, 1
    %s17 = ssub.s32 %s9, %s16
    %p18 = scmp.eq.s32.totalorder %s17, 0
    %s20 = sadd.s32 %s19, 1
    %s21 = scalar_select %p18, %s19, %s20
    %p24 = pneg %p18
    %p25 = scmp.eq.s32.totalorder %s9, 1
    %p26 = por %p24, %p25
    %p27 = scmp.ne.s32.totalorder %s19, %s22
    %p28 = scmp.eq.s32.totalorder %s9, 0
    %p29 = por %p27, %p28
    %p30 = scmp.ne.s32.totalorder %s19, %s22
    %p31 = scmp.eq.s32.totalorder %s14, 1
    %p32 = por %p30, %p31
    %p33 = scmp.ne.s32.totalorder %s22, %s23
    %p34 = scmp.eq.s32.totalorder %s14, 0
    %p35 = por %p33, %p34
    %p36 = scmp.ne.s32.totalorder %s22, %s23
    %p37 = scmp.eq.s32.totalorder %s15, 1
    %p38 = por %p36, %p37
    %p40 = scmp.ne.s32.totalorder %s23, %s39
    %p41 = scmp.eq.s32.totalorder %s15, 0
    %p42 = por %p40, %p41
    %s44 = sadd.s32 %s43, 1
    %p47 = scmp.eq.s32.totalorder %s9, 1
    %p48 = scmp.ne.s32.totalorder %s43, %s45
    %p49 = scmp.eq.s32.totalorder %s9, 0
    %p50 = por %p48, %p49
    %p51 = scmp.ne.s32.totalorder %s43, %s45
    %p52 = scmp.eq.s32.totalorder %s14, 1
    %p53 = por %p51, %p52
    %p54 = scmp.ne.s32.totalorder %s45, %s46
    %p55 = scmp.eq.s32.totalorder %s14, 0
    %p56 = por %p54, %p55
    %p57 = scmp.ne.s32.totalorder %s45, %s46
    %p58 = scmp.eq.s32.totalorder %s15, 1
    %p59 = por %p57, %p58
    %p61 = scmp.ne.s32.totalorder %s46, %s60
    %p62 = scmp.eq.s32.totalorder %s15, 0
    %p63 = por %p61, %p62
    %s65 = sadd.s32 %s64, 1
    %p68 = scmp.eq.s32.totalorder %s9, 1
    %p69 = scmp.ne.s32.totalorder %s64, %s66
    %p70 = scmp.eq.s32.totalorder %s9, 0
    %p71 = por %p69, %p70
    %p72 = scmp.ne.s32.totalorder %s64, %s66
    %p73 = scmp.eq.s32.totalorder %s14, 1
    %p74 = por %p72, %p73
    %p75 = scmp.ne.s32.totalorder %s66, %s67
    %p76 = scmp.eq.s32.totalorder %s14, 0
    %p77 = por %p75, %p76
    %p78 = scmp.ne.s32.totalorder %s66, %s67
    %p79 = scmp.eq.s32.totalorder %s15, 1
    %p80 = por %p78, %p79
    %p82 = scmp.ne.s32.totalorder %s67, %s81
    %p83 = scmp.eq.s32.totalorder %s15, 0
    %p84 = por %p82, %p83
    %s85 = ssub.s32 %s9, %s16
    %p86 = scmp.eq.s32.totalorder %s85, 0
    %s88 = sadd.s32 %s87, 1
    %s89 = scalar_select %p86, %s87, %s88
    %p92 = pneg %p86
    %p93 = scmp.eq.s32.totalorder %s9, 1
    %p94 = por %p92, %p93
    %p95 = scmp.ne.s32.totalorder %s87, %s90
    %p96 = scmp.eq.s32.totalorder %s9, 0
    %p97 = por %p95, %p96
    %p98 = scmp.ne.s32.totalorder %s87, %s90
    %p99 = scmp.eq.s32.totalorder %s14, 1
    %p100 = por %p98, %p99
    %p101 = scmp.ne.s32.totalorder %s90, %s91
    %p102 = scmp.eq.s32.totalorder %s14, 0
    %p103 = por %p101, %p102
    %p104 = scmp.ne.s32.totalorder %s90, %s91
    %p105 = scmp.eq.s32.totalorder %s15, 1
    %p106 = por %p104, %p105
    %p108 = scmp.ne.s32.totalorder %s91, %s107
    %p109 = scmp.eq.s32.totalorder %s15, 0
    %p110 = por %p108, %p109
    %p111 = scmp.le.s32.totalorder 1, %s9
    %p112 = scmp.lt.s32.totalorder %s9, 3
    %p113 = pnand %p111, %p112
    %p114 = pneg %p113
    // Predicated region
    $region9: #{attn_resnet_generator.19} parent=5 // pred_check
      _
    $region10: #{attn_resnet_generator.19} parent=5 // pred_check_branch
      %116 = sbr.rel (%p113) target = $region12
    $region11: #{attn_resnet_generator.19} parent=5 // pred_region
      %s117 = ssub.s32 %s9, 1
      // Predicated region
      $region13: #{attn_resnet_generator.19} parent=11 // pred_check
        %p118 = pneg %p56
      $region14: #{attn_resnet_generator.19} parent=11 // pred_check_branch
        %120 = sbr.rel (%p118) target = $region16
      $region15: #{attn_resnet_generator.19} parent=11 // pred_region
        _
      $region16: #{attn_resnet_generator.19} parent=11 // pred_fallthru
        _
      // Predicated region
      $region17: #{attn_resnet_generator.19} parent=11 // pred_check
        %p121 = pneg %p77
      $region18: #{attn_resnet_generator.19} parent=11 // pred_check_branch
        %123 = sbr.rel (%p121) target = $region20
      $region19: #{attn_resnet_generator.19} parent=11 // pred_region
        _
      $region20: #{attn_resnet_generator.19} parent=11 // pred_fallthru
        _
    $region12: #{attn_resnet_generator.19} parent=5 // pred_fallthru
      _
    %p124 = scmp.lt.s32.totalorder %s9, 2
    // Predicated region
    $region21: #{attn_resnet_generator.19} parent=5 // pred_check
      %p125 = pneg %p124
    $region22: #{attn_resnet_generator.19} parent=5 // pred_check_branch
      %127 = sbr.rel (%p125) target = $region24
    $region23: #{attn_resnet_generator.19} parent=5 // pred_region
      // Predicated region
      $region25: #{attn_resnet_generator.19} parent=23 // pred_check
        %p128 = pneg %p29
      $region26: #{attn_resnet_generator.19} parent=23 // pred_check_branch
        %130 = sbr.rel (%p128) target = $region28
      $region27: #{attn_resnet_generator.19} parent=23 // pred_region
        %p131 = scmp.lt.s32.totalorder %s9, 1
        %s132 = scalar_select %p131, %s9, 1
        %s133 = smul.addr %s132, 98
        %s134 = smul.addr %s133, 4
        %s135 = scalar_lea.vmem %s0, %s134
      $region28: #{attn_resnet_generator.19} parent=23 // pred_fallthru
        _
    $region24: #{attn_resnet_generator.19} parent=5 // pred_fallthru
      _
    %p136 = scmp.le.s32.totalorder 1, %s9
    %p137 = scmp.lt.s32.totalorder %s9, 3
    %p138 = pnand %p136, %p137
    %p139 = pneg %p138
    // Predicated region
    $region29: #{attn_resnet_generator.19} parent=5 // pred_check
      _
    $region30: #{attn_resnet_generator.19} parent=5 // pred_check_branch
      %141 = sbr.rel (%p138) target = $region32
    $region31: #{attn_resnet_generator.19} parent=5 // pred_region
      %s142 = ssub.s32 %s9, 1
      %p143 = scmp.lt.s32.totalorder %s14, 1
      %s144 = scalar_select %p143, %s14, 1
      %s145 = smul.addr %s144, 98
      %s146 = smul.addr %s145, 4
      %s147 = scalar_lea.vmem %s0, %s146
      %p148 = pneg %p35
      %p149 = pneg %p32
      %p150 = pneg %p56
      %p151 = pneg %p53
      %p152 = pneg %p77
      %p153 = pneg %p74
      %p154 = pneg %p103
      %p155 = pneg %p100
      %p156 = scmp.lt.s32.totalorder %s14, 1
      %s157 = scalar_select %p156, %s14, 1
      %s158 = smul.addr %s157, 2
      %s159 = smul.addr %s158, 4
      %s160 = scalar_lea.vmem %s3, %s159
      %p161 = scmp.lt.s32.totalorder %s14, 1
      %s162 = scalar_select %p161, %s14, 1
      %s163 = smul.addr %s162, 98
      %s164 = smul.addr %s163, 4
      %s165 = scalar_lea.vmem %s0, %s164
      %p166 = scmp.lt.s32.totalorder %s14, 1
      %s167 = scalar_select %p166, %s14, 1
      %s168 = smul.addr %s167, 2
      %s169 = smul.addr %s168, 4
      %s170 = scalar_lea.vmem %s3, %s169
      %v172 = vld [vmem:[%s1] sm:$0xff]
      %v173 = vld [vmem:[%s165] sm:$0xff]
      %v174 = vld [vmem:[%s165 + $0x8] sm:$0xff]
      %v175 = vld [vmem:[%s165 + $0x10] sm:$0xff]
      %v176 = vld [vmem:[%s165 + $0x18] sm:$0xff]
      %v177 = vld [vmem:[%s165 + $0x20] sm:$0xff]
      %v178 = vld [vmem:[%s165 + $0x28] sm:$0xff]
      %v179 = vld [vmem:[%s165 + $0x30] sm:$0xff]
      %v180 = vld [vmem:[%s165 + $0x38] sm:$0xff]
      %v181 = vld [vmem:[%s165 + $0x40] sm:$0xff]
      %v182 = vld [vmem:[%s165 + $0x48] sm:$0xff]
      %v183 = vld [vmem:[%s165 + $0x50] sm:$0xff]
      %v184 = vld [vmem:[%s165 + $0x58] sm:$0xff]
      %v185 = vld [vmem:[%s165 + $0x60] sm:$0xff]
      %v186 = vld [vmem:[%s165 + $0x68] sm:$0xff]
      %v187 = vld [vmem:[%s165 + $0x70] sm:$0xff]
      %v188 = vld [vmem:[%s165 + $0x78] sm:$0xff]
      %v189 = vld [vmem:[%s165 + $0x80] sm:$0xff]
      %v190 = vld [vmem:[%s165 + $0x88] sm:$0xff]
      %v191 = vld [vmem:[%s165 + $0x90] sm:$0xff]
      %v192 = vld [vmem:[%s165 + $0x98] sm:$0xff]
      %v193 = vld [vmem:[%s165 + $0xa0] sm:$0xff]
      %v194 = vld [vmem:[%s165 + $0xa8] sm:$0xff]
      %v195 = vld [vmem:[%s165 + $0xb0] sm:$0xff]
      %v196 = vld [vmem:[%s165 + $0xb8] sm:$0xff]
      %v197 = vld [vmem:[%s165 + $0xc0] sm:$0xff]
      %v198 = vld [vmem:[%s165 + $0xc8] sm:$0xff]
      %v199 = vld [vmem:[%s165 + $0xd0] sm:$0xff]
      %v200 = vld [vmem:[%s165 + $0xd8] sm:$0xff]
      %v201 = vld [vmem:[%s165 + $0xe0] sm:$0xff]
      %v202 = vld [vmem:[%s165 + $0xe8] sm:$0xff]
      %v203 = vld [vmem:[%s165 + $0xf0] sm:$0xff]
      %v204 = vld [vmem:[%s165 + $0xf8] sm:$0xff]
      %v205 = vld [vmem:[%s165 + $0x100] sm:$0xff]
      %v206 = vld [vmem:[%s165 + $0x108] sm:$0xff]
      %v207 = vld [vmem:[%s165 + $0x110] sm:$0xff]
      %v208 = vld [vmem:[%s165 + $0x118] sm:$0xff]
      %v209 = vld [vmem:[%s165 + $0x120] sm:$0xff]
      %v210 = vld [vmem:[%s165 + $0x128] sm:$0xff]
      %v211 = vld [vmem:[%s165 + $0x130] sm:$0xff]
      %v212 = vld [vmem:[%s165 + $0x138] sm:$0xff]
      %v213 = vld [vmem:[%s165 + $0x140] sm:$0xff]
      %v214 = vld [vmem:[%s165 + $0x148] sm:$0xff]
      %v215 = vld [vmem:[%s165 + $0x150] sm:$0xff]
      %v216 = vld [vmem:[%s165 + $0x158] sm:$0xff]
      %v217 = vld [vmem:[%s165 + $0x160] sm:$0xff]
      %v218 = vld [vmem:[%s165 + $0x168] sm:$0xff]
      %v219 = vld [vmem:[%s165 + $0x170] sm:$0xff]
      %v220 = vld [vmem:[%s165 + $0x178] sm:$0xff]
      %v221 = vld [vmem:[%s165 + $0x180] sm:$0xff]
      %v222 = vld [vmem:[%s2] sm:$0x7]
      %224 = vset.pattern.permute.xlu0 0
      %225 = vperm.xlu0 %224, %v222
      %v226 = vpop.permute.xlu0 %225
      %v229 = vcombine.high %v172, %v172
      %v231 = vunpack.c.l.s4 1983009808
      %v232 = vunpack.c.0.s8 %v231
      %v233 = vlaneseq
      %v234 = vshrl.u32 %v233, 7
      %v235 = vsub.s32 %v232, %v234
      %v236 = vrot.slane %v172, %v235
      %v238 = vunpack.c.l.s4 1983009808
      %v239 = vunpack.c.0.s8 %v238
      %v240 = vlaneseq
      %v241 = vshrl.u32 %v240, 7
      %v242 = vsub.s32 %v239, %v241
      %v243 = vrot.slane %v229, %v242
      %v244 = vcombine.high %v236, %v236
      %v245 = vcombine.high %v243, %v243
      %v298 = vunpack.c.l.b16 %v173
      %v299 = vunpack.c.h.b16 %v173
      %v300 = vunpack.c.l.b16 %v174
      %v301 = vunpack.c.h.b16 %v174
      %v302 = vunpack.c.l.b16 %v175
      %v303 = vunpack.c.h.b16 %v175
      %v304 = vunpack.c.l.b16 %v176
      %v305 = vunpack.c.h.b16 %v176
      %v306 = vunpack.c.l.b16 %v177
      %v307 = vunpack.c.h.b16 %v177
      %v308 = vunpack.c.l.b16 %v178
      %v309 = vunpack.c.h.b16 %v178
      %v310 = vunpack.c.l.b16 %v179
      %v311 = vunpack.c.h.b16 %v179
      %v312 = vunpack.c.l.b16 %v180
      %v313 = vunpack.c.h.b16 %v180
      %v314 = vunpack.c.l.b16 %v181
      %v315 = vunpack.c.h.b16 %v181
      %v316 = vunpack.c.l.b16 %v182
      %v317 = vunpack.c.h.b16 %v182
      %v318 = vunpack.c.l.b16 %v183
      %v319 = vunpack.c.h.b16 %v183
      %v320 = vunpack.c.l.b16 %v184
      %v321 = vunpack.c.h.b16 %v184
      %v322 = vunpack.c.l.b16 %v185
      %v323 = vunpack.c.h.b16 %v185
      %v324 = vunpack.c.l.b16 %v186
      %v325 = vunpack.c.h.b16 %v186
      %v326 = vunpack.c.l.b16 %v187
      %v327 = vunpack.c.h.b16 %v187
      %v328 = vunpack.c.l.b16 %v188
      %v329 = vunpack.c.h.b16 %v188
      %v330 = vunpack.c.l.b16 %v189
      %v331 = vunpack.c.h.b16 %v189
      %v332 = vunpack.c.l.b16 %v190
      %v333 = vunpack.c.h.b16 %v190
      %v334 = vunpack.c.l.b16 %v191
      %v335 = vunpack.c.h.b16 %v191
      %v336 = vunpack.c.l.b16 %v192
      %v337 = vunpack.c.h.b16 %v192
      %v338 = vunpack.c.l.b16 %v193
      %v339 = vunpack.c.h.b16 %v193
      %v340 = vunpack.c.l.b16 %v194
      %v341 = vunpack.c.h.b16 %v194
      %v342 = vunpack.c.l.b16 %v195
      %v343 = vunpack.c.h.b16 %v195
      %v344 = vunpack.c.l.b16 %v196
      %v345 = vunpack.c.h.b16 %v196
      %v346 = vunpack.c.l.b16 %v197
      %v347 = vunpack.c.h.b16 %v197
      %v348 = vunpack.c.l.b16 %v198
      %v349 = vunpack.c.h.b16 %v198
      %v350 = vunpack.c.l.b16 %v199
      %v351 = vunpack.c.h.b16 %v199
      %v352 = vunpack.c.l.b16 %v200
      %v353 = vunpack.c.h.b16 %v200
      %v354 = vunpack.c.l.b16 %v201
      %v355 = vunpack.c.h.b16 %v201
      %v356 = vunpack.c.l.b16 %v202
      %v357 = vunpack.c.h.b16 %v202
      %v358 = vunpack.c.l.b16 %v203
      %v359 = vunpack.c.h.b16 %v203
      %v360 = vunpack.c.l.b16 %v204
      %v361 = vunpack.c.h.b16 %v204
      %v362 = vunpack.c.l.b16 %v205
      %v363 = vunpack.c.h.b16 %v205
      %v364 = vunpack.c.l.b16 %v206
      %v365 = vunpack.c.h.b16 %v206
      %v366 = vunpack.c.l.b16 %v207
      %v367 = vunpack.c.h.b16 %v207
      %v368 = vunpack.c.l.b16 %v208
      %v369 = vunpack.c.h.b16 %v208
      %v370 = vunpack.c.l.b16 %v209
      %v371 = vunpack.c.h.b16 %v209
      %v372 = vunpack.c.l.b16 %v210
      %v373 = vunpack.c.h.b16 %v210
      %v374 = vunpack.c.l.b16 %v211
      %v375 = vunpack.c.h.b16 %v211
      %v376 = vunpack.c.l.b16 %v212
      %v377 = vunpack.c.h.b16 %v212
      %v378 = vunpack.c.l.b16 %v213
      %v379 = vunpack.c.h.b16 %v213
      %v380 = vunpack.c.l.b16 %v214
      %v381 = vunpack.c.h.b16 %v214
      %v382 = vunpack.c.l.b16 %v215
      %v383 = vunpack.c.h.b16 %v215
      %v384 = vunpack.c.l.b16 %v216
      %v385 = vunpack.c.h.b16 %v216
      %v386 = vunpack.c.l.b16 %v217
      %v387 = vunpack.c.h.b16 %v217
      %v388 = vunpack.c.l.b16 %v218
      %v389 = vunpack.c.h.b16 %v218
      %v390 = vunpack.c.l.b16 %v219
      %v391 = vunpack.c.h.b16 %v219
      %v392 = vunpack.c.l.b16 %v220
      %v393 = vunpack.c.h.b16 %v220
      %v394 = vunpack.c.l.b16 %v221
      %v395 = vunpack.c.h.b16 %v221
      %v396 = vpack.c.b16 %v300, %v298
      %v397 = vpack.c.b16 %v301, %v299
      %v398 = vpack.c.b16 %v304, %v302
      %v399 = vpack.c.b16 %v305, %v303
      %v400 = vpack.c.b16 %v308, %v306
      %v401 = vpack.c.b16 %v309, %v307
      %v402 = vpack.c.b16 %v312, %v310
      %v403 = vpack.c.b16 %v313, %v311
      %v404 = vpack.c.b16 %v316, %v314
      %v405 = vpack.c.b16 %v317, %v315
      %v406 = vpack.c.b16 %v320, %v318
      %v407 = vpack.c.b16 %v321, %v319
      %v408 = vpack.c.b16 %v324, %v322
      %v409 = vpack.c.b16 %v325, %v323
      %v410 = vpack.c.b16 %v328, %v326
      %v411 = vpack.c.b16 %v329, %v327
      %v412 = vpack.c.b16 %v332, %v330
      %v413 = vpack.c.b16 %v333, %v331
      %v414 = vpack.c.b16 %v336, %v334
      %v415 = vpack.c.b16 %v337, %v335
      %v416 = vpack.c.b16 %v340, %v338
      %v417 = vpack.c.b16 %v341, %v339
      %v418 = vpack.c.b16 %v344, %v342
      %v419 = vpack.c.b16 %v345, %v343
      %v420 = vpack.c.b16 %v348, %v346
      %v421 = vpack.c.b16 %v349, %v347
      %v422 = vpack.c.b16 %v352, %v350
      %v423 = vpack.c.b16 %v353, %v351
      %v424 = vpack.c.b16 %v356, %v354
      %v425 = vpack.c.b16 %v357, %v355
      %v426 = vpack.c.b16 %v360, %v358
      %v427 = vpack.c.b16 %v361, %v359
      %v428 = vpack.c.b16 %v364, %v362
      %v429 = vpack.c.b16 %v365, %v363
      %v430 = vpack.c.b16 %v368, %v366
      %v431 = vpack.c.b16 %v369, %v367
      %v432 = vpack.c.b16 %v372, %v370
      %v433 = vpack.c.b16 %v373, %v371
      %v434 = vpack.c.b16 %v376, %v374
      %v435 = vpack.c.b16 %v377, %v375
      %v436 = vpack.c.b16 %v380, %v378
      %v437 = vpack.c.b16 %v381, %v379
      %v438 = vpack.c.b16 %v384, %v382
      %v439 = vpack.c.b16 %v385, %v383
      %v440 = vpack.c.b16 %v388, %v386
      %v441 = vpack.c.b16 %v389, %v387
      %v442 = vpack.c.b16 %v392, %v390
      %v443 = vpack.c.b16 %v393, %v391
      %v444 = vpack.c.b16 %v394, %v394
      %v445 = vpack.c.b16 %v395, %v395
      %vm494 = vcmask 64512
      %v496 = vsel %vm494, %v245, 0
      %vm498 = vcmask 1043456
      %v500 = vsel %vm498, %v444, 0
      %v503 = vsel %vm498, %v445, 0
      %505 = vmatprep.subr.bf16.mxu0 %v397
      %506 = vmatpush1.bf16.msra.mxu0 %v396
      %507 = vmatprep.subr.bf16.mxu0 %v399
      %508 = vmatpush1.bf16.msra.mxu0 %v398
      %509 = vmatprep.subr.bf16.mxu0 %v401
      %510 = vmatpush1.bf16.msra.mxu0 %v400
      %511 = vmatprep.subr.bf16.mxu0 %v403
      %512 = vmatpush1.bf16.msra.mxu0 %v402
      %513 = vmatprep.subr.bf16.mxu0 %v405
      %514 = vmatpush1.bf16.msra.mxu0 %v404
      %515 = vmatprep.subr.bf16.mxu0 %v407
      %516 = vmatpush1.bf16.msra.mxu0 %v406
      %517 = vmatprep.subr.bf16.mxu0 %v409
      %518 = vmatpush1.bf16.msra.mxu0 %v408
      %519 = vmatprep.subr.bf16.mxu0 %v411
      %520 = vmatpush1.bf16.msra.mxu0 %v410
      %521 = vmatprep.subr.bf16.mxu0 %v413
      %522 = vmatpush1.bf16.msra.mxu0 %v412
      %523 = vmatprep.subr.bf16.mxu0 %v415
      %524 = vmatpush1.bf16.msra.mxu0 %v414
      %525 = vmatprep.subr.bf16.mxu0 %v417
      %526 = vmatpush1.bf16.msra.mxu0 %v416
      %527 = vmatprep.subr.bf16.mxu0 %v419
      %528 = vmatpush1.bf16.msra.mxu0 %v418
      %529 = vmatprep.subr.bf16.mxu0 %v421
      %530 = vmatpush1.bf16.msra.mxu0 %v420
      %531 = vmatprep.subr.bf16.mxu0 %v423
      %532 = vmatpush1.bf16.msra.mxu0 %v422
      %533 = vmatprep.subr.bf16.mxu0 %v425
      %534 = vmatpush1.bf16.msra.mxu0 %v424
      %535 = vmatprep.subr.bf16.mxu0 %v427
      %536 = vmatpush1.bf16.msra.mxu0 %v426
      %537 = vmatprep.mubr.bf16.mxu0 %v244
      %538 = vmatmul.mubr.bf16.gmra.mrb[0].mxu0 %v236
      %v539 = vpop.f32.mrb[0].mxu0
      %v540 = vadd.f32 %v226, %v539
      %v541 = vpop.f32.mrb[0].mxu0
      %v542 = vadd.f32 %v226, %v541
      %v543 = vpop.f32.mrb[0].mxu0
      %v544 = vpop.f32.mrb[0].mxu0
      %545 = vdwg.mxu0
      %546 = vmatprep.subr.bf16.mxu0 %v429
      %547 = vmatpush1.bf16.msra.mxu0 %v428
      %548 = vmatprep.subr.bf16.mxu0 %v431
      %549 = vmatpush1.bf16.msra.mxu0 %v430
      %550 = vmatprep.subr.bf16.mxu0 %v433
      %551 = vmatpush1.bf16.msra.mxu0 %v432
      %552 = vmatprep.subr.bf16.mxu0 %v435
      %553 = vmatpush1.bf16.msra.mxu0 %v434
      %554 = vmatprep.subr.bf16.mxu0 %v437
      %555 = vmatpush1.bf16.msra.mxu0 %v436
      %556 = vmatprep.subr.bf16.mxu0 %v439
      %557 = vmatpush1.bf16.msra.mxu0 %v438
      %558 = vmatprep.subr.bf16.mxu0 %v441
      %559 = vmatpush1.bf16.msra.mxu0 %v440
      %560 = vmatprep.subr.bf16.mxu0 %v443
      %561 = vmatpush1.bf16.msra.mxu0 %v442
      %562 = vmatprep.subr.bf16.mxu0 %v503
      %563 = vmatpush1.bf16.msra.mxu0 %v500
      %564 = vmatprep.subr.bf16.mxu0 0
      %565 = vmatpush1.bf16.msra.mxu0 0
      %566 = vmatprep.subr.bf16.mxu0 0
      %567 = vmatpush1.bf16.msra.mxu0 0
      %568 = vmatprep.subr.bf16.mxu0 0
      %569 = vmatpush1.bf16.msra.mxu0 0
      %570 = vmatprep.subr.bf16.mxu0 0
      %571 = vmatpush1.bf16.msra.mxu0 0
      %572 = vmatprep.subr.bf16.mxu0 0
      %573 = vmatpush1.bf16.msra.mxu0 0
      %574 = vmatprep.subr.bf16.mxu0 0
      %575 = vmatpush1.bf16.msra.mxu0 0
      %576 = vmatprep.subr.bf16.mxu0 0
      %577 = vmatpush1.bf16.msra.mxu0 0
      %578 = vmatprep.mubr.bf16.mxu0 %v496
      %579 = vmatmul.mubr.bf16.gmra.mrb[0].mxu0 %v243
      %v580 = vpop.f32.mrb[0].mxu0
      %v581 = vadd.f32 %v540, %v580
      %v582 = vpop.f32.mrb[0].mxu0
      %v583 = vadd.f32 %v542, %v582
      %v584 = vpop.f32.mrb[0].mxu0
      %v585 = vpop.f32.mrb[0].mxu0
      %586 = vdwg.mxu0
      %v587 = vtanh.pop %v581
      %v588 = vtanh.pop %v583
      %v591 = vcombine.low %v587, %v588
      %593 = vst [vmem:[%s170] sm:$0x77] %v591
      %p594 = scmp.lt.s32.totalorder %s14, 1
      %s595 = scalar_select %p594, %s14, 1
      %s596 = smul.addr %s595, 2
      %s597 = smul.addr %s596, 4
      %s598 = scalar_lea.vmem %s3, %s597
      // Predicated region
      $region33: #{attn_resnet_generator.19} parent=31 // pred_check
        %p599 = pneg %p100
      $region34: #{attn_resnet_generator.19} parent=31 // pred_check_branch
        %601 = sbr.rel (%p599) target = $region36
      $region35: #{attn_resnet_generator.19} parent=31 // pred_region
        _
      $region36: #{attn_resnet_generator.19} parent=31 // pred_fallthru
        _
    $region32: #{attn_resnet_generator.19} parent=5 // pred_fallthru
      _
    %p602 = scmp.le.s32.totalorder 2, %s9
    // Predicated region
    $region37: #{attn_resnet_generator.19} parent=5 // pred_check
      %p603 = pneg %p602
    $region38: #{attn_resnet_generator.19} parent=5 // pred_check_branch
      %605 = sbr.rel (%p603) target = $region40
    $region39: #{attn_resnet_generator.19} parent=5 // pred_region
      %s606 = ssub.s32 %s9, 2
      // Predicated region
      $region41: #{attn_resnet_generator.19} parent=39 // pred_check
        %p607 = pneg %p106
      $region42: #{attn_resnet_generator.19} parent=39 // pred_check_branch
        %609 = sbr.rel (%p607) target = $region44
      $region43: #{attn_resnet_generator.19} parent=39 // pred_region
        %p610 = scmp.lt.s32.totalorder %s15, 1
        %s611 = scalar_select %p610, %s15, 1
        %s612 = smul.addr %s611, 2
        %s613 = smul.addr %s612, 4
        %s614 = scalar_lea.vmem %s3, %s613
      $region44: #{attn_resnet_generator.19} parent=39 // pred_fallthru
        _
    $region40: #{attn_resnet_generator.19} parent=5 // pred_fallthru
      _
  $region6: #{attn_resnet_generator.19} parent=0 // loop_footer
    %s13 = sadd.s32 1, %s9
  $region7: #{attn_resnet_generator.19} parent=0 // loop_footer_branch
    %8 = sbr.rel target = $region3
  $region8: #{attn_resnet_generator.19} parent=0 // loop_exit
    _

</llo_original>
